<compile_context>
chip_gen: v7x
topology: tpu7x:2x2x1
jax: 0.10.0
libtpu: 0.0.40
codegen_flags: <defaults>
</compile_context>

<pallas_src>
import functools
import math

import numpy as np
import jax
import jax.numpy as jnp
from jax.experimental import pallas as pl
from jax.experimental.pallas import tpu as pltpu


# ------------------------------ in-kernel helpers ------------------------------ #

def _gn_affine_relu(y_f32, gamma, beta):
    """GroupNorm(num_groups=1) over the whole per-sample (HW, C) block, one-pass stats,
    followed by per-channel affine and ReLU.  Returns bf16 (input dtype of the next matmul)."""
    n = float(y_f32.size)
    s1 = jnp.sum(y_f32)
    s2 = jnp.sum(y_f32 * y_f32)
    mean = s1 / n
    var = jnp.maximum(s2 / n - mean * mean, 0.0)     # biased variance, like F.group_norm
    y = (y_f32 - mean) * jax.lax.rsqrt(var + 1e-5)
    y = y * gamma + beta
    return jnp.maximum(y, 0.0).astype(jnp.bfloat16)


# --------------------------------- Pallas kernels -------------------------------- #

def _head_kernel(x_ref, w_ref, g_ref, b_ref, o_ref):
    # Initial 1x1 Conv2dBlock (latent -> 64): matmul (MXU, bf16) + GroupNorm + affine + ReLU.
    y = jnp.dot(x_ref[0], w_ref[...], preferred_element_type=jnp.float32)
    o_ref[0] = _gn_affine_relu(y, g_ref[0], b_ref[0])


def _stage_kernel(xp_ref, w3_ref, g3_ref, b3_ref,
                  wa_ref, ga_ref, ba_ref,
                  wb_ref, gb_ref, bb_ref,
                  wc_ref, gc_ref, bc_ref,
                  o_ref, *, H, W):
    """Fused upsample stage (one sample):
         Conv2dBlock(64,64,3,p=1) -> Conv2dBlock(64,64,1) -> Conv2dBlock(64,64,1)
         -> Conv2dBlock(64,256,1)
       Everything stays in VMEM; only the 256-channel result is stored (lane-dense, 2x128)."""
    C = wa_ref.shape[0]                      # 64
    HW = H * W
    Cout3 = w3_ref.shape[2]                  # 64

    # ---- 3x3 conv as 9 shifted slices of the flat zero-padded input (no HBM im2col) ----
    # xp_ref[0] holds x flattened row-major with W+1 zero rows of padding on each side, so
    # tap (dy, dx) is the static slice starting at (W+1) + dy*W + dx.  Vertical out-of-bounds
    # taps land in the zero pad; horizontal wrap-arounds are masked with a per-dx column mask.
    col = jax.lax.broadcasted_iota(jnp.int32, (HW, 1), 0) % W
    acc = jnp.zeros((HW, Cout3), jnp.float32)
    base = W + 1
    t = 0
    for dy in (-1, 0, 1):
        for dx in (-1, 0, 1):
            start = base + dy * W + dx
            win = xp_ref[0, start:start + HW, :]                     # (HW, C) bf16
            if dx != 0:
                valid = jnp.logical_and(col + dx >= 0, col + dx < W)
                win = jnp.where(valid, win, jnp.zeros_like(win))
            acc = acc + jnp.dot(win, w3_ref[t], preferred_element_type=jnp.float32)
            t += 1
    y = _gn_affine_relu(acc, g3_ref[0], b3_ref[0])                   # (HW, 64) bf16

    # ---- chained 1x1 Conv2dBlocks, activation kept in VMEM ----
    y = _gn_affine_relu(jnp.dot(y, wa_ref[...], preferred_element_type=jnp.float32),
                        ga_ref[0], ba_ref[0])
    y = _gn_affine_relu(jnp.dot(y, wb_ref[...], preferred_element_type=jnp.float32),
                        gb_ref[0], bb_ref[0])
    y = _gn_affine_relu(jnp.dot(y, wc_ref[...], preferred_element_type=jnp.float32),
                        gc_ref[0], bc_ref[0])
    o_ref[0] = y                                                     # (HW, 256) bf16


def _tail_kernel(x_ref, w_ref, b_ref, o_ref):
    # Final 1x1 conv with bias, no norm / activation; fp32 output.
    y = jnp.dot(x_ref[0], w_ref[...], preferred_element_type=jnp.float32)
    o_ref[0] = y + b_ref[0]


# -------------------------------- wrapper glue (JAX) ------------------------------ #

_VMEM_LIMIT = 48 * 1024 * 1024   # explicit scoped-VMEM budget (< v7x 64 MiB physical)


def _cparams():
    return pltpu.CompilerParams(dimension_semantics=("parallel",),
                                vmem_limit_bytes=_VMEM_LIMIT)


def _mat1x1(w):
    # (Cout, Cin, 1, 1) PyTorch OIHW -> (Cin, Cout) bf16 matmul matrix.
    return jnp.transpose(w[:, :, 0, 0], (1, 0)).astype(jnp.bfloat16)


def _mat3x3(w):
    # (Cout, Cin, 3, 3) -> (9, Cin, Cout) bf16, tap-major (kh, kw) order.
    cout, cin = w.shape[0], w.shape[1]
    return jnp.transpose(w, (2, 3, 1, 0)).reshape(9, cin, cout).astype(jnp.bfloat16)


def _run_head(x_nhwc, w, gamma, beta):
    B, H, W, Cin = x_nhwc.shape
    Cout = w.shape[0]
    x_flat = x_nhwc.reshape(B, H * W, Cin)
    out = pl.pallas_call(
        _head_kernel,
        out_shape=jax.ShapeDtypeStruct((B, H * W, Cout), jnp.bfloat16),
        grid=(B,),
        in_specs=[
            pl.BlockSpec((1, H * W, Cin), lambda i: (i, 0, 0)),
            pl.BlockSpec((Cin, Cout), lambda i: (0, 0)),
            pl.BlockSpec((1, Cout), lambda i: (0, 0)),
            pl.BlockSpec((1, Cout), lambda i: (0, 0)),
        ],
        out_specs=pl.BlockSpec((1, H * W, Cout), lambda i: (i, 0, 0)),
        compiler_params=_cparams(),
    )(x_flat, _mat1x1(w), gamma[None, :], beta[None, :])
    return out.reshape(B, H, W, Cout)


def _run_stage(x_nhwc, sp):
    (w3, g3, b3, wa, ga, ba, wb, gb, bb, wc, gc, bc) = sp
    B, H, W, C = x_nhwc.shape
    HW = H * W
    Cout = wc.shape[0]                               # 256
    x_flat = x_nhwc.reshape(B, HW, C)
    # Flat zero-pad of W+1 rows per side: a single cheap XLA pass (vs. 9x im2col), and every
    # 3x3 tap offset becomes a static slice of this buffer inside the kernel.
    xpf = jnp.pad(x_flat, ((0, 0), (W + 1, W + 1), (0, 0)))
    Hp = HW + 2 * W + 2
    out = pl.pallas_call(
        functools.partial(_stage_kernel, H=H, W=W),
        out_shape=jax.ShapeDtypeStruct((B, HW, Cout), jnp.bfloat16),
        grid=(B,),
        in_specs=[
            pl.BlockSpec((1, Hp, C), lambda i: (i, 0, 0)),
            pl.BlockSpec((9, C, C), lambda i: (0, 0, 0)),
            pl.BlockSpec((1, C), lambda i: (0, 0)),
            pl.BlockSpec((1, C), lambda i: (0, 0)),
            pl.BlockSpec((C, C), lambda i: (0, 0)),
            pl.BlockSpec((1, C), lambda i: (0, 0)),
            pl.BlockSpec((1, C), lambda i: (0, 0)),
            pl.BlockSpec((C, C), lambda i: (0, 0)),
            pl.BlockSpec((1, C), lambda i: (0, 0)),
            pl.BlockSpec((1, C), lambda i: (0, 0)),
            pl.BlockSpec((C, Cout), lambda i: (0, 0)),
            pl.BlockSpec((1, Cout), lambda i: (0, 0)),
            pl.BlockSpec((1, Cout), lambda i: (0, 0)),
        ],
        out_specs=pl.BlockSpec((1, HW, Cout), lambda i: (i, 0, 0)),
        compiler_params=_cparams(),
    )(xpf, _mat3x3(w3), g3[None, :], b3[None, :],
      _mat1x1(wa), ga[None, :], ba[None, :],
      _mat1x1(wb), gb[None, :], bb[None, :],
      _mat1x1(wc), gc[None, :], bc[None, :])
    return out.reshape(B, H, W, Cout)


def _run_tail(x_nhwc, w, bias):
    B, H, W, Cin = x_nhwc.shape
    Cout = w.shape[0]
    x_flat = x_nhwc.reshape(B, H * W, Cin)
    out = pl.pallas_call(
        _tail_kernel,
        out_shape=jax.ShapeDtypeStruct((B, H * W, Cout), jnp.float32),
        grid=(B,),
        in_specs=[
            pl.BlockSpec((1, H * W, Cin), lambda i: (i, 0, 0)),
            pl.BlockSpec((Cin, Cout), lambda i: (0, 0)),
            pl.BlockSpec((1, Cout), lambda i: (0, 0)),
        ],
        out_specs=pl.BlockSpec((1, H * W, Cout), lambda i: (i, 0, 0)),
        compiler_params=_cparams(),
    )(x_flat, _mat1x1(w), bias[None, :])
    return out.reshape(B, H, W, Cout)


def _pixel_shuffle_nhwc(x, r=2):
    # PyTorch PixelShuffle: out[b, c, h*r+i, w*r+j] = in[b, c*r*r + i*r + j, h, w]  (NHWC here).
    B, H, W, C = x.shape
    c = C // (r * r)
    x = x.reshape(B, H, W, c, r, r)
    x = jnp.transpose(x, (0, 1, 4, 2, 5, 3))
    return x.reshape(B, H * r, W * r, c)


# ----------------------------------- parameters ---------------------------------- #

def init_params(key, latent_dim, obs_channels, compression_rate):
    assert math.log2(compression_rate).is_integer()
    n_up = int(math.log2(compression_rate))
    keys = iter(jax.random.split(key, 8 + 8 * n_up + 8))

    def conv_w(cout, cin, k):
        fan_in = cin * k * k
        return jax.random.normal(next(keys), (cout, cin, k, k), jnp.float32) / np.sqrt(fan_in)

    def blk(cout, cin, k):
        return (conv_w(cout, cin, k),
                1.0 + 0.05 * jax.random.normal(next(keys), (cout,), jnp.float32),
                0.05 * jax.random.normal(next(keys), (cout,), jnp.float32))

    head = blk(64, latent_dim, 1)
    stages = []
    for _ in range(n_up):
        w3, g3, b3 = blk(64, 64, 3)
        wa, ga, ba = blk(64, 64, 1)
        wb, gb, bb = blk(64, 64, 1)
        wc, gc, bc = blk(256, 64, 1)
        stages.append((w3, g3, b3, wa, ga, ba, wb, gb, bb, wc, gc, bc))
    tail = (conv_w(obs_channels, 64, 1),
            0.05 * jax.random.normal(next(keys), (obs_channels,), jnp.float32))
    return {"head": head, "stages": stages, "tail": tail}


# ------------------------------------- forward ------------------------------------ #

def vae_decoder_forward(obs_nchw, params):
    x = jnp.transpose(obs_nchw, (0, 2, 3, 1)).astype(jnp.bfloat16)   # NCHW -> NHWC, bf16 matmuls
    w0, g0, b0 = params["head"]
    x = _run_head(x, w0, g0, b0)
    for sp in params["stages"]:
        x = _run_stage(x, sp)              # fused 3x3 block + 3x 1x1 blocks, 256-ch output
        x = _pixel_shuffle_nhwc(x, 2)      # TODO(synk): fold into the stage kernel
    wf, bf_ = params["tail"]
    x = _run_tail(x, wf, bf_)
    return jnp.transpose(x, (0, 3, 1, 2)).astype(jnp.float32)        # back to NCHW


# ------------------------------ pure-JAX reference -------------------------------- #
# Same math, same precision choice (bf16 conv inputs/weights, fp32 accumulation & GroupNorm).

def reference_forward(obs_nchw, params):
    def conv(x, w, pad):
        return jax.lax.conv_general_dilated(
            x.astype(jnp.bfloat16), w.astype(jnp.bfloat16), (1, 1), [(pad, pad), (pad, pad)],
            dimension_numbers=("NCHW", "OIHW", "NCHW"),
            preferred_element_type=jnp.float32)

    def block(x, w, g, b, pad):
        y = conv(x, w, pad)
        mean = jnp.mean(y, axis=(1, 2, 3), keepdims=True)
        var = jnp.var(y, axis=(1, 2, 3), keepdims=True)
        y = (y - mean) * jax.lax.rsqrt(var + 1e-5)
        y = y * g[None, :, None, None] + b[None, :, None, None]
        return jnp.maximum(y, 0.0)

    def shuffle(x):
        B, C, H, W = x.shape
        c = C // 4
        x = x.reshape(B, c, 2, 2, H, W)
        return jnp.transpose(x, (0, 1, 4, 2, 5, 3)).reshape(B, c, H * 2, W * 2)

    x = obs_nchw
    w0, g0, b0 = params["head"]
    x = block(x, w0, g0, b0, 0)
    for (w3, g3, b3, wa, ga, ba, wb, gb, bb, wc, gc, bc) in params["stages"]:
        x = block(x, w3, g3, b3, 1)
        x = block(x, wa, ga, ba, 0)
        x = block(x, wb, gb, bb, 0)
        x = block(x, wc, gc, bc, 0)
        x = shuffle(x)
    wf, bf_ = params["tail"]
    return conv(x, wf, 0) + bf_[None, :, None, None]


# -------------------------------------- main --------------------------------------- #

if __name__ == "__main__":
    latent_dim, obs_channels, compression_rate = 8, 3, 4
    B, H, W = 2, 4, 4

    key = jax.random.PRNGKey(0)
    kp, kx = jax.random.split(key)
    params = init_params(kp, latent_dim, obs_channels, compression_rate)
    obs = jax.random.normal(kx, (B, latent_dim, H, W), jnp.float32)   # NCHW like PyTorch

    out = jax.block_until_ready(jax.jit(vae_decoder_forward)(obs, params))
    assert out.shape == (B, obs_channels, H * compression_rate, W * compression_rate), out.shape

    ref = jax.block_until_ready(jax.jit(reference_forward)(obs, params))
    np.testing.assert_allclose(np.asarray(out), np.asarray(ref), rtol=1e-2, atol=1e-2)

    print("KERNEL_OK")
</pallas_src>

<mosaic_0001>
module attributes {stable_mosaic.version = 11 : i64} {
  func.func @_head_kernel(%arg0: i32, %arg1: memref<1x16x8xbf16, #tpu.memory_space<vmem>>, %arg2: memref<8x64xbf16, #tpu.memory_space<vmem>>, %arg3: memref<1x64xf32, #tpu.memory_space<vmem>>, %arg4: memref<1x64xf32, #tpu.memory_space<vmem>>, %arg5: memref<1x16x64xbf16, #tpu.memory_space<vmem>>) attributes {dimension_semantics = [#tpu.dimension_semantics<parallel>], iteration_bounds = array<i64: 2>, scalar_prefetch = 0 : i64, scratch_operands = 0 : i64, tpu.core_type = #tpu.core_type<tc>, window_params = [{transform_indices = @transform_0, window_bounds = array<i64: 1, 16, 8>}, {pipeline_mode = #tpu.pipeline_mode<synchronous>, transform_indices = @transform_1, window_bounds = array<i64: 8, 64>}, {pipeline_mode = #tpu.pipeline_mode<synchronous>, transform_indices = @transform_2, window_bounds = array<i64: 1, 64>}, {pipeline_mode = #tpu.pipeline_mode<synchronous>, transform_indices = @transform_3, window_bounds = array<i64: 1, 64>}, {transform_indices = @transform_4, window_bounds = array<i64: 1, 16, 64>}]} {
    %c0 = arith.constant 0 : index
    %c0_0 = arith.constant 0 : index
    %c0_1 = arith.constant 0 : index
    %0 = vector.load %arg1[%c0, %c0_0, %c0_1] : memref<1x16x8xbf16, #tpu.memory_space<vmem>>, vector<1x16x8xbf16>
    %1 = vector.shape_cast %0 : vector<1x16x8xbf16> to vector<16x8xbf16>
    %c0_2 = arith.constant 0 : index
    %c0_3 = arith.constant 0 : index
    %2 = vector.load %arg2[%c0_2, %c0_3] : memref<8x64xbf16, #tpu.memory_space<vmem>>, vector<8x64xbf16>
    %cst = arith.constant dense<0.000000e+00> : vector<16x64xf32>
    %3 = tpu.matmul %1, %2, %cst {dimension_numbers = #tpu.dot_dimension_numbers<[1], [0], [0], [1], [0, 0, 1, 1], [], []>} : vector<16x8xbf16>, vector<8x64xbf16>, vector<16x64xf32> -> vector<16x64xf32>
    %c0_4 = arith.constant 0 : index
    %c0_5 = arith.constant 0 : index
    %4 = vector.load %arg3[%c0_4, %c0_5] : memref<1x64xf32, #tpu.memory_space<vmem>>, vector<1x64xf32>
    %5 = vector.shape_cast %4 : vector<1x64xf32> to vector<64xf32>
    %c0_6 = arith.constant 0 : index
    %c0_7 = arith.constant 0 : index
    %6 = vector.load %arg4[%c0_6, %c0_7] : memref<1x64xf32, #tpu.memory_space<vmem>>, vector<1x64xf32>
    %7 = vector.shape_cast %6 : vector<1x64xf32> to vector<64xf32>
    %8 = vector.shape_cast %3 : vector<16x64xf32> to vector<1x16x64xf32>
    %cst_8 = arith.constant dense<0.000000e+00> : vector<1xf32>
    %9 = vector.multi_reduction <add>, %8, %cst_8 [1, 2] : vector<1x16x64xf32> to vector<1xf32>
    %10 = vector.shape_cast %9 : vector<1xf32> to vector<1x1x1xf32>
    %11 = vector.extract %10[0, 0, 0] : f32 from vector<1x1x1xf32>
    %12 = arith.mulf %3, %3 : vector<16x64xf32>
    %13 = vector.shape_cast %12 : vector<16x64xf32> to vector<1x16x64xf32>
    %cst_9 = arith.constant dense<0.000000e+00> : vector<1xf32>
    %14 = vector.multi_reduction <add>, %13, %cst_9 [1, 2] : vector<1x16x64xf32> to vector<1xf32>
    %15 = vector.shape_cast %14 : vector<1xf32> to vector<1x1x1xf32>
    %16 = vector.extract %15[0, 0, 0] : f32 from vector<1x1x1xf32>
    %cst_10 = arith.constant 1.024000e+03 : f32
    %17 = arith.divf %11, %cst_10 : f32
    %cst_11 = arith.constant 1.024000e+03 : f32
    %18 = arith.divf %16, %cst_11 : f32
    %19 = arith.mulf %17, %17 : f32
    %20 = arith.subf %18, %19 : f32
    %cst_12 = arith.constant 0.000000e+00 : f32
    %21 = arith.maximumf %20, %cst_12 : f32
    %22 = vector.broadcast %17 : f32 to vector<16x64xf32>
    %23 = arith.subf %3, %22 : vector<16x64xf32>
    %cst_13 = arith.constant 9.99999974E-6 : f32
    %24 = arith.addf %21, %cst_13 : f32
    %25 = math.rsqrt %24 : f32
    %26 = vector.broadcast %25 : f32 to vector<16x64xf32>
    %27 = arith.mulf %23, %26 : vector<16x64xf32>
    %28 = vector.shape_cast %5 : vector<64xf32> to vector<1x64xf32>
    %29 = vector.broadcast %28 : vector<1x64xf32> to vector<16x64xf32>
    %30 = arith.mulf %27, %29 : vector<16x64xf32>
    %31 = vector.shape_cast %7 : vector<64xf32> to vector<1x64xf32>
    %32 = vector.broadcast %31 : vector<1x64xf32> to vector<16x64xf32>
    %33 = arith.addf %30, %32 : vector<16x64xf32>
    %cst_14 = arith.constant 0.000000e+00 : f32
    %34 = vector.broadcast %cst_14 : f32 to vector<16x64xf32>
    %35 = arith.maximumf %33, %34 : vector<16x64xf32>
    %36 = arith.truncf %35 : vector<16x64xf32> to vector<16x64xbf16>
    %c0_15 = arith.constant 0 : index
    %c0_16 = arith.constant 0 : index
    %c0_17 = arith.constant 0 : index
    %37 = vector.load %arg5[%c0_15, %c0_16, %c0_17] : memref<1x16x64xbf16, #tpu.memory_space<vmem>>, vector<1x16x64xbf16>
    %38 = vector.shape_cast %37 : vector<1x16x64xbf16> to vector<16x64xbf16>
    %39 = vector.shape_cast %36 : vector<16x64xbf16> to vector<1x16x64xbf16>
    tpu.vector_store %arg5[%c0_15, %c0_16, %c0_17], %39 {strides = array<i32>} : memref<1x16x64xbf16, #tpu.memory_space<vmem>>, vector<1x16x64xbf16>,
    return
  }
  func.func @transform_0(%arg0: i32) -> (i32, i32, i32) {
    %c0_i32 = arith.constant 0 : i32
    %c0_i32_0 = arith.constant 0 : i32
    %c0_i32_1 = arith.constant 0 : i32
    return %arg0, %c0_i32, %c0_i32_0 : i32, i32, i32
  }
  func.func @transform_1(%arg0: i32) -> (i32, i32) {
    %c0_i32 = arith.constant 0 : i32
    %c0_i32_0 = arith.constant 0 : i32
    %c0_i32_1 = arith.constant 0 : i32
    return %c0_i32, %c0_i32_0 : i32, i32
  }
  func.func @transform_2(%arg0: i32) -> (i32, i32) {
    %c0_i32 = arith.constant 0 : i32
    %c0_i32_0 = arith.constant 0 : i32
    %c0_i32_1 = arith.constant 0 : i32
    return %c0_i32, %c0_i32_0 : i32, i32
  }
  func.func @transform_3(%arg0: i32) -> (i32, i32) {
    %c0_i32 = arith.constant 0 : i32
    %c0_i32_0 = arith.constant 0 : i32
    %c0_i32_1 = arith.constant 0 : i32
    return %c0_i32, %c0_i32_0 : i32, i32
  }
  func.func @transform_4(%arg0: i32) -> (i32, i32, i32) {
    %c0_i32 = arith.constant 0 : i32
    %c0_i32_0 = arith.constant 0 : i32
    %c0_i32_1 = arith.constant 0 : i32
    return %arg0, %c0_i32, %c0_i32_0 : i32, i32, i32
  }
}

module attributes {stable_mosaic.version = 11 : i64} {
  func.func @_stage_kernel(%arg0: i32, %arg1: memref<1x26x64xbf16, #tpu.memory_space<vmem>>, %arg2: memref<9x64x64xbf16, #tpu.memory_space<vmem>>, %arg3: memref<1x64xf32, #tpu.memory_space<vmem>>, %arg4: memref<1x64xf32, #tpu.memory_space<vmem>>, %arg5: memref<64x64xbf16, #tpu.memory_space<vmem>>, %arg6: memref<1x64xf32, #tpu.memory_space<vmem>>, %arg7: memref<1x64xf32, #tpu.memory_space<vmem>>, %arg8: memref<64x64xbf16, #tpu.memory_space<vmem>>, %arg9: memref<1x64xf32, #tpu.memory_space<vmem>>, %arg10: memref<1x64xf32, #tpu.memory_space<vmem>>, %arg11: memref<64x256xbf16, #tpu.memory_space<vmem>>, %arg12: memref<1x256xf32, #tpu.memory_space<vmem>>, %arg13: memref<1x256xf32, #tpu.memory_space<vmem>>, %arg14: memref<1x16x256xbf16, #tpu.memory_space<vmem>>) attributes {dimension_semantics = [#tpu.dimension_semantics<parallel>], iteration_bounds = array<i64: 2>, scalar_prefetch = 0 : i64, scratch_operands = 0 : i64, tpu.core_type = #tpu.core_type<tc>, window_params = [{transform_indices = @transform_0, window_bounds = array<i64: 1, 26, 64>}, {pipeline_mode = #tpu.pipeline_mode<synchronous>, transform_indices = @transform_1, window_bounds = array<i64: 9, 64, 64>}, {pipeline_mode = #tpu.pipeline_mode<synchronous>, transform_indices = @transform_2, window_bounds = array<i64: 1, 64>}, {pipeline_mode = #tpu.pipeline_mode<synchronous>, transform_indices = @transform_3, window_bounds = array<i64: 1, 64>}, {pipeline_mode = #tpu.pipeline_mode<synchronous>, transform_indices = @transform_4, window_bounds = array<i64: 64, 64>}, {pipeline_mode = #tpu.pipeline_mode<synchronous>, transform_indices = @transform_5, window_bounds = array<i64: 1, 64>}, {pipeline_mode = #tpu.pipeline_mode<synchronous>, transform_indices = @transform_6, window_bounds = array<i64: 1, 64>}, {pipeline_mode = #tpu.pipeline_mode<synchronous>, transform_indices = @transform_7, window_bounds = array<i64: 64, 64>}, {pipeline_mode = #tpu.pipeline_mode<synchronous>, transform_indices = @transform_8, window_bounds = array<i64: 1, 64>}, {pipeline_mode = #tpu.pipeline_mode<synchronous>, transform_indices = @transform_9, window_bounds = array<i64: 1, 64>}, {pipeline_mode = #tpu.pipeline_mode<synchronous>, transform_indices = @transform_10, window_bounds = array<i64: 64, 256>}, {pipeline_mode = #tpu.pipeline_mode<synchronous>, transform_indices = @transform_11, window_bounds = array<i64: 1, 256>}, {pipeline_mode = #tpu.pipeline_mode<synchronous>, transform_indices = @transform_12, window_bounds = array<i64: 1, 256>}, {transform_indices = @transform_13, window_bounds = array<i64: 1, 16, 256>}]} {
    %0 = tpu.iota {dimensions = array<i32: 0>} : vector<16x1xi32>
    %c4_i32 = arith.constant 4 : i32
    %c0_i32 = arith.constant 0 : i32
    %1 = arith.cmpi eq, %c4_i32, %c0_i32 : i32
    %c1_i32 = arith.constant 1 : i32
    %2 = arith.select %1, %c1_i32, %c4_i32 : i32
    %3 = vector.broadcast %2 : i32 to vector<16x1xi32>
    %4 = arith.remsi %0, %3 : vector<16x1xi32>
    %c0_i32_0 = arith.constant 0 : i32
    %5 = vector.broadcast %c0_i32_0 : i32 to vector<16x1xi32>
    %6 = arith.cmpi ne, %4, %5 : vector<16x1xi32>
    %c0_i32_1 = arith.constant 0 : i32
    %7 = vector.broadcast %c0_i32_1 : i32 to vector<16x1xi32>
    %8 = arith.cmpi slt, %4, %7 : vector<16x1xi32>
    %c0_i32_2 = arith.constant 0 : i32
    %9 = arith.cmpi slt, %2, %c0_i32_2 : i32
    %10 = vector.broadcast %9 : i1 to vector<16x1xi1>
    %11 = vector.broadcast %10 : vector<16x1xi1> to vector<16x1xi1>
    %12 = arith.xori %8, %11 : vector<16x1xi1>
    %13 = arith.andi %12, %6 : vector<16x1xi1>
    %14 = vector.broadcast %2 : i32 to vector<16x1xi32>
    %15 = arith.addi %4, %14 : vector<16x1xi32>
    %16 = arith.select %13, %15, %4 : vector<16x1xi1>, vector<16x1xi32>
    %cst = arith.constant 0.000000e+00 : f32
    %17 = vector.broadcast %cst : f32 to vector<16x64xf32>
    %c0 = arith.constant 0 : index
    %c0_3 = arith.constant 0 : index
    %c0_4 = arith.constant 0 : index
    %18 = vector.load %arg1[%c0, %c0_3, %c0_4] : memref<1x26x64xbf16, #tpu.memory_space<vmem>>, vector<1x16x64xbf16>
    %19 = vector.shape_cast %18 : vector<1x16x64xbf16> to vector<16x64xbf16>
    %c-1_i32 = arith.constant -1 : i32
    %20 = vector.broadcast %c-1_i32 : i32 to vector<16x1xi32>
    %21 = arith.addi %16, %20 : vector<16x1xi32>
    %c0_i32_5 = arith.constant 0 : i32
    %22 = vector.broadcast %c0_i32_5 : i32 to vector<16x1xi32>
    %23 = arith.cmpi sge, %21, %22 : vector<16x1xi32>
    %c-1_i32_6 = arith.constant -1 : i32
    %24 = vector.broadcast %c-1_i32_6 : i32 to vector<16x1xi32>
    %25 = arith.addi %16, %24 : vector<16x1xi32>
    %c4_i32_7 = arith.constant 4 : i32
    %26 = vector.broadcast %c4_i32_7 : i32 to vector<16x1xi32>
    %27 = arith.cmpi slt, %25, %26 : vector<16x1xi32>
    %28 = arith.andi %23, %27 : vector<16x1xi1>
    %cst_8 = arith.constant 0.000000e+00 : bf16
    %29 = vector.broadcast %cst_8 : bf16 to vector<16x64xbf16>
    %30 = vector.shape_cast %28 : vector<16x1xi1> to vector<16x1xi1>
    %31 = vector.broadcast %30 : vector<16x1xi1> to vector<16x64xi1>
    %32 = arith.select %31, %19, %29 : vector<16x64xi1>, vector<16x64xbf16>
    %c0_9 = arith.constant 0 : index
    %c0_10 = arith.constant 0 : index
    %c0_11 = arith.constant 0 : index
    %33 = vector.load %arg2[%c0_9, %c0_10, %c0_11] : memref<9x64x64xbf16, #tpu.memory_space<vmem>>, vector<1x64x64xbf16>
    %34 = vector.shape_cast %33 : vector<1x64x64xbf16> to vector<64x64xbf16>
    %cst_12 = arith.constant dense<0.000000e+00> : vector<16x64xf32>
    %35 = tpu.matmul %32, %34, %cst_12 {dimension_numbers = #tpu.dot_dimension_numbers<[1], [0], [0], [1], [0, 0, 1, 1], [], []>} : vector<16x64xbf16>, vector<64x64xbf16>, vector<16x64xf32> -> vector<16x64xf32>
    %36 = arith.addf %17, %35 : vector<16x64xf32>
    %c0_13 = arith.constant 0 : index
    %c1 = arith.constant 1 : index
    %c0_14 = arith.constant 0 : index
    %37 = vector.load %arg1[%c0_13, %c1, %c0_14] : memref<1x26x64xbf16, #tpu.memory_space<vmem>>, vector<1x16x64xbf16>
    %38 = vector.shape_cast %37 : vector<1x16x64xbf16> to vector<16x64xbf16>
    %c1_15 = arith.constant 1 : index
    %c0_16 = arith.constant 0 : index
    %c0_17 = arith.constant 0 : index
    %39 = vector.load %arg2[%c1_15, %c0_16, %c0_17] : memref<9x64x64xbf16, #tpu.memory_space<vmem>>, vector<1x64x64xbf16>
    %40 = vector.shape_cast %39 : vector<1x64x64xbf16> to vector<64x64xbf16>
    %cst_18 = arith.constant dense<0.000000e+00> : vector<16x64xf32>
    %41 = tpu.matmul %38, %40, %cst_18 {dimension_numbers = #tpu.dot_dimension_numbers<[1], [0], [0], [1], [0, 0, 1, 1], [], []>} : vector<16x64xbf16>, vector<64x64xbf16>, vector<16x64xf32> -> vector<16x64xf32>
    %42 = arith.addf %36, %41 : vector<16x64xf32>
    %c0_19 = arith.constant 0 : index
    %c2 = arith.constant 2 : index
    %c0_20 = arith.constant 0 : index
    %43 = vector.load %arg1[%c0_19, %c2, %c0_20] : memref<1x26x64xbf16, #tpu.memory_space<vmem>>, vector<1x16x64xbf16>
    %44 = vector.shape_cast %43 : vector<1x16x64xbf16> to vector<16x64xbf16>
    %c1_i32_21 = arith.constant 1 : i32
    %45 = vector.broadcast %c1_i32_21 : i32 to vector<16x1xi32>
    %46 = arith.addi %16, %45 : vector<16x1xi32>
    %c0_i32_22 = arith.constant 0 : i32
    %47 = vector.broadcast %c0_i32_22 : i32 to vector<16x1xi32>
    %48 = arith.cmpi sge, %46, %47 : vector<16x1xi32>
    %c1_i32_23 = arith.constant 1 : i32
    %49 = vector.broadcast %c1_i32_23 : i32 to vector<16x1xi32>
    %50 = arith.addi %16, %49 : vector<16x1xi32>
    %c4_i32_24 = arith.constant 4 : i32
    %51 = vector.broadcast %c4_i32_24 : i32 to vector<16x1xi32>
    %52 = arith.cmpi slt, %50, %51 : vector<16x1xi32>
    %53 = arith.andi %48, %52 : vector<16x1xi1>
    %cst_25 = arith.constant 0.000000e+00 : bf16
    %54 = vector.broadcast %cst_25 : bf16 to vector<16x64xbf16>
    %55 = vector.shape_cast %53 : vector<16x1xi1> to vector<16x1xi1>
    %56 = vector.broadcast %55 : vector<16x1xi1> to vector<16x64xi1>
    %57 = arith.select %56, %44, %54 : vector<16x64xi1>, vector<16x64xbf16>
    %c2_26 = arith.constant 2 : index
    %c0_27 = arith.constant 0 : index
    %c0_28 = arith.constant 0 : index
    %58 = vector.load %arg2[%c2_26, %c0_27, %c0_28] : memref<9x64x64xbf16, #tpu.memory_space<vmem>>, vector<1x64x64xbf16>
    %59 = vector.shape_cast %58 : vector<1x64x64xbf16> to vector<64x64xbf16>
    %cst_29 = arith.constant dense<0.000000e+00> : vector<16x64xf32>
    %60 = tpu.matmul %57, %59, %cst_29 {dimension_numbers = #tpu.dot_dimension_numbers<[1], [0], [0], [1], [0, 0, 1, 1], [], []>} : vector<16x64xbf16>, vector<64x64xbf16>, vector<16x64xf32> -> vector<16x64xf32>
    %61 = arith.addf %42, %60 : vector<16x64xf32>
    %c0_30 = arith.constant 0 : index
    %c4 = arith.constant 4 : index
    %c0_31 = arith.constant 0 : index
    %62 = vector.load %arg1[%c0_30, %c4, %c0_31] : memref<1x26x64xbf16, #tpu.memory_space<vmem>>, vector<1x16x64xbf16>
    %63 = vector.shape_cast %62 : vector<1x16x64xbf16> to vector<16x64xbf16>
    %c-1_i32_32 = arith.constant -1 : i32
    %64 = vector.broadcast %c-1_i32_32 : i32 to vector<16x1xi32>
    %65 = arith.addi %16, %64 : vector<16x1xi32>
    %c0_i32_33 = arith.constant 0 : i32
    %66 = vector.broadcast %c0_i32_33 : i32 to vector<16x1xi32>
    %67 = arith.cmpi sge, %65, %66 : vector<16x1xi32>
    %c-1_i32_34 = arith.constant -1 : i32
    %68 = vector.broadcast %c-1_i32_34 : i32 to vector<16x1xi32>
    %69 = arith.addi %16, %68 : vector<16x1xi32>
    %c4_i32_35 = arith.constant 4 : i32
    %70 = vector.broadcast %c4_i32_35 : i32 to vector<16x1xi32>
    %71 = arith.cmpi slt, %69, %70 : vector<16x1xi32>
    %72 = arith.andi %67, %71 : vector<16x1xi1>
    %cst_36 = arith.constant 0.000000e+00 : bf16
    %73 = vector.broadcast %cst_36 : bf16 to vector<16x64xbf16>
    %74 = vector.shape_cast %72 : vector<16x1xi1> to vector<16x1xi1>
    %75 = vector.broadcast %74 : vector<16x1xi1> to vector<16x64xi1>
    %76 = arith.select %75, %63, %73 : vector<16x64xi1>, vector<16x64xbf16>
    %c3 = arith.constant 3 : index
    %c0_37 = arith.constant 0 : index
    %c0_38 = arith.constant 0 : index
    %77 = vector.load %arg2[%c3, %c0_37, %c0_38] : memref<9x64x64xbf16, #tpu.memory_space<vmem>>, vector<1x64x64xbf16>
    %78 = vector.shape_cast %77 : vector<1x64x64xbf16> to vector<64x64xbf16>
    %cst_39 = arith.constant dense<0.000000e+00> : vector<16x64xf32>
    %79 = tpu.matmul %76, %78, %cst_39 {dimension_numbers = #tpu.dot_dimension_numbers<[1], [0], [0], [1], [0, 0, 1, 1], [], []>} : vector<16x64xbf16>, vector<64x64xbf16>, vector<16x64xf32> -> vector<16x64xf32>
    %80 = arith.addf %61, %79 : vector<16x64xf32>
    %c0_40 = arith.constant 0 : index
    %c5 = arith.constant 5 : index
    %c0_41 = arith.constant 0 : index
    %81 = vector.load %arg1[%c0_40, %c5, %c0_41] : memref<1x26x64xbf16, #tpu.memory_space<vmem>>, vector<1x16x64xbf16>
    %82 = vector.shape_cast %81 : vector<1x16x64xbf16> to vector<16x64xbf16>
    %c4_42 = arith.constant 4 : index
    %c0_43 = arith.constant 0 : index
    %c0_44 = arith.constant 0 : index
    %83 = vector.load %arg2[%c4_42, %c0_43, %c0_44] : memref<9x64x64xbf16, #tpu.memory_space<vmem>>, vector<1x64x64xbf16>
    %84 = vector.shape_cast %83 : vector<1x64x64xbf16> to vector<64x64xbf16>
    %cst_45 = arith.constant dense<0.000000e+00> : vector<16x64xf32>
    %85 = tpu.matmul %82, %84, %cst_45 {dimension_numbers = #tpu.dot_dimension_numbers<[1], [0], [0], [1], [0, 0, 1, 1], [], []>} : vector<16x64xbf16>, vector<64x64xbf16>, vector<16x64xf32> -> vector<16x64xf32>
    %86 = arith.addf %80, %85 : vector<16x64xf32>
    %c0_46 = arith.constant 0 : index
    %c6 = arith.constant 6 : index
    %c0_47 = arith.constant 0 : index
    %87 = vector.load %arg1[%c0_46, %c6, %c0_47] : memref<1x26x64xbf16, #tpu.memory_space<vmem>>, vector<1x16x64xbf16>
    %88 = vector.shape_cast %87 : vector<1x16x64xbf16> to vector<16x64xbf16>
    %c1_i32_48 = arith.constant 1 : i32
    %89 = vector.broadcast %c1_i32_48 : i32 to vector<16x1xi32>
    %90 = arith.addi %16, %89 : vector<16x1xi32>
    %c0_i32_49 = arith.constant 0 : i32
    %91 = vector.broadcast %c0_i32_49 : i32 to vector<16x1xi32>
    %92 = arith.cmpi sge, %90, %91 : vector<16x1xi32>
    %c1_i32_50 = arith.constant 1 : i32
    %93 = vector.broadcast %c1_i32_50 : i32 to vector<16x1xi32>
    %94 = arith.addi %16, %93 : vector<16x1xi32>
    %c4_i32_51 = arith.constant 4 : i32
    %95 = vector.broadcast %c4_i32_51 : i32 to vector<16x1xi32>
    %96 = arith.cmpi slt, %94, %95 : vector<16x1xi32>
    %97 = arith.andi %92, %96 : vector<16x1xi1>
    %cst_52 = arith.constant 0.000000e+00 : bf16
    %98 = vector.broadcast %cst_52 : bf16 to vector<16x64xbf16>
    %99 = vector.shape_cast %97 : vector<16x1xi1> to vector<16x1xi1>
    %100 = vector.broadcast %99 : vector<16x1xi1> to vector<16x64xi1>
    %101 = arith.select %100, %88, %98 : vector<16x64xi1>, vector<16x64xbf16>
    %c5_53 = arith.constant 5 : index
    %c0_54 = arith.constant 0 : index
    %c0_55 = arith.constant 0 : index
    %102 = vector.load %arg2[%c5_53, %c0_54, %c0_55] : memref<9x64x64xbf16, #tpu.memory_space<vmem>>, vector<1x64x64xbf16>
    %103 = vector.shape_cast %102 : vector<1x64x64xbf16> to vector<64x64xbf16>
    %cst_56 = arith.constant dense<0.000000e+00> : vector<16x64xf32>
    %104 = tpu.matmul %101, %103, %cst_56 {dimension_numbers = #tpu.dot_dimension_numbers<[1], [0], [0], [1], [0, 0, 1, 1], [], []>} : vector<16x64xbf16>, vector<64x64xbf16>, vector<16x64xf32> -> vector<16x64xf32>
    %105 = arith.addf %86, %104 : vector<16x64xf32>
    %c0_57 = arith.constant 0 : index
    %c8 = arith.constant 8 : index
    %c0_58 = arith.constant 0 : index
    %106 = vector.load %arg1[%c0_57, %c8, %c0_58] : memref<1x26x64xbf16, #tpu.memory_space<vmem>>, vector<1x16x64xbf16>
    %107 = vector.shape_cast %106 : vector<1x16x64xbf16> to vector<16x64xbf16>
    %c-1_i32_59 = arith.constant -1 : i32
    %108 = vector.broadcast %c-1_i32_59 : i32 to vector<16x1xi32>
    %109 = arith.addi %16, %108 : vector<16x1xi32>
    %c0_i32_60 = arith.constant 0 : i32
    %110 = vector.broadcast %c0_i32_60 : i32 to vector<16x1xi32>
    %111 = arith.cmpi sge, %109, %110 : vector<16x1xi32>
    %c-1_i32_61 = arith.constant -1 : i32
    %112 = vector.broadcast %c-1_i32_61 : i32 to vector<16x1xi32>
    %113 = arith.addi %16, %112 : vector<16x1xi32>
    %c4_i32_62 = arith.constant 4 : i32
    %114 = vector.broadcast %c4_i32_62 : i32 to vector<16x1xi32>
    %115 = arith.cmpi slt, %113, %114 : vector<16x1xi32>
    %116 = arith.andi %111, %115 : vector<16x1xi1>
    %cst_63 = arith.constant 0.000000e+00 : bf16
    %117 = vector.broadcast %cst_63 : bf16 to vector<16x64xbf16>
    %118 = vector.shape_cast %116 : vector<16x1xi1> to vector<16x1xi1>
    %119 = vector.broadcast %118 : vector<16x1xi1> to vector<16x64xi1>
    %120 = arith.select %119, %107, %117 : vector<16x64xi1>, vector<16x64xbf16>
    %c6_64 = arith.constant 6 : index
    %c0_65 = arith.constant 0 : index
    %c0_66 = arith.constant 0 : index
    %121 = vector.load %arg2[%c6_64, %c0_65, %c0_66] : memref<9x64x64xbf16, #tpu.memory_space<vmem>>, vector<1x64x64xbf16>
    %122 = vector.shape_cast %121 : vector<1x64x64xbf16> to vector<64x64xbf16>
    %cst_67 = arith.constant dense<0.000000e+00> : vector<16x64xf32>
    %123 = tpu.matmul %120, %122, %cst_67 {dimension_numbers = #tpu.dot_dimension_numbers<[1], [0], [0], [1], [0, 0, 1, 1], [], []>} : vector<16x64xbf16>, vector<64x64xbf16>, vector<16x64xf32> -> vector<16x64xf32>
    %124 = arith.addf %105, %123 : vector<16x64xf32>
    %c0_68 = arith.constant 0 : index
    %c9 = arith.constant 9 : index
    %c0_69 = arith.constant 0 : index
    %125 = vector.load %arg1[%c0_68, %c9, %c0_69] : memref<1x26x64xbf16, #tpu.memory_space<vmem>>, vector<1x16x64xbf16>
    %126 = vector.shape_cast %125 : vector<1x16x64xbf16> to vector<16x64xbf16>
    %c7 = arith.constant 7 : index
    %c0_70 = arith.constant 0 : index
    %c0_71 = arith.constant 0 : index
    %127 = vector.load %arg2[%c7, %c0_70, %c0_71] : memref<9x64x64xbf16, #tpu.memory_space<vmem>>, vector<1x64x64xbf16>
    %128 = vector.shape_cast %127 : vector<1x64x64xbf16> to vector<64x64xbf16>
    %cst_72 = arith.constant dense<0.000000e+00> : vector<16x64xf32>
    %129 = tpu.matmul %126, %128, %cst_72 {dimension_numbers = #tpu.dot_dimension_numbers<[1], [0], [0], [1], [0, 0, 1, 1], [], []>} : vector<16x64xbf16>, vector<64x64xbf16>, vector<16x64xf32> -> vector<16x64xf32>
    %130 = arith.addf %124, %129 : vector<16x64xf32>
    %c0_73 = arith.constant 0 : index
    %c10 = arith.constant 10 : index
    %c0_74 = arith.constant 0 : index
    %131 = vector.load %arg1[%c0_73, %c10, %c0_74] : memref<1x26x64xbf16, #tpu.memory_space<vmem>>, vector<1x16x64xbf16>
    %132 = vector.shape_cast %131 : vector<1x16x64xbf16> to vector<16x64xbf16>
    %c1_i32_75 = arith.constant 1 : i32
    %133 = vector.broadcast %c1_i32_75 : i32 to vector<16x1xi32>
    %134 = arith.addi %16, %133 : vector<16x1xi32>
    %c0_i32_76 = arith.constant 0 : i32
    %135 = vector.broadcast %c0_i32_76 : i32 to vector<16x1xi32>
    %136 = arith.cmpi sge, %134, %135 : vector<16x1xi32>
    %c1_i32_77 = arith.constant 1 : i32
    %137 = vector.broadcast %c1_i32_77 : i32 to vector<16x1xi32>
    %138 = arith.addi %16, %137 : vector<16x1xi32>
    %c4_i32_78 = arith.constant 4 : i32
    %139 = vector.broadcast %c4_i32_78 : i32 to vector<16x1xi32>
    %140 = arith.cmpi slt, %138, %139 : vector<16x1xi32>
    %141 = arith.andi %136, %140 : vector<16x1xi1>
    %cst_79 = arith.constant 0.000000e+00 : bf16
    %142 = vector.broadcast %cst_79 : bf16 to vector<16x64xbf16>
    %143 = vector.shape_cast %141 : vector<16x1xi1> to vector<16x1xi1>
    %144 = vector.broadcast %143 : vector<16x1xi1> to vector<16x64xi1>
    %145 = arith.select %144, %132, %142 : vector<16x64xi1>, vector<16x64xbf16>
    %c8_80 = arith.constant 8 : index
    %c0_81 = arith.constant 0 : index
    %c0_82 = arith.constant 0 : index
    %146 = vector.load %arg2[%c8_80, %c0_81, %c0_82] : memref<9x64x64xbf16, #tpu.memory_space<vmem>>, vector<1x64x64xbf16>
    %147 = vector.shape_cast %146 : vector<1x64x64xbf16> to vector<64x64xbf16>
    %cst_83 = arith.constant dense<0.000000e+00> : vector<16x64xf32>
    %148 = tpu.matmul %145, %147, %cst_83 {dimension_numbers = #tpu.dot_dimension_numbers<[1], [0], [0], [1], [0, 0, 1, 1], [], []>} : vector<16x64xbf16>, vector<64x64xbf16>, vector<16x64xf32> -> vector<16x64xf32>
    %149 = arith.addf %130, %148 : vector<16x64xf32>
    %c0_84 = arith.constant 0 : index
    %c0_85 = arith.constant 0 : index
    %150 = vector.load %arg3[%c0_84, %c0_85] : memref<1x64xf32, #tpu.memory_space<vmem>>, vector<1x64xf32>
    %151 = vector.shape_cast %150 : vector<1x64xf32> to vector<64xf32>
    %c0_86 = arith.constant 0 : index
    %c0_87 = arith.constant 0 : index
    %152 = vector.load %arg4[%c0_86, %c0_87] : memref<1x64xf32, #tpu.memory_space<vmem>>, vector<1x64xf32>
    %153 = vector.shape_cast %152 : vector<1x64xf32> to vector<64xf32>
    %154 = vector.shape_cast %149 : vector<16x64xf32> to vector<1x16x64xf32>
    %cst_88 = arith.constant dense<0.000000e+00> : vector<1xf32>
    %155 = vector.multi_reduction <add>, %154, %cst_88 [1, 2] : vector<1x16x64xf32> to vector<1xf32>
    %156 = vector.shape_cast %155 : vector<1xf32> to vector<1x1x1xf32>
    %157 = vector.extract %156[0, 0, 0] : f32 from vector<1x1x1xf32>
    %158 = arith.mulf %149, %149 : vector<16x64xf32>
    %159 = vector.shape_cast %158 : vector<16x64xf32> to vector<1x16x64xf32>
    %cst_89 = arith.constant dense<0.000000e+00> : vector<1xf32>
    %160 = vector.multi_reduction <add>, %159, %cst_89 [1, 2] : vector<1x16x64xf32> to vector<1xf32>
    %161 = vector.shape_cast %160 : vector<1xf32> to vector<1x1x1xf32>
    %162 = vector.extract %161[0, 0, 0] : f32 from vector<1x1x1xf32>
    %cst_90 = arith.constant 1.024000e+03 : f32
    %163 = arith.divf %157, %cst_90 : f32
    %cst_91 = arith.constant 1.024000e+03 : f32
    %164 = arith.divf %162, %cst_91 : f32
    %165 = arith.mulf %163, %163 : f32
    %166 = arith.subf %164, %165 : f32
    %cst_92 = arith.constant 0.000000e+00 : f32
    %167 = arith.maximumf %166, %cst_92 : f32
    %168 = vector.broadcast %163 : f32 to vector<16x64xf32>
    %169 = arith.subf %149, %168 : vector<16x64xf32>
    %cst_93 = arith.constant 9.99999974E-6 : f32
    %170 = arith.addf %167, %cst_93 : f32
    %171 = math.rsqrt %170 : f32
    %172 = vector.broadcast %171 : f32 to vector<16x64xf32>
    %173 = arith.mulf %169, %172 : vector<16x64xf32>
    %174 = vector.shape_cast %151 : vector<64xf32> to vector<1x64xf32>
    %175 = vector.broadcast %174 : vector<1x64xf32> to vector<16x64xf32>
    %176 = arith.mulf %173, %175 : vector<16x64xf32>
    %177 = vector.shape_cast %153 : vector<64xf32> to vector<1x64xf32>
    %178 = vector.broadcast %177 : vector<1x64xf32> to vector<16x64xf32>
    %179 = arith.addf %176, %178 : vector<16x64xf32>
    %cst_94 = arith.constant 0.000000e+00 : f32
    %180 = vector.broadcast %cst_94 : f32 to vector<16x64xf32>
    %181 = arith.maximumf %179, %180 : vector<16x64xf32>
    %182 = arith.truncf %181 : vector<16x64xf32> to vector<16x64xbf16>
    %c0_95 = arith.constant 0 : index
    %c0_96 = arith.constant 0 : index
    %183 = vector.load %arg5[%c0_95, %c0_96] : memref<64x64xbf16, #tpu.memory_space<vmem>>, vector<64x64xbf16>
    %cst_97 = arith.constant dense<0.000000e+00> : vector<16x64xf32>
    %184 = tpu.matmul %182, %183, %cst_97 {dimension_numbers = #tpu.dot_dimension_numbers<[1], [0], [0], [1], [0, 0, 1, 1], [], []>} : vector<16x64xbf16>, vector<64x64xbf16>, vector<16x64xf32> -> vector<16x64xf32>
    %c0_98 = arith.constant 0 : index
    %c0_99 = arith.constant 0 : index
    %185 = vector.load %arg6[%c0_98, %c0_99] : memref<1x64xf32, #tpu.memory_space<vmem>>, vector<1x64xf32>
    %186 = vector.shape_cast %185 : vector<1x64xf32> to vector<64xf32>
    %c0_100 = arith.constant 0 : index
    %c0_101 = arith.constant 0 : index
    %187 = vector.load %arg7[%c0_100, %c0_101] : memref<1x64xf32, #tpu.memory_space<vmem>>, vector<1x64xf32>
    %188 = vector.shape_cast %187 : vector<1x64xf32> to vector<64xf32>
    %189 = vector.shape_cast %184 : vector<16x64xf32> to vector<1x16x64xf32>
    %cst_102 = arith.constant dense<0.000000e+00> : vector<1xf32>
    %190 = vector.multi_reduction <add>, %189, %cst_102 [1, 2] : vector<1x16x64xf32> to vector<1xf32>
    %191 = vector.shape_cast %190 : vector<1xf32> to vector<1x1x1xf32>
    %192 = vector.extract %191[0, 0, 0] : f32 from vector<1x1x1xf32>
    %193 = arith.mulf %184, %184 : vector<16x64xf32>
    %194 = vector.shape_cast %193 : vector<16x64xf32> to vector<1x16x64xf32>
    %cst_103 = arith.constant dense<0.000000e+00> : vector<1xf32>
    %195 = vector.multi_reduction <add>, %194, %cst_103 [1, 2] : vector<1x16x64xf32> to vector<1xf32>
    %196 = vector.shape_cast %195 : vector<1xf32> to vector<1x1x1xf32>
    %197 = vector.extract %196[0, 0, 0] : f32 from vector<1x1x1xf32>
    %cst_104 = arith.constant 1.024000e+03 : f32
    %198 = arith.divf %192, %cst_104 : f32
    %cst_105 = arith.constant 1.024000e+03 : f32
    %199 = arith.divf %197, %cst_105 : f32
    %200 = arith.mulf %198, %198 : f32
    %201 = arith.subf %199, %200 : f32
    %cst_106 = arith.constant 0.000000e+00 : f32
    %202 = arith.maximumf %201, %cst_106 : f32
    %203 = vector.broadcast %198 : f32 to vector<16x64xf32>
    %204 = arith.subf %184, %203 : vector<16x64xf32>
    %cst_107 = arith.constant 9.99999974E-6 : f32
    %205 = arith.addf %202, %cst_107 : f32
    %206 = math.rsqrt %205 : f32
    %207 = vector.broadcast %206 : f32 to vector<16x64xf32>
    %208 = arith.mulf %204, %207 : vector<16x64xf32>
    %209 = vector.shape_cast %186 : vector<64xf32> to vector<1x64xf32>
    %210 = vector.broadcast %209 : vector<1x64xf32> to vector<16x64xf32>
    %211 = arith.mulf %208, %210 : vector<16x64xf32>
    %212 = vector.shape_cast %188 : vector<64xf32> to vector<1x64xf32>
    %213 = vector.broadcast %212 : vector<1x64xf32> to vector<16x64xf32>
    %214 = arith.addf %211, %213 : vector<16x64xf32>
    %cst_108 = arith.constant 0.000000e+00 : f32
    %215 = vector.broadcast %cst_108 : f32 to vector<16x64xf32>
    %216 = arith.maximumf %214, %215 : vector<16x64xf32>
    %217 = arith.truncf %216 : vector<16x64xf32> to vector<16x64xbf16>
    %c0_109 = arith.constant 0 : index
    %c0_110 = arith.constant 0 : index
    %218 = vector.load %arg8[%c0_109, %c0_110] : memref<64x64xbf16, #tpu.memory_space<vmem>>, vector<64x64xbf16>
    %cst_111 = arith.constant dense<0.000000e+00> : vector<16x64xf32>
    %219 = tpu.matmul %217, %218, %cst_111 {dimension_numbers = #tpu.dot_dimension_numbers<[1], [0], [0], [1], [0, 0, 1, 1], [], []>} : vector<16x64xbf16>, vector<64x64xbf16>, vector<16x64xf32> -> vector<16x64xf32>
    %c0_112 = arith.constant 0 : index
    %c0_113 = arith.constant 0 : index
    %220 = vector.load %arg9[%c0_112, %c0_113] : memref<1x64xf32, #tpu.memory_space<vmem>>, vector<1x64xf32>
    %221 = vector.shape_cast %220 : vector<1x64xf32> to vector<64xf32>
    %c0_114 = arith.constant 0 : index
    %c0_115 = arith.constant 0 : index
    %222 = vector.load %arg10[%c0_114, %c0_115] : memref<1x64xf32, #tpu.memory_space<vmem>>, vector<1x64xf32>
    %223 = vector.shape_cast %222 : vector<1x64xf32> to vector<64xf32>
    %224 = vector.shape_cast %219 : vector<16x64xf32> to vector<1x16x64xf32>
    %cst_116 = arith.constant dense<0.000000e+00> : vector<1xf32>
    %225 = vector.multi_reduction <add>, %224, %cst_116 [1, 2] : vector<1x16x64xf32> to vector<1xf32>
    %226 = vector.shape_cast %225 : vector<1xf32> to vector<1x1x1xf32>
    %227 = vector.extract %226[0, 0, 0] : f32 from vector<1x1x1xf32>
    %228 = arith.mulf %219, %219 : vector<16x64xf32>
    %229 = vector.shape_cast %228 : vector<16x64xf32> to vector<1x16x64xf32>
    %cst_117 = arith.constant dense<0.000000e+00> : vector<1xf32>
    %230 = vector.multi_reduction <add>, %229, %cst_117 [1, 2] : vector<1x16x64xf32> to vector<1xf32>
    %231 = vector.shape_cast %230 : vector<1xf32> to vector<1x1x1xf32>
    %232 = vector.extract %231[0, 0, 0] : f32 from vector<1x1x1xf32>
    %cst_118 = arith.constant 1.024000e+03 : f32
    %233 = arith.divf %227, %cst_118 : f32
    %cst_119 = arith.constant 1.024000e+03 : f32
    %234 = arith.divf %232, %cst_119 : f32
    %235 = arith.mulf %233, %233 : f32
    %236 = arith.subf %234, %235 : f32
    %cst_120 = arith.constant 0.000000e+00 : f32
    %237 = arith.maximumf %236, %cst_120 : f32
    %238 = vector.broadcast %233 : f32 to vector<16x64xf32>
    %239 = arith.subf %219, %238 : vector<16x64xf32>
    %cst_121 = arith.constant 9.99999974E-6 : f32
    %240 = arith.addf %237, %cst_121 : f32
    %241 = math.rsqrt %240 : f32
    %242 = vector.broadcast %241 : f32 to vector<16x64xf32>
    %243 = arith.mulf %239, %242 : vector<16x64xf32>
    %244 = vector.shape_cast %221 : vector<64xf32> to vector<1x64xf32>
    %245 = vector.broadcast %244 : vector<1x64xf32> to vector<16x64xf32>
    %246 = arith.mulf %243, %245 : vector<16x64xf32>
    %247 = vector.shape_cast %223 : vector<64xf32> to vector<1x64xf32>
    %248 = vector.broadcast %247 : vector<1x64xf32> to vector<16x64xf32>
    %249 = arith.addf %246, %248 : vector<16x64xf32>
    %cst_122 = arith.constant 0.000000e+00 : f32
    %250 = vector.broadcast %cst_122 : f32 to vector<16x64xf32>
    %251 = arith.maximumf %249, %250 : vector<16x64xf32>
    %252 = arith.truncf %251 : vector<16x64xf32> to vector<16x64xbf16>
    %c0_123 = arith.constant 0 : index
    %c0_124 = arith.constant 0 : index
    %253 = vector.load %arg11[%c0_123, %c0_124] : memref<64x256xbf16, #tpu.memory_space<vmem>>, vector<64x256xbf16>
    %cst_125 = arith.constant dense<0.000000e+00> : vector<16x256xf32>
    %254 = tpu.matmul %252, %253, %cst_125 {dimension_numbers = #tpu.dot_dimension_numbers<[1], [0], [0], [1], [0, 0, 1, 1], [], []>} : vector<16x64xbf16>, vector<64x256xbf16>, vector<16x256xf32> -> vector<16x256xf32>
    %c0_126 = arith.constant 0 : index
    %c0_127 = arith.constant 0 : index
    %255 = vector.load %arg12[%c0_126, %c0_127] : memref<1x256xf32, #tpu.memory_space<vmem>>, vector<1x256xf32>
    %256 = vector.shape_cast %255 : vector<1x256xf32> to vector<256xf32>
    %c0_128 = arith.constant 0 : index
    %c0_129 = arith.constant 0 : index
    %257 = vector.load %arg13[%c0_128, %c0_129] : memref<1x256xf32, #tpu.memory_space<vmem>>, vector<1x256xf32>
    %258 = vector.shape_cast %257 : vector<1x256xf32> to vector<256xf32>
    %259 = vector.shape_cast %254 : vector<16x256xf32> to vector<1x16x256xf32>
    %cst_130 = arith.constant dense<0.000000e+00> : vector<1xf32>
    %260 = vector.multi_reduction <add>, %259, %cst_130 [1, 2] : vector<1x16x256xf32> to vector<1xf32>
    %261 = vector.shape_cast %260 : vector<1xf32> to vector<1x1x1xf32>
    %262 = vector.extract %261[0, 0, 0] : f32 from vector<1x1x1xf32>
    %263 = arith.mulf %254, %254 : vector<16x256xf32>
    %264 = vector.shape_cast %263 : vector<16x256xf32> to vector<1x16x256xf32>
    %cst_131 = arith.constant dense<0.000000e+00> : vector<1xf32>
    %265 = vector.multi_reduction <add>, %264, %cst_131 [1, 2] : vector<1x16x256xf32> to vector<1xf32>
    %266 = vector.shape_cast %265 : vector<1xf32> to vector<1x1x1xf32>
    %267 = vector.extract %266[0, 0, 0] : f32 from vector<1x1x1xf32>
    %cst_132 = arith.constant 4.096000e+03 : f32
    %268 = arith.divf %262, %cst_132 : f32
    %cst_133 = arith.constant 4.096000e+03 : f32
    %269 = arith.divf %267, %cst_133 : f32
    %270 = arith.mulf %268, %268 : f32
    %271 = arith.subf %269, %270 : f32
    %cst_134 = arith.constant 0.000000e+00 : f32
    %272 = arith.maximumf %271, %cst_134 : f32
    %273 = vector.broadcast %268 : f32 to vector<16x256xf32>
    %274 = arith.subf %254, %273 : vector<16x256xf32>
    %cst_135 = arith.constant 9.99999974E-6 : f32
    %275 = arith.addf %272, %cst_135 : f32
    %276 = math.rsqrt %275 : f32
    %277 = vector.broadcast %276 : f32 to vector<16x256xf32>
    %278 = arith.mulf %274, %277 : vector<16x256xf32>
    %279 = vector.shape_cast %256 : vector<256xf32> to vector<1x256xf32>
    %280 = vector.broadcast %279 : vector<1x256xf32> to vector<16x256xf32>
    %281 = arith.mulf %278, %280 : vector<16x256xf32>
    %282 = vector.shape_cast %258 : vector<256xf32> to vector<1x256xf32>
    %283 = vector.broadcast %282 : vector<1x256xf32> to vector<16x256xf32>
    %284 = arith.addf %281, %283 : vector<16x256xf32>
    %cst_136 = arith.constant 0.000000e+00 : f32
    %285 = vector.broadcast %cst_136 : f32 to vector<16x256xf32>
    %286 = arith.maximumf %284, %285 : vector<16x256xf32>
    %287 = arith.truncf %286 : vector<16x256xf32> to vector<16x256xbf16>
    %c0_137 = arith.constant 0 : index
    %c0_138 = arith.constant 0 : index
    %c0_139 = arith.constant 0 : index
    %288 = vector.load %arg14[%c0_137, %c0_138, %c0_139] : memref<1x16x256xbf16, #tpu.memory_space<vmem>>, vector<1x16x256xbf16>
    %289 = vector.shape_cast %288 : vector<1x16x256xbf16> to vector<16x256xbf16>
    %290 = vector.shape_cast %287 : vector<16x256xbf16> to vector<1x16x256xbf16>
    tpu.vector_store %arg14[%c0_137, %c0_138, %c0_139], %290 {strides = array<i32>} : memref<1x16x256xbf16, #tpu.memory_space<vmem>>, vector<1x16x256xbf16>,
    return
  }
  func.func @transform_0(%arg0: i32) -> (i32, i32, i32) {
    %c0_i32 = arith.constant 0 : i32
    %c0_i32_0 = arith.constant 0 : i32
    %c0_i32_1 = arith.constant 0 : i32
    return %arg0, %c0_i32, %c0_i32_0 : i32, i32, i32
  }
  func.func @transform_1(%arg0: i32) -> (i32, i32, i32) {
    %c0_i32 = arith.constant 0 : i32
    %c0_i32_0 = arith.constant 0 : i32
    %c0_i32_1 = arith.constant 0 : i32
    %c0_i32_2 = arith.constant 0 : i32
    return %c0_i32, %c0_i32_0, %c0_i32_1 : i32, i32, i32
  }
  func.func @transform_2(%arg0: i32) -> (i32, i32) {
    %c0_i32 = arith.constant 0 : i32
    %c0_i32_0 = arith.constant 0 : i32
    %c0_i32_1 = arith.constant 0 : i32
    return %c0_i32, %c0_i32_0 : i32, i32
  }
  func.func @transform_3(%arg0: i32) -> (i32, i32) {
    %c0_i32 = arith.constant 0 : i32
    %c0_i32_0 = arith.constant 0 : i32
    %c0_i32_1 = arith.constant 0 : i32
    return %c0_i32, %c0_i32_0 : i32, i32
  }
  func.func @transform_4(%arg0: i32) -> (i32, i32) {
    %c0_i32 = arith.constant 0 : i32
    %c0_i32_0 = arith.constant 0 : i32
    %c0_i32_1 = arith.constant 0 : i32
    return %c0_i32, %c0_i32_0 : i32, i32
  }
  func.func @transform_5(%arg0: i32) -> (i32, i32) {
    %c0_i32 = arith.constant 0 : i32
    %c0_i32_0 = arith.constant 0 : i32
    %c0_i32_1 = arith.constant 0 : i32
    return %c0_i32, %c0_i32_0 : i32, i32
  }
  func.func @transform_6(%arg0: i32) -> (i32, i32) {
    %c0_i32 = arith.constant 0 : i32
    %c0_i32_0 = arith.constant 0 : i32
    %c0_i32_1 = arith.constant 0 : i32
    return %c0_i32, %c0_i32_0 : i32, i32
  }
  func.func @transform_7(%arg0: i32) -> (i32, i32) {
    %c0_i32 = arith.constant 0 : i32
    %c0_i32_0 = arith.constant 0 : i32
    %c0_i32_1 = arith.constant 0 : i32
    return %c0_i32, %c0_i32_0 : i32, i32
  }
  func.func @transform_8(%arg0: i32) -> (i32, i32) {
    %c0_i32 = arith.constant 0 : i32
    %c0_i32_0 = arith.constant 0 : i32
    %c0_i32_1 = arith.constant 0 : i32
    return %c0_i32, %c0_i32_0 : i32, i32
  }
  func.func @transform_9(%arg0: i32) -> (i32, i32) {
    %c0_i32 = arith.constant 0 : i32
    %c0_i32_0 = arith.constant 0 : i32
    %c0_i32_1 = arith.constant 0 : i32
    return %c0_i32, %c0_i32_0 : i32, i32
  }
  func.func @transform_10(%arg0: i32) -> (i32, i32) {
    %c0_i32 = arith.constant 0 : i32
    %c0_i32_0 = arith.constant 0 : i32
    %c0_i32_1 = arith.constant 0 : i32
    return %c0_i32, %c0_i32_0 : i32, i32
  }
  func.func @transform_11(%arg0: i32) -> (i32, i32) {
    %c0_i32 = arith.constant 0 : i32
    %c0_i32_0 = arith.constant 0 : i32
    %c0_i32_1 = arith.constant 0 : i32
    return %c0_i32, %c0_i32_0 : i32, i32
  }
  func.func @transform_12(%arg0: i32) -> (i32, i32) {
    %c0_i32 = arith.constant 0 : i32
    %c0_i32_0 = arith.constant 0 : i32
    %c0_i32_1 = arith.constant 0 : i32
    return %c0_i32, %c0_i32_0 : i32, i32
  }
  func.func @transform_13(%arg0: i32) -> (i32, i32, i32) {
    %c0_i32 = arith.constant 0 : i32
    %c0_i32_0 = arith.constant 0 : i32
    %c0_i32_1 = arith.constant 0 : i32
    return %arg0, %c0_i32, %c0_i32_0 : i32, i32, i32
  }
}

module attributes {stable_mosaic.version = 11 : i64} {
  func.func @_stage_kernel(%arg0: i32, %arg1: memref<1x82x64xbf16, #tpu.memory_space<vmem>>, %arg2: memref<9x64x64xbf16, #tpu.memory_space<vmem>>, %arg3: memref<1x64xf32, #tpu.memory_space<vmem>>, %arg4: memref<1x64xf32, #tpu.memory_space<vmem>>, %arg5: memref<64x64xbf16, #tpu.memory_space<vmem>>, %arg6: memref<1x64xf32, #tpu.memory_space<vmem>>, %arg7: memref<1x64xf32, #tpu.memory_space<vmem>>, %arg8: memref<64x64xbf16, #tpu.memory_space<vmem>>, %arg9: memref<1x64xf32, #tpu.memory_space<vmem>>, %arg10: memref<1x64xf32, #tpu.memory_space<vmem>>, %arg11: memref<64x256xbf16, #tpu.memory_space<vmem>>, %arg12: memref<1x256xf32, #tpu.memory_space<vmem>>, %arg13: memref<1x256xf32, #tpu.memory_space<vmem>>, %arg14: memref<1x64x256xbf16, #tpu.memory_space<vmem>>) attributes {dimension_semantics = [#tpu.dimension_semantics<parallel>], iteration_bounds = array<i64: 2>, scalar_prefetch = 0 : i64, scratch_operands = 0 : i64, tpu.core_type = #tpu.core_type<tc>, window_params = [{transform_indices = @transform_0, window_bounds = array<i64: 1, 82, 64>}, {pipeline_mode = #tpu.pipeline_mode<synchronous>, transform_indices = @transform_1, window_bounds = array<i64: 9, 64, 64>}, {pipeline_mode = #tpu.pipeline_mode<synchronous>, transform_indices = @transform_2, window_bounds = array<i64: 1, 64>}, {pipeline_mode = #tpu.pipeline_mode<synchronous>, transform_indices = @transform_3, window_bounds = array<i64: 1, 64>}, {pipeline_mode = #tpu.pipeline_mode<synchronous>, transform_indices = @transform_4, window_bounds = array<i64: 64, 64>}, {pipeline_mode = #tpu.pipeline_mode<synchronous>, transform_indices = @transform_5, window_bounds = array<i64: 1, 64>}, {pipeline_mode = #tpu.pipeline_mode<synchronous>, transform_indices = @transform_6, window_bounds = array<i64: 1, 64>}, {pipeline_mode = #tpu.pipeline_mode<synchronous>, transform_indices = @transform_7, window_bounds = array<i64: 64, 64>}, {pipeline_mode = #tpu.pipeline_mode<synchronous>, transform_indices = @transform_8, window_bounds = array<i64: 1, 64>}, {pipeline_mode = #tpu.pipeline_mode<synchronous>, transform_indices = @transform_9, window_bounds = array<i64: 1, 64>}, {pipeline_mode = #tpu.pipeline_mode<synchronous>, transform_indices = @transform_10, window_bounds = array<i64: 64, 256>}, {pipeline_mode = #tpu.pipeline_mode<synchronous>, transform_indices = @transform_11, window_bounds = array<i64: 1, 256>}, {pipeline_mode = #tpu.pipeline_mode<synchronous>, transform_indices = @transform_12, window_bounds = array<i64: 1, 256>}, {transform_indices = @transform_13, window_bounds = array<i64: 1, 64, 256>}]} {
    %0 = tpu.iota {dimensions = array<i32: 0>} : vector<64x1xi32>
    %c8_i32 = arith.constant 8 : i32
    %c0_i32 = arith.constant 0 : i32
    %1 = arith.cmpi eq, %c8_i32, %c0_i32 : i32
    %c1_i32 = arith.constant 1 : i32
    %2 = arith.select %1, %c1_i32, %c8_i32 : i32
    %3 = vector.broadcast %2 : i32 to vector<64x1xi32>
    %4 = arith.remsi %0, %3 : vector<64x1xi32>
    %c0_i32_0 = arith.constant 0 : i32
    %5 = vector.broadcast %c0_i32_0 : i32 to vector<64x1xi32>
    %6 = arith.cmpi ne, %4, %5 : vector<64x1xi32>
    %c0_i32_1 = arith.constant 0 : i32
    %7 = vector.broadcast %c0_i32_1 : i32 to vector<64x1xi32>
    %8 = arith.cmpi slt, %4, %7 : vector<64x1xi32>
    %c0_i32_2 = arith.constant 0 : i32
    %9 = arith.cmpi slt, %2, %c0_i32_2 : i32
    %10 = vector.broadcast %9 : i1 to vector<64x1xi1>
    %11 = vector.broadcast %10 : vector<64x1xi1> to vector<64x1xi1>
    %12 = arith.xori %8, %11 : vector<64x1xi1>
    %13 = arith.andi %12, %6 : vector<64x1xi1>
    %14 = vector.broadcast %2 : i32 to vector<64x1xi32>
    %15 = arith.addi %4, %14 : vector<64x1xi32>
    %16 = arith.select %13, %15, %4 : vector<64x1xi1>, vector<64x1xi32>
    %cst = arith.constant 0.000000e+00 : f32
    %17 = vector.broadcast %cst : f32 to vector<64x64xf32>
    %c0 = arith.constant 0 : index
    %c0_3 = arith.constant 0 : index
    %c0_4 = arith.constant 0 : index
    %18 = vector.load %arg1[%c0, %c0_3, %c0_4] : memref<1x82x64xbf16, #tpu.memory_space<vmem>>, vector<1x64x64xbf16>
    %19 = vector.shape_cast %18 : vector<1x64x64xbf16> to vector<64x64xbf16>
    %c-1_i32 = arith.constant -1 : i32
    %20 = vector.broadcast %c-1_i32 : i32 to vector<64x1xi32>
    %21 = arith.addi %16, %20 : vector<64x1xi32>
    %c0_i32_5 = arith.constant 0 : i32
    %22 = vector.broadcast %c0_i32_5 : i32 to vector<64x1xi32>
    %23 = arith.cmpi sge, %21, %22 : vector<64x1xi32>
    %c-1_i32_6 = arith.constant -1 : i32
    %24 = vector.broadcast %c-1_i32_6 : i32 to vector<64x1xi32>
    %25 = arith.addi %16, %24 : vector<64x1xi32>
    %c8_i32_7 = arith.constant 8 : i32
    %26 = vector.broadcast %c8_i32_7 : i32 to vector<64x1xi32>
    %27 = arith.cmpi slt, %25, %26 : vector<64x1xi32>
    %28 = arith.andi %23, %27 : vector<64x1xi1>
    %cst_8 = arith.constant 0.000000e+00 : bf16
    %29 = vector.broadcast %cst_8 : bf16 to vector<64x64xbf16>
    %30 = vector.shape_cast %28 : vector<64x1xi1> to vector<64x1xi1>
    %31 = vector.broadcast %30 : vector<64x1xi1> to vector<64x64xi1>
    %32 = arith.select %31, %19, %29 : vector<64x64xi1>, vector<64x64xbf16>
    %c0_9 = arith.constant 0 : index
    %c0_10 = arith.constant 0 : index
    %c0_11 = arith.constant 0 : index
    %33 = vector.load %arg2[%c0_9, %c0_10, %c0_11] : memref<9x64x64xbf16, #tpu.memory_space<vmem>>, vector<1x64x64xbf16>
    %34 = vector.shape_cast %33 : vector<1x64x64xbf16> to vector<64x64xbf16>
    %cst_12 = arith.constant dense<0.000000e+00> : vector<64x64xf32>
    %35 = tpu.matmul %32, %34, %cst_12 {dimension_numbers = #tpu.dot_dimension_numbers<[1], [0], [0], [1], [0, 0, 1, 1], [], []>} : vector<64x64xbf16>, vector<64x64xbf16>, vector<64x64xf32> -> vector<64x64xf32>
    %36 = arith.addf %17, %35 : vector<64x64xf32>
    %c0_13 = arith.constant 0 : index
    %c1 = arith.constant 1 : index
    %c0_14 = arith.constant 0 : index
    %37 = vector.load %arg1[%c0_13, %c1, %c0_14] : memref<1x82x64xbf16, #tpu.memory_space<vmem>>, vector<1x64x64xbf16>
    %38 = vector.shape_cast %37 : vector<1x64x64xbf16> to vector<64x64xbf16>
    %c1_15 = arith.constant 1 : index
    %c0_16 = arith.constant 0 : index
    %c0_17 = arith.constant 0 : index
    %39 = vector.load %arg2[%c1_15, %c0_16, %c0_17] : memref<9x64x64xbf16, #tpu.memory_space<vmem>>, vector<1x64x64xbf16>
    %40 = vector.shape_cast %39 : vector<1x64x64xbf16> to vector<64x64xbf16>
    %cst_18 = arith.constant dense<0.000000e+00> : vector<64x64xf32>
    %41 = tpu.matmul %38, %40, %cst_18 {dimension_numbers = #tpu.dot_dimension_numbers<[1], [0], [0], [1], [0, 0, 1, 1], [], []>} : vector<64x64xbf16>, vector<64x64xbf16>, vector<64x64xf32> -> vector<64x64xf32>
    %42 = arith.addf %36, %41 : vector<64x64xf32>
    %c0_19 = arith.constant 0 : index
    %c2 = arith.constant 2 : index
    %c0_20 = arith.constant 0 : index
    %43 = vector.load %arg1[%c0_19, %c2, %c0_20] : memref<1x82x64xbf16, #tpu.memory_space<vmem>>, vector<1x64x64xbf16>
    %44 = vector.shape_cast %43 : vector<1x64x64xbf16> to vector<64x64xbf16>
    %c1_i32_21 = arith.constant 1 : i32
    %45 = vector.broadcast %c1_i32_21 : i32 to vector<64x1xi32>
    %46 = arith.addi %16, %45 : vector<64x1xi32>
    %c0_i32_22 = arith.constant 0 : i32
    %47 = vector.broadcast %c0_i32_22 : i32 to vector<64x1xi32>
    %48 = arith.cmpi sge, %46, %47 : vector<64x1xi32>
    %c1_i32_23 = arith.constant 1 : i32
    %49 = vector.broadcast %c1_i32_23 : i32 to vector<64x1xi32>
    %50 = arith.addi %16, %49 : vector<64x1xi32>
    %c8_i32_24 = arith.constant 8 : i32
    %51 = vector.broadcast %c8_i32_24 : i32 to vector<64x1xi32>
    %52 = arith.cmpi slt, %50, %51 : vector<64x1xi32>
    %53 = arith.andi %48, %52 : vector<64x1xi1>
    %cst_25 = arith.constant 0.000000e+00 : bf16
    %54 = vector.broadcast %cst_25 : bf16 to vector<64x64xbf16>
    %55 = vector.shape_cast %53 : vector<64x1xi1> to vector<64x1xi1>
    %56 = vector.broadcast %55 : vector<64x1xi1> to vector<64x64xi1>
    %57 = arith.select %56, %44, %54 : vector<64x64xi1>, vector<64x64xbf16>
    %c2_26 = arith.constant 2 : index
    %c0_27 = arith.constant 0 : index
    %c0_28 = arith.constant 0 : index
    %58 = vector.load %arg2[%c2_26, %c0_27, %c0_28] : memref<9x64x64xbf16, #tpu.memory_space<vmem>>, vector<1x64x64xbf16>
    %59 = vector.shape_cast %58 : vector<1x64x64xbf16> to vector<64x64xbf16>
    %cst_29 = arith.constant dense<0.000000e+00> : vector<64x64xf32>
    %60 = tpu.matmul %57, %59, %cst_29 {dimension_numbers = #tpu.dot_dimension_numbers<[1], [0], [0], [1], [0, 0, 1, 1], [], []>} : vector<64x64xbf16>, vector<64x64xbf16>, vector<64x64xf32> -> vector<64x64xf32>
    %61 = arith.addf %42, %60 : vector<64x64xf32>
    %c0_30 = arith.constant 0 : index
    %c8 = arith.constant 8 : index
    %c0_31 = arith.constant 0 : index
    %62 = vector.load %arg1[%c0_30, %c8, %c0_31] : memref<1x82x64xbf16, #tpu.memory_space<vmem>>, vector<1x64x64xbf16>
    %63 = vector.shape_cast %62 : vector<1x64x64xbf16> to vector<64x64xbf16>
    %c-1_i32_32 = arith.constant -1 : i32
    %64 = vector.broadcast %c-1_i32_32 : i32 to vector<64x1xi32>
    %65 = arith.addi %16, %64 : vector<64x1xi32>
    %c0_i32_33 = arith.constant 0 : i32
    %66 = vector.broadcast %c0_i32_33 : i32 to vector<64x1xi32>
    %67 = arith.cmpi sge, %65, %66 : vector<64x1xi32>
    %c-1_i32_34 = arith.constant -1 : i32
    %68 = vector.broadcast %c-1_i32_34 : i32 to vector<64x1xi32>
    %69 = arith.addi %16, %68 : vector<64x1xi32>
    %c8_i32_35 = arith.constant 8 : i32
    %70 = vector.broadcast %c8_i32_35 : i32 to vector<64x1xi32>
    %71 = arith.cmpi slt, %69, %70 : vector<64x1xi32>
    %72 = arith.andi %67, %71 : vector<64x1xi1>
    %cst_36 = arith.constant 0.000000e+00 : bf16
    %73 = vector.broadcast %cst_36 : bf16 to vector<64x64xbf16>
    %74 = vector.shape_cast %72 : vector<64x1xi1> to vector<64x1xi1>
    %75 = vector.broadcast %74 : vector<64x1xi1> to vector<64x64xi1>
    %76 = arith.select %75, %63, %73 : vector<64x64xi1>, vector<64x64xbf16>
    %c3 = arith.constant 3 : index
    %c0_37 = arith.constant 0 : index
    %c0_38 = arith.constant 0 : index
    %77 = vector.load %arg2[%c3, %c0_37, %c0_38] : memref<9x64x64xbf16, #tpu.memory_space<vmem>>, vector<1x64x64xbf16>
    %78 = vector.shape_cast %77 : vector<1x64x64xbf16> to vector<64x64xbf16>
    %cst_39 = arith.constant dense<0.000000e+00> : vector<64x64xf32>
    %79 = tpu.matmul %76, %78, %cst_39 {dimension_numbers = #tpu.dot_dimension_numbers<[1], [0], [0], [1], [0, 0, 1, 1], [], []>} : vector<64x64xbf16>, vector<64x64xbf16>, vector<64x64xf32> -> vector<64x64xf32>
    %80 = arith.addf %61, %79 : vector<64x64xf32>
    %c0_40 = arith.constant 0 : index
    %c9 = arith.constant 9 : index
    %c0_41 = arith.constant 0 : index
    %81 = vector.load %arg1[%c0_40, %c9, %c0_41] : memref<1x82x64xbf16, #tpu.memory_space<vmem>>, vector<1x64x64xbf16>
    %82 = vector.shape_cast %81 : vector<1x64x64xbf16> to vector<64x64xbf16>
    %c4 = arith.constant 4 : index
    %c0_42 = arith.constant 0 : index
    %c0_43 = arith.constant 0 : index
    %83 = vector.load %arg2[%c4, %c0_42, %c0_43] : memref<9x64x64xbf16, #tpu.memory_space<vmem>>, vector<1x64x64xbf16>
    %84 = vector.shape_cast %83 : vector<1x64x64xbf16> to vector<64x64xbf16>
    %cst_44 = arith.constant dense<0.000000e+00> : vector<64x64xf32>
    %85 = tpu.matmul %82, %84, %cst_44 {dimension_numbers = #tpu.dot_dimension_numbers<[1], [0], [0], [1], [0, 0, 1, 1], [], []>} : vector<64x64xbf16>, vector<64x64xbf16>, vector<64x64xf32> -> vector<64x64xf32>
    %86 = arith.addf %80, %85 : vector<64x64xf32>
    %c0_45 = arith.constant 0 : index
    %c10 = arith.constant 10 : index
    %c0_46 = arith.constant 0 : index
    %87 = vector.load %arg1[%c0_45, %c10, %c0_46] : memref<1x82x64xbf16, #tpu.memory_space<vmem>>, vector<1x64x64xbf16>
    %88 = vector.shape_cast %87 : vector<1x64x64xbf16> to vector<64x64xbf16>
    %c1_i32_47 = arith.constant 1 : i32
    %89 = vector.broadcast %c1_i32_47 : i32 to vector<64x1xi32>
    %90 = arith.addi %16, %89 : vector<64x1xi32>
    %c0_i32_48 = arith.constant 0 : i32
    %91 = vector.broadcast %c0_i32_48 : i32 to vector<64x1xi32>
    %92 = arith.cmpi sge, %90, %91 : vector<64x1xi32>
    %c1_i32_49 = arith.constant 1 : i32
    %93 = vector.broadcast %c1_i32_49 : i32 to vector<64x1xi32>
    %94 = arith.addi %16, %93 : vector<64x1xi32>
    %c8_i32_50 = arith.constant 8 : i32
    %95 = vector.broadcast %c8_i32_50 : i32 to vector<64x1xi32>
    %96 = arith.cmpi slt, %94, %95 : vector<64x1xi32>
    %97 = arith.andi %92, %96 : vector<64x1xi1>
    %cst_51 = arith.constant 0.000000e+00 : bf16
    %98 = vector.broadcast %cst_51 : bf16 to vector<64x64xbf16>
    %99 = vector.shape_cast %97 : vector<64x1xi1> to vector<64x1xi1>
    %100 = vector.broadcast %99 : vector<64x1xi1> to vector<64x64xi1>
    %101 = arith.select %100, %88, %98 : vector<64x64xi1>, vector<64x64xbf16>
    %c5 = arith.constant 5 : index
    %c0_52 = arith.constant 0 : index
    %c0_53 = arith.constant 0 : index
    %102 = vector.load %arg2[%c5, %c0_52, %c0_53] : memref<9x64x64xbf16, #tpu.memory_space<vmem>>, vector<1x64x64xbf16>
    %103 = vector.shape_cast %102 : vector<1x64x64xbf16> to vector<64x64xbf16>
    %cst_54 = arith.constant dense<0.000000e+00> : vector<64x64xf32>
    %104 = tpu.matmul %101, %103, %cst_54 {dimension_numbers = #tpu.dot_dimension_numbers<[1], [0], [0], [1], [0, 0, 1, 1], [], []>} : vector<64x64xbf16>, vector<64x64xbf16>, vector<64x64xf32> -> vector<64x64xf32>
    %105 = arith.addf %86, %104 : vector<64x64xf32>
    %c0_55 = arith.constant 0 : index
    %c16 = arith.constant 16 : index
    %c0_56 = arith.constant 0 : index
    %106 = vector.load %arg1[%c0_55, %c16, %c0_56] : memref<1x82x64xbf16, #tpu.memory_space<vmem>>, vector<1x64x64xbf16>
    %107 = vector.shape_cast %106 : vector<1x64x64xbf16> to vector<64x64xbf16>
    %c-1_i32_57 = arith.constant -1 : i32
    %108 = vector.broadcast %c-1_i32_57 : i32 to vector<64x1xi32>
    %109 = arith.addi %16, %108 : vector<64x1xi32>
    %c0_i32_58 = arith.constant 0 : i32
    %110 = vector.broadcast %c0_i32_58 : i32 to vector<64x1xi32>
    %111 = arith.cmpi sge, %109, %110 : vector<64x1xi32>
    %c-1_i32_59 = arith.constant -1 : i32
    %112 = vector.broadcast %c-1_i32_59 : i32 to vector<64x1xi32>
    %113 = arith.addi %16, %112 : vector<64x1xi32>
    %c8_i32_60 = arith.constant 8 : i32
    %114 = vector.broadcast %c8_i32_60 : i32 to vector<64x1xi32>
    %115 = arith.cmpi slt, %113, %114 : vector<64x1xi32>
    %116 = arith.andi %111, %115 : vector<64x1xi1>
    %cst_61 = arith.constant 0.000000e+00 : bf16
    %117 = vector.broadcast %cst_61 : bf16 to vector<64x64xbf16>
    %118 = vector.shape_cast %116 : vector<64x1xi1> to vector<64x1xi1>
    %119 = vector.broadcast %118 : vector<64x1xi1> to vector<64x64xi1>
    %120 = arith.select %119, %107, %117 : vector<64x64xi1>, vector<64x64xbf16>
    %c6 = arith.constant 6 : index
    %c0_62 = arith.constant 0 : index
    %c0_63 = arith.constant 0 : index
    %121 = vector.load %arg2[%c6, %c0_62, %c0_63] : memref<9x64x64xbf16, #tpu.memory_space<vmem>>, vector<1x64x64xbf16>
    %122 = vector.shape_cast %121 : vector<1x64x64xbf16> to vector<64x64xbf16>
    %cst_64 = arith.constant dense<0.000000e+00> : vector<64x64xf32>
    %123 = tpu.matmul %120, %122, %cst_64 {dimension_numbers = #tpu.dot_dimension_numbers<[1], [0], [0], [1], [0, 0, 1, 1], [], []>} : vector<64x64xbf16>, vector<64x64xbf16>, vector<64x64xf32> -> vector<64x64xf32>
    %124 = arith.addf %105, %123 : vector<64x64xf32>
    %c0_65 = arith.constant 0 : index
    %c17 = arith.constant 17 : index
    %c0_66 = arith.constant 0 : index
    %125 = vector.load %arg1[%c0_65, %c17, %c0_66] : memref<1x82x64xbf16, #tpu.memory_space<vmem>>, vector<1x64x64xbf16>
    %126 = vector.shape_cast %125 : vector<1x64x64xbf16> to vector<64x64xbf16>
    %c7 = arith.constant 7 : index
    %c0_67 = arith.constant 0 : index
    %c0_68 = arith.constant 0 : index
    %127 = vector.load %arg2[%c7, %c0_67, %c0_68] : memref<9x64x64xbf16, #tpu.memory_space<vmem>>, vector<1x64x64xbf16>
    %128 = vector.shape_cast %127 : vector<1x64x64xbf16> to vector<64x64xbf16>
    %cst_69 = arith.constant dense<0.000000e+00> : vector<64x64xf32>
    %129 = tpu.matmul %126, %128, %cst_69 {dimension_numbers = #tpu.dot_dimension_numbers<[1], [0], [0], [1], [0, 0, 1, 1], [], []>} : vector<64x64xbf16>, vector<64x64xbf16>, vector<64x64xf32> -> vector<64x64xf32>
    %130 = arith.addf %124, %129 : vector<64x64xf32>
    %c0_70 = arith.constant 0 : index
    %c18 = arith.constant 18 : index
    %c0_71 = arith.constant 0 : index
    %131 = vector.load %arg1[%c0_70, %c18, %c0_71] : memref<1x82x64xbf16, #tpu.memory_space<vmem>>, vector<1x64x64xbf16>
    %132 = vector.shape_cast %131 : vector<1x64x64xbf16> to vector<64x64xbf16>
    %c1_i32_72 = arith.constant 1 : i32
    %133 = vector.broadcast %c1_i32_72 : i32 to vector<64x1xi32>
    %134 = arith.addi %16, %133 : vector<64x1xi32>
    %c0_i32_73 = arith.constant 0 : i32
    %135 = vector.broadcast %c0_i32_73 : i32 to vector<64x1xi32>
    %136 = arith.cmpi sge, %134, %135 : vector<64x1xi32>
    %c1_i32_74 = arith.constant 1 : i32
    %137 = vector.broadcast %c1_i32_74 : i32 to vector<64x1xi32>
    %138 = arith.addi %16, %137 : vector<64x1xi32>
    %c8_i32_75 = arith.constant 8 : i32
    %139 = vector.broadcast %c8_i32_75 : i32 to vector<64x1xi32>
    %140 = arith.cmpi slt, %138, %139 : vector<64x1xi32>
    %141 = arith.andi %136, %140 : vector<64x1xi1>
    %cst_76 = arith.constant 0.000000e+00 : bf16
    %142 = vector.broadcast %cst_76 : bf16 to vector<64x64xbf16>
    %143 = vector.shape_cast %141 : vector<64x1xi1> to vector<64x1xi1>
    %144 = vector.broadcast %143 : vector<64x1xi1> to vector<64x64xi1>
    %145 = arith.select %144, %132, %142 : vector<64x64xi1>, vector<64x64xbf16>
    %c8_77 = arith.constant 8 : index
    %c0_78 = arith.constant 0 : index
    %c0_79 = arith.constant 0 : index
    %146 = vector.load %arg2[%c8_77, %c0_78, %c0_79] : memref<9x64x64xbf16, #tpu.memory_space<vmem>>, vector<1x64x64xbf16>
    %147 = vector.shape_cast %146 : vector<1x64x64xbf16> to vector<64x64xbf16>
    %cst_80 = arith.constant dense<0.000000e+00> : vector<64x64xf32>
    %148 = tpu.matmul %145, %147, %cst_80 {dimension_numbers = #tpu.dot_dimension_numbers<[1], [0], [0], [1], [0, 0, 1, 1], [], []>} : vector<64x64xbf16>, vector<64x64xbf16>, vector<64x64xf32> -> vector<64x64xf32>
    %149 = arith.addf %130, %148 : vector<64x64xf32>
    %c0_81 = arith.constant 0 : index
    %c0_82 = arith.constant 0 : index
    %150 = vector.load %arg3[%c0_81, %c0_82] : memref<1x64xf32, #tpu.memory_space<vmem>>, vector<1x64xf32>
    %151 = vector.shape_cast %150 : vector<1x64xf32> to vector<64xf32>
    %c0_83 = arith.constant 0 : index
    %c0_84 = arith.constant 0 : index
    %152 = vector.load %arg4[%c0_83, %c0_84] : memref<1x64xf32, #tpu.memory_space<vmem>>, vector<1x64xf32>
    %153 = vector.shape_cast %152 : vector<1x64xf32> to vector<64xf32>
    %154 = vector.shape_cast %149 : vector<64x64xf32> to vector<1x64x64xf32>
    %cst_85 = arith.constant dense<0.000000e+00> : vector<1xf32>
    %155 = vector.multi_reduction <add>, %154, %cst_85 [1, 2] : vector<1x64x64xf32> to vector<1xf32>
    %156 = vector.shape_cast %155 : vector<1xf32> to vector<1x1x1xf32>
    %157 = vector.extract %156[0, 0, 0] : f32 from vector<1x1x1xf32>
    %158 = arith.mulf %149, %149 : vector<64x64xf32>
    %159 = vector.shape_cast %158 : vector<64x64xf32> to vector<1x64x64xf32>
    %cst_86 = arith.constant dense<0.000000e+00> : vector<1xf32>
    %160 = vector.multi_reduction <add>, %159, %cst_86 [1, 2] : vector<1x64x64xf32> to vector<1xf32>
    %161 = vector.shape_cast %160 : vector<1xf32> to vector<1x1x1xf32>
    %162 = vector.extract %161[0, 0, 0] : f32 from vector<1x1x1xf32>
    %cst_87 = arith.constant 4.096000e+03 : f32
    %163 = arith.divf %157, %cst_87 : f32
    %cst_88 = arith.constant 4.096000e+03 : f32
    %164 = arith.divf %162, %cst_88 : f32
    %165 = arith.mulf %163, %163 : f32
    %166 = arith.subf %164, %165 : f32
    %cst_89 = arith.constant 0.000000e+00 : f32
    %167 = arith.maximumf %166, %cst_89 : f32
    %168 = vector.broadcast %163 : f32 to vector<64x64xf32>
    %169 = arith.subf %149, %168 : vector<64x64xf32>
    %cst_90 = arith.constant 9.99999974E-6 : f32
    %170 = arith.addf %167, %cst_90 : f32
    %171 = math.rsqrt %170 : f32
    %172 = vector.broadcast %171 : f32 to vector<64x64xf32>
    %173 = arith.mulf %169, %172 : vector<64x64xf32>
    %174 = vector.shape_cast %151 : vector<64xf32> to vector<1x64xf32>
    %175 = vector.broadcast %174 : vector<1x64xf32> to vector<64x64xf32>
    %176 = arith.mulf %173, %175 : vector<64x64xf32>
    %177 = vector.shape_cast %153 : vector<64xf32> to vector<1x64xf32>
    %178 = vector.broadcast %177 : vector<1x64xf32> to vector<64x64xf32>
    %179 = arith.addf %176, %178 : vector<64x64xf32>
    %cst_91 = arith.constant 0.000000e+00 : f32
    %180 = vector.broadcast %cst_91 : f32 to vector<64x64xf32>
    %181 = arith.maximumf %179, %180 : vector<64x64xf32>
    %182 = arith.truncf %181 : vector<64x64xf32> to vector<64x64xbf16>
    %c0_92 = arith.constant 0 : index
    %c0_93 = arith.constant 0 : index
    %183 = vector.load %arg5[%c0_92, %c0_93] : memref<64x64xbf16, #tpu.memory_space<vmem>>, vector<64x64xbf16>
    %cst_94 = arith.constant dense<0.000000e+00> : vector<64x64xf32>
    %184 = tpu.matmul %182, %183, %cst_94 {dimension_numbers = #tpu.dot_dimension_numbers<[1], [0], [0], [1], [0, 0, 1, 1], [], []>} : vector<64x64xbf16>, vector<64x64xbf16>, vector<64x64xf32> -> vector<64x64xf32>
    %c0_95 = arith.constant 0 : index
    %c0_96 = arith.constant 0 : index
    %185 = vector.load %arg6[%c0_95, %c0_96] : memref<1x64xf32, #tpu.memory_space<vmem>>, vector<1x64xf32>
    %186 = vector.shape_cast %185 : vector<1x64xf32> to vector<64xf32>
    %c0_97 = arith.constant 0 : index
    %c0_98 = arith.constant 0 : index
    %187 = vector.load %arg7[%c0_97, %c0_98] : memref<1x64xf32, #tpu.memory_space<vmem>>, vector<1x64xf32>
    %188 = vector.shape_cast %187 : vector<1x64xf32> to vector<64xf32>
    %189 = vector.shape_cast %184 : vector<64x64xf32> to vector<1x64x64xf32>
    %cst_99 = arith.constant dense<0.000000e+00> : vector<1xf32>
    %190 = vector.multi_reduction <add>, %189, %cst_99 [1, 2] : vector<1x64x64xf32> to vector<1xf32>
    %191 = vector.shape_cast %190 : vector<1xf32> to vector<1x1x1xf32>
    %192 = vector.extract %191[0, 0, 0] : f32 from vector<1x1x1xf32>
    %193 = arith.mulf %184, %184 : vector<64x64xf32>
    %194 = vector.shape_cast %193 : vector<64x64xf32> to vector<1x64x64xf32>
    %cst_100 = arith.constant dense<0.000000e+00> : vector<1xf32>
    %195 = vector.multi_reduction <add>, %194, %cst_100 [1, 2] : vector<1x64x64xf32> to vector<1xf32>
    %196 = vector.shape_cast %195 : vector<1xf32> to vector<1x1x1xf32>
    %197 = vector.extract %196[0, 0, 0] : f32 from vector<1x1x1xf32>
    %cst_101 = arith.constant 4.096000e+03 : f32
    %198 = arith.divf %192, %cst_101 : f32
    %cst_102 = arith.constant 4.096000e+03 : f32
    %199 = arith.divf %197, %cst_102 : f32
    %200 = arith.mulf %198, %198 : f32
    %201 = arith.subf %199, %200 : f32
    %cst_103 = arith.constant 0.000000e+00 : f32
    %202 = arith.maximumf %201, %cst_103 : f32
    %203 = vector.broadcast %198 : f32 to vector<64x64xf32>
    %204 = arith.subf %184, %203 : vector<64x64xf32>
    %cst_104 = arith.constant 9.99999974E-6 : f32
    %205 = arith.addf %202, %cst_104 : f32
    %206 = math.rsqrt %205 : f32
    %207 = vector.broadcast %206 : f32 to vector<64x64xf32>
    %208 = arith.mulf %204, %207 : vector<64x64xf32>
    %209 = vector.shape_cast %186 : vector<64xf32> to vector<1x64xf32>
    %210 = vector.broadcast %209 : vector<1x64xf32> to vector<64x64xf32>
    %211 = arith.mulf %208, %210 : vector<64x64xf32>
    %212 = vector.shape_cast %188 : vector<64xf32> to vector<1x64xf32>
    %213 = vector.broadcast %212 : vector<1x64xf32> to vector<64x64xf32>
    %214 = arith.addf %211, %213 : vector<64x64xf32>
    %cst_105 = arith.constant 0.000000e+00 : f32
    %215 = vector.broadcast %cst_105 : f32 to vector<64x64xf32>
    %216 = arith.maximumf %214, %215 : vector<64x64xf32>
    %217 = arith.truncf %216 : vector<64x64xf32> to vector<64x64xbf16>
    %c0_106 = arith.constant 0 : index
    %c0_107 = arith.constant 0 : index
    %218 = vector.load %arg8[%c0_106, %c0_107] : memref<64x64xbf16, #tpu.memory_space<vmem>>, vector<64x64xbf16>
    %cst_108 = arith.constant dense<0.000000e+00> : vector<64x64xf32>
    %219 = tpu.matmul %217, %218, %cst_108 {dimension_numbers = #tpu.dot_dimension_numbers<[1], [0], [0], [1], [0, 0, 1, 1], [], []>} : vector<64x64xbf16>, vector<64x64xbf16>, vector<64x64xf32> -> vector<64x64xf32>
    %c0_109 = arith.constant 0 : index
    %c0_110 = arith.constant 0 : index
    %220 = vector.load %arg9[%c0_109, %c0_110] : memref<1x64xf32, #tpu.memory_space<vmem>>, vector<1x64xf32>
    %221 = vector.shape_cast %220 : vector<1x64xf32> to vector<64xf32>
    %c0_111 = arith.constant 0 : index
    %c0_112 = arith.constant 0 : index
    %222 = vector.load %arg10[%c0_111, %c0_112] : memref<1x64xf32, #tpu.memory_space<vmem>>, vector<1x64xf32>
    %223 = vector.shape_cast %222 : vector<1x64xf32> to vector<64xf32>
    %224 = vector.shape_cast %219 : vector<64x64xf32> to vector<1x64x64xf32>
    %cst_113 = arith.constant dense<0.000000e+00> : vector<1xf32>
    %225 = vector.multi_reduction <add>, %224, %cst_113 [1, 2] : vector<1x64x64xf32> to vector<1xf32>
    %226 = vector.shape_cast %225 : vector<1xf32> to vector<1x1x1xf32>
    %227 = vector.extract %226[0, 0, 0] : f32 from vector<1x1x1xf32>
    %228 = arith.mulf %219, %219 : vector<64x64xf32>
    %229 = vector.shape_cast %228 : vector<64x64xf32> to vector<1x64x64xf32>
    %cst_114 = arith.constant dense<0.000000e+00> : vector<1xf32>
    %230 = vector.multi_reduction <add>, %229, %cst_114 [1, 2] : vector<1x64x64xf32> to vector<1xf32>
    %231 = vector.shape_cast %230 : vector<1xf32> to vector<1x1x1xf32>
    %232 = vector.extract %231[0, 0, 0] : f32 from vector<1x1x1xf32>
    %cst_115 = arith.constant 4.096000e+03 : f32
    %233 = arith.divf %227, %cst_115 : f32
    %cst_116 = arith.constant 4.096000e+03 : f32
    %234 = arith.divf %232, %cst_116 : f32
    %235 = arith.mulf %233, %233 : f32
    %236 = arith.subf %234, %235 : f32
    %cst_117 = arith.constant 0.000000e+00 : f32
    %237 = arith.maximumf %236, %cst_117 : f32
    %238 = vector.broadcast %233 : f32 to vector<64x64xf32>
    %239 = arith.subf %219, %238 : vector<64x64xf32>
    %cst_118 = arith.constant 9.99999974E-6 : f32
    %240 = arith.addf %237, %cst_118 : f32
    %241 = math.rsqrt %240 : f32
    %242 = vector.broadcast %241 : f32 to vector<64x64xf32>
    %243 = arith.mulf %239, %242 : vector<64x64xf32>
    %244 = vector.shape_cast %221 : vector<64xf32> to vector<1x64xf32>
    %245 = vector.broadcast %244 : vector<1x64xf32> to vector<64x64xf32>
    %246 = arith.mulf %243, %245 : vector<64x64xf32>
    %247 = vector.shape_cast %223 : vector<64xf32> to vector<1x64xf32>
    %248 = vector.broadcast %247 : vector<1x64xf32> to vector<64x64xf32>
    %249 = arith.addf %246, %248 : vector<64x64xf32>
    %cst_119 = arith.constant 0.000000e+00 : f32
    %250 = vector.broadcast %cst_119 : f32 to vector<64x64xf32>
    %251 = arith.maximumf %249, %250 : vector<64x64xf32>
    %252 = arith.truncf %251 : vector<64x64xf32> to vector<64x64xbf16>
    %c0_120 = arith.constant 0 : index
    %c0_121 = arith.constant 0 : index
    %253 = vector.load %arg11[%c0_120, %c0_121] : memref<64x256xbf16, #tpu.memory_space<vmem>>, vector<64x256xbf16>
    %cst_122 = arith.constant dense<0.000000e+00> : vector<64x256xf32>
    %254 = tpu.matmul %252, %253, %cst_122 {dimension_numbers = #tpu.dot_dimension_numbers<[1], [0], [0], [1], [0, 0, 1, 1], [], []>} : vector<64x64xbf16>, vector<64x256xbf16>, vector<64x256xf32> -> vector<64x256xf32>
    %c0_123 = arith.constant 0 : index
    %c0_124 = arith.constant 0 : index
    %255 = vector.load %arg12[%c0_123, %c0_124] : memref<1x256xf32, #tpu.memory_space<vmem>>, vector<1x256xf32>
    %256 = vector.shape_cast %255 : vector<1x256xf32> to vector<256xf32>
    %c0_125 = arith.constant 0 : index
    %c0_126 = arith.constant 0 : index
    %257 = vector.load %arg13[%c0_125, %c0_126] : memref<1x256xf32, #tpu.memory_space<vmem>>, vector<1x256xf32>
    %258 = vector.shape_cast %257 : vector<1x256xf32> to vector<256xf32>
    %259 = vector.shape_cast %254 : vector<64x256xf32> to vector<1x64x256xf32>
    %cst_127 = arith.constant dense<0.000000e+00> : vector<1xf32>
    %260 = vector.multi_reduction <add>, %259, %cst_127 [1, 2] : vector<1x64x256xf32> to vector<1xf32>
    %261 = vector.shape_cast %260 : vector<1xf32> to vector<1x1x1xf32>
    %262 = vector.extract %261[0, 0, 0] : f32 from vector<1x1x1xf32>
    %263 = arith.mulf %254, %254 : vector<64x256xf32>
    %264 = vector.shape_cast %263 : vector<64x256xf32> to vector<1x64x256xf32>
    %cst_128 = arith.constant dense<0.000000e+00> : vector<1xf32>
    %265 = vector.multi_reduction <add>, %264, %cst_128 [1, 2] : vector<1x64x256xf32> to vector<1xf32>
    %266 = vector.shape_cast %265 : vector<1xf32> to vector<1x1x1xf32>
    %267 = vector.extract %266[0, 0, 0] : f32 from vector<1x1x1xf32>
    %cst_129 = arith.constant 1.638400e+04 : f32
    %268 = arith.divf %262, %cst_129 : f32
    %cst_130 = arith.constant 1.638400e+04 : f32
    %269 = arith.divf %267, %cst_130 : f32
    %270 = arith.mulf %268, %268 : f32
    %271 = arith.subf %269, %270 : f32
    %cst_131 = arith.constant 0.000000e+00 : f32
    %272 = arith.maximumf %271, %cst_131 : f32
    %273 = vector.broadcast %268 : f32 to vector<64x256xf32>
    %274 = arith.subf %254, %273 : vector<64x256xf32>
    %cst_132 = arith.constant 9.99999974E-6 : f32
    %275 = arith.addf %272, %cst_132 : f32
    %276 = math.rsqrt %275 : f32
    %277 = vector.broadcast %276 : f32 to vector<64x256xf32>
    %278 = arith.mulf %274, %277 : vector<64x256xf32>
    %279 = vector.shape_cast %256 : vector<256xf32> to vector<1x256xf32>
    %280 = vector.broadcast %279 : vector<1x256xf32> to vector<64x256xf32>
    %281 = arith.mulf %278, %280 : vector<64x256xf32>
    %282 = vector.shape_cast %258 : vector<256xf32> to vector<1x256xf32>
    %283 = vector.broadcast %282 : vector<1x256xf32> to vector<64x256xf32>
    %284 = arith.addf %281, %283 : vector<64x256xf32>
    %cst_133 = arith.constant 0.000000e+00 : f32
    %285 = vector.broadcast %cst_133 : f32 to vector<64x256xf32>
    %286 = arith.maximumf %284, %285 : vector<64x256xf32>
    %287 = arith.truncf %286 : vector<64x256xf32> to vector<64x256xbf16>
    %c0_134 = arith.constant 0 : index
    %c0_135 = arith.constant 0 : index
    %c0_136 = arith.constant 0 : index
    %288 = vector.load %arg14[%c0_134, %c0_135, %c0_136] : memref<1x64x256xbf16, #tpu.memory_space<vmem>>, vector<1x64x256xbf16>
    %289 = vector.shape_cast %288 : vector<1x64x256xbf16> to vector<64x256xbf16>
    %290 = vector.shape_cast %287 : vector<64x256xbf16> to vector<1x64x256xbf16>
    tpu.vector_store %arg14[%c0_134, %c0_135, %c0_136], %290 {strides = array<i32>} : memref<1x64x256xbf16, #tpu.memory_space<vmem>>, vector<1x64x256xbf16>,
    return
  }
  func.func @transform_0(%arg0: i32) -> (i32, i32, i32) {
    %c0_i32 = arith.constant 0 : i32
    %c0_i32_0 = arith.constant 0 : i32
    %c0_i32_1 = arith.constant 0 : i32
    return %arg0, %c0_i32, %c0_i32_0 : i32, i32, i32
  }
  func.func @transform_1(%arg0: i32) -> (i32, i32, i32) {
    %c0_i32 = arith.constant 0 : i32
    %c0_i32_0 = arith.constant 0 : i32
    %c0_i32_1 = arith.constant 0 : i32
    %c0_i32_2 = arith.constant 0 : i32
    return %c0_i32, %c0_i32_0, %c0_i32_1 : i32, i32, i32
  }
  func.func @transform_2(%arg0: i32) -> (i32, i32) {
    %c0_i32 = arith.constant 0 : i32
    %c0_i32_0 = arith.constant 0 : i32
    %c0_i32_1 = arith.constant 0 : i32
    return %c0_i32, %c0_i32_0 : i32, i32
  }
  func.func @transform_3(%arg0: i32) -> (i32, i32) {
    %c0_i32 = arith.constant 0 : i32
    %c0_i32_0 = arith.constant 0 : i32
    %c0_i32_1 = arith.constant 0 : i32
    return %c0_i32, %c0_i32_0 : i32, i32
  }
  func.func @transform_4(%arg0: i32) -> (i32, i32) {
    %c0_i32 = arith.constant 0 : i32
    %c0_i32_0 = arith.constant 0 : i32
    %c0_i32_1 = arith.constant 0 : i32
    return %c0_i32, %c0_i32_0 : i32, i32
  }
  func.func @transform_5(%arg0: i32) -> (i32, i32) {
    %c0_i32 = arith.constant 0 : i32
    %c0_i32_0 = arith.constant 0 : i32
    %c0_i32_1 = arith.constant 0 : i32
    return %c0_i32, %c0_i32_0 : i32, i32
  }
  func.func @transform_6(%arg0: i32) -> (i32, i32) {
    %c0_i32 = arith.constant 0 : i32
    %c0_i32_0 = arith.constant 0 : i32
    %c0_i32_1 = arith.constant 0 : i32
    return %c0_i32, %c0_i32_0 : i32, i32
  }
  func.func @transform_7(%arg0: i32) -> (i32, i32) {
    %c0_i32 = arith.constant 0 : i32
    %c0_i32_0 = arith.constant 0 : i32
    %c0_i32_1 = arith.constant 0 : i32
    return %c0_i32, %c0_i32_0 : i32, i32
  }
  func.func @transform_8(%arg0: i32) -> (i32, i32) {
    %c0_i32 = arith.constant 0 : i32
    %c0_i32_0 = arith.constant 0 : i32
    %c0_i32_1 = arith.constant 0 : i32
    return %c0_i32, %c0_i32_0 : i32, i32
  }
  func.func @transform_9(%arg0: i32) -> (i32, i32) {
    %c0_i32 = arith.constant 0 : i32
    %c0_i32_0 = arith.constant 0 : i32
    %c0_i32_1 = arith.constant 0 : i32
    return %c0_i32, %c0_i32_0 : i32, i32
  }
  func.func @transform_10(%arg0: i32) -> (i32, i32) {
    %c0_i32 = arith.constant 0 : i32
    %c0_i32_0 = arith.constant 0 : i32
    %c0_i32_1 = arith.constant 0 : i32
    return %c0_i32, %c0_i32_0 : i32, i32
  }
  func.func @transform_11(%arg0: i32) -> (i32, i32) {
    %c0_i32 = arith.constant 0 : i32
    %c0_i32_0 = arith.constant 0 : i32
    %c0_i32_1 = arith.constant 0 : i32
    return %c0_i32, %c0_i32_0 : i32, i32
  }
  func.func @transform_12(%arg0: i32) -> (i32, i32) {
    %c0_i32 = arith.constant 0 : i32
    %c0_i32_0 = arith.constant 0 : i32
    %c0_i32_1 = arith.constant 0 : i32
    return %c0_i32, %c0_i32_0 : i32, i32
  }
  func.func @transform_13(%arg0: i32) -> (i32, i32, i32) {
    %c0_i32 = arith.constant 0 : i32
    %c0_i32_0 = arith.constant 0 : i32
    %c0_i32_1 = arith.constant 0 : i32
    return %arg0, %c0_i32, %c0_i32_0 : i32, i32, i32
  }
}

module attributes {stable_mosaic.version = 11 : i64} {
  func.func @_tail_kernel(%arg0: i32, %arg1: memref<1x256x64xbf16, #tpu.memory_space<vmem>>, %arg2: memref<64x3xbf16, #tpu.memory_space<vmem>>, %arg3: memref<1x3xf32, #tpu.memory_space<vmem>>, %arg4: memref<1x256x3xf32, #tpu.memory_space<vmem>>) attributes {dimension_semantics = [#tpu.dimension_semantics<parallel>], iteration_bounds = array<i64: 2>, scalar_prefetch = 0 : i64, scratch_operands = 0 : i64, tpu.core_type = #tpu.core_type<tc>, window_params = [{transform_indices = @transform_0, window_bounds = array<i64: 1, 256, 64>}, {pipeline_mode = #tpu.pipeline_mode<synchronous>, transform_indices = @transform_1, window_bounds = array<i64: 64, 3>}, {pipeline_mode = #tpu.pipeline_mode<synchronous>, transform_indices = @transform_2, window_bounds = array<i64: 1, 3>}, {transform_indices = @transform_3, window_bounds = array<i64: 1, 256, 3>}]} {
    %c0 = arith.constant 0 : index
    %c0_0 = arith.constant 0 : index
    %c0_1 = arith.constant 0 : index
    %0 = vector.load %arg1[%c0, %c0_0, %c0_1] : memref<1x256x64xbf16, #tpu.memory_space<vmem>>, vector<1x256x64xbf16>
    %1 = vector.shape_cast %0 : vector<1x256x64xbf16> to vector<256x64xbf16>
    %c0_2 = arith.constant 0 : index
    %c0_3 = arith.constant 0 : index
    %2 = vector.load %arg2[%c0_2, %c0_3] : memref<64x3xbf16, #tpu.memory_space<vmem>>, vector<64x3xbf16>
    %cst = arith.constant dense<0.000000e+00> : vector<256x3xf32>
    %3 = tpu.matmul %1, %2, %cst {dimension_numbers = #tpu.dot_dimension_numbers<[1], [0], [0], [1], [0, 0, 1, 1], [], []>} : vector<256x64xbf16>, vector<64x3xbf16>, vector<256x3xf32> -> vector<256x3xf32>
    %c0_4 = arith.constant 0 : index
    %c0_5 = arith.constant 0 : index
    %4 = vector.load %arg3[%c0_4, %c0_5] : memref<1x3xf32, #tpu.memory_space<vmem>>, vector<1x3xf32>
    %5 = vector.shape_cast %4 : vector<1x3xf32> to vector<3xf32>
    %6 = vector.shape_cast %5 : vector<3xf32> to vector<1x3xf32>
    %7 = vector.broadcast %6 : vector<1x3xf32> to vector<256x3xf32>
    %8 = arith.addf %3, %7 : vector<256x3xf32>
    %c0_6 = arith.constant 0 : index
    %c0_7 = arith.constant 0 : index
    %c0_8 = arith.constant 0 : index
    %9 = vector.load %arg4[%c0_6, %c0_7, %c0_8] : memref<1x256x3xf32, #tpu.memory_space<vmem>>, vector<1x256x3xf32>
    %10 = vector.shape_cast %9 : vector<1x256x3xf32> to vector<256x3xf32>
    %11 = vector.shape_cast %8 : vector<256x3xf32> to vector<1x256x3xf32>
    tpu.vector_store %arg4[%c0_6, %c0_7, %c0_8], %11 {strides = array<i32>} : memref<1x256x3xf32, #tpu.memory_space<vmem>>, vector<1x256x3xf32>,
    return
  }
  func.func @transform_0(%arg0: i32) -> (i32, i32, i32) {
    %c0_i32 = arith.constant 0 : i32
    %c0_i32_0 = arith.constant 0 : i32
    %c0_i32_1 = arith.constant 0 : i32
    return %arg0, %c0_i32, %c0_i32_0 : i32, i32, i32
  }
  func.func @transform_1(%arg0: i32) -> (i32, i32) {
    %c0_i32 = arith.constant 0 : i32
    %c0_i32_0 = arith.constant 0 : i32
    %c0_i32_1 = arith.constant 0 : i32
    return %c0_i32, %c0_i32_0 : i32, i32
  }
  func.func @transform_2(%arg0: i32) -> (i32, i32) {
    %c0_i32 = arith.constant 0 : i32
    %c0_i32_0 = arith.constant 0 : i32
    %c0_i32_1 = arith.constant 0 : i32
    return %c0_i32, %c0_i32_0 : i32, i32
  }
  func.func @transform_3(%arg0: i32) -> (i32, i32, i32) {
    %c0_i32 = arith.constant 0 : i32
    %c0_i32_0 = arith.constant 0 : i32
    %c0_i32_1 = arith.constant 0 : i32
    return %arg0, %c0_i32, %c0_i32_0 : i32, i32, i32
  }
}

</mosaic_0001>

<llo_original>
// kernel: vae_decoder_forward.4
$region0: #{vae_decoder_forward.4}
  #allocation0 [shape = 'u32[]', space=smem, size = 0x4, offset = 0x4, fixed_abs, tag = 'smem constant byte address 0x4 - core index']
  #allocation1 [shape = 'u32[144,128]{1,0:T(1,128)}', space=vmem, size = 0x12000, scoped, tag = 'internal scratch']
  %s0 = inlined_call_operand.vmem [shape: bf16[2,16,8], index: 0, kind: input, shape index: {}]
  %s1 = inlined_call_operand.vmem [shape: bf16[8,64], index: 1, kind: input, shape index: {}]
  %s2 = inlined_call_operand.vmem [shape: f32[1,64], index: 2, kind: input, shape index: {}]
  %s3 = inlined_call_operand.vmem [shape: f32[1,64], index: 3, kind: input, shape index: {}]
  %s4 = inlined_call_operand.vmem [shape: bf16[2,16,64], index: 4, kind: output, shape index: {}]
  %s5 = sld [smem:[#allocation0]]
  $region49: #{vae_decoder_forward.4} parent=0
    _
  %s7 = ssub.s32 1, %s5
  %s8 = scalar_select 0, %s7, %s5
  loop: start=0, step=1, limit=4
  $region2: #{vae_decoder_forward.4} parent=0 // loop_pre_header
    _
  $region3: #{vae_decoder_forward.4} parent=0 // loop_header
    %s10 = sphi 0, %s14
    %p11 = scmp.ge.s32.totalorder %s10, 4
    %s20 = sphi 0, %s22
    %s23 = sphi 0, %s20
    %s24 = sphi 0, %s23
    %s40 = sphi 0, %s24
    %s44 = sphi 0, %s44
    %s46 = sphi 0, %s44
    %s47 = sphi 0, %s46
    %s61 = sphi 0, %s47
    %s65 = sphi 0, %s65
    %s67 = sphi 0, %s65
    %s68 = sphi 0, %s67
    %s82 = sphi 0, %s68
    %s86 = sphi 0, %s86
    %s88 = sphi 0, %s86
    %s89 = sphi 0, %s88
    %s103 = sphi 0, %s89
    %s109 = sphi 0, %s111
    %s112 = sphi 0, %s109
    %s113 = sphi 0, %s112
    %s129 = sphi 0, %s113
  $region4: #{vae_decoder_forward.4} parent=0 // loop_header_branch
    %13 = sbr.rel (%p11) target = $region8
  $region5: #{vae_decoder_forward.4} parent=0 // loop_body
    %s15 = ssub.s32 %s10, 1
    %s16 = ssub.s32 %s10, 2
    %s17 = sadd.s32 %s10, 1
    %s18 = ssub.s32 %s10, %s17
    %p19 = scmp.eq.s32.totalorder %s18, 0
    %s21 = sadd.s32 %s20, 1
    %s22 = scalar_select %p19, %s20, %s21
    %p25 = pneg %p19
    %p26 = scmp.eq.s32.totalorder %s10, 1
    %p27 = por %p25, %p26
    %p28 = scmp.ne.s32.totalorder %s20, %s23
    %p29 = scmp.eq.s32.totalorder %s10, 0
    %p30 = por %p28, %p29
    %p31 = scmp.ne.s32.totalorder %s20, %s23
    %p32 = scmp.eq.s32.totalorder %s15, 1
    %p33 = por %p31, %p32
    %p34 = scmp.ne.s32.totalorder %s23, %s24
    %p35 = scmp.eq.s32.totalorder %s15, 0
    %p36 = por %p34, %p35
    %p37 = scmp.ne.s32.totalorder %s23, %s24
    %p38 = scmp.eq.s32.totalorder %s16, 1
    %p39 = por %p37, %p38
    %p41 = scmp.ne.s32.totalorder %s24, %s40
    %p42 = scmp.eq.s32.totalorder %s16, 0
    %p43 = por %p41, %p42
    %s45 = sadd.s32 %s44, 1
    %p48 = scmp.eq.s32.totalorder %s10, 1
    %p49 = scmp.ne.s32.totalorder %s44, %s46
    %p50 = scmp.eq.s32.totalorder %s10, 0
    %p51 = por %p49, %p50
    %p52 = scmp.ne.s32.totalorder %s44, %s46
    %p53 = scmp.eq.s32.totalorder %s15, 1
    %p54 = por %p52, %p53
    %p55 = scmp.ne.s32.totalorder %s46, %s47
    %p56 = scmp.eq.s32.totalorder %s15, 0
    %p57 = por %p55, %p56
    %p58 = scmp.ne.s32.totalorder %s46, %s47
    %p59 = scmp.eq.s32.totalorder %s16, 1
    %p60 = por %p58, %p59
    %p62 = scmp.ne.s32.totalorder %s47, %s61
    %p63 = scmp.eq.s32.totalorder %s16, 0
    %p64 = por %p62, %p63
    %s66 = sadd.s32 %s65, 1
    %p69 = scmp.eq.s32.totalorder %s10, 1
    %p70 = scmp.ne.s32.totalorder %s65, %s67
    %p71 = scmp.eq.s32.totalorder %s10, 0
    %p72 = por %p70, %p71
    %p73 = scmp.ne.s32.totalorder %s65, %s67
    %p74 = scmp.eq.s32.totalorder %s15, 1
    %p75 = por %p73, %p74
    %p76 = scmp.ne.s32.totalorder %s67, %s68
    %p77 = scmp.eq.s32.totalorder %s15, 0
    %p78 = por %p76, %p77
    %p79 = scmp.ne.s32.totalorder %s67, %s68
    %p80 = scmp.eq.s32.totalorder %s16, 1
    %p81 = por %p79, %p80
    %p83 = scmp.ne.s32.totalorder %s68, %s82
    %p84 = scmp.eq.s32.totalorder %s16, 0
    %p85 = por %p83, %p84
    %s87 = sadd.s32 %s86, 1
    %p90 = scmp.eq.s32.totalorder %s10, 1
    %p91 = scmp.ne.s32.totalorder %s86, %s88
    %p92 = scmp.eq.s32.totalorder %s10, 0
    %p93 = por %p91, %p92
    %p94 = scmp.ne.s32.totalorder %s86, %s88
    %p95 = scmp.eq.s32.totalorder %s15, 1
    %p96 = por %p94, %p95
    %p97 = scmp.ne.s32.totalorder %s88, %s89
    %p98 = scmp.eq.s32.totalorder %s15, 0
    %p99 = por %p97, %p98
    %p100 = scmp.ne.s32.totalorder %s88, %s89
    %p101 = scmp.eq.s32.totalorder %s16, 1
    %p102 = por %p100, %p101
    %p104 = scmp.ne.s32.totalorder %s89, %s103
    %p105 = scmp.eq.s32.totalorder %s16, 0
    %p106 = por %p104, %p105
    %s107 = ssub.s32 %s10, %s17
    %p108 = scmp.eq.s32.totalorder %s107, 0
    %s110 = sadd.s32 %s109, 1
    %s111 = scalar_select %p108, %s109, %s110
    %p114 = pneg %p108
    %p115 = scmp.eq.s32.totalorder %s10, 1
    %p116 = por %p114, %p115
    %p117 = scmp.ne.s32.totalorder %s109, %s112
    %p118 = scmp.eq.s32.totalorder %s10, 0
    %p119 = por %p117, %p118
    %p120 = scmp.ne.s32.totalorder %s109, %s112
    %p121 = scmp.eq.s32.totalorder %s15, 1
    %p122 = por %p120, %p121
    %p123 = scmp.ne.s32.totalorder %s112, %s113
    %p124 = scmp.eq.s32.totalorder %s15, 0
    %p125 = por %p123, %p124
    %p126 = scmp.ne.s32.totalorder %s112, %s113
    %p127 = scmp.eq.s32.totalorder %s16, 1
    %p128 = por %p126, %p127
    %p130 = scmp.ne.s32.totalorder %s113, %s129
    %p131 = scmp.eq.s32.totalorder %s16, 0
    %p132 = por %p130, %p131
    %p133 = scmp.le.s32.totalorder 1, %s10
    %p134 = scmp.lt.s32.totalorder %s10, 3
    %p135 = pnand %p133, %p134
    %p136 = pneg %p135
    // Predicated region
    $region9: #{vae_decoder_forward.4} parent=5 // pred_check
      _
    $region10: #{vae_decoder_forward.4} parent=5 // pred_check_branch
      %138 = sbr.rel (%p135) target = $region12
    $region11: #{vae_decoder_forward.4} parent=5 // pred_region
      %s139 = ssub.s32 %s10, 1
      // Predicated region
      $region13: #{vae_decoder_forward.4} parent=11 // pred_check
        %p140 = pneg %p57
      $region14: #{vae_decoder_forward.4} parent=11 // pred_check_branch
        %142 = sbr.rel (%p140) target = $region16
      $region15: #{vae_decoder_forward.4} parent=11 // pred_region
        _
      $region16: #{vae_decoder_forward.4} parent=11 // pred_fallthru
        _
      // Predicated region
      $region17: #{vae_decoder_forward.4} parent=11 // pred_check
        %p143 = pneg %p78
      $region18: #{vae_decoder_forward.4} parent=11 // pred_check_branch
        %145 = sbr.rel (%p143) target = $region20
      $region19: #{vae_decoder_forward.4} parent=11 // pred_region
        _
      $region20: #{vae_decoder_forward.4} parent=11 // pred_fallthru
        _
      // Predicated region
      $region21: #{vae_decoder_forward.4} parent=11 // pred_check
        %p146 = pneg %p99
      $region22: #{vae_decoder_forward.4} parent=11 // pred_check_branch
        %148 = sbr.rel (%p146) target = $region24
      $region23: #{vae_decoder_forward.4} parent=11 // pred_region
        _
      $region24: #{vae_decoder_forward.4} parent=11 // pred_fallthru
        _
    $region12: #{vae_decoder_forward.4} parent=5 // pred_fallthru
      _
    %p149 = scmp.lt.s32.totalorder %s10, 2
    // Predicated region
    $region25: #{vae_decoder_forward.4} parent=5 // pred_check
      %p150 = pneg %p149
    $region26: #{vae_decoder_forward.4} parent=5 // pred_check_branch
      %152 = sbr.rel (%p150) target = $region28
    $region27: #{vae_decoder_forward.4} parent=5 // pred_region
      // Predicated region
      $region29: #{vae_decoder_forward.4} parent=27 // pred_check
        %p153 = pneg %p30
      $region30: #{vae_decoder_forward.4} parent=27 // pred_check_branch
        %155 = sbr.rel (%p153) target = $region32
      $region31: #{vae_decoder_forward.4} parent=27 // pred_region
        %p156 = scmp.lt.s32.totalorder %s10, 1
        %s157 = scalar_select %p156, %s10, 1
        %s158 = smul.addr %s157, 2
        %s159 = smul.addr %s158, 4
        %s160 = scalar_lea.vmem %s0, %s159
      $region32: #{vae_decoder_forward.4} parent=27 // pred_fallthru
        _
    $region28: #{vae_decoder_forward.4} parent=5 // pred_fallthru
      _
    %p161 = scmp.le.s32.totalorder 1, %s10
    %p162 = scmp.lt.s32.totalorder %s10, 3
    %p163 = pnand %p161, %p162
    %p164 = pneg %p163
    // Predicated region
    $region33: #{vae_decoder_forward.4} parent=5 // pred_check
      _
    $region34: #{vae_decoder_forward.4} parent=5 // pred_check_branch
      %166 = sbr.rel (%p163) target = $region36
    $region35: #{vae_decoder_forward.4} parent=5 // pred_region
      %s167 = ssub.s32 %s10, 1
      %p168 = scmp.lt.s32.totalorder %s15, 1
      %s169 = scalar_select %p168, %s15, 1
      %s170 = smul.addr %s169, 2
      %s171 = smul.addr %s170, 4
      %s172 = scalar_lea.vmem %s0, %s171
      %p173 = pneg %p36
      %p174 = pneg %p33
      %p175 = pneg %p57
      %p176 = pneg %p54
      %p177 = pneg %p78
      %p178 = pneg %p75
      %p179 = pneg %p99
      %p180 = pneg %p96
      %p181 = pneg %p125
      %p182 = pneg %p122
      %p183 = scmp.lt.s32.totalorder %s15, 1
      %s184 = scalar_select %p183, %s15, 1
      %s185 = smul.addr %s184, 2
      %s186 = smul.addr %s185, 4
      %s187 = scalar_lea.vmem %s4, %s186
      %p188 = scmp.lt.s32.totalorder %s15, 1
      %s189 = scalar_select %p188, %s15, 1
      %s190 = smul.addr %s189, 2
      %s191 = smul.addr %s190, 4
      %s192 = scalar_lea.vmem %s0, %s191
      %p193 = scmp.lt.s32.totalorder %s15, 1
      %s194 = scalar_select %p193, %s15, 1
      %s195 = smul.addr %s194, 2
      %s196 = smul.addr %s195, 4
      %s197 = scalar_lea.vmem %s4, %s196
      %v199 = vld [vmem:[%s192] sm:$0xf]
      %v200 = vld [vmem:[%s192 + $0x4] sm:$0xf]
      %v201 = vld [vmem:[%s1] sm:$0xf]
      %v204 = vunpack.c.l.b16 %v199
      %v205 = vunpack.c.l.b16 %v200
      %v206 = vpack.c.b16 %v205, %v204
      %vm207 = vcmask 64512
      %v209 = vsel %vm207, %v206, 0
      %vm211 = vcmask 1043456
      %v213 = vsel %vm211, %v201, 0
      %215 = vmatprep.subr.bf16.mxu0 0
      %216 = vmatpush1.bf16.msra.mxu0 %v213
      %217 = vmatprep.subr.bf16.mxu0 0
      %218 = vmatpush1.bf16.msra.mxu0 0
      %219 = vmatprep.subr.bf16.mxu0 0
      %220 = vmatpush1.bf16.msra.mxu0 0
      %221 = vmatprep.subr.bf16.mxu0 0
      %222 = vmatpush1.bf16.msra.mxu0 0
      %223 = vmatprep.subr.bf16.mxu0 0
      %224 = vmatpush1.bf16.msra.mxu0 0
      %225 = vmatprep.subr.bf16.mxu0 0
      %226 = vmatpush1.bf16.msra.mxu0 0
      %227 = vmatprep.subr.bf16.mxu0 0
      %228 = vmatpush1.bf16.msra.mxu0 0
      %229 = vmatprep.subr.bf16.mxu0 0
      %230 = vmatpush1.bf16.msra.mxu0 0
      %231 = vmatprep.subr.bf16.mxu0 0
      %232 = vmatpush1.bf16.msra.mxu0 0
      %233 = vmatprep.subr.bf16.mxu0 0
      %234 = vmatpush1.bf16.msra.mxu0 0
      %235 = vmatprep.subr.bf16.mxu0 0
      %236 = vmatpush1.bf16.msra.mxu0 0
      %237 = vmatprep.subr.bf16.mxu0 0
      %238 = vmatpush1.bf16.msra.mxu0 0
      %239 = vmatprep.subr.bf16.mxu0 0
      %240 = vmatpush1.bf16.msra.mxu0 0
      %241 = vmatprep.subr.bf16.mxu0 0
      %242 = vmatpush1.bf16.msra.mxu0 0
      %243 = vmatprep.subr.bf16.mxu0 0
      %244 = vmatpush1.bf16.msra.mxu0 0
      %245 = vmatprep.subr.bf16.mxu0 0
      %246 = vmatpush1.bf16.msra.mxu0 0
      %247 = vmatprep.mubr.bf16.mxu0 0
      %248 = vmatmul.mubr.bf16.gmra.mrb[0].mxu0 %v209
      %v249 = vpop.f32.mrb[0].mxu0
      %v250 = vadd.f32 0.0, %v249
      %v251 = vpop.f32.mrb[0].mxu0
      %v252 = vpop.f32.mrb[0].mxu0
      %v253 = vadd.f32 0.0, %v252
      %v254 = vpop.f32.mrb[0].mxu0
      %255 = vdwg.mxu0
      %v256 = vld [vmem:[%s2] sm:$0x1]
      %v257 = vld [vmem:[%s3] sm:$0x1]
      %vm258 = vcmask 523264
      %v259 = vsel %vm258, %v250, 0.0
      %v260 = vsel %vm258, %v253, 0.0
      %v261 = vadd.f32 %v259, %v260
      %262 = vadd.xlane.f32.xlu0 %v261
      %v263 = vpop.xlane.xlu0 %262
      %v264 = vrot.slane %v263, 4
      %v265 = vadd.f32 %v263, %v264
      %v266 = vrot.slane %v265, 2
      %v267 = vadd.f32 %v265, %v266
      %v268 = vrot.slane %v267, 1
      %v269 = vadd.f32 %v267, %v268
      %s270 = vtos %v269
      %v271 = vmul.f32 %v250, %v250
      %v272 = vmul.f32 %v253, %v253
      %v273 = vsel %vm258, %v271, 0.0
      %v274 = vsel %vm258, %v272, 0.0
      %v275 = vadd.f32 %v273, %v274
      %276 = vadd.xlane.f32.xlu0 %v275
      %v277 = vpop.xlane.xlu0 %276
      %v278 = vrot.slane %v277, 4
      %v279 = vadd.f32 %v277, %v278
      %v280 = vrot.slane %v279, 2
      %v281 = vadd.f32 %v279, %v280
      %v282 = vrot.slane %v281, 1
      %v283 = vadd.f32 %v281, %v282
      %s284 = vtos %v283
      %v285 = vrcp.pop 1024.0
      %s286 = vtos %v285
      %s287 = smul.f32 %s270, %s286
      %v288 = vrcp.pop 1024.0
      %s289 = vtos %v288
      %s290 = smul.f32 %s284, %s289
      %s291 = smul.f32 %s287, %s287
      %s292 = ssub.f32 %s290, %s291
      %s293 = smax.f32 %s292, 0.0
      %v294 = vstv %s287
      %v295 = vsub.f32 %v250, %v294
      %v296 = vsub.f32 %v253, %v294
      %s297 = sadd.f32 %s293, 1e-05
      %v298 = vstv %s297
      %v299 = vrsqrt.pop %v298
      %s300 = vtos %v299
      %v301 = vstv %s300
      %v302 = vmul.f32 %v295, %v301
      %v303 = vmul.f32 %v296, %v301
      %v305 = vlaneseq
      %v306 = vshrl.u32 %v305, 7
      %v307 = vsub.s32 0, %v306
      %v308 = vrot.slane %v256, %v307
      %v310 = vmul.f32 %v302, %v308
      %v311 = vmul.f32 %v303, %v308
      %v313 = vlaneseq
      %v314 = vshrl.u32 %v313, 7
      %v315 = vsub.s32 0, %v314
      %v316 = vrot.slane %v257, %v315
      %v318 = vadd.f32 %v310, %v316
      %v319 = vadd.f32 %v311, %v316
      %v320 = vmax.f32 %v318, 0.0
      %v321 = vmax.f32 %v319, 0.0
      %v322 = vpack.c.bf16 %v321, %v320
      %v324 = vunpack.c.l.b16 %v322
      %v325 = vunpack.c.h.b16 %v322
      %v326 = vpack.c.b16 %v324, %v324
      %v327 = vpack.c.b16 %v325, %v325
      %vm330 = vcmask 519168
      %331 = vst.msk [vmem:[%s197] sm:$0xf] %vm330, %v326
      %332 = vst.msk [vmem:[%s197 + $0x4] sm:$0xf] %vm330, %v327
      %p333 = scmp.lt.s32.totalorder %s15, 1
      %s334 = scalar_select %p333, %s15, 1
      %s335 = smul.addr %s334, 2
      %s336 = smul.addr %s335, 4
      %s337 = scalar_lea.vmem %s4, %s336
      // Predicated region
      $region37: #{vae_decoder_forward.4} parent=35 // pred_check
        %p338 = pneg %p122
      $region38: #{vae_decoder_forward.4} parent=35 // pred_check_branch
        %340 = sbr.rel (%p338) target = $region40
      $region39: #{vae_decoder_forward.4} parent=35 // pred_region
        _
      $region40: #{vae_decoder_forward.4} parent=35 // pred_fallthru
        _
    $region36: #{vae_decoder_forward.4} parent=5 // pred_fallthru
      _
    %p341 = scmp.le.s32.totalorder 2, %s10
    // Predicated region
    $region41: #{vae_decoder_forward.4} parent=5 // pred_check
      %p342 = pneg %p341
    $region42: #{vae_decoder_forward.4} parent=5 // pred_check_branch
      %344 = sbr.rel (%p342) target = $region44
    $region43: #{vae_decoder_forward.4} parent=5 // pred_region
      %s345 = ssub.s32 %s10, 2
      // Predicated region
      $region45: #{vae_decoder_forward.4} parent=43 // pred_check
        %p346 = pneg %p128
      $region46: #{vae_decoder_forward.4} parent=43 // pred_check_branch
        %348 = sbr.rel (%p346) target = $region48
      $region47: #{vae_decoder_forward.4} parent=43 // pred_region
        %p349 = scmp.lt.s32.totalorder %s16, 1
        %s350 = scalar_select %p349, %s16, 1
        %s351 = smul.addr %s350, 2
        %s352 = smul.addr %s351, 4
        %s353 = scalar_lea.vmem %s4, %s352
      $region48: #{vae_decoder_forward.4} parent=43 // pred_fallthru
        _
    $region44: #{vae_decoder_forward.4} parent=5 // pred_fallthru
      _
  $region6: #{vae_decoder_forward.4} parent=0 // loop_footer
    %s14 = sadd.s32 1, %s10
  $region7: #{vae_decoder_forward.4} parent=0 // loop_footer_branch
    %9 = sbr.rel target = $region3
  $region8: #{vae_decoder_forward.4} parent=0 // loop_exit
    _

// kernel: vae_decoder_forward.5
$region0: #{vae_decoder_forward.5}
  #allocation0 [shape = 'u32[]', space=smem, size = 0x4, offset = 0x4, fixed_abs, tag = 'smem constant byte address 0x4 - core index']
  #allocation1 [shape = 'u32[144,128]{1,0:T(1,128)}', space=vmem, size = 0x12000, scoped, tag = 'internal scratch']
  %s0 = inlined_call_operand.vmem [shape: bf16[2,26,64], index: 0, kind: input, shape index: {}]
  %s1 = inlined_call_operand.vmem [shape: bf16[9,64,64], index: 1, kind: input, shape index: {}]
  %s2 = inlined_call_operand.vmem [shape: f32[1,64], index: 2, kind: input, shape index: {}]
  %s3 = inlined_call_operand.vmem [shape: f32[1,64], index: 3, kind: input, shape index: {}]
  %s4 = inlined_call_operand.vmem [shape: bf16[64,64], index: 4, kind: input, shape index: {}]
  %s5 = inlined_call_operand.vmem [shape: f32[1,64], index: 5, kind: input, shape index: {}]
  %s6 = inlined_call_operand.vmem [shape: f32[1,64], index: 6, kind: input, shape index: {}]
  %s7 = inlined_call_operand.vmem [shape: bf16[64,64], index: 7, kind: input, shape index: {}]
  %s8 = inlined_call_operand.vmem [shape: f32[1,64], index: 8, kind: input, shape index: {}]
  %s9 = inlined_call_operand.vmem [shape: f32[1,64], index: 9, kind: input, shape index: {}]
  %s10 = inlined_call_operand.vmem [shape: bf16[64,256], index: 10, kind: input, shape index: {}]
  %s11 = inlined_call_operand.vmem [shape: f32[1,256], index: 11, kind: input, shape index: {}]
  %s12 = inlined_call_operand.vmem [shape: f32[1,256], index: 12, kind: input, shape index: {}]
  %s13 = inlined_call_operand.vmem [shape: bf16[2,16,256], index: 13, kind: output, shape index: {}]
  %s14 = sld [smem:[#allocation0]]
  $region85: #{vae_decoder_forward.5} parent=0
    _
  %s16 = ssub.s32 1, %s14
  %s17 = scalar_select 0, %s16, %s14
  loop: start=0, step=1, limit=4
  $region2: #{vae_decoder_forward.5} parent=0 // loop_pre_header
    _
  $region3: #{vae_decoder_forward.5} parent=0 // loop_header
    %s19 = sphi 0, %s23
    %p20 = scmp.ge.s32.totalorder %s19, 4
    %s29 = sphi 0, %s31
    %s32 = sphi 0, %s29
    %s33 = sphi 0, %s32
    %s49 = sphi 0, %s33
    %s53 = sphi 0, %s53
    %s55 = sphi 0, %s53
    %s56 = sphi 0, %s55
    %s70 = sphi 0, %s56
    %s74 = sphi 0, %s74
    %s76 = sphi 0, %s74
    %s77 = sphi 0, %s76
    %s91 = sphi 0, %s77
    %s95 = sphi 0, %s95
    %s97 = sphi 0, %s95
    %s98 = sphi 0, %s97
    %s112 = sphi 0, %s98
    %s116 = sphi 0, %s116
    %s118 = sphi 0, %s116
    %s119 = sphi 0, %s118
    %s133 = sphi 0, %s119
    %s137 = sphi 0, %s137
    %s139 = sphi 0, %s137
    %s140 = sphi 0, %s139
    %s154 = sphi 0, %s140
    %s158 = sphi 0, %s158
    %s160 = sphi 0, %s158
    %s161 = sphi 0, %s160
    %s175 = sphi 0, %s161
    %s179 = sphi 0, %s179
    %s181 = sphi 0, %s179
    %s182 = sphi 0, %s181
    %s196 = sphi 0, %s182
    %s200 = sphi 0, %s200
    %s202 = sphi 0, %s200
    %s203 = sphi 0, %s202
    %s217 = sphi 0, %s203
    %s221 = sphi 0, %s221
    %s223 = sphi 0, %s221
    %s224 = sphi 0, %s223
    %s238 = sphi 0, %s224
    %s242 = sphi 0, %s242
    %s244 = sphi 0, %s242
    %s245 = sphi 0, %s244
    %s259 = sphi 0, %s245
    %s263 = sphi 0, %s263
    %s265 = sphi 0, %s263
    %s266 = sphi 0, %s265
    %s280 = sphi 0, %s266
    %s284 = sphi 0, %s284
    %s286 = sphi 0, %s284
    %s287 = sphi 0, %s286
    %s301 = sphi 0, %s287
    %s307 = sphi 0, %s309
    %s310 = sphi 0, %s307
    %s311 = sphi 0, %s310
    %s327 = sphi 0, %s311
  $region4: #{vae_decoder_forward.5} parent=0 // loop_header_branch
    %22 = sbr.rel (%p20) target = $region8
  $region5: #{vae_decoder_forward.5} parent=0 // loop_body
    %s24 = ssub.s32 %s19, 1
    %s25 = ssub.s32 %s19, 2
    %s26 = sadd.s32 %s19, 1
    %s27 = ssub.s32 %s19, %s26
    %p28 = scmp.eq.s32.totalorder %s27, 0
    %s30 = sadd.s32 %s29, 1
    %s31 = scalar_select %p28, %s29, %s30
    %p34 = pneg %p28
    %p35 = scmp.eq.s32.totalorder %s19, 1
    %p36 = por %p34, %p35
    %p37 = scmp.ne.s32.totalorder %s29, %s32
    %p38 = scmp.eq.s32.totalorder %s19, 0
    %p39 = por %p37, %p38
    %p40 = scmp.ne.s32.totalorder %s29, %s32
    %p41 = scmp.eq.s32.totalorder %s24, 1
    %p42 = por %p40, %p41
    %p43 = scmp.ne.s32.totalorder %s32, %s33
    %p44 = scmp.eq.s32.totalorder %s24, 0
    %p45 = por %p43, %p44
    %p46 = scmp.ne.s32.totalorder %s32, %s33
    %p47 = scmp.eq.s32.totalorder %s25, 1
    %p48 = por %p46, %p47
    %p50 = scmp.ne.s32.totalorder %s33, %s49
    %p51 = scmp.eq.s32.totalorder %s25, 0
    %p52 = por %p50, %p51
    %s54 = sadd.s32 %s53, 1
    %p57 = scmp.eq.s32.totalorder %s19, 1
    %p58 = scmp.ne.s32.totalorder %s53, %s55
    %p59 = scmp.eq.s32.totalorder %s19, 0
    %p60 = por %p58, %p59
    %p61 = scmp.ne.s32.totalorder %s53, %s55
    %p62 = scmp.eq.s32.totalorder %s24, 1
    %p63 = por %p61, %p62
    %p64 = scmp.ne.s32.totalorder %s55, %s56
    %p65 = scmp.eq.s32.totalorder %s24, 0
    %p66 = por %p64, %p65
    %p67 = scmp.ne.s32.totalorder %s55, %s56
    %p68 = scmp.eq.s32.totalorder %s25, 1
    %p69 = por %p67, %p68
    %p71 = scmp.ne.s32.totalorder %s56, %s70
    %p72 = scmp.eq.s32.totalorder %s25, 0
    %p73 = por %p71, %p72
    %s75 = sadd.s32 %s74, 1
    %p78 = scmp.eq.s32.totalorder %s19, 1
    %p79 = scmp.ne.s32.totalorder %s74, %s76
    %p80 = scmp.eq.s32.totalorder %s19, 0
    %p81 = por %p79, %p80
    %p82 = scmp.ne.s32.totalorder %s74, %s76
    %p83 = scmp.eq.s32.totalorder %s24, 1
    %p84 = por %p82, %p83
    %p85 = scmp.ne.s32.totalorder %s76, %s77
    %p86 = scmp.eq.s32.totalorder %s24, 0
    %p87 = por %p85, %p86
    %p88 = scmp.ne.s32.totalorder %s76, %s77
    %p89 = scmp.eq.s32.totalorder %s25, 1
    %p90 = por %p88, %p89
    %p92 = scmp.ne.s32.totalorder %s77, %s91
    %p93 = scmp.eq.s32.totalorder %s25, 0
    %p94 = por %p92, %p93
    %s96 = sadd.s32 %s95, 1
    %p99 = scmp.eq.s32.totalorder %s19, 1
    %p100 = scmp.ne.s32.totalorder %s95, %s97
    %p101 = scmp.eq.s32.totalorder %s19, 0
    %p102 = por %p100, %p101
    %p103 = scmp.ne.s32.totalorder %s95, %s97
    %p104 = scmp.eq.s32.totalorder %s24, 1
    %p105 = por %p103, %p104
    %p106 = scmp.ne.s32.totalorder %s97, %s98
    %p107 = scmp.eq.s32.totalorder %s24, 0
    %p108 = por %p106, %p107
    %p109 = scmp.ne.s32.totalorder %s97, %s98
    %p110 = scmp.eq.s32.totalorder %s25, 1
    %p111 = por %p109, %p110
    %p113 = scmp.ne.s32.totalorder %s98, %s112
    %p114 = scmp.eq.s32.totalorder %s25, 0
    %p115 = por %p113, %p114
    %s117 = sadd.s32 %s116, 1
    %p120 = scmp.eq.s32.totalorder %s19, 1
    %p121 = scmp.ne.s32.totalorder %s116, %s118
    %p122 = scmp.eq.s32.totalorder %s19, 0
    %p123 = por %p121, %p122
    %p124 = scmp.ne.s32.totalorder %s116, %s118
    %p125 = scmp.eq.s32.totalorder %s24, 1
    %p126 = por %p124, %p125
    %p127 = scmp.ne.s32.totalorder %s118, %s119
    %p128 = scmp.eq.s32.totalorder %s24, 0
    %p129 = por %p127, %p128
    %p130 = scmp.ne.s32.totalorder %s118, %s119
    %p131 = scmp.eq.s32.totalorder %s25, 1
    %p132 = por %p130, %p131
    %p134 = scmp.ne.s32.totalorder %s119, %s133
    %p135 = scmp.eq.s32.totalorder %s25, 0
    %p136 = por %p134, %p135
    %s138 = sadd.s32 %s137, 1
    %p141 = scmp.eq.s32.totalorder %s19, 1
    %p142 = scmp.ne.s32.totalorder %s137, %s139
    %p143 = scmp.eq.s32.totalorder %s19, 0
    %p144 = por %p142, %p143
    %p145 = scmp.ne.s32.totalorder %s137, %s139
    %p146 = scmp.eq.s32.totalorder %s24, 1
    %p147 = por %p145, %p146
    %p148 = scmp.ne.s32.totalorder %s139, %s140
    %p149 = scmp.eq.s32.totalorder %s24, 0
    %p150 = por %p148, %p149
    %p151 = scmp.ne.s32.totalorder %s139, %s140
    %p152 = scmp.eq.s32.totalorder %s25, 1
    %p153 = por %p151, %p152
    %p155 = scmp.ne.s32.totalorder %s140, %s154
    %p156 = scmp.eq.s32.totalorder %s25, 0
    %p157 = por %p155, %p156
    %s159 = sadd.s32 %s158, 1
    %p162 = scmp.eq.s32.totalorder %s19, 1
    %p163 = scmp.ne.s32.totalorder %s158, %s160
    %p164 = scmp.eq.s32.totalorder %s19, 0
    %p165 = por %p163, %p164
    %p166 = scmp.ne.s32.totalorder %s158, %s160
    %p167 = scmp.eq.s32.totalorder %s24, 1
    %p168 = por %p166, %p167
    %p169 = scmp.ne.s32.totalorder %s160, %s161
    %p170 = scmp.eq.s32.totalorder %s24, 0
    %p171 = por %p169, %p170
    %p172 = scmp.ne.s32.totalorder %s160, %s161
    %p173 = scmp.eq.s32.totalorder %s25, 1
    %p174 = por %p172, %p173
    %p176 = scmp.ne.s32.totalorder %s161, %s175
    %p177 = scmp.eq.s32.totalorder %s25, 0
    %p178 = por %p176, %p177
    %s180 = sadd.s32 %s179, 1
    %p183 = scmp.eq.s32.totalorder %s19, 1
    %p184 = scmp.ne.s32.totalorder %s179, %s181
    %p185 = scmp.eq.s32.totalorder %s19, 0
    %p186 = por %p184, %p185
    %p187 = scmp.ne.s32.totalorder %s179, %s181
    %p188 = scmp.eq.s32.totalorder %s24, 1
    %p189 = por %p187, %p188
    %p190 = scmp.ne.s32.totalorder %s181, %s182
    %p191 = scmp.eq.s32.totalorder %s24, 0
    %p192 = por %p190, %p191
    %p193 = scmp.ne.s32.totalorder %s181, %s182
    %p194 = scmp.eq.s32.totalorder %s25, 1
    %p195 = por %p193, %p194
    %p197 = scmp.ne.s32.totalorder %s182, %s196
    %p198 = scmp.eq.s32.totalorder %s25, 0
    %p199 = por %p197, %p198
    %s201 = sadd.s32 %s200, 1
    %p204 = scmp.eq.s32.totalorder %s19, 1
    %p205 = scmp.ne.s32.totalorder %s200, %s202
    %p206 = scmp.eq.s32.totalorder %s19, 0
    %p207 = por %p205, %p206
    %p208 = scmp.ne.s32.totalorder %s200, %s202
    %p209 = scmp.eq.s32.totalorder %s24, 1
    %p210 = por %p208, %p209
    %p211 = scmp.ne.s32.totalorder %s202, %s203
    %p212 = scmp.eq.s32.totalorder %s24, 0
    %p213 = por %p211, %p212
    %p214 = scmp.ne.s32.totalorder %s202, %s203
    %p215 = scmp.eq.s32.totalorder %s25, 1
    %p216 = por %p214, %p215
    %p218 = scmp.ne.s32.totalorder %s203, %s217
    %p219 = scmp.eq.s32.totalorder %s25, 0
    %p220 = por %p218, %p219
    %s222 = sadd.s32 %s221, 1
    %p225 = scmp.eq.s32.totalorder %s19, 1
    %p226 = scmp.ne.s32.totalorder %s221, %s223
    %p227 = scmp.eq.s32.totalorder %s19, 0
    %p228 = por %p226, %p227
    %p229 = scmp.ne.s32.totalorder %s221, %s223
    %p230 = scmp.eq.s32.totalorder %s24, 1
    %p231 = por %p229, %p230
    %p232 = scmp.ne.s32.totalorder %s223, %s224
    %p233 = scmp.eq.s32.totalorder %s24, 0
    %p234 = por %p232, %p233
    %p235 = scmp.ne.s32.totalorder %s223, %s224
    %p236 = scmp.eq.s32.totalorder %s25, 1
    %p237 = por %p235, %p236
    %p239 = scmp.ne.s32.totalorder %s224, %s238
    %p240 = scmp.eq.s32.totalorder %s25, 0
    %p241 = por %p239, %p240
    %s243 = sadd.s32 %s242, 1
    %p246 = scmp.eq.s32.totalorder %s19, 1
    %p247 = scmp.ne.s32.totalorder %s242, %s244
    %p248 = scmp.eq.s32.totalorder %s19, 0
    %p249 = por %p247, %p248
    %p250 = scmp.ne.s32.totalorder %s242, %s244
    %p251 = scmp.eq.s32.totalorder %s24, 1
    %p252 = por %p250, %p251
    %p253 = scmp.ne.s32.totalorder %s244, %s245
    %p254 = scmp.eq.s32.totalorder %s24, 0
    %p255 = por %p253, %p254
    %p256 = scmp.ne.s32.totalorder %s244, %s245
    %p257 = scmp.eq.s32.totalorder %s25, 1
    %p258 = por %p256, %p257
    %p260 = scmp.ne.s32.totalorder %s245, %s259
    %p261 = scmp.eq.s32.totalorder %s25, 0
    %p262 = por %p260, %p261
    %s264 = sadd.s32 %s263, 1
    %p267 = scmp.eq.s32.totalorder %s19, 1
    %p268 = scmp.ne.s32.totalorder %s263, %s265
    %p269 = scmp.eq.s32.totalorder %s19, 0
    %p270 = por %p268, %p269
    %p271 = scmp.ne.s32.totalorder %s263, %s265
    %p272 = scmp.eq.s32.totalorder %s24, 1
    %p273 = por %p271, %p272
    %p274 = scmp.ne.s32.totalorder %s265, %s266
    %p275 = scmp.eq.s32.totalorder %s24, 0
    %p276 = por %p274, %p275
    %p277 = scmp.ne.s32.totalorder %s265, %s266
    %p278 = scmp.eq.s32.totalorder %s25, 1
    %p279 = por %p277, %p278
    %p281 = scmp.ne.s32.totalorder %s266, %s280
    %p282 = scmp.eq.s32.totalorder %s25, 0
    %p283 = por %p281, %p282
    %s285 = sadd.s32 %s284, 1
    %p288 = scmp.eq.s32.totalorder %s19, 1
    %p289 = scmp.ne.s32.totalorder %s284, %s286
    %p290 = scmp.eq.s32.totalorder %s19, 0
    %p291 = por %p289, %p290
    %p292 = scmp.ne.s32.totalorder %s284, %s286
    %p293 = scmp.eq.s32.totalorder %s24, 1
    %p294 = por %p292, %p293
    %p295 = scmp.ne.s32.totalorder %s286, %s287
    %p296 = scmp.eq.s32.totalorder %s24, 0
    %p297 = por %p295, %p296
    %p298 = scmp.ne.s32.totalorder %s286, %s287
    %p299 = scmp.eq.s32.totalorder %s25, 1
    %p300 = por %p298, %p299
    %p302 = scmp.ne.s32.totalorder %s287, %s301
    %p303 = scmp.eq.s32.totalorder %s25, 0
    %p304 = por %p302, %p303
    %s305 = ssub.s32 %s19, %s26
    %p306 = scmp.eq.s32.totalorder %s305, 0
    %s308 = sadd.s32 %s307, 1
    %s309 = scalar_select %p306, %s307, %s308
    %p312 = pneg %p306
    %p313 = scmp.eq.s32.totalorder %s19, 1
    %p314 = por %p312, %p313
    %p315 = scmp.ne.s32.totalorder %s307, %s310
    %p316 = scmp.eq.s32.totalorder %s19, 0
    %p317 = por %p315, %p316
    %p318 = scmp.ne.s32.totalorder %s307, %s310
    %p319 = scmp.eq.s32.totalorder %s24, 1
    %p320 = por %p318, %p319
    %p321 = scmp.ne.s32.totalorder %s310, %s311
    %p322 = scmp.eq.s32.totalorder %s24, 0
    %p323 = por %p321, %p322
    %p324 = scmp.ne.s32.totalorder %s310, %s311
    %p325 = scmp.eq.s32.totalorder %s25, 1
    %p326 = por %p324, %p325
    %p328 = scmp.ne.s32.totalorder %s311, %s327
    %p329 = scmp.eq.s32.totalorder %s25, 0
    %p330 = por %p328, %p329
    %p331 = scmp.le.s32.totalorder 1, %s19
    %p332 = scmp.lt.s32.totalorder %s19, 3
    %p333 = pnand %p331, %p332
    %p334 = pneg %p333
    // Predicated region
    $region9: #{vae_decoder_forward.5} parent=5 // pred_check
      _
    $region10: #{vae_decoder_forward.5} parent=5 // pred_check_branch
      %336 = sbr.rel (%p333) target = $region12
    $region11: #{vae_decoder_forward.5} parent=5 // pred_region
      %s337 = ssub.s32 %s19, 1
      // Predicated region
      $region13: #{vae_decoder_forward.5} parent=11 // pred_check
        %p338 = pneg %p66
      $region14: #{vae_decoder_forward.5} parent=11 // pred_check_branch
        %340 = sbr.rel (%p338) target = $region16
      $region15: #{vae_decoder_forward.5} parent=11 // pred_region
        _
      $region16: #{vae_decoder_forward.5} parent=11 // pred_fallthru
        _
      // Predicated region
      $region17: #{vae_decoder_forward.5} parent=11 // pred_check
        %p341 = pneg %p87
      $region18: #{vae_decoder_forward.5} parent=11 // pred_check_branch
        %343 = sbr.rel (%p341) target = $region20
      $region19: #{vae_decoder_forward.5} parent=11 // pred_region
        _
      $region20: #{vae_decoder_forward.5} parent=11 // pred_fallthru
        _
      // Predicated region
      $region21: #{vae_decoder_forward.5} parent=11 // pred_check
        %p344 = pneg %p108
      $region22: #{vae_decoder_forward.5} parent=11 // pred_check_branch
        %346 = sbr.rel (%p344) target = $region24
      $region23: #{vae_decoder_forward.5} parent=11 // pred_region
        _
      $region24: #{vae_decoder_forward.5} parent=11 // pred_fallthru
        _
      // Predicated region
      $region25: #{vae_decoder_forward.5} parent=11 // pred_check
        %p347 = pneg %p129
      $region26: #{vae_decoder_forward.5} parent=11 // pred_check_branch
        %349 = sbr.rel (%p347) target = $region28
      $region27: #{vae_decoder_forward.5} parent=11 // pred_region
        _
      $region28: #{vae_decoder_forward.5} parent=11 // pred_fallthru
        _
      // Predicated region
      $region29: #{vae_decoder_forward.5} parent=11 // pred_check
        %p350 = pneg %p150
      $region30: #{vae_decoder_forward.5} parent=11 // pred_check_branch
        %352 = sbr.rel (%p350) target = $region32
      $region31: #{vae_decoder_forward.5} parent=11 // pred_region
        _
      $region32: #{vae_decoder_forward.5} parent=11 // pred_fallthru
        _
      // Predicated region
      $region33: #{vae_decoder_forward.5} parent=11 // pred_check
        %p353 = pneg %p171
      $region34: #{vae_decoder_forward.5} parent=11 // pred_check_branch
        %355 = sbr.rel (%p353) target = $region36
      $region35: #{vae_decoder_forward.5} parent=11 // pred_region
        _
      $region36: #{vae_decoder_forward.5} parent=11 // pred_fallthru
        _
      // Predicated region
      $region37: #{vae_decoder_forward.5} parent=11 // pred_check
        %p356 = pneg %p192
      $region38: #{vae_decoder_forward.5} parent=11 // pred_check_branch
        %358 = sbr.rel (%p356) target = $region40
      $region39: #{vae_decoder_forward.5} parent=11 // pred_region
        _
      $region40: #{vae_decoder_forward.5} parent=11 // pred_fallthru
        _
      // Predicated region
      $region41: #{vae_decoder_forward.5} parent=11 // pred_check
        %p359 = pneg %p213
      $region42: #{vae_decoder_forward.5} parent=11 // pred_check_branch
        %361 = sbr.rel (%p359) target = $region44
      $region43: #{vae_decoder_forward.5} parent=11 // pred_region
        _
      $region44: #{vae_decoder_forward.5} parent=11 // pred_fallthru
        _
      // Predicated region
      $region45: #{vae_decoder_forward.5} parent=11 // pred_check
        %p362 = pneg %p234
      $region46: #{vae_decoder_forward.5} parent=11 // pred_check_branch
        %364 = sbr.rel (%p362) target = $region48
      $region47: #{vae_decoder_forward.5} parent=11 // pred_region
        _
      $region48: #{vae_decoder_forward.5} parent=11 // pred_fallthru
        _
      // Predicated region
      $region49: #{vae_decoder_forward.5} parent=11 // pred_check
        %p365 = pneg %p255
      $region50: #{vae_decoder_forward.5} parent=11 // pred_check_branch
        %367 = sbr.rel (%p365) target = $region52
      $region51: #{vae_decoder_forward.5} parent=11 // pred_region
        _
      $region52: #{vae_decoder_forward.5} parent=11 // pred_fallthru
        _
      // Predicated region
      $region53: #{vae_decoder_forward.5} parent=11 // pred_check
        %p368 = pneg %p276
      $region54: #{vae_decoder_forward.5} parent=11 // pred_check_branch
        %370 = sbr.rel (%p368) target = $region56
      $region55: #{vae_decoder_forward.5} parent=11 // pred_region
        _
      $region56: #{vae_decoder_forward.5} parent=11 // pred_fallthru
        _
      // Predicated region
      $region57: #{vae_decoder_forward.5} parent=11 // pred_check
        %p371 = pneg %p297
      $region58: #{vae_decoder_forward.5} parent=11 // pred_check_branch
        %373 = sbr.rel (%p371) target = $region60
      $region59: #{vae_decoder_forward.5} parent=11 // pred_region
        _
      $region60: #{vae_decoder_forward.5} parent=11 // pred_fallthru
        _
    $region12: #{vae_decoder_forward.5} parent=5 // pred_fallthru
      _
    %p374 = scmp.lt.s32.totalorder %s19, 2
    // Predicated region
    $region61: #{vae_decoder_forward.5} parent=5 // pred_check
      %p375 = pneg %p374
    $region62: #{vae_decoder_forward.5} parent=5 // pred_check_branch
      %377 = sbr.rel (%p375) target = $region64
    $region63: #{vae_decoder_forward.5} parent=5 // pred_region
      // Predicated region
      $region65: #{vae_decoder_forward.5} parent=63 // pred_check
        %p378 = pneg %p39
      $region66: #{vae_decoder_forward.5} parent=63 // pred_check_branch
        %380 = sbr.rel (%p378) target = $region68
      $region67: #{vae_decoder_forward.5} parent=63 // pred_region
        %p381 = scmp.lt.s32.totalorder %s19, 1
        %s382 = scalar_select %p381, %s19, 1
        %s383 = smul.addr %s382, 4
        %s384 = smul.addr %s383, 4
        %s385 = scalar_lea.vmem %s0, %s384
      $region68: #{vae_decoder_forward.5} parent=63 // pred_fallthru
        _
    $region64: #{vae_decoder_forward.5} parent=5 // pred_fallthru
      _
    %p386 = scmp.le.s32.totalorder 1, %s19
    %p387 = scmp.lt.s32.totalorder %s19, 3
    %p388 = pnand %p386, %p387
    %p389 = pneg %p388
    // Predicated region
    $region69: #{vae_decoder_forward.5} parent=5 // pred_check
      _
    $region70: #{vae_decoder_forward.5} parent=5 // pred_check_branch
      %391 = sbr.rel (%p388) target = $region72
    $region71: #{vae_decoder_forward.5} parent=5 // pred_region
      %s392 = ssub.s32 %s19, 1
      %p393 = scmp.lt.s32.totalorder %s24, 1
      %s394 = scalar_select %p393, %s24, 1
      %s395 = smul.addr %s394, 4
      %s396 = smul.addr %s395, 4
      %s397 = scalar_lea.vmem %s0, %s396
      %p398 = pneg %p45
      %p399 = pneg %p42
      %p400 = pneg %p66
      %p401 = pneg %p63
      %p402 = pneg %p87
      %p403 = pneg %p84
      %p404 = pneg %p108
      %p405 = pneg %p105
      %p406 = pneg %p129
      %p407 = pneg %p126
      %p408 = pneg %p150
      %p409 = pneg %p147
      %p410 = pneg %p171
      %p411 = pneg %p168
      %p412 = pneg %p192
      %p413 = pneg %p189
      %p414 = pneg %p213
      %p415 = pneg %p210
      %p416 = pneg %p234
      %p417 = pneg %p231
      %p418 = pneg %p255
      %p419 = pneg %p252
      %p420 = pneg %p276
      %p421 = pneg %p273
      %p422 = pneg %p297
      %p423 = pneg %p294
      %p424 = pneg %p323
      %p425 = pneg %p320
      %p426 = scmp.lt.s32.totalorder %s24, 1
      %s427 = scalar_select %p426, %s24, 1
      %s428 = smul.addr %s427, 4
      %s429 = smul.addr %s428, 4
      %s430 = scalar_lea.vmem %s13, %s429
      %p431 = scmp.lt.s32.totalorder %s24, 1
      %s432 = scalar_select %p431, %s24, 1
      %s433 = smul.addr %s432, 4
      %s434 = smul.addr %s433, 4
      %s435 = scalar_lea.vmem %s0, %s434
      %p436 = scmp.lt.s32.totalorder %s24, 1
      %s437 = scalar_select %p436, %s24, 1
      %s438 = smul.addr %s437, 4
      %s439 = smul.addr %s438, 4
      %s440 = scalar_lea.vmem %s13, %s439
      %v444 = vlaneseq
      %v445 = vshrl.u32 %v444, 7
      %v446 = vadd.s32 %v445, 8
      %vm447 = vcmp.lt.s32.totalorder %v445, 0
      %v448 = vsub.s32 0, %v445
      %v449 = vsel %vm447, %v448, %v445
      %v450 = vshrl.u32 %v449, 2
      %v451 = vand.u32 %v449, 3
      %v452 = vsub.s32 0, %v451
      %v453 = vsel %vm447, %v452, %v451
      %vm454 = vcmp.lt.s32.totalorder %v446, 0
      %v455 = vsub.s32 0, %v446
      %v456 = vsel %vm454, %v455, %v446
      %v457 = vshrl.u32 %v456, 2
      %v458 = vand.u32 %v456, 3
      %v459 = vsub.s32 0, %v458
      %v460 = vsel %vm454, %v459, %v458
      %vm461 = vcmp.ne.s32.totalorder %v453, 0
      %vm462 = vcmp.ne.s32.totalorder %v460, 0
      %vm463 = vcmp.lt.s32.totalorder %v453, 0
      %vm464 = vcmp.lt.s32.totalorder %v460, 0
      %vm465 = vmand %vm463, %vm461
      %vm466 = vmand %vm464, %vm462
      %v467 = vadd.s32 %v453, 4
      %v468 = vadd.s32 %v460, 4
      %v469 = vsel %vm465, %v467, %v453
      %v470 = vsel %vm466, %v468, %v460
      %v471 = vld [vmem:[%s435] sm:$0xf]
      %v472 = vld [vmem:[%s435 + $0x4] sm:$0xf]
      %v473 = vadd.s32 %v469, 4294967295
      %v474 = vadd.s32 %v470, 4294967295
      %vm475 = vcmp.ge.s32.totalorder %v473, 0
      %vm476 = vcmp.ge.s32.totalorder %v474, 0
      %vm477 = vcmp.lt.s32.totalorder %v473, 4
      %vm478 = vcmp.lt.s32.totalorder %v474, 4
      %vm479 = vmand %vm475, %vm477
      %vm480 = vmand %vm476, %vm478
      %v481 = vsel %vm479, 1, 0
      %v482 = vsel %vm480, 1, 0
      %vm483 = vcmp.eq.s32.totalorder %v481, 1
      %vm484 = vcmp.eq.s32.totalorder %v482, 1
      %vm485 = vmpackc.low %vm483, %vm483
      %vm486 = vmpackc.low %vm484, %vm484
      %v487 = vsel %vm485, %v471, 0
      %v488 = vsel %vm486, %v472, 0
      %v489 = vld [vmem:[%s1] sm:$0xf]
      %v490 = vld [vmem:[%s1 + $0x4] sm:$0xf]
      %v491 = vld [vmem:[%s1 + $0x8] sm:$0xf]
      %v492 = vld [vmem:[%s1 + $0xc] sm:$0xf]
      %v493 = vld [vmem:[%s1 + $0x10] sm:$0xf]
      %v494 = vld [vmem:[%s1 + $0x14] sm:$0xf]
      %v495 = vld [vmem:[%s1 + $0x18] sm:$0xf]
      %v496 = vld [vmem:[%s1 + $0x1c] sm:$0xf]
      %v497 = vld [vmem:[%s435 + $0x8] sm:$0x1]
      %s498 = scalar_lea.vmem %s1, 32
      %v499 = vld [vmem:[%s498] sm:$0xf]
      %v500 = vld [vmem:[%s498 + $0x4] sm:$0xf]
      %v501 = vld [vmem:[%s498 + $0x8] sm:$0xf]
      %v502 = vld [vmem:[%s498 + $0xc] sm:$0xf]
      %v503 = vld [vmem:[%s498 + $0x10] sm:$0xf]
      %v504 = vld [vmem:[%s498 + $0x14] sm:$0xf]
      %v505 = vld [vmem:[%s498 + $0x18] sm:$0xf]
      %v506 = vld [vmem:[%s498 + $0x1c] sm:$0xf]
      %v510 = vunpack.c.l.b16 %v471
      %v511 = vunpack.c.l.b16 %v472
      %v512 = vunpack.c.l.b16 %v497
      %v513 = vpack.c.b16 %v511, %v510
      %v514 = vpack.c.b16 %v512, %v512
      %vm515 = vsmask.f32 7424
      %v517 = vshrl.u32 %v513, 16
      %v519 = vshll.u32 %v513, 16
      %v521 = vrot.slane %v519, 1
      %v522 = vor.u32 %v517, %v521
      %v524 = vshll.u32 %v514, 16
      %v526 = vrot.slane %v524, 1
      %v527 = vsel %vm515, %v522, %v526
      %v536 = vunpack.c.l.b16 %v499
      %v537 = vunpack.c.l.b16 %v500
      %v538 = vunpack.c.l.b16 %v501
      %v539 = vunpack.c.l.b16 %v502
      %v540 = vunpack.c.l.b16 %v503
      %v541 = vunpack.c.l.b16 %v504
      %v542 = vunpack.c.l.b16 %v505
      %v543 = vunpack.c.l.b16 %v506
      %v544 = vpack.c.b16 %v537, %v536
      %v545 = vpack.c.b16 %v539, %v538
      %v546 = vpack.c.b16 %v541, %v540
      %v547 = vpack.c.b16 %v543, %v542
      %vm552 = vcmask 523264
      %v554 = vsel %vm552, %v527, 0
      %556 = vmatprep.subr.bf16.mxu0 0
      %557 = vmatpush1.bf16.msra.mxu0 %v544
      %558 = vmatprep.subr.bf16.mxu0 0
      %559 = vmatpush1.bf16.msra.mxu0 %v545
      %560 = vmatprep.subr.bf16.mxu0 0
      %561 = vmatpush1.bf16.msra.mxu0 %v546
      %562 = vmatprep.subr.bf16.mxu0 0
      %563 = vmatpush1.bf16.msra.mxu0 %v547
      %564 = vmatprep.subr.bf16.mxu0 0
      %565 = vmatpush1.bf16.msra.mxu0 0
      %566 = vmatprep.subr.bf16.mxu0 0
      %567 = vmatpush1.bf16.msra.mxu0 0
      %568 = vmatprep.subr.bf16.mxu0 0
      %569 = vmatpush1.bf16.msra.mxu0 0
      %570 = vmatprep.subr.bf16.mxu0 0
      %571 = vmatpush1.bf16.msra.mxu0 0
      %572 = vmatprep.subr.bf16.mxu0 0
      %573 = vmatpush1.bf16.msra.mxu0 0
      %574 = vmatprep.subr.bf16.mxu0 0
      %575 = vmatpush1.bf16.msra.mxu0 0
      %576 = vmatprep.subr.bf16.mxu0 0
      %577 = vmatpush1.bf16.msra.mxu0 0
      %578 = vmatprep.subr.bf16.mxu0 0
      %579 = vmatpush1.bf16.msra.mxu0 0
      %580 = vmatprep.subr.bf16.mxu0 0
      %581 = vmatpush1.bf16.msra.mxu0 0
      %582 = vmatprep.subr.bf16.mxu0 0
      %583 = vmatpush1.bf16.msra.mxu0 0
      %584 = vmatprep.subr.bf16.mxu0 0
      %585 = vmatpush1.bf16.msra.mxu0 0
      %586 = vmatprep.subr.bf16.mxu0 0
      %587 = vmatpush1.bf16.msra.mxu0 0
      %588 = vmatprep.mubr.bf16.mxu0 0
      %589 = vmatmul.mubr.bf16.gmra.mrb[0].mxu0 %v554
      %v590 = vpop.f32.mrb[0].mxu0
      %v591 = vadd.f32 0.0, %v590
      %v592 = vpop.f32.mrb[0].mxu0
      %v593 = vpop.f32.mrb[0].mxu0
      %v594 = vadd.f32 0.0, %v593
      %v595 = vpop.f32.mrb[0].mxu0
      %596 = vdwg.mxu0
      %v599 = vunpack.c.l.b16 %v487
      %v600 = vunpack.c.l.b16 %v488
      %v601 = vpack.c.b16 %v600, %v599
      %v610 = vunpack.c.l.b16 %v489
      %v611 = vunpack.c.l.b16 %v490
      %v612 = vunpack.c.l.b16 %v491
      %v613 = vunpack.c.l.b16 %v492
      %v614 = vunpack.c.l.b16 %v493
      %v615 = vunpack.c.l.b16 %v494
      %v616 = vunpack.c.l.b16 %v495
      %v617 = vunpack.c.l.b16 %v496
      %v618 = vpack.c.b16 %v611, %v610
      %v619 = vpack.c.b16 %v613, %v612
      %v620 = vpack.c.b16 %v615, %v614
      %v621 = vpack.c.b16 %v617, %v616
      %v627 = vsel %vm552, %v601, 0
      %629 = vmatprep.subr.bf16.mxu0 0
      %630 = vmatpush1.bf16.msra.mxu0 %v618
      %631 = vmatprep.subr.bf16.mxu0 0
      %632 = vmatpush1.bf16.msra.mxu0 %v619
      %633 = vmatprep.subr.bf16.mxu0 0
      %634 = vmatpush1.bf16.msra.mxu0 %v620
      %635 = vmatprep.subr.bf16.mxu0 0
      %636 = vmatpush1.bf16.msra.mxu0 %v621
      %637 = vmatprep.subr.bf16.mxu0 0
      %638 = vmatpush1.bf16.msra.mxu0 0
      %639 = vmatprep.subr.bf16.mxu0 0
      %640 = vmatpush1.bf16.msra.mxu0 0
      %641 = vmatprep.subr.bf16.mxu0 0
      %642 = vmatpush1.bf16.msra.mxu0 0
      %643 = vmatprep.subr.bf16.mxu0 0
      %644 = vmatpush1.bf16.msra.mxu0 0
      %645 = vmatprep.subr.bf16.mxu0 0
      %646 = vmatpush1.bf16.msra.mxu0 0
      %647 = vmatprep.subr.bf16.mxu0 0
      %648 = vmatpush1.bf16.msra.mxu0 0
      %649 = vmatprep.subr.bf16.mxu0 0
      %650 = vmatpush1.bf16.msra.mxu0 0
      %651 = vmatprep.subr.bf16.mxu0 0
      %652 = vmatpush1.bf16.msra.mxu0 0
      %653 = vmatprep.subr.bf16.mxu0 0
      %654 = vmatpush1.bf16.msra.mxu0 0
      %655 = vmatprep.subr.bf16.mxu0 0
      %656 = vmatpush1.bf16.msra.mxu0 0
      %657 = vmatprep.subr.bf16.mxu0 0
      %658 = vmatpush1.bf16.msra.mxu0 0
      %659 = vmatprep.subr.bf16.mxu0 0
      %660 = vmatpush1.bf16.msra.mxu0 0
      %661 = vmatprep.mubr.bf16.mxu0 0
      %662 = vmatmul.mubr.bf16.gmra.mrb[0].mxu0 %v627
      %v663 = vpop.f32.mrb[0].mxu0
      %v664 = vadd.f32 %v591, %v663
      %v665 = vpop.f32.mrb[0].mxu0
      %v666 = vpop.f32.mrb[0].mxu0
      %v667 = vadd.f32 %v594, %v666
      %v668 = vpop.f32.mrb[0].mxu0
      %669 = vdwg.mxu0
      %v670 = vld [vmem:[%s435] sm:$0xe]
      %v671 = vadd.s32 %v469, 1
      %v672 = vadd.s32 %v470, 1
      %vm673 = vcmp.ge.s32.totalorder %v671, 0
      %vm674 = vcmp.ge.s32.totalorder %v672, 0
      %vm675 = vcmp.lt.s32.totalorder %v671, 4
      %vm676 = vcmp.lt.s32.totalorder %v672, 4
      %vm677 = vmand %vm673, %vm675
      %vm678 = vmand %vm674, %vm676
      %v679 = vsel %vm677, 1, 0
      %v680 = vsel %vm678, 1, 0
      %vm681 = vcmp.eq.s32.totalorder %v679, 1
      %vm682 = vcmp.eq.s32.totalorder %v680, 1
      %vm683 = vmpackc.low %vm681, %vm681
      %vm684 = vmpackc.low %vm682, %vm682
      %v685 = vsel %vm683, 65537, 0
      %v686 = vsel %vm684, 65537, 0
      %vm687 = vcmask 1040384
      %vm688 = vcmask 1044484
      %vm689 = vmor %vm687, %vm688
      %v690 = vrot.slane %v685, 7
      %v691 = vrot.slane %v690, 4
      %v692 = vrot.slane %v686, 7
      %v693 = vsel %vm689, %v691, %v692
      %v694 = vrot.slane %v692, 4
      %vm695 = vcmp.ne.s16.totalorder %v690, 0
      %vm696 = vcmp.ne.s16.totalorder %v693, 0
      %vm697 = vcmp.ne.s16.totalorder %v694, 0
      %v698 = vsel %vm695, %v670, 0
      %v699 = vsel %vm696, %v472, 0
      %v700 = vsel %vm697, %v497, 0
      %s701 = scalar_lea.vmem %s1, 64
      %v702 = vld [vmem:[%s701] sm:$0xf]
      %v703 = vld [vmem:[%s701 + $0x4] sm:$0xf]
      %v704 = vld [vmem:[%s701 + $0x8] sm:$0xf]
      %v705 = vld [vmem:[%s701 + $0xc] sm:$0xf]
      %v706 = vld [vmem:[%s701 + $0x10] sm:$0xf]
      %v707 = vld [vmem:[%s701 + $0x14] sm:$0xf]
      %v708 = vld [vmem:[%s701 + $0x18] sm:$0xf]
      %v709 = vld [vmem:[%s701 + $0x1c] sm:$0xf]
      %v713 = vunpack.c.l.b16 %v698
      %v714 = vunpack.c.l.b16 %v699
      %v715 = vunpack.c.l.b16 %v700
      %v716 = vpack.c.b16 %v714, %v713
      %v717 = vpack.c.b16 %v715, %v715
      %vm718 = vcmask 1046528
      %v719 = vrot.slane %v716, 1
      %v720 = vrot.slane %v717, 1
      %v721 = vsel %vm718, %v719, %v720
      %v730 = vunpack.c.l.b16 %v702
      %v731 = vunpack.c.l.b16 %v703
      %v732 = vunpack.c.l.b16 %v704
      %v733 = vunpack.c.l.b16 %v705
      %v734 = vunpack.c.l.b16 %v706
      %v735 = vunpack.c.l.b16 %v707
      %v736 = vunpack.c.l.b16 %v708
      %v737 = vunpack.c.l.b16 %v709
      %v738 = vpack.c.b16 %v731, %v730
      %v739 = vpack.c.b16 %v733, %v732
      %v740 = vpack.c.b16 %v735, %v734
      %v741 = vpack.c.b16 %v737, %v736
      %v747 = vsel %vm552, %v721, 0
      %749 = vmatprep.subr.bf16.mxu0 0
      %750 = vmatpush1.bf16.msra.mxu0 %v738
      %751 = vmatprep.subr.bf16.mxu0 0
      %752 = vmatpush1.bf16.msra.mxu0 %v739
      %753 = vmatprep.subr.bf16.mxu0 0
      %754 = vmatpush1.bf16.msra.mxu0 %v740
      %755 = vmatprep.subr.bf16.mxu0 0
      %756 = vmatpush1.bf16.msra.mxu0 %v741
      %757 = vmatprep.subr.bf16.mxu0 0
      %758 = vmatpush1.bf16.msra.mxu0 0
      %759 = vmatprep.subr.bf16.mxu0 0
      %760 = vmatpush1.bf16.msra.mxu0 0
      %761 = vmatprep.subr.bf16.mxu0 0
      %762 = vmatpush1.bf16.msra.mxu0 0
      %763 = vmatprep.subr.bf16.mxu0 0
      %764 = vmatpush1.bf16.msra.mxu0 0
      %765 = vmatprep.subr.bf16.mxu0 0
      %766 = vmatpush1.bf16.msra.mxu0 0
      %767 = vmatprep.subr.bf16.mxu0 0
      %768 = vmatpush1.bf16.msra.mxu0 0
      %769 = vmatprep.subr.bf16.mxu0 0
      %770 = vmatpush1.bf16.msra.mxu0 0
      %771 = vmatprep.subr.bf16.mxu0 0
      %772 = vmatpush1.bf16.msra.mxu0 0
      %773 = vmatprep.subr.bf16.mxu0 0
      %774 = vmatpush1.bf16.msra.mxu0 0
      %775 = vmatprep.subr.bf16.mxu0 0
      %776 = vmatpush1.bf16.msra.mxu0 0
      %777 = vmatprep.subr.bf16.mxu0 0
      %778 = vmatpush1.bf16.msra.mxu0 0
      %779 = vmatprep.subr.bf16.mxu0 0
      %780 = vmatpush1.bf16.msra.mxu0 0
      %781 = vmatprep.mubr.bf16.mxu0 0
      %782 = vmatmul.mubr.bf16.gmra.mrb[0].mxu0 %v747
      %v783 = vpop.f32.mrb[0].mxu0
      %v784 = vadd.f32 0.0, %v783
      %v785 = vpop.f32.mrb[0].mxu0
      %v786 = vpop.f32.mrb[0].mxu0
      %v787 = vadd.f32 0.0, %v786
      %v788 = vpop.f32.mrb[0].mxu0
      %789 = vdwg.mxu0
      %v790 = vadd.f32 %v664, %v784
      %v791 = vadd.f32 %v667, %v787
      %v792 = vld [vmem:[%s435] sm:$0xc]
      %v793 = vld [vmem:[%s435 + $0x8] sm:$0x3]
      %v794 = vsel %vm485, 65537, 0
      %v795 = vsel %vm486, 65537, 0
      %vm796 = vcmask 1041408
      %vm797 = vcmask 1045508
      %vm798 = vmor %vm796, %vm797
      %v799 = vrot.slane %v794, 6
      %v800 = vrot.slane %v799, 4
      %v801 = vrot.slane %v795, 6
      %v802 = vsel %vm798, %v800, %v801
      %v803 = vrot.slane %v801, 4
      %vm804 = vcmp.ne.s16.totalorder %v799, 0
      %vm805 = vcmp.ne.s16.totalorder %v802, 0
      %vm806 = vcmp.ne.s16.totalorder %v803, 0
      %v807 = vsel %vm804, %v792, 0
      %v808 = vsel %vm805, %v472, 0
      %v809 = vsel %vm806, %v793, 0
      %s810 = scalar_lea.vmem %s1, 96
      %v811 = vld [vmem:[%s810] sm:$0xf]
      %v812 = vld [vmem:[%s810 + $0x4] sm:$0xf]
      %v813 = vld [vmem:[%s810 + $0x8] sm:$0xf]
      %v814 = vld [vmem:[%s810 + $0xc] sm:$0xf]
      %v815 = vld [vmem:[%s810 + $0x10] sm:$0xf]
      %v816 = vld [vmem:[%s810 + $0x14] sm:$0xf]
      %v817 = vld [vmem:[%s810 + $0x18] sm:$0xf]
      %v818 = vld [vmem:[%s810 + $0x1c] sm:$0xf]
      %v822 = vunpack.c.l.b16 %v807
      %v823 = vunpack.c.l.b16 %v808
      %v824 = vunpack.c.l.b16 %v809
      %v825 = vpack.c.b16 %v823, %v822
      %v826 = vpack.c.b16 %v824, %v824
      %vm827 = vcmask 1045504
      %v828 = vrot.slane %v825, 2
      %v829 = vrot.slane %v826, 2
      %v830 = vsel %vm827, %v828, %v829
      %v839 = vunpack.c.l.b16 %v811
      %v840 = vunpack.c.l.b16 %v812
      %v841 = vunpack.c.l.b16 %v813
      %v842 = vunpack.c.l.b16 %v814
      %v843 = vunpack.c.l.b16 %v815
      %v844 = vunpack.c.l.b16 %v816
      %v845 = vunpack.c.l.b16 %v817
      %v846 = vunpack.c.l.b16 %v818
      %v847 = vpack.c.b16 %v840, %v839
      %v848 = vpack.c.b16 %v842, %v841
      %v849 = vpack.c.b16 %v844, %v843
      %v850 = vpack.c.b16 %v846, %v845
      %v856 = vsel %vm552, %v830, 0
      %858 = vmatprep.subr.bf16.mxu0 0
      %859 = vmatpush1.bf16.msra.mxu0 %v847
      %860 = vmatprep.subr.bf16.mxu0 0
      %861 = vmatpush1.bf16.msra.mxu0 %v848
      %862 = vmatprep.subr.bf16.mxu0 0
      %863 = vmatpush1.bf16.msra.mxu0 %v849
      %864 = vmatprep.subr.bf16.mxu0 0
      %865 = vmatpush1.bf16.msra.mxu0 %v850
      %866 = vmatprep.subr.bf16.mxu0 0
      %867 = vmatpush1.bf16.msra.mxu0 0
      %868 = vmatprep.subr.bf16.mxu0 0
      %869 = vmatpush1.bf16.msra.mxu0 0
      %870 = vmatprep.subr.bf16.mxu0 0
      %871 = vmatpush1.bf16.msra.mxu0 0
      %872 = vmatprep.subr.bf16.mxu0 0
      %873 = vmatpush1.bf16.msra.mxu0 0
      %874 = vmatprep.subr.bf16.mxu0 0
      %875 = vmatpush1.bf16.msra.mxu0 0
      %876 = vmatprep.subr.bf16.mxu0 0
      %877 = vmatpush1.bf16.msra.mxu0 0
      %878 = vmatprep.subr.bf16.mxu0 0
      %879 = vmatpush1.bf16.msra.mxu0 0
      %880 = vmatprep.subr.bf16.mxu0 0
      %881 = vmatpush1.bf16.msra.mxu0 0
      %882 = vmatprep.subr.bf16.mxu0 0
      %883 = vmatpush1.bf16.msra.mxu0 0
      %884 = vmatprep.subr.bf16.mxu0 0
      %885 = vmatpush1.bf16.msra.mxu0 0
      %886 = vmatprep.subr.bf16.mxu0 0
      %887 = vmatpush1.bf16.msra.mxu0 0
      %888 = vmatprep.subr.bf16.mxu0 0
      %889 = vmatpush1.bf16.msra.mxu0 0
      %890 = vmatprep.mubr.bf16.mxu0 0
      %891 = vmatmul.mubr.bf16.gmra.mrb[0].mxu0 %v856
      %v892 = vpop.f32.mrb[0].mxu0
      %v893 = vadd.f32 0.0, %v892
      %v894 = vpop.f32.mrb[0].mxu0
      %v895 = vpop.f32.mrb[0].mxu0
      %v896 = vadd.f32 0.0, %v895
      %v897 = vpop.f32.mrb[0].mxu0
      %898 = vdwg.mxu0
      %v899 = vadd.f32 %v790, %v893
      %v900 = vadd.f32 %v791, %v896
      %v901 = vld [vmem:[%s435 + $0x8] sm:$0x7]
      %s902 = scalar_lea.vmem %s1, 128
      %v903 = vld [vmem:[%s902] sm:$0xf]
      %v904 = vld [vmem:[%s902 + $0x4] sm:$0xf]
      %v905 = vld [vmem:[%s902 + $0x8] sm:$0xf]
      %v906 = vld [vmem:[%s902 + $0xc] sm:$0xf]
      %v907 = vld [vmem:[%s902 + $0x10] sm:$0xf]
      %v908 = vld [vmem:[%s902 + $0x14] sm:$0xf]
      %v909 = vld [vmem:[%s902 + $0x18] sm:$0xf]
      %v910 = vld [vmem:[%s902 + $0x1c] sm:$0xf]
      %v913 = vunpack.c.l.b16 %v792
      %v914 = vunpack.c.l.b16 %v901
      %v915 = vpack.c.b16 %v511, %v913
      %v916 = vpack.c.b16 %v914, %v914
      %vm917 = vsmask.f32 5376
      %v919 = vshrl.u32 %v915, 16
      %v921 = vrot.slane %v919, 2
      %v922 = vshll.u32 %v915, 16
      %v924 = vrot.slane %v922, 3
      %v925 = vor.u32 %v921, %v924
      %v927 = vshrl.u32 %v916, 16
      %v929 = vrot.slane %v927, 2
      %v930 = vshll.u32 %v916, 16
      %v932 = vrot.slane %v930, 3
      %v933 = vor.u32 %v929, %v932
      %v934 = vsel %vm917, %v925, %v933
      %v943 = vunpack.c.l.b16 %v903
      %v944 = vunpack.c.l.b16 %v904
      %v945 = vunpack.c.l.b16 %v905
      %v946 = vunpack.c.l.b16 %v906
      %v947 = vunpack.c.l.b16 %v907
      %v948 = vunpack.c.l.b16 %v908
      %v949 = vunpack.c.l.b16 %v909
      %v950 = vunpack.c.l.b16 %v910
      %v951 = vpack.c.b16 %v944, %v943
      %v952 = vpack.c.b16 %v946, %v945
      %v953 = vpack.c.b16 %v948, %v947
      %v954 = vpack.c.b16 %v950, %v949
      %v960 = vsel %vm552, %v934, 0
      %962 = vmatprep.subr.bf16.mxu0 0
      %963 = vmatpush1.bf16.msra.mxu0 %v951
      %964 = vmatprep.subr.bf16.mxu0 0
      %965 = vmatpush1.bf16.msra.mxu0 %v952
      %966 = vmatprep.subr.bf16.mxu0 0
      %967 = vmatpush1.bf16.msra.mxu0 %v953
      %968 = vmatprep.subr.bf16.mxu0 0
      %969 = vmatpush1.bf16.msra.mxu0 %v954
      %970 = vmatprep.subr.bf16.mxu0 0
      %971 = vmatpush1.bf16.msra.mxu0 0
      %972 = vmatprep.subr.bf16.mxu0 0
      %973 = vmatpush1.bf16.msra.mxu0 0
      %974 = vmatprep.subr.bf16.mxu0 0
      %975 = vmatpush1.bf16.msra.mxu0 0
      %976 = vmatprep.subr.bf16.mxu0 0
      %977 = vmatpush1.bf16.msra.mxu0 0
      %978 = vmatprep.subr.bf16.mxu0 0
      %979 = vmatpush1.bf16.msra.mxu0 0
      %980 = vmatprep.subr.bf16.mxu0 0
      %981 = vmatpush1.bf16.msra.mxu0 0
      %982 = vmatprep.subr.bf16.mxu0 0
      %983 = vmatpush1.bf16.msra.mxu0 0
      %984 = vmatprep.subr.bf16.mxu0 0
      %985 = vmatpush1.bf16.msra.mxu0 0
      %986 = vmatprep.subr.bf16.mxu0 0
      %987 = vmatpush1.bf16.msra.mxu0 0
      %988 = vmatprep.subr.bf16.mxu0 0
      %989 = vmatpush1.bf16.msra.mxu0 0
      %990 = vmatprep.subr.bf16.mxu0 0
      %991 = vmatpush1.bf16.msra.mxu0 0
      %992 = vmatprep.subr.bf16.mxu0 0
      %993 = vmatpush1.bf16.msra.mxu0 0
      %994 = vmatprep.mubr.bf16.mxu0 0
      %995 = vmatmul.mubr.bf16.gmra.mrb[0].mxu0 %v960
      %v996 = vpop.f32.mrb[0].mxu0
      %v997 = vadd.f32 0.0, %v996
      %v998 = vpop.f32.mrb[0].mxu0
      %v999 = vpop.f32.mrb[0].mxu0
      %v1000 = vadd.f32 0.0, %v999
      %v1001 = vpop.f32.mrb[0].mxu0
      %1002 = vdwg.mxu0
      %v1003 = vadd.f32 %v899, %v997
      %v1004 = vadd.f32 %v900, %v1000
      %v1005 = vld [vmem:[%s435] sm:$0x8]
      %vm1006 = vcmask 1042432
      %vm1007 = vcmask 1046532
      %vm1008 = vmor %vm1006, %vm1007
      %v1009 = vrot.slane %v685, 5
      %v1010 = vrot.slane %v1009, 4
      %v1011 = vrot.slane %v686, 5
      %v1012 = vsel %vm1008, %v1010, %v1011
      %v1013 = vrot.slane %v1011, 4
      %vm1014 = vcmp.ne.s16.totalorder %v1009, 0
      %vm1015 = vcmp.ne.s16.totalorder %v1012, 0
      %vm1016 = vcmp.ne.s16.totalorder %v1013, 0
      %v1017 = vsel %vm1014, %v1005, 0
      %v1018 = vsel %vm1015, %v472, 0
      %v1019 = vsel %vm1016, %v901, 0
      %s1020 = scalar_lea.vmem %s1, 160
      %v1021 = vld [vmem:[%s1020] sm:$0xf]
      %v1022 = vld [vmem:[%s1020 + $0x4] sm:$0xf]
      %v1023 = vld [vmem:[%s1020 + $0x8] sm:$0xf]
      %v1024 = vld [vmem:[%s1020 + $0xc] sm:$0xf]
      %v1025 = vld [vmem:[%s1020 + $0x10] sm:$0xf]
      %v1026 = vld [vmem:[%s1020 + $0x14] sm:$0xf]
      %v1027 = vld [vmem:[%s1020 + $0x18] sm:$0xf]
      %v1028 = vld [vmem:[%s1020 + $0x1c] sm:$0xf]
      %v1032 = vunpack.c.l.b16 %v1017
      %v1033 = vunpack.c.l.b16 %v1018
      %v1034 = vunpack.c.l.b16 %v1019
      %v1035 = vpack.c.b16 %v1033, %v1032
      %v1036 = vpack.c.b16 %v1034, %v1034
      %vm1037 = vcmask 1044480
      %v1038 = vrot.slane %v1035, 3
      %v1039 = vrot.slane %v1036, 3
      %v1040 = vsel %vm1037, %v1038, %v1039
      %v1049 = vunpack.c.l.b16 %v1021
      %v1050 = vunpack.c.l.b16 %v1022
      %v1051 = vunpack.c.l.b16 %v1023
      %v1052 = vunpack.c.l.b16 %v1024
      %v1053 = vunpack.c.l.b16 %v1025
      %v1054 = vunpack.c.l.b16 %v1026
      %v1055 = vunpack.c.l.b16 %v1027
      %v1056 = vunpack.c.l.b16 %v1028
      %v1057 = vpack.c.b16 %v1050, %v1049
      %v1058 = vpack.c.b16 %v1052, %v1051
      %v1059 = vpack.c.b16 %v1054, %v1053
      %v1060 = vpack.c.b16 %v1056, %v1055
      %v1066 = vsel %vm552, %v1040, 0
      %1068 = vmatprep.subr.bf16.mxu0 0
      %1069 = vmatpush1.bf16.msra.mxu0 %v1057
      %1070 = vmatprep.subr.bf16.mxu0 0
      %1071 = vmatpush1.bf16.msra.mxu0 %v1058
      %1072 = vmatprep.subr.bf16.mxu0 0
      %1073 = vmatpush1.bf16.msra.mxu0 %v1059
      %1074 = vmatprep.subr.bf16.mxu0 0
      %1075 = vmatpush1.bf16.msra.mxu0 %v1060
      %1076 = vmatprep.subr.bf16.mxu0 0
      %1077 = vmatpush1.bf16.msra.mxu0 0
      %1078 = vmatprep.subr.bf16.mxu0 0
      %1079 = vmatpush1.bf16.msra.mxu0 0
      %1080 = vmatprep.subr.bf16.mxu0 0
      %1081 = vmatpush1.bf16.msra.mxu0 0
      %1082 = vmatprep.subr.bf16.mxu0 0
      %1083 = vmatpush1.bf16.msra.mxu0 0
      %1084 = vmatprep.subr.bf16.mxu0 0
      %1085 = vmatpush1.bf16.msra.mxu0 0
      %1086 = vmatprep.subr.bf16.mxu0 0
      %1087 = vmatpush1.bf16.msra.mxu0 0
      %1088 = vmatprep.subr.bf16.mxu0 0
      %1089 = vmatpush1.bf16.msra.mxu0 0
      %1090 = vmatprep.subr.bf16.mxu0 0
      %1091 = vmatpush1.bf16.msra.mxu0 0
      %1092 = vmatprep.subr.bf16.mxu0 0
      %1093 = vmatpush1.bf16.msra.mxu0 0
      %1094 = vmatprep.subr.bf16.mxu0 0
      %1095 = vmatpush1.bf16.msra.mxu0 0
      %1096 = vmatprep.subr.bf16.mxu0 0
      %1097 = vmatpush1.bf16.msra.mxu0 0
      %1098 = vmatprep.subr.bf16.mxu0 0
      %1099 = vmatpush1.bf16.msra.mxu0 0
      %1100 = vmatprep.mubr.bf16.mxu0 0
      %1101 = vmatmul.mubr.bf16.gmra.mrb[0].mxu0 %v1066
      %v1102 = vpop.f32.mrb[0].mxu0
      %v1103 = vadd.f32 0.0, %v1102
      %v1104 = vpop.f32.mrb[0].mxu0
      %v1105 = vpop.f32.mrb[0].mxu0
      %v1106 = vadd.f32 0.0, %v1105
      %v1107 = vpop.f32.mrb[0].mxu0
      %1108 = vdwg.mxu0
      %v1109 = vadd.f32 %v1003, %v1103
      %v1110 = vadd.f32 %v1004, %v1106
      %v1111 = vld [vmem:[%s435 + $0x8] sm:$0xf]
      %v1112 = vsel %vm485, %v472, 0
      %v1113 = vsel %vm486, %v1111, 0
      %s1114 = scalar_lea.vmem %s1, 192
      %v1115 = vld [vmem:[%s1114] sm:$0xf]
      %v1116 = vld [vmem:[%s1114 + $0x4] sm:$0xf]
      %v1117 = vld [vmem:[%s1114 + $0x8] sm:$0xf]
      %v1118 = vld [vmem:[%s1114 + $0xc] sm:$0xf]
      %v1119 = vld [vmem:[%s1114 + $0x10] sm:$0xf]
      %v1120 = vld [vmem:[%s1114 + $0x14] sm:$0xf]
      %v1121 = vld [vmem:[%s1114 + $0x18] sm:$0xf]
      %v1122 = vld [vmem:[%s1114 + $0x1c] sm:$0xf]
      %v1125 = vunpack.c.l.b16 %v1112
      %v1126 = vunpack.c.l.b16 %v1113
      %v1127 = vpack.c.b16 %v1126, %v1125
      %v1136 = vunpack.c.l.b16 %v1115
      %v1137 = vunpack.c.l.b16 %v1116
      %v1138 = vunpack.c.l.b16 %v1117
      %v1139 = vunpack.c.l.b16 %v1118
      %v1140 = vunpack.c.l.b16 %v1119
      %v1141 = vunpack.c.l.b16 %v1120
      %v1142 = vunpack.c.l.b16 %v1121
      %v1143 = vunpack.c.l.b16 %v1122
      %v1144 = vpack.c.b16 %v1137, %v1136
      %v1145 = vpack.c.b16 %v1139, %v1138
      %v1146 = vpack.c.b16 %v1141, %v1140
      %v1147 = vpack.c.b16 %v1143, %v1142
      %v1153 = vsel %vm552, %v1127, 0
      %1155 = vmatprep.subr.bf16.mxu0 0
      %1156 = vmatpush1.bf16.msra.mxu0 %v1144
      %1157 = vmatprep.subr.bf16.mxu0 0
      %1158 = vmatpush1.bf16.msra.mxu0 %v1145
      %1159 = vmatprep.subr.bf16.mxu0 0
      %1160 = vmatpush1.bf16.msra.mxu0 %v1146
      %1161 = vmatprep.subr.bf16.mxu0 0
      %1162 = vmatpush1.bf16.msra.mxu0 %v1147
      %1163 = vmatprep.subr.bf16.mxu0 0
      %1164 = vmatpush1.bf16.msra.mxu0 0
      %1165 = vmatprep.subr.bf16.mxu0 0
      %1166 = vmatpush1.bf16.msra.mxu0 0
      %1167 = vmatprep.subr.bf16.mxu0 0
      %1168 = vmatpush1.bf16.msra.mxu0 0
      %1169 = vmatprep.subr.bf16.mxu0 0
      %1170 = vmatpush1.bf16.msra.mxu0 0
      %1171 = vmatprep.subr.bf16.mxu0 0
      %1172 = vmatpush1.bf16.msra.mxu0 0
      %1173 = vmatprep.subr.bf16.mxu0 0
      %1174 = vmatpush1.bf16.msra.mxu0 0
      %1175 = vmatprep.subr.bf16.mxu0 0
      %1176 = vmatpush1.bf16.msra.mxu0 0
      %1177 = vmatprep.subr.bf16.mxu0 0
      %1178 = vmatpush1.bf16.msra.mxu0 0
      %1179 = vmatprep.subr.bf16.mxu0 0
      %1180 = vmatpush1.bf16.msra.mxu0 0
      %1181 = vmatprep.subr.bf16.mxu0 0
      %1182 = vmatpush1.bf16.msra.mxu0 0
      %1183 = vmatprep.subr.bf16.mxu0 0
      %1184 = vmatpush1.bf16.msra.mxu0 0
      %1185 = vmatprep.subr.bf16.mxu0 0
      %1186 = vmatpush1.bf16.msra.mxu0 0
      %1187 = vmatprep.mubr.bf16.mxu0 0
      %1188 = vmatmul.mubr.bf16.gmra.mrb[0].mxu0 %v1153
      %v1189 = vpop.f32.mrb[0].mxu0
      %v1190 = vadd.f32 0.0, %v1189
      %v1191 = vpop.f32.mrb[0].mxu0
      %v1192 = vpop.f32.mrb[0].mxu0
      %v1193 = vadd.f32 0.0, %v1192
      %v1194 = vpop.f32.mrb[0].mxu0
      %1195 = vdwg.mxu0
      %v1196 = vadd.f32 %v1109, %v1190
      %v1197 = vadd.f32 %v1110, %v1193
      %v1198 = vld [vmem:[%s435 + $0x4] sm:$0xf]
      %v1199 = vld [vmem:[%s435 + $0x8] sm:$0xf]
      %v1200 = vld [vmem:[%s435 + $0xc] sm:$0x1]
      %s1201 = scalar_lea.vmem %s1, 224
      %v1202 = vld [vmem:[%s1201] sm:$0xf]
      %v1203 = vld [vmem:[%s1201 + $0x4] sm:$0xf]
      %v1204 = vld [vmem:[%s1201 + $0x8] sm:$0xf]
      %v1205 = vld [vmem:[%s1201 + $0xc] sm:$0xf]
      %v1206 = vld [vmem:[%s1201 + $0x10] sm:$0xf]
      %v1207 = vld [vmem:[%s1201 + $0x14] sm:$0xf]
      %v1208 = vld [vmem:[%s1201 + $0x18] sm:$0xf]
      %v1209 = vld [vmem:[%s1201 + $0x1c] sm:$0xf]
      %v1213 = vunpack.c.l.b16 %v1198
      %v1214 = vunpack.c.l.b16 %v1199
      %v1215 = vunpack.c.l.b16 %v1200
      %v1216 = vpack.c.b16 %v1214, %v1213
      %v1217 = vpack.c.b16 %v1215, %v1215
      %v1219 = vshrl.u32 %v1216, 16
      %v1221 = vshll.u32 %v1216, 16
      %v1223 = vrot.slane %v1221, 1
      %v1224 = vor.u32 %v1219, %v1223
      %v1226 = vshll.u32 %v1217, 16
      %v1228 = vrot.slane %v1226, 1
      %v1229 = vsel %vm515, %v1224, %v1228
      %v1238 = vunpack.c.l.b16 %v1202
      %v1239 = vunpack.c.l.b16 %v1203
      %v1240 = vunpack.c.l.b16 %v1204
      %v1241 = vunpack.c.l.b16 %v1205
      %v1242 = vunpack.c.l.b16 %v1206
      %v1243 = vunpack.c.l.b16 %v1207
      %v1244 = vunpack.c.l.b16 %v1208
      %v1245 = vunpack.c.l.b16 %v1209
      %v1246 = vpack.c.b16 %v1239, %v1238
      %v1247 = vpack.c.b16 %v1241, %v1240
      %v1248 = vpack.c.b16 %v1243, %v1242
      %v1249 = vpack.c.b16 %v1245, %v1244
      %v1255 = vsel %vm552, %v1229, 0
      %1257 = vmatprep.subr.bf16.mxu0 0
      %1258 = vmatpush1.bf16.msra.mxu0 %v1246
      %1259 = vmatprep.subr.bf16.mxu0 0
      %1260 = vmatpush1.bf16.msra.mxu0 %v1247
      %1261 = vmatprep.subr.bf16.mxu0 0
      %1262 = vmatpush1.bf16.msra.mxu0 %v1248
      %1263 = vmatprep.subr.bf16.mxu0 0
      %1264 = vmatpush1.bf16.msra.mxu0 %v1249
      %1265 = vmatprep.subr.bf16.mxu0 0
      %1266 = vmatpush1.bf16.msra.mxu0 0
      %1267 = vmatprep.subr.bf16.mxu0 0
      %1268 = vmatpush1.bf16.msra.mxu0 0
      %1269 = vmatprep.subr.bf16.mxu0 0
      %1270 = vmatpush1.bf16.msra.mxu0 0
      %1271 = vmatprep.subr.bf16.mxu0 0
      %1272 = vmatpush1.bf16.msra.mxu0 0
      %1273 = vmatprep.subr.bf16.mxu0 0
      %1274 = vmatpush1.bf16.msra.mxu0 0
      %1275 = vmatprep.subr.bf16.mxu0 0
      %1276 = vmatpush1.bf16.msra.mxu0 0
      %1277 = vmatprep.subr.bf16.mxu0 0
      %1278 = vmatpush1.bf16.msra.mxu0 0
      %1279 = vmatprep.subr.bf16.mxu0 0
      %1280 = vmatpush1.bf16.msra.mxu0 0
      %1281 = vmatprep.subr.bf16.mxu0 0
      %1282 = vmatpush1.bf16.msra.mxu0 0
      %1283 = vmatprep.subr.bf16.mxu0 0
      %1284 = vmatpush1.bf16.msra.mxu0 0
      %1285 = vmatprep.subr.bf16.mxu0 0
      %1286 = vmatpush1.bf16.msra.mxu0 0
      %1287 = vmatprep.subr.bf16.mxu0 0
      %1288 = vmatpush1.bf16.msra.mxu0 0
      %1289 = vmatprep.mubr.bf16.mxu0 0
      %1290 = vmatmul.mubr.bf16.gmra.mrb[0].mxu0 %v1255
      %v1291 = vpop.f32.mrb[0].mxu0
      %v1292 = vadd.f32 0.0, %v1291
      %v1293 = vpop.f32.mrb[0].mxu0
      %v1294 = vpop.f32.mrb[0].mxu0
      %v1295 = vadd.f32 0.0, %v1294
      %v1296 = vpop.f32.mrb[0].mxu0
      %1297 = vdwg.mxu0
      %v1298 = vadd.f32 %v1196, %v1292
      %v1299 = vadd.f32 %v1197, %v1295
      %v1300 = vld [vmem:[%s435 + $0x4] sm:$0xe]
      %v1301 = vsel %vm695, %v1300, 0
      %v1302 = vsel %vm696, %v1199, 0
      %v1303 = vsel %vm697, %v1200, 0
      %s1304 = scalar_lea.vmem %s1, 256
      %v1305 = vld [vmem:[%s1304] sm:$0xf]
      %v1306 = vld [vmem:[%s1304 + $0x4] sm:$0xf]
      %v1307 = vld [vmem:[%s1304 + $0x8] sm:$0xf]
      %v1308 = vld [vmem:[%s1304 + $0xc] sm:$0xf]
      %v1309 = vld [vmem:[%s1304 + $0x10] sm:$0xf]
      %v1310 = vld [vmem:[%s1304 + $0x14] sm:$0xf]
      %v1311 = vld [vmem:[%s1304 + $0x18] sm:$0xf]
      %v1312 = vld [vmem:[%s1304 + $0x1c] sm:$0xf]
      %v1316 = vunpack.c.l.b16 %v1301
      %v1317 = vunpack.c.l.b16 %v1302
      %v1318 = vunpack.c.l.b16 %v1303
      %v1319 = vpack.c.b16 %v1317, %v1316
      %v1320 = vpack.c.b16 %v1318, %v1318
      %v1321 = vrot.slane %v1319, 1
      %v1322 = vrot.slane %v1320, 1
      %v1323 = vsel %vm718, %v1321, %v1322
      %v1332 = vunpack.c.l.b16 %v1305
      %v1333 = vunpack.c.l.b16 %v1306
      %v1334 = vunpack.c.l.b16 %v1307
      %v1335 = vunpack.c.l.b16 %v1308
      %v1336 = vunpack.c.l.b16 %v1309
      %v1337 = vunpack.c.l.b16 %v1310
      %v1338 = vunpack.c.l.b16 %v1311
      %v1339 = vunpack.c.l.b16 %v1312
      %v1340 = vpack.c.b16 %v1333, %v1332
      %v1341 = vpack.c.b16 %v1335, %v1334
      %v1342 = vpack.c.b16 %v1337, %v1336
      %v1343 = vpack.c.b16 %v1339, %v1338
      %v1349 = vsel %vm552, %v1323, 0
      %1351 = vmatprep.subr.bf16.mxu0 0
      %1352 = vmatpush1.bf16.msra.mxu0 %v1340
      %1353 = vmatprep.subr.bf16.mxu0 0
      %1354 = vmatpush1.bf16.msra.mxu0 %v1341
      %1355 = vmatprep.subr.bf16.mxu0 0
      %1356 = vmatpush1.bf16.msra.mxu0 %v1342
      %1357 = vmatprep.subr.bf16.mxu0 0
      %1358 = vmatpush1.bf16.msra.mxu0 %v1343
      %1359 = vmatprep.subr.bf16.mxu0 0
      %1360 = vmatpush1.bf16.msra.mxu0 0
      %1361 = vmatprep.subr.bf16.mxu0 0
      %1362 = vmatpush1.bf16.msra.mxu0 0
      %1363 = vmatprep.subr.bf16.mxu0 0
      %1364 = vmatpush1.bf16.msra.mxu0 0
      %1365 = vmatprep.subr.bf16.mxu0 0
      %1366 = vmatpush1.bf16.msra.mxu0 0
      %1367 = vmatprep.subr.bf16.mxu0 0
      %1368 = vmatpush1.bf16.msra.mxu0 0
      %1369 = vmatprep.subr.bf16.mxu0 0
      %1370 = vmatpush1.bf16.msra.mxu0 0
      %1371 = vmatprep.subr.bf16.mxu0 0
      %1372 = vmatpush1.bf16.msra.mxu0 0
      %1373 = vmatprep.subr.bf16.mxu0 0
      %1374 = vmatpush1.bf16.msra.mxu0 0
      %1375 = vmatprep.subr.bf16.mxu0 0
      %1376 = vmatpush1.bf16.msra.mxu0 0
      %1377 = vmatprep.subr.bf16.mxu0 0
      %1378 = vmatpush1.bf16.msra.mxu0 0
      %1379 = vmatprep.subr.bf16.mxu0 0
      %1380 = vmatpush1.bf16.msra.mxu0 0
      %1381 = vmatprep.subr.bf16.mxu0 0
      %1382 = vmatpush1.bf16.msra.mxu0 0
      %1383 = vmatprep.mubr.bf16.mxu0 0
      %1384 = vmatmul.mubr.bf16.gmra.mrb[0].mxu0 %v1349
      %v1385 = vpop.f32.mrb[0].mxu0
      %v1386 = vadd.f32 0.0, %v1385
      %v1387 = vpop.f32.mrb[0].mxu0
      %v1388 = vpop.f32.mrb[0].mxu0
      %v1389 = vadd.f32 0.0, %v1388
      %v1390 = vpop.f32.mrb[0].mxu0
      %1391 = vdwg.mxu0
      %v1392 = vadd.f32 %v1298, %v1386
      %v1393 = vadd.f32 %v1299, %v1389
      %v1394 = vld [vmem:[%s2] sm:$0x1]
      %v1395 = vld [vmem:[%s3] sm:$0x1]
      %v1396 = vsel %vm552, %v1392, 0.0
      %v1397 = vsel %vm552, %v1393, 0.0
      %v1398 = vadd.f32 %v1396, %v1397
      %1399 = vadd.xlane.f32.xlu0 %v1398
      %v1400 = vpop.xlane.xlu0 %1399
      %v1401 = vrot.slane %v1400, 4
      %v1402 = vadd.f32 %v1400, %v1401
      %v1403 = vrot.slane %v1402, 2
      %v1404 = vadd.f32 %v1402, %v1403
      %v1405 = vrot.slane %v1404, 1
      %v1406 = vadd.f32 %v1404, %v1405
      %s1407 = vtos %v1406
      %v1408 = vmul.f32 %v1392, %v1392
      %v1409 = vmul.f32 %v1393, %v1393
      %v1410 = vsel %vm552, %v1408, 0.0
      %v1411 = vsel %vm552, %v1409, 0.0
      %v1412 = vadd.f32 %v1410, %v1411
      %1413 = vadd.xlane.f32.xlu0 %v1412
      %v1414 = vpop.xlane.xlu0 %1413
      %v1415 = vrot.slane %v1414, 4
      %v1416 = vadd.f32 %v1414, %v1415
      %v1417 = vrot.slane %v1416, 2
      %v1418 = vadd.f32 %v1416, %v1417
      %v1419 = vrot.slane %v1418, 1
      %v1420 = vadd.f32 %v1418, %v1419
      %s1421 = vtos %v1420
      %v1422 = vrcp.pop 1024.0
      %s1423 = vtos %v1422
      %s1424 = smul.f32 %s1407, %s1423
      %v1425 = vrcp.pop 1024.0
      %s1426 = vtos %v1425
      %s1427 = smul.f32 %s1421, %s1426
      %s1428 = smul.f32 %s1424, %s1424
      %s1429 = ssub.f32 %s1427, %s1428
      %s1430 = smax.f32 %s1429, 0.0
      %v1431 = vstv %s1424
      %v1432 = vsub.f32 %v1392, %v1431
      %v1433 = vsub.f32 %v1393, %v1431
      %s1434 = sadd.f32 %s1430, 1e-05
      %v1435 = vstv %s1434
      %v1436 = vrsqrt.pop %v1435
      %s1437 = vtos %v1436
      %v1438 = vstv %s1437
      %v1439 = vmul.f32 %v1432, %v1438
      %v1440 = vmul.f32 %v1433, %v1438
      %v1442 = vlaneseq
      %v1443 = vshrl.u32 %v1442, 7
      %v1444 = vsub.s32 0, %v1443
      %v1445 = vrot.slane %v1394, %v1444
      %v1447 = vmul.f32 %v1439, %v1445
      %v1448 = vmul.f32 %v1440, %v1445
      %v1450 = vlaneseq
      %v1451 = vshrl.u32 %v1450, 7
      %v1452 = vsub.s32 0, %v1451
      %v1453 = vrot.slane %v1395, %v1452
      %v1455 = vadd.f32 %v1447, %v1453
      %v1456 = vadd.f32 %v1448, %v1453
      %v1457 = vmax.f32 %v1455, 0.0
      %v1458 = vmax.f32 %v1456, 0.0
      %v1459 = vpack.c.bf16 %v1458, %v1457
      %v1460 = vld [vmem:[%s4] sm:$0xf]
      %v1461 = vld [vmem:[%s4 + $0x4] sm:$0xf]
      %v1462 = vld [vmem:[%s4 + $0x8] sm:$0xf]
      %v1463 = vld [vmem:[%s4 + $0xc] sm:$0xf]
      %v1464 = vld [vmem:[%s4 + $0x10] sm:$0xf]
      %v1465 = vld [vmem:[%s4 + $0x14] sm:$0xf]
      %v1466 = vld [vmem:[%s4 + $0x18] sm:$0xf]
      %v1467 = vld [vmem:[%s4 + $0x1c] sm:$0xf]
      %v1476 = vunpack.c.l.b16 %v1460
      %v1477 = vunpack.c.l.b16 %v1461
      %v1478 = vunpack.c.l.b16 %v1462
      %v1479 = vunpack.c.l.b16 %v1463
      %v1480 = vunpack.c.l.b16 %v1464
      %v1481 = vunpack.c.l.b16 %v1465
      %v1482 = vunpack.c.l.b16 %v1466
      %v1483 = vunpack.c.l.b16 %v1467
      %v1484 = vpack.c.b16 %v1477, %v1476
      %v1485 = vpack.c.b16 %v1479, %v1478
      %v1486 = vpack.c.b16 %v1481, %v1480
      %v1487 = vpack.c.b16 %v1483, %v1482
      %v1493 = vsel %vm552, %v1459, 0
      %1495 = vmatprep.subr.bf16.mxu0 0
      %1496 = vmatpush1.bf16.msra.mxu0 %v1484
      %1497 = vmatprep.subr.bf16.mxu0 0
      %1498 = vmatpush1.bf16.msra.mxu0 %v1485
      %1499 = vmatprep.subr.bf16.mxu0 0
      %1500 = vmatpush1.bf16.msra.mxu0 %v1486
      %1501 = vmatprep.subr.bf16.mxu0 0
      %1502 = vmatpush1.bf16.msra.mxu0 %v1487
      %1503 = vmatprep.subr.bf16.mxu0 0
      %1504 = vmatpush1.bf16.msra.mxu0 0
      %1505 = vmatprep.subr.bf16.mxu0 0
      %1506 = vmatpush1.bf16.msra.mxu0 0
      %1507 = vmatprep.subr.bf16.mxu0 0
      %1508 = vmatpush1.bf16.msra.mxu0 0
      %1509 = vmatprep.subr.bf16.mxu0 0
      %1510 = vmatpush1.bf16.msra.mxu0 0
      %1511 = vmatprep.subr.bf16.mxu0 0
      %1512 = vmatpush1.bf16.msra.mxu0 0
      %1513 = vmatprep.subr.bf16.mxu0 0
      %1514 = vmatpush1.bf16.msra.mxu0 0
      %1515 = vmatprep.subr.bf16.mxu0 0
      %1516 = vmatpush1.bf16.msra.mxu0 0
      %1517 = vmatprep.subr.bf16.mxu0 0
      %1518 = vmatpush1.bf16.msra.mxu0 0
      %1519 = vmatprep.subr.bf16.mxu0 0
      %1520 = vmatpush1.bf16.msra.mxu0 0
      %1521 = vmatprep.subr.bf16.mxu0 0
      %1522 = vmatpush1.bf16.msra.mxu0 0
      %1523 = vmatprep.subr.bf16.mxu0 0
      %1524 = vmatpush1.bf16.msra.mxu0 0
      %1525 = vmatprep.subr.bf16.mxu0 0
      %1526 = vmatpush1.bf16.msra.mxu0 0
      %1527 = vmatprep.mubr.bf16.mxu0 0
      %1528 = vmatmul.mubr.bf16.gmra.mrb[0].mxu0 %v1493
      %v1529 = vpop.f32.mrb[0].mxu0
      %v1530 = vadd.f32 0.0, %v1529
      %v1531 = vpop.f32.mrb[0].mxu0
      %v1532 = vpop.f32.mrb[0].mxu0
      %v1533 = vadd.f32 0.0, %v1532
      %v1534 = vpop.f32.mrb[0].mxu0
      %1535 = vdwg.mxu0
      %v1536 = vld [vmem:[%s5] sm:$0x1]
      %v1537 = vld [vmem:[%s6] sm:$0x1]
      %v1538 = vsel %vm552, %v1530, 0.0
      %v1539 = vsel %vm552, %v1533, 0.0
      %v1540 = vadd.f32 %v1538, %v1539
      %1541 = vadd.xlane.f32.xlu0 %v1540
      %v1542 = vpop.xlane.xlu0 %1541
      %v1543 = vrot.slane %v1542, 4
      %v1544 = vadd.f32 %v1542, %v1543
      %v1545 = vrot.slane %v1544, 2
      %v1546 = vadd.f32 %v1544, %v1545
      %v1547 = vrot.slane %v1546, 1
      %v1548 = vadd.f32 %v1546, %v1547
      %s1549 = vtos %v1548
      %v1550 = vmul.f32 %v1530, %v1530
      %v1551 = vmul.f32 %v1533, %v1533
      %v1552 = vsel %vm552, %v1550, 0.0
      %v1553 = vsel %vm552, %v1551, 0.0
      %v1554 = vadd.f32 %v1552, %v1553
      %1555 = vadd.xlane.f32.xlu0 %v1554
      %v1556 = vpop.xlane.xlu0 %1555
      %v1557 = vrot.slane %v1556, 4
      %v1558 = vadd.f32 %v1556, %v1557
      %v1559 = vrot.slane %v1558, 2
      %v1560 = vadd.f32 %v1558, %v1559
      %v1561 = vrot.slane %v1560, 1
      %v1562 = vadd.f32 %v1560, %v1561
      %s1563 = vtos %v1562
      %v1564 = vrcp.pop 1024.0
      %s1565 = vtos %v1564
      %s1566 = smul.f32 %s1549, %s1565
      %v1567 = vrcp.pop 1024.0
      %s1568 = vtos %v1567
      %s1569 = smul.f32 %s1563, %s1568
      %s1570 = smul.f32 %s1566, %s1566
      %s1571 = ssub.f32 %s1569, %s1570
      %s1572 = smax.f32 %s1571, 0.0
      %v1573 = vstv %s1566
      %v1574 = vsub.f32 %v1530, %v1573
      %v1575 = vsub.f32 %v1533, %v1573
      %s1576 = sadd.f32 %s1572, 1e-05
      %v1577 = vstv %s1576
      %v1578 = vrsqrt.pop %v1577
      %s1579 = vtos %v1578
      %v1580 = vstv %s1579
      %v1581 = vmul.f32 %v1574, %v1580
      %v1582 = vmul.f32 %v1575, %v1580
      %v1584 = vlaneseq
      %v1585 = vshrl.u32 %v1584, 7
      %v1586 = vsub.s32 0, %v1585
      %v1587 = vrot.slane %v1536, %v1586
      %v1589 = vmul.f32 %v1581, %v1587
      %v1590 = vmul.f32 %v1582, %v1587
      %v1592 = vlaneseq
      %v1593 = vshrl.u32 %v1592, 7
      %v1594 = vsub.s32 0, %v1593
      %v1595 = vrot.slane %v1537, %v1594
      %v1597 = vadd.f32 %v1589, %v1595
      %v1598 = vadd.f32 %v1590, %v1595
      %v1599 = vmax.f32 %v1597, 0.0
      %v1600 = vmax.f32 %v1598, 0.0
      %v1601 = vpack.c.bf16 %v1600, %v1599
      %v1602 = vld [vmem:[%s7] sm:$0xf]
      %v1603 = vld [vmem:[%s7 + $0x4] sm:$0xf]
      %v1604 = vld [vmem:[%s7 + $0x8] sm:$0xf]
      %v1605 = vld [vmem:[%s7 + $0xc] sm:$0xf]
      %v1606 = vld [vmem:[%s7 + $0x10] sm:$0xf]
      %v1607 = vld [vmem:[%s7 + $0x14] sm:$0xf]
      %v1608 = vld [vmem:[%s7 + $0x18] sm:$0xf]
      %v1609 = vld [vmem:[%s7 + $0x1c] sm:$0xf]
      %v1618 = vunpack.c.l.b16 %v1602
      %v1619 = vunpack.c.l.b16 %v1603
      %v1620 = vunpack.c.l.b16 %v1604
      %v1621 = vunpack.c.l.b16 %v1605
      %v1622 = vunpack.c.l.b16 %v1606
      %v1623 = vunpack.c.l.b16 %v1607
      %v1624 = vunpack.c.l.b16 %v1608
      %v1625 = vunpack.c.l.b16 %v1609
      %v1626 = vpack.c.b16 %v1619, %v1618
      %v1627 = vpack.c.b16 %v1621, %v1620
      %v1628 = vpack.c.b16 %v1623, %v1622
      %v1629 = vpack.c.b16 %v1625, %v1624
      %v1635 = vsel %vm552, %v1601, 0
      %1637 = vmatprep.subr.bf16.mxu0 0
      %1638 = vmatpush1.bf16.msra.mxu0 %v1626
      %1639 = vmatprep.subr.bf16.mxu0 0
      %1640 = vmatpush1.bf16.msra.mxu0 %v1627
      %1641 = vmatprep.subr.bf16.mxu0 0
      %1642 = vmatpush1.bf16.msra.mxu0 %v1628
      %1643 = vmatprep.subr.bf16.mxu0 0
      %1644 = vmatpush1.bf16.msra.mxu0 %v1629
      %1645 = vmatprep.subr.bf16.mxu0 0
      %1646 = vmatpush1.bf16.msra.mxu0 0
      %1647 = vmatprep.subr.bf16.mxu0 0
      %1648 = vmatpush1.bf16.msra.mxu0 0
      %1649 = vmatprep.subr.bf16.mxu0 0
      %1650 = vmatpush1.bf16.msra.mxu0 0
      %1651 = vmatprep.subr.bf16.mxu0 0
      %1652 = vmatpush1.bf16.msra.mxu0 0
      %1653 = vmatprep.subr.bf16.mxu0 0
      %1654 = vmatpush1.bf16.msra.mxu0 0
      %1655 = vmatprep.subr.bf16.mxu0 0
      %1656 = vmatpush1.bf16.msra.mxu0 0
      %1657 = vmatprep.subr.bf16.mxu0 0
      %1658 = vmatpush1.bf16.msra.mxu0 0
      %1659 = vmatprep.subr.bf16.mxu0 0
      %1660 = vmatpush1.bf16.msra.mxu0 0
      %1661 = vmatprep.subr.bf16.mxu0 0
      %1662 = vmatpush1.bf16.msra.mxu0 0
      %1663 = vmatprep.subr.bf16.mxu0 0
      %1664 = vmatpush1.bf16.msra.mxu0 0
      %1665 = vmatprep.subr.bf16.mxu0 0
      %1666 = vmatpush1.bf16.msra.mxu0 0
      %1667 = vmatprep.subr.bf16.mxu0 0
      %1668 = vmatpush1.bf16.msra.mxu0 0
      %1669 = vmatprep.mubr.bf16.mxu0 0
      %1670 = vmatmul.mubr.bf16.gmra.mrb[0].mxu0 %v1635
      %v1671 = vpop.f32.mrb[0].mxu0
      %v1672 = vadd.f32 0.0, %v1671
      %v1673 = vpop.f32.mrb[0].mxu0
      %v1674 = vpop.f32.mrb[0].mxu0
      %v1675 = vadd.f32 0.0, %v1674
      %v1676 = vpop.f32.mrb[0].mxu0
      %1677 = vdwg.mxu0
      %v1678 = vld [vmem:[%s8] sm:$0x1]
      %v1679 = vld [vmem:[%s9] sm:$0x1]
      %v1680 = vsel %vm552, %v1672, 0.0
      %v1681 = vsel %vm552, %v1675, 0.0
      %v1682 = vadd.f32 %v1680, %v1681
      %1683 = vadd.xlane.f32.xlu0 %v1682
      %v1684 = vpop.xlane.xlu0 %1683
      %v1685 = vrot.slane %v1684, 4
      %v1686 = vadd.f32 %v1684, %v1685
      %v1687 = vrot.slane %v1686, 2
      %v1688 = vadd.f32 %v1686, %v1687
      %v1689 = vrot.slane %v1688, 1
      %v1690 = vadd.f32 %v1688, %v1689
      %s1691 = vtos %v1690
      %v1692 = vmul.f32 %v1672, %v1672
      %v1693 = vmul.f32 %v1675, %v1675
      %v1694 = vsel %vm552, %v1692, 0.0
      %v1695 = vsel %vm552, %v1693, 0.0
      %v1696 = vadd.f32 %v1694, %v1695
      %1697 = vadd.xlane.f32.xlu0 %v1696
      %v1698 = vpop.xlane.xlu0 %1697
      %v1699 = vrot.slane %v1698, 4
      %v1700 = vadd.f32 %v1698, %v1699
      %v1701 = vrot.slane %v1700, 2
      %v1702 = vadd.f32 %v1700, %v1701
      %v1703 = vrot.slane %v1702, 1
      %v1704 = vadd.f32 %v1702, %v1703
      %s1705 = vtos %v1704
      %v1706 = vrcp.pop 1024.0
      %s1707 = vtos %v1706
      %s1708 = smul.f32 %s1691, %s1707
      %v1709 = vrcp.pop 1024.0
      %s1710 = vtos %v1709
      %s1711 = smul.f32 %s1705, %s1710
      %s1712 = smul.f32 %s1708, %s1708
      %s1713 = ssub.f32 %s1711, %s1712
      %s1714 = smax.f32 %s1713, 0.0
      %v1715 = vstv %s1708
      %v1716 = vsub.f32 %v1672, %v1715
      %v1717 = vsub.f32 %v1675, %v1715
      %s1718 = sadd.f32 %s1714, 1e-05
      %v1719 = vstv %s1718
      %v1720 = vrsqrt.pop %v1719
      %s1721 = vtos %v1720
      %v1722 = vstv %s1721
      %v1723 = vmul.f32 %v1716, %v1722
      %v1724 = vmul.f32 %v1717, %v1722
      %v1726 = vlaneseq
      %v1727 = vshrl.u32 %v1726, 7
      %v1728 = vsub.s32 0, %v1727
      %v1729 = vrot.slane %v1678, %v1728
      %v1731 = vmul.f32 %v1723, %v1729
      %v1732 = vmul.f32 %v1724, %v1729
      %v1734 = vlaneseq
      %v1735 = vshrl.u32 %v1734, 7
      %v1736 = vsub.s32 0, %v1735
      %v1737 = vrot.slane %v1679, %v1736
      %v1739 = vadd.f32 %v1731, %v1737
      %v1740 = vadd.f32 %v1732, %v1737
      %v1741 = vmax.f32 %v1739, 0.0
      %v1742 = vmax.f32 %v1740, 0.0
      %v1743 = vpack.c.bf16 %v1742, %v1741
      %v1744 = vld [vmem:[%s10] sm:$0xff]
      %v1745 = vld [vmem:[%s10 + $0x8] sm:$0xff]
      %v1746 = vld [vmem:[%s10 + $0x10] sm:$0xff]
      %v1747 = vld [vmem:[%s10 + $0x18] sm:$0xff]
      %v1748 = vld [vmem:[%s10 + $0x20] sm:$0xff]
      %v1749 = vld [vmem:[%s10 + $0x28] sm:$0xff]
      %v1750 = vld [vmem:[%s10 + $0x30] sm:$0xff]
      %v1751 = vld [vmem:[%s10 + $0x38] sm:$0xff]
      %v1760 = vunpack.c.l.b16 %v1744
      %v1761 = vunpack.c.h.b16 %v1744
      %v1762 = vunpack.c.l.b16 %v1745
      %v1763 = vunpack.c.h.b16 %v1745
      %v1764 = vunpack.c.l.b16 %v1746
      %v1765 = vunpack.c.h.b16 %v1746
      %v1766 = vunpack.c.l.b16 %v1747
      %v1767 = vunpack.c.h.b16 %v1747
      %v1768 = vunpack.c.l.b16 %v1748
      %v1769 = vunpack.c.h.b16 %v1748
      %v1770 = vunpack.c.l.b16 %v1749
      %v1771 = vunpack.c.h.b16 %v1749
      %v1772 = vunpack.c.l.b16 %v1750
      %v1773 = vunpack.c.h.b16 %v1750
      %v1774 = vunpack.c.l.b16 %v1751
      %v1775 = vunpack.c.h.b16 %v1751
      %v1776 = vpack.c.b16 %v1762, %v1760
      %v1777 = vpack.c.b16 %v1763, %v1761
      %v1778 = vpack.c.b16 %v1766, %v1764
      %v1779 = vpack.c.b16 %v1767, %v1765
      %v1780 = vpack.c.b16 %v1770, %v1768
      %v1781 = vpack.c.b16 %v1771, %v1769
      %v1782 = vpack.c.b16 %v1774, %v1772
      %v1783 = vpack.c.b16 %v1775, %v1773
      %v1793 = vsel %vm552, %v1743, 0
      %1795 = vmatprep.subr.bf16.mxu0 %v1777
      %1796 = vmatpush1.bf16.msra.mxu0 %v1776
      %1797 = vmatprep.subr.bf16.mxu0 %v1779
      %1798 = vmatpush1.bf16.msra.mxu0 %v1778
      %1799 = vmatprep.subr.bf16.mxu0 %v1781
      %1800 = vmatpush1.bf16.msra.mxu0 %v1780
      %1801 = vmatprep.subr.bf16.mxu0 %v1783
      %1802 = vmatpush1.bf16.msra.mxu0 %v1782
      %1803 = vmatprep.subr.bf16.mxu0 0
      %1804 = vmatpush1.bf16.msra.mxu0 0
      %1805 = vmatprep.subr.bf16.mxu0 0
      %1806 = vmatpush1.bf16.msra.mxu0 0
      %1807 = vmatprep.subr.bf16.mxu0 0
      %1808 = vmatpush1.bf16.msra.mxu0 0
      %1809 = vmatprep.subr.bf16.mxu0 0
      %1810 = vmatpush1.bf16.msra.mxu0 0
      %1811 = vmatprep.subr.bf16.mxu0 0
      %1812 = vmatpush1.bf16.msra.mxu0 0
      %1813 = vmatprep.subr.bf16.mxu0 0
      %1814 = vmatpush1.bf16.msra.mxu0 0
      %1815 = vmatprep.subr.bf16.mxu0 0
      %1816 = vmatpush1.bf16.msra.mxu0 0
      %1817 = vmatprep.subr.bf16.mxu0 0
      %1818 = vmatpush1.bf16.msra.mxu0 0
      %1819 = vmatprep.subr.bf16.mxu0 0
      %1820 = vmatpush1.bf16.msra.mxu0 0
      %1821 = vmatprep.subr.bf16.mxu0 0
      %1822 = vmatpush1.bf16.msra.mxu0 0
      %1823 = vmatprep.subr.bf16.mxu0 0
      %1824 = vmatpush1.bf16.msra.mxu0 0
      %1825 = vmatprep.subr.bf16.mxu0 0
      %1826 = vmatpush1.bf16.msra.mxu0 0
      %1827 = vmatprep.mubr.bf16.mxu0 0
      %1828 = vmatmul.mubr.bf16.gmra.mrb[0].mxu0 %v1793
      %v1829 = vpop.f32.mrb[0].mxu0
      %v1830 = vadd.f32 0.0, %v1829
      %v1831 = vpop.f32.mrb[0].mxu0
      %v1832 = vadd.f32 0.0, %v1831
      %v1833 = vpop.f32.mrb[0].mxu0
      %v1834 = vadd.f32 0.0, %v1833
      %v1835 = vpop.f32.mrb[0].mxu0
      %v1836 = vadd.f32 0.0, %v1835
      %1837 = vdwg.mxu0
      %v1838 = vld [vmem:[%s11] sm:$0x3]
      %v1839 = vld [vmem:[%s12] sm:$0x3]
      %v1840 = vadd.f32 %v1830, %v1832
      %v1841 = vadd.f32 %v1840, %v1834
      %v1842 = vadd.f32 %v1841, %v1836
      %1843 = vadd.xlane.f32.xlu0 %v1842
      %v1844 = vpop.xlane.xlu0 %1843
      %v1845 = vrot.slane %v1844, 4
      %v1846 = vadd.f32 %v1844, %v1845
      %v1847 = vrot.slane %v1846, 2
      %v1848 = vadd.f32 %v1846, %v1847
      %v1849 = vrot.slane %v1848, 1
      %v1850 = vadd.f32 %v1848, %v1849
      %s1851 = vtos %v1850
      %v1852 = vmul.f32 %v1830, %v1830
      %v1853 = vmul.f32 %v1832, %v1832
      %v1854 = vmul.f32 %v1834, %v1834
      %v1855 = vmul.f32 %v1836, %v1836
      %v1856 = vadd.f32 %v1852, %v1853
      %v1857 = vadd.f32 %v1856, %v1854
      %v1858 = vadd.f32 %v1857, %v1855
      %1859 = vadd.xlane.f32.xlu0 %v1858
      %v1860 = vpop.xlane.xlu0 %1859
      %v1861 = vrot.slane %v1860, 4
      %v1862 = vadd.f32 %v1860, %v1861
      %v1863 = vrot.slane %v1862, 2
      %v1864 = vadd.f32 %v1862, %v1863
      %v1865 = vrot.slane %v1864, 1
      %v1866 = vadd.f32 %v1864, %v1865
      %s1867 = vtos %v1866
      %v1868 = vrcp.pop 4096.0
      %s1869 = vtos %v1868
      %s1870 = smul.f32 %s1851, %s1869
      %v1871 = vrcp.pop 4096.0
      %s1872 = vtos %v1871
      %s1873 = smul.f32 %s1867, %s1872
      %s1874 = smul.f32 %s1870, %s1870
      %s1875 = ssub.f32 %s1873, %s1874
      %s1876 = smax.f32 %s1875, 0.0
      %v1877 = vstv %s1870
      %v1878 = vsub.f32 %v1830, %v1877
      %v1879 = vsub.f32 %v1832, %v1877
      %v1880 = vsub.f32 %v1834, %v1877
      %v1881 = vsub.f32 %v1836, %v1877
      %s1882 = sadd.f32 %s1876, 1e-05
      %v1883 = vstv %s1882
      %v1884 = vrsqrt.pop %v1883
      %s1885 = vtos %v1884
      %v1886 = vstv %s1885
      %v1887 = vmul.f32 %v1878, %v1886
      %v1888 = vmul.f32 %v1879, %v1886
      %v1889 = vmul.f32 %v1880, %v1886
      %v1890 = vmul.f32 %v1881, %v1886
      %v1892 = vlaneseq
      %v1893 = vshrl.u32 %v1892, 7
      %v1894 = vsub.s32 0, %v1893
      %v1895 = vrot.slane %v1838, %v1894
      %v1896 = vlaneseq
      %v1897 = vshrl.u32 %v1896, 7
      %v1898 = vsub.s32 1, %v1897
      %v1899 = vrot.slane %v1838, %v1898
      %v1902 = vmul.f32 %v1887, %v1895
      %v1903 = vmul.f32 %v1888, %v1899
      %v1904 = vmul.f32 %v1889, %v1895
      %v1905 = vmul.f32 %v1890, %v1899
      %v1907 = vlaneseq
      %v1908 = vshrl.u32 %v1907, 7
      %v1909 = vsub.s32 0, %v1908
      %v1910 = vrot.slane %v1839, %v1909
      %v1911 = vlaneseq
      %v1912 = vshrl.u32 %v1911, 7
      %v1913 = vsub.s32 1, %v1912
      %v1914 = vrot.slane %v1839, %v1913
      %v1917 = vadd.f32 %v1902, %v1910
      %v1918 = vadd.f32 %v1903, %v1914
      %v1919 = vadd.f32 %v1904, %v1910
      %v1920 = vadd.f32 %v1905, %v1914
      %v1921 = vmax.f32 %v1917, 0.0
      %v1922 = vmax.f32 %v1918, 0.0
      %v1923 = vmax.f32 %v1919, 0.0
      %v1924 = vmax.f32 %v1920, 0.0
      %v1925 = vpack.c.bf16 %v1923, %v1921
      %v1926 = vpack.c.bf16 %v1924, %v1922
      %v1929 = vunpack.c.l.b16 %v1925
      %v1930 = vunpack.c.l.b16 %v1926
      %v1931 = vunpack.c.h.b16 %v1925
      %v1932 = vunpack.c.h.b16 %v1926
      %v1933 = vpack.c.b16 %v1930, %v1929
      %v1934 = vpack.c.b16 %v1932, %v1931
      %1937 = vst [vmem:[%s440] sm:$0xff] %v1933
      %1938 = vst [vmem:[%s440 + $0x8] sm:$0xff] %v1934
      %p1939 = scmp.lt.s32.totalorder %s24, 1
      %s1940 = scalar_select %p1939, %s24, 1
      %s1941 = smul.addr %s1940, 4
      %s1942 = smul.addr %s1941, 4
      %s1943 = scalar_lea.vmem %s13, %s1942
      // Predicated region
      $region73: #{vae_decoder_forward.5} parent=71 // pred_check
        %p1944 = pneg %p320
      $region74: #{vae_decoder_forward.5} parent=71 // pred_check_branch
        %1946 = sbr.rel (%p1944) target = $region76
      $region75: #{vae_decoder_forward.5} parent=71 // pred_region
        _
      $region76: #{vae_decoder_forward.5} parent=71 // pred_fallthru
        _
    $region72: #{vae_decoder_forward.5} parent=5 // pred_fallthru
      _
    %p1947 = scmp.le.s32.totalorder 2, %s19
    // Predicated region
    $region77: #{vae_decoder_forward.5} parent=5 // pred_check
      %p1948 = pneg %p1947
    $region78: #{vae_decoder_forward.5} parent=5 // pred_check_branch
      %1950 = sbr.rel (%p1948) target = $region80
    $region79: #{vae_decoder_forward.5} parent=5 // pred_region
      %s1951 = ssub.s32 %s19, 2
      // Predicated region
      $region81: #{vae_decoder_forward.5} parent=79 // pred_check
        %p1952 = pneg %p326
      $region82: #{vae_decoder_forward.5} parent=79 // pred_check_branch
        %1954 = sbr.rel (%p1952) target = $region84
      $region83: #{vae_decoder_forward.5} parent=79 // pred_region
        %p1955 = scmp.lt.s32.totalorder %s25, 1
        %s1956 = scalar_select %p1955, %s25, 1
        %s1957 = smul.addr %s1956, 4
        %s1958 = smul.addr %s1957, 4
        %s1959 = scalar_lea.vmem %s13, %s1958
      $region84: #{vae_decoder_forward.5} parent=79 // pred_fallthru
        _
    $region80: #{vae_decoder_forward.5} parent=5 // pred_fallthru
      _
  $region6: #{vae_decoder_forward.5} parent=0 // loop_footer
    %s23 = sadd.s32 1, %s19
  $region7: #{vae_decoder_forward.5} parent=0 // loop_footer_branch
    %18 = sbr.rel target = $region3
  $region8: #{vae_decoder_forward.5} parent=0 // loop_exit
    _

// kernel: vae_decoder_forward.6
$region0: #{vae_decoder_forward.6}
  #allocation0 [shape = 'u32[]', space=smem, size = 0x4, offset = 0x4, fixed_abs, tag = 'smem constant byte address 0x4 - core index']
  #allocation1 [shape = 'u32[144,128]{1,0:T(1,128)}', space=vmem, size = 0x12000, scoped, tag = 'internal scratch']
  %s0 = inlined_call_operand.vmem [shape: bf16[2,82,64], index: 0, kind: input, shape index: {}]
  %s1 = inlined_call_operand.vmem [shape: bf16[9,64,64], index: 1, kind: input, shape index: {}]
  %s2 = inlined_call_operand.vmem [shape: f32[1,64], index: 2, kind: input, shape index: {}]
  %s3 = inlined_call_operand.vmem [shape: f32[1,64], index: 3, kind: input, shape index: {}]
  %s4 = inlined_call_operand.vmem [shape: bf16[64,64], index: 4, kind: input, shape index: {}]
  %s5 = inlined_call_operand.vmem [shape: f32[1,64], index: 5, kind: input, shape index: {}]
  %s6 = inlined_call_operand.vmem [shape: f32[1,64], index: 6, kind: input, shape index: {}]
  %s7 = inlined_call_operand.vmem [shape: bf16[64,64], index: 7, kind: input, shape index: {}]
  %s8 = inlined_call_operand.vmem [shape: f32[1,64], index: 8, kind: input, shape index: {}]
  %s9 = inlined_call_operand.vmem [shape: f32[1,64], index: 9, kind: input, shape index: {}]
  %s10 = inlined_call_operand.vmem [shape: bf16[64,256], index: 10, kind: input, shape index: {}]
  %s11 = inlined_call_operand.vmem [shape: f32[1,256], index: 11, kind: input, shape index: {}]
  %s12 = inlined_call_operand.vmem [shape: f32[1,256], index: 12, kind: input, shape index: {}]
  %s13 = inlined_call_operand.vmem [shape: bf16[2,64,256], index: 13, kind: output, shape index: {}]
  %s14 = sld [smem:[#allocation0]]
  $region85: #{vae_decoder_forward.6} parent=0
    _
  %s16 = ssub.s32 1, %s14
  %s17 = scalar_select 0, %s16, %s14
  loop: start=0, step=1, limit=4
  $region2: #{vae_decoder_forward.6} parent=0 // loop_pre_header
    _
  $region3: #{vae_decoder_forward.6} parent=0 // loop_header
    %s19 = sphi 0, %s23
    %p20 = scmp.ge.s32.totalorder %s19, 4
    %s29 = sphi 0, %s31
    %s32 = sphi 0, %s29
    %s33 = sphi 0, %s32
    %s49 = sphi 0, %s33
    %s53 = sphi 0, %s53
    %s55 = sphi 0, %s53
    %s56 = sphi 0, %s55
    %s70 = sphi 0, %s56
    %s74 = sphi 0, %s74
    %s76 = sphi 0, %s74
    %s77 = sphi 0, %s76
    %s91 = sphi 0, %s77
    %s95 = sphi 0, %s95
    %s97 = sphi 0, %s95
    %s98 = sphi 0, %s97
    %s112 = sphi 0, %s98
    %s116 = sphi 0, %s116
    %s118 = sphi 0, %s116
    %s119 = sphi 0, %s118
    %s133 = sphi 0, %s119
    %s137 = sphi 0, %s137
    %s139 = sphi 0, %s137
    %s140 = sphi 0, %s139
    %s154 = sphi 0, %s140
    %s158 = sphi 0, %s158
    %s160 = sphi 0, %s158
    %s161 = sphi 0, %s160
    %s175 = sphi 0, %s161
    %s179 = sphi 0, %s179
    %s181 = sphi 0, %s179
    %s182 = sphi 0, %s181
    %s196 = sphi 0, %s182
    %s200 = sphi 0, %s200
    %s202 = sphi 0, %s200
    %s203 = sphi 0, %s202
    %s217 = sphi 0, %s203
    %s221 = sphi 0, %s221
    %s223 = sphi 0, %s221
    %s224 = sphi 0, %s223
    %s238 = sphi 0, %s224
    %s242 = sphi 0, %s242
    %s244 = sphi 0, %s242
    %s245 = sphi 0, %s244
    %s259 = sphi 0, %s245
    %s263 = sphi 0, %s263
    %s265 = sphi 0, %s263
    %s266 = sphi 0, %s265
    %s280 = sphi 0, %s266
    %s284 = sphi 0, %s284
    %s286 = sphi 0, %s284
    %s287 = sphi 0, %s286
    %s301 = sphi 0, %s287
    %s307 = sphi 0, %s309
    %s310 = sphi 0, %s307
    %s311 = sphi 0, %s310
    %s327 = sphi 0, %s311
  $region4: #{vae_decoder_forward.6} parent=0 // loop_header_branch
    %22 = sbr.rel (%p20) target = $region8
  $region5: #{vae_decoder_forward.6} parent=0 // loop_body
    %s24 = ssub.s32 %s19, 1
    %s25 = ssub.s32 %s19, 2
    %s26 = sadd.s32 %s19, 1
    %s27 = ssub.s32 %s19, %s26
    %p28 = scmp.eq.s32.totalorder %s27, 0
    %s30 = sadd.s32 %s29, 1
    %s31 = scalar_select %p28, %s29, %s30
    %p34 = pneg %p28
    %p35 = scmp.eq.s32.totalorder %s19, 1
    %p36 = por %p34, %p35
    %p37 = scmp.ne.s32.totalorder %s29, %s32
    %p38 = scmp.eq.s32.totalorder %s19, 0
    %p39 = por %p37, %p38
    %p40 = scmp.ne.s32.totalorder %s29, %s32
    %p41 = scmp.eq.s32.totalorder %s24, 1
    %p42 = por %p40, %p41
    %p43 = scmp.ne.s32.totalorder %s32, %s33
    %p44 = scmp.eq.s32.totalorder %s24, 0
    %p45 = por %p43, %p44
    %p46 = scmp.ne.s32.totalorder %s32, %s33
    %p47 = scmp.eq.s32.totalorder %s25, 1
    %p48 = por %p46, %p47
    %p50 = scmp.ne.s32.totalorder %s33, %s49
    %p51 = scmp.eq.s32.totalorder %s25, 0
    %p52 = por %p50, %p51
    %s54 = sadd.s32 %s53, 1
    %p57 = scmp.eq.s32.totalorder %s19, 1
    %p58 = scmp.ne.s32.totalorder %s53, %s55
    %p59 = scmp.eq.s32.totalorder %s19, 0
    %p60 = por %p58, %p59
    %p61 = scmp.ne.s32.totalorder %s53, %s55
    %p62 = scmp.eq.s32.totalorder %s24, 1
    %p63 = por %p61, %p62
    %p64 = scmp.ne.s32.totalorder %s55, %s56
    %p65 = scmp.eq.s32.totalorder %s24, 0
    %p66 = por %p64, %p65
    %p67 = scmp.ne.s32.totalorder %s55, %s56
    %p68 = scmp.eq.s32.totalorder %s25, 1
    %p69 = por %p67, %p68
    %p71 = scmp.ne.s32.totalorder %s56, %s70
    %p72 = scmp.eq.s32.totalorder %s25, 0
    %p73 = por %p71, %p72
    %s75 = sadd.s32 %s74, 1
    %p78 = scmp.eq.s32.totalorder %s19, 1
    %p79 = scmp.ne.s32.totalorder %s74, %s76
    %p80 = scmp.eq.s32.totalorder %s19, 0
    %p81 = por %p79, %p80
    %p82 = scmp.ne.s32.totalorder %s74, %s76
    %p83 = scmp.eq.s32.totalorder %s24, 1
    %p84 = por %p82, %p83
    %p85 = scmp.ne.s32.totalorder %s76, %s77
    %p86 = scmp.eq.s32.totalorder %s24, 0
    %p87 = por %p85, %p86
    %p88 = scmp.ne.s32.totalorder %s76, %s77
    %p89 = scmp.eq.s32.totalorder %s25, 1
    %p90 = por %p88, %p89
    %p92 = scmp.ne.s32.totalorder %s77, %s91
    %p93 = scmp.eq.s32.totalorder %s25, 0
    %p94 = por %p92, %p93
    %s96 = sadd.s32 %s95, 1
    %p99 = scmp.eq.s32.totalorder %s19, 1
    %p100 = scmp.ne.s32.totalorder %s95, %s97
    %p101 = scmp.eq.s32.totalorder %s19, 0
    %p102 = por %p100, %p101
    %p103 = scmp.ne.s32.totalorder %s95, %s97
    %p104 = scmp.eq.s32.totalorder %s24, 1
    %p105 = por %p103, %p104
    %p106 = scmp.ne.s32.totalorder %s97, %s98
    %p107 = scmp.eq.s32.totalorder %s24, 0
    %p108 = por %p106, %p107
    %p109 = scmp.ne.s32.totalorder %s97, %s98
    %p110 = scmp.eq.s32.totalorder %s25, 1
    %p111 = por %p109, %p110
    %p113 = scmp.ne.s32.totalorder %s98, %s112
    %p114 = scmp.eq.s32.totalorder %s25, 0
    %p115 = por %p113, %p114
    %s117 = sadd.s32 %s116, 1
    %p120 = scmp.eq.s32.totalorder %s19, 1
    %p121 = scmp.ne.s32.totalorder %s116, %s118
    %p122 = scmp.eq.s32.totalorder %s19, 0
    %p123 = por %p121, %p122
    %p124 = scmp.ne.s32.totalorder %s116, %s118
    %p125 = scmp.eq.s32.totalorder %s24, 1
    %p126 = por %p124, %p125
    %p127 = scmp.ne.s32.totalorder %s118, %s119
    %p128 = scmp.eq.s32.totalorder %s24, 0
    %p129 = por %p127, %p128
    %p130 = scmp.ne.s32.totalorder %s118, %s119
    %p131 = scmp.eq.s32.totalorder %s25, 1
    %p132 = por %p130, %p131
    %p134 = scmp.ne.s32.totalorder %s119, %s133
    %p135 = scmp.eq.s32.totalorder %s25, 0
    %p136 = por %p134, %p135
    %s138 = sadd.s32 %s137, 1
    %p141 = scmp.eq.s32.totalorder %s19, 1
    %p142 = scmp.ne.s32.totalorder %s137, %s139
    %p143 = scmp.eq.s32.totalorder %s19, 0
    %p144 = por %p142, %p143
    %p145 = scmp.ne.s32.totalorder %s137, %s139
    %p146 = scmp.eq.s32.totalorder %s24, 1
    %p147 = por %p145, %p146
    %p148 = scmp.ne.s32.totalorder %s139, %s140
    %p149 = scmp.eq.s32.totalorder %s24, 0
    %p150 = por %p148, %p149
    %p151 = scmp.ne.s32.totalorder %s139, %s140
    %p152 = scmp.eq.s32.totalorder %s25, 1
    %p153 = por %p151, %p152
    %p155 = scmp.ne.s32.totalorder %s140, %s154
    %p156 = scmp.eq.s32.totalorder %s25, 0
    %p157 = por %p155, %p156
    %s159 = sadd.s32 %s158, 1
    %p162 = scmp.eq.s32.totalorder %s19, 1
    %p163 = scmp.ne.s32.totalorder %s158, %s160
    %p164 = scmp.eq.s32.totalorder %s19, 0
    %p165 = por %p163, %p164
    %p166 = scmp.ne.s32.totalorder %s158, %s160
    %p167 = scmp.eq.s32.totalorder %s24, 1
    %p168 = por %p166, %p167
    %p169 = scmp.ne.s32.totalorder %s160, %s161
    %p170 = scmp.eq.s32.totalorder %s24, 0
    %p171 = por %p169, %p170
    %p172 = scmp.ne.s32.totalorder %s160, %s161
    %p173 = scmp.eq.s32.totalorder %s25, 1
    %p174 = por %p172, %p173
    %p176 = scmp.ne.s32.totalorder %s161, %s175
    %p177 = scmp.eq.s32.totalorder %s25, 0
    %p178 = por %p176, %p177
    %s180 = sadd.s32 %s179, 1
    %p183 = scmp.eq.s32.totalorder %s19, 1
    %p184 = scmp.ne.s32.totalorder %s179, %s181
    %p185 = scmp.eq.s32.totalorder %s19, 0
    %p186 = por %p184, %p185
    %p187 = scmp.ne.s32.totalorder %s179, %s181
    %p188 = scmp.eq.s32.totalorder %s24, 1
    %p189 = por %p187, %p188
    %p190 = scmp.ne.s32.totalorder %s181, %s182
    %p191 = scmp.eq.s32.totalorder %s24, 0
    %p192 = por %p190, %p191
    %p193 = scmp.ne.s32.totalorder %s181, %s182
    %p194 = scmp.eq.s32.totalorder %s25, 1
    %p195 = por %p193, %p194
    %p197 = scmp.ne.s32.totalorder %s182, %s196
    %p198 = scmp.eq.s32.totalorder %s25, 0
    %p199 = por %p197, %p198
    %s201 = sadd.s32 %s200, 1
    %p204 = scmp.eq.s32.totalorder %s19, 1
    %p205 = scmp.ne.s32.totalorder %s200, %s202
    %p206 = scmp.eq.s32.totalorder %s19, 0
    %p207 = por %p205, %p206
    %p208 = scmp.ne.s32.totalorder %s200, %s202
    %p209 = scmp.eq.s32.totalorder %s24, 1
    %p210 = por %p208, %p209
    %p211 = scmp.ne.s32.totalorder %s202, %s203
    %p212 = scmp.eq.s32.totalorder %s24, 0
    %p213 = por %p211, %p212
    %p214 = scmp.ne.s32.totalorder %s202, %s203
    %p215 = scmp.eq.s32.totalorder %s25, 1
    %p216 = por %p214, %p215
    %p218 = scmp.ne.s32.totalorder %s203, %s217
    %p219 = scmp.eq.s32.totalorder %s25, 0
    %p220 = por %p218, %p219
    %s222 = sadd.s32 %s221, 1
    %p225 = scmp.eq.s32.totalorder %s19, 1
    %p226 = scmp.ne.s32.totalorder %s221, %s223
    %p227 = scmp.eq.s32.totalorder %s19, 0
    %p228 = por %p226, %p227
    %p229 = scmp.ne.s32.totalorder %s221, %s223
    %p230 = scmp.eq.s32.totalorder %s24, 1
    %p231 = por %p229, %p230
    %p232 = scmp.ne.s32.totalorder %s223, %s224
    %p233 = scmp.eq.s32.totalorder %s24, 0
    %p234 = por %p232, %p233
    %p235 = scmp.ne.s32.totalorder %s223, %s224
    %p236 = scmp.eq.s32.totalorder %s25, 1
    %p237 = por %p235, %p236
    %p239 = scmp.ne.s32.totalorder %s224, %s238
    %p240 = scmp.eq.s32.totalorder %s25, 0
    %p241 = por %p239, %p240
    %s243 = sadd.s32 %s242, 1
    %p246 = scmp.eq.s32.totalorder %s19, 1
    %p247 = scmp.ne.s32.totalorder %s242, %s244
    %p248 = scmp.eq.s32.totalorder %s19, 0
    %p249 = por %p247, %p248
    %p250 = scmp.ne.s32.totalorder %s242, %s244
    %p251 = scmp.eq.s32.totalorder %s24, 1
    %p252 = por %p250, %p251
    %p253 = scmp.ne.s32.totalorder %s244, %s245
    %p254 = scmp.eq.s32.totalorder %s24, 0
    %p255 = por %p253, %p254
    %p256 = scmp.ne.s32.totalorder %s244, %s245
    %p257 = scmp.eq.s32.totalorder %s25, 1
    %p258 = por %p256, %p257
    %p260 = scmp.ne.s32.totalorder %s245, %s259
    %p261 = scmp.eq.s32.totalorder %s25, 0
    %p262 = por %p260, %p261
    %s264 = sadd.s32 %s263, 1
    %p267 = scmp.eq.s32.totalorder %s19, 1
    %p268 = scmp.ne.s32.totalorder %s263, %s265
    %p269 = scmp.eq.s32.totalorder %s19, 0
    %p270 = por %p268, %p269
    %p271 = scmp.ne.s32.totalorder %s263, %s265
    %p272 = scmp.eq.s32.totalorder %s24, 1
    %p273 = por %p271, %p272
    %p274 = scmp.ne.s32.totalorder %s265, %s266
    %p275 = scmp.eq.s32.totalorder %s24, 0
    %p276 = por %p274, %p275
    %p277 = scmp.ne.s32.totalorder %s265, %s266
    %p278 = scmp.eq.s32.totalorder %s25, 1
    %p279 = por %p277, %p278
    %p281 = scmp.ne.s32.totalorder %s266, %s280
    %p282 = scmp.eq.s32.totalorder %s25, 0
    %p283 = por %p281, %p282
    %s285 = sadd.s32 %s284, 1
    %p288 = scmp.eq.s32.totalorder %s19, 1
    %p289 = scmp.ne.s32.totalorder %s284, %s286
    %p290 = scmp.eq.s32.totalorder %s19, 0
    %p291 = por %p289, %p290
    %p292 = scmp.ne.s32.totalorder %s284, %s286
    %p293 = scmp.eq.s32.totalorder %s24, 1
    %p294 = por %p292, %p293
    %p295 = scmp.ne.s32.totalorder %s286, %s287
    %p296 = scmp.eq.s32.totalorder %s24, 0
    %p297 = por %p295, %p296
    %p298 = scmp.ne.s32.totalorder %s286, %s287
    %p299 = scmp.eq.s32.totalorder %s25, 1
    %p300 = por %p298, %p299
    %p302 = scmp.ne.s32.totalorder %s287, %s301
    %p303 = scmp.eq.s32.totalorder %s25, 0
    %p304 = por %p302, %p303
    %s305 = ssub.s32 %s19, %s26
    %p306 = scmp.eq.s32.totalorder %s305, 0
    %s308 = sadd.s32 %s307, 1
    %s309 = scalar_select %p306, %s307, %s308
    %p312 = pneg %p306
    %p313 = scmp.eq.s32.totalorder %s19, 1
    %p314 = por %p312, %p313
    %p315 = scmp.ne.s32.totalorder %s307, %s310
    %p316 = scmp.eq.s32.totalorder %s19, 0
    %p317 = por %p315, %p316
    %p318 = scmp.ne.s32.totalorder %s307, %s310
    %p319 = scmp.eq.s32.totalorder %s24, 1
    %p320 = por %p318, %p319
    %p321 = scmp.ne.s32.totalorder %s310, %s311
    %p322 = scmp.eq.s32.totalorder %s24, 0
    %p323 = por %p321, %p322
    %p324 = scmp.ne.s32.totalorder %s310, %s311
    %p325 = scmp.eq.s32.totalorder %s25, 1
    %p326 = por %p324, %p325
    %p328 = scmp.ne.s32.totalorder %s311, %s327
    %p329 = scmp.eq.s32.totalorder %s25, 0
    %p330 = por %p328, %p329
    %p331 = scmp.le.s32.totalorder 1, %s19
    %p332 = scmp.lt.s32.totalorder %s19, 3
    %p333 = pnand %p331, %p332
    %p334 = pneg %p333
    // Predicated region
    $region9: #{vae_decoder_forward.6} parent=5 // pred_check
      _
    $region10: #{vae_decoder_forward.6} parent=5 // pred_check_branch
      %336 = sbr.rel (%p333) target = $region12
    $region11: #{vae_decoder_forward.6} parent=5 // pred_region
      %s337 = ssub.s32 %s19, 1
      // Predicated region
      $region13: #{vae_decoder_forward.6} parent=11 // pred_check
        %p338 = pneg %p66
      $region14: #{vae_decoder_forward.6} parent=11 // pred_check_branch
        %340 = sbr.rel (%p338) target = $region16
      $region15: #{vae_decoder_forward.6} parent=11 // pred_region
        _
      $region16: #{vae_decoder_forward.6} parent=11 // pred_fallthru
        _
      // Predicated region
      $region17: #{vae_decoder_forward.6} parent=11 // pred_check
        %p341 = pneg %p87
      $region18: #{vae_decoder_forward.6} parent=11 // pred_check_branch
        %343 = sbr.rel (%p341) target = $region20
      $region19: #{vae_decoder_forward.6} parent=11 // pred_region
        _
      $region20: #{vae_decoder_forward.6} parent=11 // pred_fallthru
        _
      // Predicated region
      $region21: #{vae_decoder_forward.6} parent=11 // pred_check
        %p344 = pneg %p108
      $region22: #{vae_decoder_forward.6} parent=11 // pred_check_branch
        %346 = sbr.rel (%p344) target = $region24
      $region23: #{vae_decoder_forward.6} parent=11 // pred_region
        _
      $region24: #{vae_decoder_forward.6} parent=11 // pred_fallthru
        _
      // Predicated region
      $region25: #{vae_decoder_forward.6} parent=11 // pred_check
        %p347 = pneg %p129
      $region26: #{vae_decoder_forward.6} parent=11 // pred_check_branch
        %349 = sbr.rel (%p347) target = $region28
      $region27: #{vae_decoder_forward.6} parent=11 // pred_region
        _
      $region28: #{vae_decoder_forward.6} parent=11 // pred_fallthru
        _
      // Predicated region
      $region29: #{vae_decoder_forward.6} parent=11 // pred_check
        %p350 = pneg %p150
      $region30: #{vae_decoder_forward.6} parent=11 // pred_check_branch
        %352 = sbr.rel (%p350) target = $region32
      $region31: #{vae_decoder_forward.6} parent=11 // pred_region
        _
      $region32: #{vae_decoder_forward.6} parent=11 // pred_fallthru
        _
      // Predicated region
      $region33: #{vae_decoder_forward.6} parent=11 // pred_check
        %p353 = pneg %p171
      $region34: #{vae_decoder_forward.6} parent=11 // pred_check_branch
        %355 = sbr.rel (%p353) target = $region36
      $region35: #{vae_decoder_forward.6} parent=11 // pred_region
        _
      $region36: #{vae_decoder_forward.6} parent=11 // pred_fallthru
        _
      // Predicated region
      $region37: #{vae_decoder_forward.6} parent=11 // pred_check
        %p356 = pneg %p192
      $region38: #{vae_decoder_forward.6} parent=11 // pred_check_branch
        %358 = sbr.rel (%p356) target = $region40
      $region39: #{vae_decoder_forward.6} parent=11 // pred_region
        _
      $region40: #{vae_decoder_forward.6} parent=11 // pred_fallthru
        _
      // Predicated region
      $region41: #{vae_decoder_forward.6} parent=11 // pred_check
        %p359 = pneg %p213
      $region42: #{vae_decoder_forward.6} parent=11 // pred_check_branch
        %361 = sbr.rel (%p359) target = $region44
      $region43: #{vae_decoder_forward.6} parent=11 // pred_region
        _
      $region44: #{vae_decoder_forward.6} parent=11 // pred_fallthru
        _
      // Predicated region
      $region45: #{vae_decoder_forward.6} parent=11 // pred_check
        %p362 = pneg %p234
      $region46: #{vae_decoder_forward.6} parent=11 // pred_check_branch
        %364 = sbr.rel (%p362) target = $region48
      $region47: #{vae_decoder_forward.6} parent=11 // pred_region
        _
      $region48: #{vae_decoder_forward.6} parent=11 // pred_fallthru
        _
      // Predicated region
      $region49: #{vae_decoder_forward.6} parent=11 // pred_check
        %p365 = pneg %p255
      $region50: #{vae_decoder_forward.6} parent=11 // pred_check_branch
        %367 = sbr.rel (%p365) target = $region52
      $region51: #{vae_decoder_forward.6} parent=11 // pred_region
        _
      $region52: #{vae_decoder_forward.6} parent=11 // pred_fallthru
        _
      // Predicated region
      $region53: #{vae_decoder_forward.6} parent=11 // pred_check
        %p368 = pneg %p276
      $region54: #{vae_decoder_forward.6} parent=11 // pred_check_branch
        %370 = sbr.rel (%p368) target = $region56
      $region55: #{vae_decoder_forward.6} parent=11 // pred_region
        _
      $region56: #{vae_decoder_forward.6} parent=11 // pred_fallthru
        _
      // Predicated region
      $region57: #{vae_decoder_forward.6} parent=11 // pred_check
        %p371 = pneg %p297
      $region58: #{vae_decoder_forward.6} parent=11 // pred_check_branch
        %373 = sbr.rel (%p371) target = $region60
      $region59: #{vae_decoder_forward.6} parent=11 // pred_region
        _
      $region60: #{vae_decoder_forward.6} parent=11 // pred_fallthru
        _
    $region12: #{vae_decoder_forward.6} parent=5 // pred_fallthru
      _
    %p374 = scmp.lt.s32.totalorder %s19, 2
    // Predicated region
    $region61: #{vae_decoder_forward.6} parent=5 // pred_check
      %p375 = pneg %p374
    $region62: #{vae_decoder_forward.6} parent=5 // pred_check_branch
      %377 = sbr.rel (%p375) target = $region64
    $region63: #{vae_decoder_forward.6} parent=5 // pred_region
      // Predicated region
      $region65: #{vae_decoder_forward.6} parent=63 // pred_check
        %p378 = pneg %p39
      $region66: #{vae_decoder_forward.6} parent=63 // pred_check_branch
        %380 = sbr.rel (%p378) target = $region68
      $region67: #{vae_decoder_forward.6} parent=63 // pred_region
        %p381 = scmp.lt.s32.totalorder %s19, 1
        %s382 = scalar_select %p381, %s19, 1
        %s383 = smul.addr %s382, 11
        %s384 = smul.addr %s383, 4
        %s385 = scalar_lea.vmem %s0, %s384
      $region68: #{vae_decoder_forward.6} parent=63 // pred_fallthru
        _
    $region64: #{vae_decoder_forward.6} parent=5 // pred_fallthru
      _
    %p386 = scmp.le.s32.totalorder 1, %s19
    %p387 = scmp.lt.s32.totalorder %s19, 3
    %p388 = pnand %p386, %p387
    %p389 = pneg %p388
    // Predicated region
    $region69: #{vae_decoder_forward.6} parent=5 // pred_check
      _
    $region70: #{vae_decoder_forward.6} parent=5 // pred_check_branch
      %391 = sbr.rel (%p388) target = $region72
    $region71: #{vae_decoder_forward.6} parent=5 // pred_region
      %s392 = ssub.s32 %s19, 1
      %p393 = scmp.lt.s32.totalorder %s24, 1
      %s394 = scalar_select %p393, %s24, 1
      %s395 = smul.addr %s394, 11
      %s396 = smul.addr %s395, 4
      %s397 = scalar_lea.vmem %s0, %s396
      %p398 = pneg %p45
      %p399 = pneg %p42
      %p400 = pneg %p66
      %p401 = pneg %p63
      %p402 = pneg %p87
      %p403 = pneg %p84
      %p404 = pneg %p108
      %p405 = pneg %p105
      %p406 = pneg %p129
      %p407 = pneg %p126
      %p408 = pneg %p150
      %p409 = pneg %p147
      %p410 = pneg %p171
      %p411 = pneg %p168
      %p412 = pneg %p192
      %p413 = pneg %p189
      %p414 = pneg %p213
      %p415 = pneg %p210
      %p416 = pneg %p234
      %p417 = pneg %p231
      %p418 = pneg %p255
      %p419 = pneg %p252
      %p420 = pneg %p276
      %p421 = pneg %p273
      %p422 = pneg %p297
      %p423 = pneg %p294
      %p424 = pneg %p323
      %p425 = pneg %p320
      %p426 = scmp.lt.s32.totalorder %s24, 1
      %s427 = scalar_select %p426, %s24, 1
      %s428 = smul.addr %s427, 16
      %s429 = smul.addr %s428, 4
      %s430 = scalar_lea.vmem %s13, %s429
      %p431 = scmp.lt.s32.totalorder %s24, 1
      %s432 = scalar_select %p431, %s24, 1
      %s433 = smul.addr %s432, 11
      %s434 = smul.addr %s433, 4
      %s435 = scalar_lea.vmem %s0, %s434
      %p436 = scmp.lt.s32.totalorder %s24, 1
      %s437 = scalar_select %p436, %s24, 1
      %s438 = smul.addr %s437, 16
      %s439 = smul.addr %s438, 4
      %s440 = scalar_lea.vmem %s13, %s439
      %v444 = vlaneseq
      %v445 = vshrl.u32 %v444, 7
      %v446 = vadd.s32 %v445, 8
      %v447 = vadd.s32 %v445, 16
      %v448 = vadd.s32 %v445, 24
      %v449 = vadd.s32 %v445, 32
      %v450 = vadd.s32 %v445, 40
      %v451 = vadd.s32 %v445, 48
      %v452 = vadd.s32 %v445, 56
      %vm453 = vcmp.lt.s32.totalorder %v445, 0
      %v454 = vsub.s32 0, %v445
      %v455 = vsel %vm453, %v454, %v445
      %v456 = vshrl.u32 %v455, 3
      %v457 = vand.u32 %v455, 7
      %v458 = vsub.s32 0, %v457
      %v459 = vsel %vm453, %v458, %v457
      %vm460 = vcmp.lt.s32.totalorder %v446, 0
      %v461 = vsub.s32 0, %v446
      %v462 = vsel %vm460, %v461, %v446
      %v463 = vshrl.u32 %v462, 3
      %v464 = vand.u32 %v462, 7
      %v465 = vsub.s32 0, %v464
      %v466 = vsel %vm460, %v465, %v464
      %vm467 = vcmp.lt.s32.totalorder %v447, 0
      %v468 = vsub.s32 0, %v447
      %v469 = vsel %vm467, %v468, %v447
      %v470 = vshrl.u32 %v469, 3
      %v471 = vand.u32 %v469, 7
      %v472 = vsub.s32 0, %v471
      %v473 = vsel %vm467, %v472, %v471
      %vm474 = vcmp.lt.s32.totalorder %v448, 0
      %v475 = vsub.s32 0, %v448
      %v476 = vsel %vm474, %v475, %v448
      %v477 = vshrl.u32 %v476, 3
      %v478 = vand.u32 %v476, 7
      %v479 = vsub.s32 0, %v478
      %v480 = vsel %vm474, %v479, %v478
      %vm481 = vcmp.lt.s32.totalorder %v449, 0
      %v482 = vsub.s32 0, %v449
      %v483 = vsel %vm481, %v482, %v449
      %v484 = vshrl.u32 %v483, 3
      %v485 = vand.u32 %v483, 7
      %v486 = vsub.s32 0, %v485
      %v487 = vsel %vm481, %v486, %v485
      %vm488 = vcmp.lt.s32.totalorder %v450, 0
      %v489 = vsub.s32 0, %v450
      %v490 = vsel %vm488, %v489, %v450
      %v491 = vshrl.u32 %v490, 3
      %v492 = vand.u32 %v490, 7
      %v493 = vsub.s32 0, %v492
      %v494 = vsel %vm488, %v493, %v492
      %vm495 = vcmp.lt.s32.totalorder %v451, 0
      %v496 = vsub.s32 0, %v451
      %v497 = vsel %vm495, %v496, %v451
      %v498 = vshrl.u32 %v497, 3
      %v499 = vand.u32 %v497, 7
      %v500 = vsub.s32 0, %v499
      %v501 = vsel %vm495, %v500, %v499
      %vm502 = vcmp.lt.s32.totalorder %v452, 0
      %v503 = vsub.s32 0, %v452
      %v504 = vsel %vm502, %v503, %v452
      %v505 = vshrl.u32 %v504, 3
      %v506 = vand.u32 %v504, 7
      %v507 = vsub.s32 0, %v506
      %v508 = vsel %vm502, %v507, %v506
      %vm509 = vcmp.ne.s32.totalorder %v459, 0
      %vm510 = vcmp.ne.s32.totalorder %v466, 0
      %vm511 = vcmp.ne.s32.totalorder %v473, 0
      %vm512 = vcmp.ne.s32.totalorder %v480, 0
      %vm513 = vcmp.ne.s32.totalorder %v487, 0
      %vm514 = vcmp.ne.s32.totalorder %v494, 0
      %vm515 = vcmp.ne.s32.totalorder %v501, 0
      %vm516 = vcmp.ne.s32.totalorder %v508, 0
      %vm517 = vcmp.lt.s32.totalorder %v459, 0
      %vm518 = vcmp.lt.s32.totalorder %v466, 0
      %vm519 = vcmp.lt.s32.totalorder %v473, 0
      %vm520 = vcmp.lt.s32.totalorder %v480, 0
      %vm521 = vcmp.lt.s32.totalorder %v487, 0
      %vm522 = vcmp.lt.s32.totalorder %v494, 0
      %vm523 = vcmp.lt.s32.totalorder %v501, 0
      %vm524 = vcmp.lt.s32.totalorder %v508, 0
      %vm525 = vmand %vm517, %vm509
      %vm526 = vmand %vm518, %vm510
      %vm527 = vmand %vm519, %vm511
      %vm528 = vmand %vm520, %vm512
      %vm529 = vmand %vm521, %vm513
      %vm530 = vmand %vm522, %vm514
      %vm531 = vmand %vm523, %vm515
      %vm532 = vmand %vm524, %vm516
      %v533 = vadd.s32 %v459, 8
      %v534 = vadd.s32 %v466, 8
      %v535 = vadd.s32 %v473, 8
      %v536 = vadd.s32 %v480, 8
      %v537 = vadd.s32 %v487, 8
      %v538 = vadd.s32 %v494, 8
      %v539 = vadd.s32 %v501, 8
      %v540 = vadd.s32 %v508, 8
      %v541 = vsel %vm525, %v533, %v459
      %v542 = vsel %vm526, %v534, %v466
      %v543 = vsel %vm527, %v535, %v473
      %v544 = vsel %vm528, %v536, %v480
      %v545 = vsel %vm529, %v537, %v487
      %v546 = vsel %vm530, %v538, %v494
      %v547 = vsel %vm531, %v539, %v501
      %v548 = vsel %vm532, %v540, %v508
      %v549 = vld [vmem:[%s435] sm:$0xf]
      %v550 = vld [vmem:[%s435 + $0x4] sm:$0xf]
      %v551 = vld [vmem:[%s435 + $0x8] sm:$0xf]
      %v552 = vld [vmem:[%s435 + $0xc] sm:$0xf]
      %v553 = vld [vmem:[%s435 + $0x10] sm:$0xf]
      %v554 = vld [vmem:[%s435 + $0x14] sm:$0xf]
      %v555 = vld [vmem:[%s435 + $0x18] sm:$0xf]
      %v556 = vld [vmem:[%s435 + $0x1c] sm:$0xf]
      %v557 = vadd.s32 %v541, 4294967295
      %v558 = vadd.s32 %v542, 4294967295
      %v559 = vadd.s32 %v543, 4294967295
      %v560 = vadd.s32 %v544, 4294967295
      %v561 = vadd.s32 %v545, 4294967295
      %v562 = vadd.s32 %v546, 4294967295
      %v563 = vadd.s32 %v547, 4294967295
      %v564 = vadd.s32 %v548, 4294967295
      %vm565 = vcmp.ge.s32.totalorder %v557, 0
      %vm566 = vcmp.ge.s32.totalorder %v558, 0
      %vm567 = vcmp.ge.s32.totalorder %v559, 0
      %vm568 = vcmp.ge.s32.totalorder %v560, 0
      %vm569 = vcmp.ge.s32.totalorder %v561, 0
      %vm570 = vcmp.ge.s32.totalorder %v562, 0
      %vm571 = vcmp.ge.s32.totalorder %v563, 0
      %vm572 = vcmp.ge.s32.totalorder %v564, 0
      %vm573 = vcmp.lt.s32.totalorder %v557, 8
      %vm574 = vcmp.lt.s32.totalorder %v558, 8
      %vm575 = vcmp.lt.s32.totalorder %v559, 8
      %vm576 = vcmp.lt.s32.totalorder %v560, 8
      %vm577 = vcmp.lt.s32.totalorder %v561, 8
      %vm578 = vcmp.lt.s32.totalorder %v562, 8
      %vm579 = vcmp.lt.s32.totalorder %v563, 8
      %vm580 = vcmp.lt.s32.totalorder %v564, 8
      %vm581 = vmand %vm565, %vm573
      %vm582 = vmand %vm566, %vm574
      %vm583 = vmand %vm567, %vm575
      %vm584 = vmand %vm568, %vm576
      %vm585 = vmand %vm569, %vm577
      %vm586 = vmand %vm570, %vm578
      %vm587 = vmand %vm571, %vm579
      %vm588 = vmand %vm572, %vm580
      %v589 = vsel %vm581, 1, 0
      %v590 = vsel %vm582, 1, 0
      %v591 = vsel %vm583, 1, 0
      %v592 = vsel %vm584, 1, 0
      %v593 = vsel %vm585, 1, 0
      %v594 = vsel %vm586, 1, 0
      %v595 = vsel %vm587, 1, 0
      %v596 = vsel %vm588, 1, 0
      %vm597 = vcmp.eq.s32.totalorder %v589, 1
      %vm598 = vcmp.eq.s32.totalorder %v590, 1
      %vm599 = vcmp.eq.s32.totalorder %v591, 1
      %vm600 = vcmp.eq.s32.totalorder %v592, 1
      %vm601 = vcmp.eq.s32.totalorder %v593, 1
      %vm602 = vcmp.eq.s32.totalorder %v594, 1
      %vm603 = vcmp.eq.s32.totalorder %v595, 1
      %vm604 = vcmp.eq.s32.totalorder %v596, 1
      %vm605 = vmpackc.low %vm597, %vm597
      %vm606 = vmpackc.low %vm598, %vm598
      %vm607 = vmpackc.low %vm599, %vm599
      %vm608 = vmpackc.low %vm600, %vm600
      %vm609 = vmpackc.low %vm601, %vm601
      %vm610 = vmpackc.low %vm602, %vm602
      %vm611 = vmpackc.low %vm603, %vm603
      %vm612 = vmpackc.low %vm604, %vm604
      %v613 = vsel %vm605, %v549, 0
      %v614 = vsel %vm606, %v550, 0
      %v615 = vsel %vm607, %v551, 0
      %v616 = vsel %vm608, %v552, 0
      %v617 = vsel %vm609, %v553, 0
      %v618 = vsel %vm610, %v554, 0
      %v619 = vsel %vm611, %v555, 0
      %v620 = vsel %vm612, %v556, 0
      %v621 = vld [vmem:[%s1] sm:$0xf]
      %v622 = vld [vmem:[%s1 + $0x4] sm:$0xf]
      %v623 = vld [vmem:[%s1 + $0x8] sm:$0xf]
      %v624 = vld [vmem:[%s1 + $0xc] sm:$0xf]
      %v625 = vld [vmem:[%s1 + $0x10] sm:$0xf]
      %v626 = vld [vmem:[%s1 + $0x14] sm:$0xf]
      %v627 = vld [vmem:[%s1 + $0x18] sm:$0xf]
      %v628 = vld [vmem:[%s1 + $0x1c] sm:$0xf]
      %v629 = vld [vmem:[%s435 + $0x20] sm:$0x1]
      %s630 = scalar_lea.vmem %s1, 32
      %v631 = vld [vmem:[%s630] sm:$0xf]
      %v632 = vld [vmem:[%s630 + $0x4] sm:$0xf]
      %v633 = vld [vmem:[%s630 + $0x8] sm:$0xf]
      %v634 = vld [vmem:[%s630 + $0xc] sm:$0xf]
      %v635 = vld [vmem:[%s630 + $0x10] sm:$0xf]
      %v636 = vld [vmem:[%s630 + $0x14] sm:$0xf]
      %v637 = vld [vmem:[%s630 + $0x18] sm:$0xf]
      %v638 = vld [vmem:[%s630 + $0x1c] sm:$0xf]
      %v648 = vunpack.c.l.b16 %v549
      %v649 = vunpack.c.l.b16 %v550
      %v650 = vunpack.c.l.b16 %v551
      %v651 = vunpack.c.l.b16 %v552
      %v652 = vunpack.c.l.b16 %v553
      %v653 = vunpack.c.l.b16 %v554
      %v654 = vunpack.c.l.b16 %v555
      %v655 = vunpack.c.l.b16 %v556
      %v656 = vunpack.c.l.b16 %v629
      %v657 = vpack.c.b16 %v649, %v648
      %v658 = vpack.c.b16 %v651, %v650
      %v659 = vpack.c.b16 %v653, %v652
      %v660 = vpack.c.b16 %v655, %v654
      %v661 = vpack.c.b16 %v656, %v656
      %vm662 = vsmask.f32 7424
      %v664 = vshrl.u32 %v657, 16
      %v666 = vshll.u32 %v657, 16
      %v668 = vrot.slane %v666, 1
      %v669 = vor.u32 %v664, %v668
      %v671 = vshll.u32 %v658, 16
      %v673 = vrot.slane %v671, 1
      %v674 = vsel %vm662, %v669, %v673
      %v675 = vshrl.u32 %v658, 16
      %v677 = vor.u32 %v675, %v673
      %v679 = vshll.u32 %v659, 16
      %v681 = vrot.slane %v679, 1
      %v682 = vsel %vm662, %v677, %v681
      %v683 = vshrl.u32 %v659, 16
      %v685 = vor.u32 %v683, %v681
      %v687 = vshll.u32 %v660, 16
      %v689 = vrot.slane %v687, 1
      %v690 = vsel %vm662, %v685, %v689
      %v691 = vshrl.u32 %v660, 16
      %v693 = vor.u32 %v691, %v689
      %v695 = vshll.u32 %v661, 16
      %v697 = vrot.slane %v695, 1
      %v698 = vsel %vm662, %v693, %v697
      %v707 = vunpack.c.l.b16 %v631
      %v708 = vunpack.c.l.b16 %v632
      %v709 = vunpack.c.l.b16 %v633
      %v710 = vunpack.c.l.b16 %v634
      %v711 = vunpack.c.l.b16 %v635
      %v712 = vunpack.c.l.b16 %v636
      %v713 = vunpack.c.l.b16 %v637
      %v714 = vunpack.c.l.b16 %v638
      %v715 = vpack.c.b16 %v708, %v707
      %v716 = vpack.c.b16 %v710, %v709
      %v717 = vpack.c.b16 %v712, %v711
      %v718 = vpack.c.b16 %v714, %v713
      %vm723 = vcmask 523264
      %v725 = vsel %vm723, %v674, 0
      %v728 = vsel %vm723, %v682, 0
      %v731 = vsel %vm723, %v690, 0
      %v734 = vsel %vm723, %v698, 0
      %736 = vmatprep.subr.bf16.mxu0 0
      %737 = vmatpush1.bf16.msra.mxu0 %v715
      %738 = vmatprep.subr.bf16.mxu0 0
      %739 = vmatpush1.bf16.msra.mxu0 %v716
      %740 = vmatprep.subr.bf16.mxu0 0
      %741 = vmatpush1.bf16.msra.mxu0 %v717
      %742 = vmatprep.subr.bf16.mxu0 0
      %743 = vmatpush1.bf16.msra.mxu0 %v718
      %744 = vmatprep.subr.bf16.mxu0 0
      %745 = vmatpush1.bf16.msra.mxu0 0
      %746 = vmatprep.subr.bf16.mxu0 0
      %747 = vmatpush1.bf16.msra.mxu0 0
      %748 = vmatprep.subr.bf16.mxu0 0
      %749 = vmatpush1.bf16.msra.mxu0 0
      %750 = vmatprep.subr.bf16.mxu0 0
      %751 = vmatpush1.bf16.msra.mxu0 0
      %752 = vmatprep.subr.bf16.mxu0 0
      %753 = vmatpush1.bf16.msra.mxu0 0
      %754 = vmatprep.subr.bf16.mxu0 0
      %755 = vmatpush1.bf16.msra.mxu0 0
      %756 = vmatprep.subr.bf16.mxu0 0
      %757 = vmatpush1.bf16.msra.mxu0 0
      %758 = vmatprep.subr.bf16.mxu0 0
      %759 = vmatpush1.bf16.msra.mxu0 0
      %760 = vmatprep.subr.bf16.mxu0 0
      %761 = vmatpush1.bf16.msra.mxu0 0
      %762 = vmatprep.subr.bf16.mxu0 0
      %763 = vmatpush1.bf16.msra.mxu0 0
      %764 = vmatprep.subr.bf16.mxu0 0
      %765 = vmatpush1.bf16.msra.mxu0 0
      %766 = vmatprep.subr.bf16.mxu0 0
      %767 = vmatpush1.bf16.msra.mxu0 0
      %768 = vmatprep.mubr.bf16.mxu0 0
      %769 = vmatmul.mubr.bf16.gmra.mrb[0].mxu0 %v725
      %v770 = vpop.f32.mrb[0].mxu0
      %v771 = vadd.f32 0.0, %v770
      %v772 = vpop.f32.mrb[0].mxu0
      %v773 = vpop.f32.mrb[0].mxu0
      %v774 = vadd.f32 0.0, %v773
      %v775 = vpop.f32.mrb[0].mxu0
      %776 = vmatprep.mubr.bf16.mxu0 0
      %777 = vmatmul.mubr.bf16.gmra.mrb[0].mxu0 %v728
      %v778 = vpop.f32.mrb[0].mxu0
      %v779 = vadd.f32 0.0, %v778
      %v780 = vpop.f32.mrb[0].mxu0
      %v781 = vpop.f32.mrb[0].mxu0
      %v782 = vadd.f32 0.0, %v781
      %v783 = vpop.f32.mrb[0].mxu0
      %784 = vmatprep.mubr.bf16.mxu0 0
      %785 = vmatmul.mubr.bf16.gmra.mrb[0].mxu0 %v731
      %v786 = vpop.f32.mrb[0].mxu0
      %v787 = vadd.f32 0.0, %v786
      %v788 = vpop.f32.mrb[0].mxu0
      %v789 = vpop.f32.mrb[0].mxu0
      %v790 = vadd.f32 0.0, %v789
      %v791 = vpop.f32.mrb[0].mxu0
      %792 = vmatprep.mubr.bf16.mxu0 0
      %793 = vmatmul.mubr.bf16.gmra.mrb[0].mxu0 %v734
      %v794 = vpop.f32.mrb[0].mxu0
      %v795 = vadd.f32 0.0, %v794
      %v796 = vpop.f32.mrb[0].mxu0
      %v797 = vpop.f32.mrb[0].mxu0
      %v798 = vadd.f32 0.0, %v797
      %v799 = vpop.f32.mrb[0].mxu0
      %800 = vdwg.mxu0
      %v809 = vunpack.c.l.b16 %v613
      %v810 = vunpack.c.l.b16 %v614
      %v811 = vunpack.c.l.b16 %v615
      %v812 = vunpack.c.l.b16 %v616
      %v813 = vunpack.c.l.b16 %v617
      %v814 = vunpack.c.l.b16 %v618
      %v815 = vunpack.c.l.b16 %v619
      %v816 = vunpack.c.l.b16 %v620
      %v817 = vpack.c.b16 %v810, %v809
      %v818 = vpack.c.b16 %v812, %v811
      %v819 = vpack.c.b16 %v814, %v813
      %v820 = vpack.c.b16 %v816, %v815
      %v829 = vunpack.c.l.b16 %v621
      %v830 = vunpack.c.l.b16 %v622
      %v831 = vunpack.c.l.b16 %v623
      %v832 = vunpack.c.l.b16 %v624
      %v833 = vunpack.c.l.b16 %v625
      %v834 = vunpack.c.l.b16 %v626
      %v835 = vunpack.c.l.b16 %v627
      %v836 = vunpack.c.l.b16 %v628
      %v837 = vpack.c.b16 %v830, %v829
      %v838 = vpack.c.b16 %v832, %v831
      %v839 = vpack.c.b16 %v834, %v833
      %v840 = vpack.c.b16 %v836, %v835
      %v846 = vsel %vm723, %v817, 0
      %v849 = vsel %vm723, %v818, 0
      %v852 = vsel %vm723, %v819, 0
      %v855 = vsel %vm723, %v820, 0
      %857 = vmatprep.subr.bf16.mxu0 0
      %858 = vmatpush1.bf16.msra.mxu0 %v837
      %859 = vmatprep.subr.bf16.mxu0 0
      %860 = vmatpush1.bf16.msra.mxu0 %v838
      %861 = vmatprep.subr.bf16.mxu0 0
      %862 = vmatpush1.bf16.msra.mxu0 %v839
      %863 = vmatprep.subr.bf16.mxu0 0
      %864 = vmatpush1.bf16.msra.mxu0 %v840
      %865 = vmatprep.subr.bf16.mxu0 0
      %866 = vmatpush1.bf16.msra.mxu0 0
      %867 = vmatprep.subr.bf16.mxu0 0
      %868 = vmatpush1.bf16.msra.mxu0 0
      %869 = vmatprep.subr.bf16.mxu0 0
      %870 = vmatpush1.bf16.msra.mxu0 0
      %871 = vmatprep.subr.bf16.mxu0 0
      %872 = vmatpush1.bf16.msra.mxu0 0
      %873 = vmatprep.subr.bf16.mxu0 0
      %874 = vmatpush1.bf16.msra.mxu0 0
      %875 = vmatprep.subr.bf16.mxu0 0
      %876 = vmatpush1.bf16.msra.mxu0 0
      %877 = vmatprep.subr.bf16.mxu0 0
      %878 = vmatpush1.bf16.msra.mxu0 0
      %879 = vmatprep.subr.bf16.mxu0 0
      %880 = vmatpush1.bf16.msra.mxu0 0
      %881 = vmatprep.subr.bf16.mxu0 0
      %882 = vmatpush1.bf16.msra.mxu0 0
      %883 = vmatprep.subr.bf16.mxu0 0
      %884 = vmatpush1.bf16.msra.mxu0 0
      %885 = vmatprep.subr.bf16.mxu0 0
      %886 = vmatpush1.bf16.msra.mxu0 0
      %887 = vmatprep.subr.bf16.mxu0 0
      %888 = vmatpush1.bf16.msra.mxu0 0
      %889 = vmatprep.mubr.bf16.mxu0 0
      %890 = vmatmul.mubr.bf16.gmra.mrb[0].mxu0 %v846
      %v891 = vpop.f32.mrb[0].mxu0
      %v892 = vadd.f32 %v771, %v891
      %v893 = vpop.f32.mrb[0].mxu0
      %v894 = vpop.f32.mrb[0].mxu0
      %v895 = vadd.f32 %v774, %v894
      %v896 = vpop.f32.mrb[0].mxu0
      %897 = vmatprep.mubr.bf16.mxu0 0
      %898 = vmatmul.mubr.bf16.gmra.mrb[0].mxu0 %v849
      %v899 = vpop.f32.mrb[0].mxu0
      %v900 = vadd.f32 %v779, %v899
      %v901 = vpop.f32.mrb[0].mxu0
      %v902 = vpop.f32.mrb[0].mxu0
      %v903 = vadd.f32 %v782, %v902
      %v904 = vpop.f32.mrb[0].mxu0
      %905 = vmatprep.mubr.bf16.mxu0 0
      %906 = vmatmul.mubr.bf16.gmra.mrb[0].mxu0 %v852
      %v907 = vpop.f32.mrb[0].mxu0
      %v908 = vadd.f32 %v787, %v907
      %v909 = vpop.f32.mrb[0].mxu0
      %v910 = vpop.f32.mrb[0].mxu0
      %v911 = vadd.f32 %v790, %v910
      %v912 = vpop.f32.mrb[0].mxu0
      %913 = vmatprep.mubr.bf16.mxu0 0
      %914 = vmatmul.mubr.bf16.gmra.mrb[0].mxu0 %v855
      %v915 = vpop.f32.mrb[0].mxu0
      %v916 = vadd.f32 %v795, %v915
      %v917 = vpop.f32.mrb[0].mxu0
      %v918 = vpop.f32.mrb[0].mxu0
      %v919 = vadd.f32 %v798, %v918
      %v920 = vpop.f32.mrb[0].mxu0
      %921 = vdwg.mxu0
      %v922 = vld [vmem:[%s435] sm:$0xe]
      %v923 = vadd.s32 %v541, 1
      %v924 = vadd.s32 %v542, 1
      %v925 = vadd.s32 %v543, 1
      %v926 = vadd.s32 %v544, 1
      %v927 = vadd.s32 %v545, 1
      %v928 = vadd.s32 %v546, 1
      %v929 = vadd.s32 %v547, 1
      %v930 = vadd.s32 %v548, 1
      %vm931 = vcmp.ge.s32.totalorder %v923, 0
      %vm932 = vcmp.ge.s32.totalorder %v924, 0
      %vm933 = vcmp.ge.s32.totalorder %v925, 0
      %vm934 = vcmp.ge.s32.totalorder %v926, 0
      %vm935 = vcmp.ge.s32.totalorder %v927, 0
      %vm936 = vcmp.ge.s32.totalorder %v928, 0
      %vm937 = vcmp.ge.s32.totalorder %v929, 0
      %vm938 = vcmp.ge.s32.totalorder %v930, 0
      %vm939 = vcmp.lt.s32.totalorder %v923, 8
      %vm940 = vcmp.lt.s32.totalorder %v924, 8
      %vm941 = vcmp.lt.s32.totalorder %v925, 8
      %vm942 = vcmp.lt.s32.totalorder %v926, 8
      %vm943 = vcmp.lt.s32.totalorder %v927, 8
      %vm944 = vcmp.lt.s32.totalorder %v928, 8
      %vm945 = vcmp.lt.s32.totalorder %v929, 8
      %vm946 = vcmp.lt.s32.totalorder %v930, 8
      %vm947 = vmand %vm931, %vm939
      %vm948 = vmand %vm932, %vm940
      %vm949 = vmand %vm933, %vm941
      %vm950 = vmand %vm934, %vm942
      %vm951 = vmand %vm935, %vm943
      %vm952 = vmand %vm936, %vm944
      %vm953 = vmand %vm937, %vm945
      %vm954 = vmand %vm938, %vm946
      %v955 = vsel %vm947, 1, 0
      %v956 = vsel %vm948, 1, 0
      %v957 = vsel %vm949, 1, 0
      %v958 = vsel %vm950, 1, 0
      %v959 = vsel %vm951, 1, 0
      %v960 = vsel %vm952, 1, 0
      %v961 = vsel %vm953, 1, 0
      %v962 = vsel %vm954, 1, 0
      %vm963 = vcmp.eq.s32.totalorder %v955, 1
      %vm964 = vcmp.eq.s32.totalorder %v956, 1
      %vm965 = vcmp.eq.s32.totalorder %v957, 1
      %vm966 = vcmp.eq.s32.totalorder %v958, 1
      %vm967 = vcmp.eq.s32.totalorder %v959, 1
      %vm968 = vcmp.eq.s32.totalorder %v960, 1
      %vm969 = vcmp.eq.s32.totalorder %v961, 1
      %vm970 = vcmp.eq.s32.totalorder %v962, 1
      %vm971 = vmpackc.low %vm963, %vm963
      %vm972 = vmpackc.low %vm964, %vm964
      %vm973 = vmpackc.low %vm965, %vm965
      %vm974 = vmpackc.low %vm966, %vm966
      %vm975 = vmpackc.low %vm967, %vm967
      %vm976 = vmpackc.low %vm968, %vm968
      %vm977 = vmpackc.low %vm969, %vm969
      %vm978 = vmpackc.low %vm970, %vm970
      %v979 = vsel %vm971, 65537, 0
      %v980 = vsel %vm972, 65537, 0
      %v981 = vsel %vm973, 65537, 0
      %v982 = vsel %vm974, 65537, 0
      %v983 = vsel %vm975, 65537, 0
      %v984 = vsel %vm976, 65537, 0
      %v985 = vsel %vm977, 65537, 0
      %v986 = vsel %vm978, 65537, 0
      %vm987 = vcmask 1040384
      %vm988 = vcmask 1044484
      %vm989 = vmor %vm987, %vm988
      %v990 = vrot.slane %v979, 7
      %v991 = vrot.slane %v990, 4
      %v992 = vrot.slane %v980, 7
      %v993 = vsel %vm989, %v991, %v992
      %v994 = vrot.slane %v992, 4
      %v995 = vrot.slane %v981, 7
      %v996 = vsel %vm989, %v994, %v995
      %v997 = vrot.slane %v995, 4
      %v998 = vrot.slane %v982, 7
      %v999 = vsel %vm989, %v997, %v998
      %v1000 = vrot.slane %v998, 4
      %v1001 = vrot.slane %v983, 7
      %v1002 = vsel %vm989, %v1000, %v1001
      %v1003 = vrot.slane %v1001, 4
      %v1004 = vrot.slane %v984, 7
      %v1005 = vsel %vm989, %v1003, %v1004
      %v1006 = vrot.slane %v1004, 4
      %v1007 = vrot.slane %v985, 7
      %v1008 = vsel %vm989, %v1006, %v1007
      %v1009 = vrot.slane %v1007, 4
      %v1010 = vrot.slane %v986, 7
      %v1011 = vsel %vm989, %v1009, %v1010
      %v1012 = vrot.slane %v1010, 4
      %vm1013 = vcmp.ne.s16.totalorder %v990, 0
      %vm1014 = vcmp.ne.s16.totalorder %v993, 0
      %vm1015 = vcmp.ne.s16.totalorder %v996, 0
      %vm1016 = vcmp.ne.s16.totalorder %v999, 0
      %vm1017 = vcmp.ne.s16.totalorder %v1002, 0
      %vm1018 = vcmp.ne.s16.totalorder %v1005, 0
      %vm1019 = vcmp.ne.s16.totalorder %v1008, 0
      %vm1020 = vcmp.ne.s16.totalorder %v1011, 0
      %vm1021 = vcmp.ne.s16.totalorder %v1012, 0
      %v1022 = vsel %vm1013, %v922, 0
      %v1023 = vsel %vm1014, %v550, 0
      %v1024 = vsel %vm1015, %v551, 0
      %v1025 = vsel %vm1016, %v552, 0
      %v1026 = vsel %vm1017, %v553, 0
      %v1027 = vsel %vm1018, %v554, 0
      %v1028 = vsel %vm1019, %v555, 0
      %v1029 = vsel %vm1020, %v556, 0
      %v1030 = vsel %vm1021, %v629, 0
      %s1031 = scalar_lea.vmem %s1, 64
      %v1032 = vld [vmem:[%s1031] sm:$0xf]
      %v1033 = vld [vmem:[%s1031 + $0x4] sm:$0xf]
      %v1034 = vld [vmem:[%s1031 + $0x8] sm:$0xf]
      %v1035 = vld [vmem:[%s1031 + $0xc] sm:$0xf]
      %v1036 = vld [vmem:[%s1031 + $0x10] sm:$0xf]
      %v1037 = vld [vmem:[%s1031 + $0x14] sm:$0xf]
      %v1038 = vld [vmem:[%s1031 + $0x18] sm:$0xf]
      %v1039 = vld [vmem:[%s1031 + $0x1c] sm:$0xf]
      %v1049 = vunpack.c.l.b16 %v1022
      %v1050 = vunpack.c.l.b16 %v1023
      %v1051 = vunpack.c.l.b16 %v1024
      %v1052 = vunpack.c.l.b16 %v1025
      %v1053 = vunpack.c.l.b16 %v1026
      %v1054 = vunpack.c.l.b16 %v1027
      %v1055 = vunpack.c.l.b16 %v1028
      %v1056 = vunpack.c.l.b16 %v1029
      %v1057 = vunpack.c.l.b16 %v1030
      %v1058 = vpack.c.b16 %v1050, %v1049
      %v1059 = vpack.c.b16 %v1052, %v1051
      %v1060 = vpack.c.b16 %v1054, %v1053
      %v1061 = vpack.c.b16 %v1056, %v1055
      %v1062 = vpack.c.b16 %v1057, %v1057
      %vm1063 = vcmask 1046528
      %v1064 = vrot.slane %v1058, 1
      %v1065 = vrot.slane %v1059, 1
      %v1066 = vsel %vm1063, %v1064, %v1065
      %v1067 = vrot.slane %v1060, 1
      %v1068 = vsel %vm1063, %v1065, %v1067
      %v1069 = vrot.slane %v1061, 1
      %v1070 = vsel %vm1063, %v1067, %v1069
      %v1071 = vrot.slane %v1062, 1
      %v1072 = vsel %vm1063, %v1069, %v1071
      %v1081 = vunpack.c.l.b16 %v1032
      %v1082 = vunpack.c.l.b16 %v1033
      %v1083 = vunpack.c.l.b16 %v1034
      %v1084 = vunpack.c.l.b16 %v1035
      %v1085 = vunpack.c.l.b16 %v1036
      %v1086 = vunpack.c.l.b16 %v1037
      %v1087 = vunpack.c.l.b16 %v1038
      %v1088 = vunpack.c.l.b16 %v1039
      %v1089 = vpack.c.b16 %v1082, %v1081
      %v1090 = vpack.c.b16 %v1084, %v1083
      %v1091 = vpack.c.b16 %v1086, %v1085
      %v1092 = vpack.c.b16 %v1088, %v1087
      %v1098 = vsel %vm723, %v1066, 0
      %v1101 = vsel %vm723, %v1068, 0
      %v1104 = vsel %vm723, %v1070, 0
      %v1107 = vsel %vm723, %v1072, 0
      %1109 = vmatprep.subr.bf16.mxu0 0
      %1110 = vmatpush1.bf16.msra.mxu0 %v1089
      %1111 = vmatprep.subr.bf16.mxu0 0
      %1112 = vmatpush1.bf16.msra.mxu0 %v1090
      %1113 = vmatprep.subr.bf16.mxu0 0
      %1114 = vmatpush1.bf16.msra.mxu0 %v1091
      %1115 = vmatprep.subr.bf16.mxu0 0
      %1116 = vmatpush1.bf16.msra.mxu0 %v1092
      %1117 = vmatprep.subr.bf16.mxu0 0
      %1118 = vmatpush1.bf16.msra.mxu0 0
      %1119 = vmatprep.subr.bf16.mxu0 0
      %1120 = vmatpush1.bf16.msra.mxu0 0
      %1121 = vmatprep.subr.bf16.mxu0 0
      %1122 = vmatpush1.bf16.msra.mxu0 0
      %1123 = vmatprep.subr.bf16.mxu0 0
      %1124 = vmatpush1.bf16.msra.mxu0 0
      %1125 = vmatprep.subr.bf16.mxu0 0
      %1126 = vmatpush1.bf16.msra.mxu0 0
      %1127 = vmatprep.subr.bf16.mxu0 0
      %1128 = vmatpush1.bf16.msra.mxu0 0
      %1129 = vmatprep.subr.bf16.mxu0 0
      %1130 = vmatpush1.bf16.msra.mxu0 0
      %1131 = vmatprep.subr.bf16.mxu0 0
      %1132 = vmatpush1.bf16.msra.mxu0 0
      %1133 = vmatprep.subr.bf16.mxu0 0
      %1134 = vmatpush1.bf16.msra.mxu0 0
      %1135 = vmatprep.subr.bf16.mxu0 0
      %1136 = vmatpush1.bf16.msra.mxu0 0
      %1137 = vmatprep.subr.bf16.mxu0 0
      %1138 = vmatpush1.bf16.msra.mxu0 0
      %1139 = vmatprep.subr.bf16.mxu0 0
      %1140 = vmatpush1.bf16.msra.mxu0 0
      %1141 = vmatprep.mubr.bf16.mxu0 0
      %1142 = vmatmul.mubr.bf16.gmra.mrb[0].mxu0 %v1098
      %v1143 = vpop.f32.mrb[0].mxu0
      %v1144 = vadd.f32 0.0, %v1143
      %v1145 = vpop.f32.mrb[0].mxu0
      %v1146 = vpop.f32.mrb[0].mxu0
      %v1147 = vadd.f32 0.0, %v1146
      %v1148 = vpop.f32.mrb[0].mxu0
      %1149 = vmatprep.mubr.bf16.mxu0 0
      %1150 = vmatmul.mubr.bf16.gmra.mrb[0].mxu0 %v1101
      %v1151 = vpop.f32.mrb[0].mxu0
      %v1152 = vadd.f32 0.0, %v1151
      %v1153 = vpop.f32.mrb[0].mxu0
      %v1154 = vpop.f32.mrb[0].mxu0
      %v1155 = vadd.f32 0.0, %v1154
      %v1156 = vpop.f32.mrb[0].mxu0
      %1157 = vmatprep.mubr.bf16.mxu0 0
      %1158 = vmatmul.mubr.bf16.gmra.mrb[0].mxu0 %v1104
      %v1159 = vpop.f32.mrb[0].mxu0
      %v1160 = vadd.f32 0.0, %v1159
      %v1161 = vpop.f32.mrb[0].mxu0
      %v1162 = vpop.f32.mrb[0].mxu0
      %v1163 = vadd.f32 0.0, %v1162
      %v1164 = vpop.f32.mrb[0].mxu0
      %1165 = vmatprep.mubr.bf16.mxu0 0
      %1166 = vmatmul.mubr.bf16.gmra.mrb[0].mxu0 %v1107
      %v1167 = vpop.f32.mrb[0].mxu0
      %v1168 = vadd.f32 0.0, %v1167
      %v1169 = vpop.f32.mrb[0].mxu0
      %v1170 = vpop.f32.mrb[0].mxu0
      %v1171 = vadd.f32 0.0, %v1170
      %v1172 = vpop.f32.mrb[0].mxu0
      %1173 = vdwg.mxu0
      %v1174 = vadd.f32 %v892, %v1144
      %v1175 = vadd.f32 %v895, %v1147
      %v1176 = vadd.f32 %v900, %v1152
      %v1177 = vadd.f32 %v903, %v1155
      %v1178 = vadd.f32 %v908, %v1160
      %v1179 = vadd.f32 %v911, %v1163
      %v1180 = vadd.f32 %v916, %v1168
      %v1181 = vadd.f32 %v919, %v1171
      %v1182 = vld [vmem:[%s435 + $0x20] sm:$0xf]
      %v1183 = vsel %vm605, %v550, 0
      %v1184 = vsel %vm606, %v551, 0
      %v1185 = vsel %vm607, %v552, 0
      %v1186 = vsel %vm608, %v553, 0
      %v1187 = vsel %vm609, %v554, 0
      %v1188 = vsel %vm610, %v555, 0
      %v1189 = vsel %vm611, %v556, 0
      %v1190 = vsel %vm612, %v1182, 0
      %s1191 = scalar_lea.vmem %s1, 96
      %v1192 = vld [vmem:[%s1191] sm:$0xf]
      %v1193 = vld [vmem:[%s1191 + $0x4] sm:$0xf]
      %v1194 = vld [vmem:[%s1191 + $0x8] sm:$0xf]
      %v1195 = vld [vmem:[%s1191 + $0xc] sm:$0xf]
      %v1196 = vld [vmem:[%s1191 + $0x10] sm:$0xf]
      %v1197 = vld [vmem:[%s1191 + $0x14] sm:$0xf]
      %v1198 = vld [vmem:[%s1191 + $0x18] sm:$0xf]
      %v1199 = vld [vmem:[%s1191 + $0x1c] sm:$0xf]
      %v1208 = vunpack.c.l.b16 %v1183
      %v1209 = vunpack.c.l.b16 %v1184
      %v1210 = vunpack.c.l.b16 %v1185
      %v1211 = vunpack.c.l.b16 %v1186
      %v1212 = vunpack.c.l.b16 %v1187
      %v1213 = vunpack.c.l.b16 %v1188
      %v1214 = vunpack.c.l.b16 %v1189
      %v1215 = vunpack.c.l.b16 %v1190
      %v1216 = vpack.c.b16 %v1209, %v1208
      %v1217 = vpack.c.b16 %v1211, %v1210
      %v1218 = vpack.c.b16 %v1213, %v1212
      %v1219 = vpack.c.b16 %v1215, %v1214
      %v1228 = vunpack.c.l.b16 %v1192
      %v1229 = vunpack.c.l.b16 %v1193
      %v1230 = vunpack.c.l.b16 %v1194
      %v1231 = vunpack.c.l.b16 %v1195
      %v1232 = vunpack.c.l.b16 %v1196
      %v1233 = vunpack.c.l.b16 %v1197
      %v1234 = vunpack.c.l.b16 %v1198
      %v1235 = vunpack.c.l.b16 %v1199
      %v1236 = vpack.c.b16 %v1229, %v1228
      %v1237 = vpack.c.b16 %v1231, %v1230
      %v1238 = vpack.c.b16 %v1233, %v1232
      %v1239 = vpack.c.b16 %v1235, %v1234
      %v1245 = vsel %vm723, %v1216, 0
      %v1248 = vsel %vm723, %v1217, 0
      %v1251 = vsel %vm723, %v1218, 0
      %v1254 = vsel %vm723, %v1219, 0
      %1256 = vmatprep.subr.bf16.mxu0 0
      %1257 = vmatpush1.bf16.msra.mxu0 %v1236
      %1258 = vmatprep.subr.bf16.mxu0 0
      %1259 = vmatpush1.bf16.msra.mxu0 %v1237
      %1260 = vmatprep.subr.bf16.mxu0 0
      %1261 = vmatpush1.bf16.msra.mxu0 %v1238
      %1262 = vmatprep.subr.bf16.mxu0 0
      %1263 = vmatpush1.bf16.msra.mxu0 %v1239
      %1264 = vmatprep.subr.bf16.mxu0 0
      %1265 = vmatpush1.bf16.msra.mxu0 0
      %1266 = vmatprep.subr.bf16.mxu0 0
      %1267 = vmatpush1.bf16.msra.mxu0 0
      %1268 = vmatprep.subr.bf16.mxu0 0
      %1269 = vmatpush1.bf16.msra.mxu0 0
      %1270 = vmatprep.subr.bf16.mxu0 0
      %1271 = vmatpush1.bf16.msra.mxu0 0
      %1272 = vmatprep.subr.bf16.mxu0 0
      %1273 = vmatpush1.bf16.msra.mxu0 0
      %1274 = vmatprep.subr.bf16.mxu0 0
      %1275 = vmatpush1.bf16.msra.mxu0 0
      %1276 = vmatprep.subr.bf16.mxu0 0
      %1277 = vmatpush1.bf16.msra.mxu0 0
      %1278 = vmatprep.subr.bf16.mxu0 0
      %1279 = vmatpush1.bf16.msra.mxu0 0
      %1280 = vmatprep.subr.bf16.mxu0 0
      %1281 = vmatpush1.bf16.msra.mxu0 0
      %1282 = vmatprep.subr.bf16.mxu0 0
      %1283 = vmatpush1.bf16.msra.mxu0 0
      %1284 = vmatprep.subr.bf16.mxu0 0
      %1285 = vmatpush1.bf16.msra.mxu0 0
      %1286 = vmatprep.subr.bf16.mxu0 0
      %1287 = vmatpush1.bf16.msra.mxu0 0
      %1288 = vmatprep.mubr.bf16.mxu0 0
      %1289 = vmatmul.mubr.bf16.gmra.mrb[0].mxu0 %v1245
      %v1290 = vpop.f32.mrb[0].mxu0
      %v1291 = vadd.f32 0.0, %v1290
      %v1292 = vpop.f32.mrb[0].mxu0
      %v1293 = vpop.f32.mrb[0].mxu0
      %v1294 = vadd.f32 0.0, %v1293
      %v1295 = vpop.f32.mrb[0].mxu0
      %1296 = vmatprep.mubr.bf16.mxu0 0
      %1297 = vmatmul.mubr.bf16.gmra.mrb[0].mxu0 %v1248
      %v1298 = vpop.f32.mrb[0].mxu0
      %v1299 = vadd.f32 0.0, %v1298
      %v1300 = vpop.f32.mrb[0].mxu0
      %v1301 = vpop.f32.mrb[0].mxu0
      %v1302 = vadd.f32 0.0, %v1301
      %v1303 = vpop.f32.mrb[0].mxu0
      %1304 = vmatprep.mubr.bf16.mxu0 0
      %1305 = vmatmul.mubr.bf16.gmra.mrb[0].mxu0 %v1251
      %v1306 = vpop.f32.mrb[0].mxu0
      %v1307 = vadd.f32 0.0, %v1306
      %v1308 = vpop.f32.mrb[0].mxu0
      %v1309 = vpop.f32.mrb[0].mxu0
      %v1310 = vadd.f32 0.0, %v1309
      %v1311 = vpop.f32.mrb[0].mxu0
      %1312 = vmatprep.mubr.bf16.mxu0 0
      %1313 = vmatmul.mubr.bf16.gmra.mrb[0].mxu0 %v1254
      %v1314 = vpop.f32.mrb[0].mxu0
      %v1315 = vadd.f32 0.0, %v1314
      %v1316 = vpop.f32.mrb[0].mxu0
      %v1317 = vpop.f32.mrb[0].mxu0
      %v1318 = vadd.f32 0.0, %v1317
      %v1319 = vpop.f32.mrb[0].mxu0
      %1320 = vdwg.mxu0
      %v1321 = vadd.f32 %v1174, %v1291
      %v1322 = vadd.f32 %v1175, %v1294
      %v1323 = vadd.f32 %v1176, %v1299
      %v1324 = vadd.f32 %v1177, %v1302
      %v1325 = vadd.f32 %v1178, %v1307
      %v1326 = vadd.f32 %v1179, %v1310
      %v1327 = vadd.f32 %v1180, %v1315
      %v1328 = vadd.f32 %v1181, %v1318
      %v1329 = vld [vmem:[%s435 + $0x4] sm:$0xf]
      %v1330 = vld [vmem:[%s435 + $0x8] sm:$0xf]
      %v1331 = vld [vmem:[%s435 + $0xc] sm:$0xf]
      %v1332 = vld [vmem:[%s435 + $0x10] sm:$0xf]
      %v1333 = vld [vmem:[%s435 + $0x14] sm:$0xf]
      %v1334 = vld [vmem:[%s435 + $0x18] sm:$0xf]
      %v1335 = vld [vmem:[%s435 + $0x1c] sm:$0xf]
      %v1336 = vld [vmem:[%s435 + $0x20] sm:$0xf]
      %v1337 = vld [vmem:[%s435 + $0x24] sm:$0x1]
      %s1338 = scalar_lea.vmem %s1, 128
      %v1339 = vld [vmem:[%s1338] sm:$0xf]
      %v1340 = vld [vmem:[%s1338 + $0x4] sm:$0xf]
      %v1341 = vld [vmem:[%s1338 + $0x8] sm:$0xf]
      %v1342 = vld [vmem:[%s1338 + $0xc] sm:$0xf]
      %v1343 = vld [vmem:[%s1338 + $0x10] sm:$0xf]
      %v1344 = vld [vmem:[%s1338 + $0x14] sm:$0xf]
      %v1345 = vld [vmem:[%s1338 + $0x18] sm:$0xf]
      %v1346 = vld [vmem:[%s1338 + $0x1c] sm:$0xf]
      %v1356 = vunpack.c.l.b16 %v1329
      %v1357 = vunpack.c.l.b16 %v1330
      %v1358 = vunpack.c.l.b16 %v1331
      %v1359 = vunpack.c.l.b16 %v1332
      %v1360 = vunpack.c.l.b16 %v1333
      %v1361 = vunpack.c.l.b16 %v1334
      %v1362 = vunpack.c.l.b16 %v1335
      %v1363 = vunpack.c.l.b16 %v1336
      %v1364 = vunpack.c.l.b16 %v1337
      %v1365 = vpack.c.b16 %v1357, %v1356
      %v1366 = vpack.c.b16 %v1359, %v1358
      %v1367 = vpack.c.b16 %v1361, %v1360
      %v1368 = vpack.c.b16 %v1363, %v1362
      %v1369 = vpack.c.b16 %v1364, %v1364
      %v1371 = vshrl.u32 %v1365, 16
      %v1373 = vshll.u32 %v1365, 16
      %v1375 = vrot.slane %v1373, 1
      %v1376 = vor.u32 %v1371, %v1375
      %v1378 = vshll.u32 %v1366, 16
      %v1380 = vrot.slane %v1378, 1
      %v1381 = vsel %vm662, %v1376, %v1380
      %v1382 = vshrl.u32 %v1366, 16
      %v1384 = vor.u32 %v1382, %v1380
      %v1386 = vshll.u32 %v1367, 16
      %v1388 = vrot.slane %v1386, 1
      %v1389 = vsel %vm662, %v1384, %v1388
      %v1390 = vshrl.u32 %v1367, 16
      %v1392 = vor.u32 %v1390, %v1388
      %v1394 = vshll.u32 %v1368, 16
      %v1396 = vrot.slane %v1394, 1
      %v1397 = vsel %vm662, %v1392, %v1396
      %v1398 = vshrl.u32 %v1368, 16
      %v1400 = vor.u32 %v1398, %v1396
      %v1402 = vshll.u32 %v1369, 16
      %v1404 = vrot.slane %v1402, 1
      %v1405 = vsel %vm662, %v1400, %v1404
      %v1414 = vunpack.c.l.b16 %v1339
      %v1415 = vunpack.c.l.b16 %v1340
      %v1416 = vunpack.c.l.b16 %v1341
      %v1417 = vunpack.c.l.b16 %v1342
      %v1418 = vunpack.c.l.b16 %v1343
      %v1419 = vunpack.c.l.b16 %v1344
      %v1420 = vunpack.c.l.b16 %v1345
      %v1421 = vunpack.c.l.b16 %v1346
      %v1422 = vpack.c.b16 %v1415, %v1414
      %v1423 = vpack.c.b16 %v1417, %v1416
      %v1424 = vpack.c.b16 %v1419, %v1418
      %v1425 = vpack.c.b16 %v1421, %v1420
      %v1431 = vsel %vm723, %v1381, 0
      %v1434 = vsel %vm723, %v1389, 0
      %v1437 = vsel %vm723, %v1397, 0
      %v1440 = vsel %vm723, %v1405, 0
      %1442 = vmatprep.subr.bf16.mxu0 0
      %1443 = vmatpush1.bf16.msra.mxu0 %v1422
      %1444 = vmatprep.subr.bf16.mxu0 0
      %1445 = vmatpush1.bf16.msra.mxu0 %v1423
      %1446 = vmatprep.subr.bf16.mxu0 0
      %1447 = vmatpush1.bf16.msra.mxu0 %v1424
      %1448 = vmatprep.subr.bf16.mxu0 0
      %1449 = vmatpush1.bf16.msra.mxu0 %v1425
      %1450 = vmatprep.subr.bf16.mxu0 0
      %1451 = vmatpush1.bf16.msra.mxu0 0
      %1452 = vmatprep.subr.bf16.mxu0 0
      %1453 = vmatpush1.bf16.msra.mxu0 0
      %1454 = vmatprep.subr.bf16.mxu0 0
      %1455 = vmatpush1.bf16.msra.mxu0 0
      %1456 = vmatprep.subr.bf16.mxu0 0
      %1457 = vmatpush1.bf16.msra.mxu0 0
      %1458 = vmatprep.subr.bf16.mxu0 0
      %1459 = vmatpush1.bf16.msra.mxu0 0
      %1460 = vmatprep.subr.bf16.mxu0 0
      %1461 = vmatpush1.bf16.msra.mxu0 0
      %1462 = vmatprep.subr.bf16.mxu0 0
      %1463 = vmatpush1.bf16.msra.mxu0 0
      %1464 = vmatprep.subr.bf16.mxu0 0
      %1465 = vmatpush1.bf16.msra.mxu0 0
      %1466 = vmatprep.subr.bf16.mxu0 0
      %1467 = vmatpush1.bf16.msra.mxu0 0
      %1468 = vmatprep.subr.bf16.mxu0 0
      %1469 = vmatpush1.bf16.msra.mxu0 0
      %1470 = vmatprep.subr.bf16.mxu0 0
      %1471 = vmatpush1.bf16.msra.mxu0 0
      %1472 = vmatprep.subr.bf16.mxu0 0
      %1473 = vmatpush1.bf16.msra.mxu0 0
      %1474 = vmatprep.mubr.bf16.mxu0 0
      %1475 = vmatmul.mubr.bf16.gmra.mrb[0].mxu0 %v1431
      %v1476 = vpop.f32.mrb[0].mxu0
      %v1477 = vadd.f32 0.0, %v1476
      %v1478 = vpop.f32.mrb[0].mxu0
      %v1479 = vpop.f32.mrb[0].mxu0
      %v1480 = vadd.f32 0.0, %v1479
      %v1481 = vpop.f32.mrb[0].mxu0
      %1482 = vmatprep.mubr.bf16.mxu0 0
      %1483 = vmatmul.mubr.bf16.gmra.mrb[0].mxu0 %v1434
      %v1484 = vpop.f32.mrb[0].mxu0
      %v1485 = vadd.f32 0.0, %v1484
      %v1486 = vpop.f32.mrb[0].mxu0
      %v1487 = vpop.f32.mrb[0].mxu0
      %v1488 = vadd.f32 0.0, %v1487
      %v1489 = vpop.f32.mrb[0].mxu0
      %1490 = vmatprep.mubr.bf16.mxu0 0
      %1491 = vmatmul.mubr.bf16.gmra.mrb[0].mxu0 %v1437
      %v1492 = vpop.f32.mrb[0].mxu0
      %v1493 = vadd.f32 0.0, %v1492
      %v1494 = vpop.f32.mrb[0].mxu0
      %v1495 = vpop.f32.mrb[0].mxu0
      %v1496 = vadd.f32 0.0, %v1495
      %v1497 = vpop.f32.mrb[0].mxu0
      %1498 = vmatprep.mubr.bf16.mxu0 0
      %1499 = vmatmul.mubr.bf16.gmra.mrb[0].mxu0 %v1440
      %v1500 = vpop.f32.mrb[0].mxu0
      %v1501 = vadd.f32 0.0, %v1500
      %v1502 = vpop.f32.mrb[0].mxu0
      %v1503 = vpop.f32.mrb[0].mxu0
      %v1504 = vadd.f32 0.0, %v1503
      %v1505 = vpop.f32.mrb[0].mxu0
      %1506 = vdwg.mxu0
      %v1507 = vadd.f32 %v1321, %v1477
      %v1508 = vadd.f32 %v1322, %v1480
      %v1509 = vadd.f32 %v1323, %v1485
      %v1510 = vadd.f32 %v1324, %v1488
      %v1511 = vadd.f32 %v1325, %v1493
      %v1512 = vadd.f32 %v1326, %v1496
      %v1513 = vadd.f32 %v1327, %v1501
      %v1514 = vadd.f32 %v1328, %v1504
      %v1515 = vld [vmem:[%s435 + $0x4] sm:$0xe]
      %v1516 = vsel %vm1013, %v1515, 0
      %v1517 = vsel %vm1014, %v1330, 0
      %v1518 = vsel %vm1015, %v1331, 0
      %v1519 = vsel %vm1016, %v1332, 0
      %v1520 = vsel %vm1017, %v1333, 0
      %v1521 = vsel %vm1018, %v1334, 0
      %v1522 = vsel %vm1019, %v1335, 0
      %v1523 = vsel %vm1020, %v1336, 0
      %v1524 = vsel %vm1021, %v1337, 0
      %s1525 = scalar_lea.vmem %s1, 160
      %v1526 = vld [vmem:[%s1525] sm:$0xf]
      %v1527 = vld [vmem:[%s1525 + $0x4] sm:$0xf]
      %v1528 = vld [vmem:[%s1525 + $0x8] sm:$0xf]
      %v1529 = vld [vmem:[%s1525 + $0xc] sm:$0xf]
      %v1530 = vld [vmem:[%s1525 + $0x10] sm:$0xf]
      %v1531 = vld [vmem:[%s1525 + $0x14] sm:$0xf]
      %v1532 = vld [vmem:[%s1525 + $0x18] sm:$0xf]
      %v1533 = vld [vmem:[%s1525 + $0x1c] sm:$0xf]
      %v1543 = vunpack.c.l.b16 %v1516
      %v1544 = vunpack.c.l.b16 %v1517
      %v1545 = vunpack.c.l.b16 %v1518
      %v1546 = vunpack.c.l.b16 %v1519
      %v1547 = vunpack.c.l.b16 %v1520
      %v1548 = vunpack.c.l.b16 %v1521
      %v1549 = vunpack.c.l.b16 %v1522
      %v1550 = vunpack.c.l.b16 %v1523
      %v1551 = vunpack.c.l.b16 %v1524
      %v1552 = vpack.c.b16 %v1544, %v1543
      %v1553 = vpack.c.b16 %v1546, %v1545
      %v1554 = vpack.c.b16 %v1548, %v1547
      %v1555 = vpack.c.b16 %v1550, %v1549
      %v1556 = vpack.c.b16 %v1551, %v1551
      %v1557 = vrot.slane %v1552, 1
      %v1558 = vrot.slane %v1553, 1
      %v1559 = vsel %vm1063, %v1557, %v1558
      %v1560 = vrot.slane %v1554, 1
      %v1561 = vsel %vm1063, %v1558, %v1560
      %v1562 = vrot.slane %v1555, 1
      %v1563 = vsel %vm1063, %v1560, %v1562
      %v1564 = vrot.slane %v1556, 1
      %v1565 = vsel %vm1063, %v1562, %v1564
      %v1574 = vunpack.c.l.b16 %v1526
      %v1575 = vunpack.c.l.b16 %v1527
      %v1576 = vunpack.c.l.b16 %v1528
      %v1577 = vunpack.c.l.b16 %v1529
      %v1578 = vunpack.c.l.b16 %v1530
      %v1579 = vunpack.c.l.b16 %v1531
      %v1580 = vunpack.c.l.b16 %v1532
      %v1581 = vunpack.c.l.b16 %v1533
      %v1582 = vpack.c.b16 %v1575, %v1574
      %v1583 = vpack.c.b16 %v1577, %v1576
      %v1584 = vpack.c.b16 %v1579, %v1578
      %v1585 = vpack.c.b16 %v1581, %v1580
      %v1591 = vsel %vm723, %v1559, 0
      %v1594 = vsel %vm723, %v1561, 0
      %v1597 = vsel %vm723, %v1563, 0
      %v1600 = vsel %vm723, %v1565, 0
      %1602 = vmatprep.subr.bf16.mxu0 0
      %1603 = vmatpush1.bf16.msra.mxu0 %v1582
      %1604 = vmatprep.subr.bf16.mxu0 0
      %1605 = vmatpush1.bf16.msra.mxu0 %v1583
      %1606 = vmatprep.subr.bf16.mxu0 0
      %1607 = vmatpush1.bf16.msra.mxu0 %v1584
      %1608 = vmatprep.subr.bf16.mxu0 0
      %1609 = vmatpush1.bf16.msra.mxu0 %v1585
      %1610 = vmatprep.subr.bf16.mxu0 0
      %1611 = vmatpush1.bf16.msra.mxu0 0
      %1612 = vmatprep.subr.bf16.mxu0 0
      %1613 = vmatpush1.bf16.msra.mxu0 0
      %1614 = vmatprep.subr.bf16.mxu0 0
      %1615 = vmatpush1.bf16.msra.mxu0 0
      %1616 = vmatprep.subr.bf16.mxu0 0
      %1617 = vmatpush1.bf16.msra.mxu0 0
      %1618 = vmatprep.subr.bf16.mxu0 0
      %1619 = vmatpush1.bf16.msra.mxu0 0
      %1620 = vmatprep.subr.bf16.mxu0 0
      %1621 = vmatpush1.bf16.msra.mxu0 0
      %1622 = vmatprep.subr.bf16.mxu0 0
      %1623 = vmatpush1.bf16.msra.mxu0 0
      %1624 = vmatprep.subr.bf16.mxu0 0
      %1625 = vmatpush1.bf16.msra.mxu0 0
      %1626 = vmatprep.subr.bf16.mxu0 0
      %1627 = vmatpush1.bf16.msra.mxu0 0
      %1628 = vmatprep.subr.bf16.mxu0 0
      %1629 = vmatpush1.bf16.msra.mxu0 0
      %1630 = vmatprep.subr.bf16.mxu0 0
      %1631 = vmatpush1.bf16.msra.mxu0 0
      %1632 = vmatprep.subr.bf16.mxu0 0
      %1633 = vmatpush1.bf16.msra.mxu0 0
      %1634 = vmatprep.mubr.bf16.mxu0 0
      %1635 = vmatmul.mubr.bf16.gmra.mrb[0].mxu0 %v1591
      %v1636 = vpop.f32.mrb[0].mxu0
      %v1637 = vadd.f32 0.0, %v1636
      %v1638 = vpop.f32.mrb[0].mxu0
      %v1639 = vpop.f32.mrb[0].mxu0
      %v1640 = vadd.f32 0.0, %v1639
      %v1641 = vpop.f32.mrb[0].mxu0
      %1642 = vmatprep.mubr.bf16.mxu0 0
      %1643 = vmatmul.mubr.bf16.gmra.mrb[0].mxu0 %v1594
      %v1644 = vpop.f32.mrb[0].mxu0
      %v1645 = vadd.f32 0.0, %v1644
      %v1646 = vpop.f32.mrb[0].mxu0
      %v1647 = vpop.f32.mrb[0].mxu0
      %v1648 = vadd.f32 0.0, %v1647
      %v1649 = vpop.f32.mrb[0].mxu0
      %1650 = vmatprep.mubr.bf16.mxu0 0
      %1651 = vmatmul.mubr.bf16.gmra.mrb[0].mxu0 %v1597
      %v1652 = vpop.f32.mrb[0].mxu0
      %v1653 = vadd.f32 0.0, %v1652
      %v1654 = vpop.f32.mrb[0].mxu0
      %v1655 = vpop.f32.mrb[0].mxu0
      %v1656 = vadd.f32 0.0, %v1655
      %v1657 = vpop.f32.mrb[0].mxu0
      %1658 = vmatprep.mubr.bf16.mxu0 0
      %1659 = vmatmul.mubr.bf16.gmra.mrb[0].mxu0 %v1600
      %v1660 = vpop.f32.mrb[0].mxu0
      %v1661 = vadd.f32 0.0, %v1660
      %v1662 = vpop.f32.mrb[0].mxu0
      %v1663 = vpop.f32.mrb[0].mxu0
      %v1664 = vadd.f32 0.0, %v1663
      %v1665 = vpop.f32.mrb[0].mxu0
      %1666 = vdwg.mxu0
      %v1667 = vadd.f32 %v1507, %v1637
      %v1668 = vadd.f32 %v1508, %v1640
      %v1669 = vadd.f32 %v1509, %v1645
      %v1670 = vadd.f32 %v1510, %v1648
      %v1671 = vadd.f32 %v1511, %v1653
      %v1672 = vadd.f32 %v1512, %v1656
      %v1673 = vadd.f32 %v1513, %v1661
      %v1674 = vadd.f32 %v1514, %v1664
      %v1675 = vld [vmem:[%s435 + $0x24] sm:$0xf]
      %v1676 = vsel %vm605, %v1330, 0
      %v1677 = vsel %vm606, %v1331, 0
      %v1678 = vsel %vm607, %v1332, 0
      %v1679 = vsel %vm608, %v1333, 0
      %v1680 = vsel %vm609, %v1334, 0
      %v1681 = vsel %vm610, %v1335, 0
      %v1682 = vsel %vm611, %v1336, 0
      %v1683 = vsel %vm612, %v1675, 0
      %s1684 = scalar_lea.vmem %s1, 192
      %v1685 = vld [vmem:[%s1684] sm:$0xf]
      %v1686 = vld [vmem:[%s1684 + $0x4] sm:$0xf]
      %v1687 = vld [vmem:[%s1684 + $0x8] sm:$0xf]
      %v1688 = vld [vmem:[%s1684 + $0xc] sm:$0xf]
      %v1689 = vld [vmem:[%s1684 + $0x10] sm:$0xf]
      %v1690 = vld [vmem:[%s1684 + $0x14] sm:$0xf]
      %v1691 = vld [vmem:[%s1684 + $0x18] sm:$0xf]
      %v1692 = vld [vmem:[%s1684 + $0x1c] sm:$0xf]
      %v1701 = vunpack.c.l.b16 %v1676
      %v1702 = vunpack.c.l.b16 %v1677
      %v1703 = vunpack.c.l.b16 %v1678
      %v1704 = vunpack.c.l.b16 %v1679
      %v1705 = vunpack.c.l.b16 %v1680
      %v1706 = vunpack.c.l.b16 %v1681
      %v1707 = vunpack.c.l.b16 %v1682
      %v1708 = vunpack.c.l.b16 %v1683
      %v1709 = vpack.c.b16 %v1702, %v1701
      %v1710 = vpack.c.b16 %v1704, %v1703
      %v1711 = vpack.c.b16 %v1706, %v1705
      %v1712 = vpack.c.b16 %v1708, %v1707
      %v1721 = vunpack.c.l.b16 %v1685
      %v1722 = vunpack.c.l.b16 %v1686
      %v1723 = vunpack.c.l.b16 %v1687
      %v1724 = vunpack.c.l.b16 %v1688
      %v1725 = vunpack.c.l.b16 %v1689
      %v1726 = vunpack.c.l.b16 %v1690
      %v1727 = vunpack.c.l.b16 %v1691
      %v1728 = vunpack.c.l.b16 %v1692
      %v1729 = vpack.c.b16 %v1722, %v1721
      %v1730 = vpack.c.b16 %v1724, %v1723
      %v1731 = vpack.c.b16 %v1726, %v1725
      %v1732 = vpack.c.b16 %v1728, %v1727
      %v1738 = vsel %vm723, %v1709, 0
      %v1741 = vsel %vm723, %v1710, 0
      %v1744 = vsel %vm723, %v1711, 0
      %v1747 = vsel %vm723, %v1712, 0
      %1749 = vmatprep.subr.bf16.mxu0 0
      %1750 = vmatpush1.bf16.msra.mxu0 %v1729
      %1751 = vmatprep.subr.bf16.mxu0 0
      %1752 = vmatpush1.bf16.msra.mxu0 %v1730
      %1753 = vmatprep.subr.bf16.mxu0 0
      %1754 = vmatpush1.bf16.msra.mxu0 %v1731
      %1755 = vmatprep.subr.bf16.mxu0 0
      %1756 = vmatpush1.bf16.msra.mxu0 %v1732
      %1757 = vmatprep.subr.bf16.mxu0 0
      %1758 = vmatpush1.bf16.msra.mxu0 0
      %1759 = vmatprep.subr.bf16.mxu0 0
      %1760 = vmatpush1.bf16.msra.mxu0 0
      %1761 = vmatprep.subr.bf16.mxu0 0
      %1762 = vmatpush1.bf16.msra.mxu0 0
      %1763 = vmatprep.subr.bf16.mxu0 0
      %1764 = vmatpush1.bf16.msra.mxu0 0
      %1765 = vmatprep.subr.bf16.mxu0 0
      %1766 = vmatpush1.bf16.msra.mxu0 0
      %1767 = vmatprep.subr.bf16.mxu0 0
      %1768 = vmatpush1.bf16.msra.mxu0 0
      %1769 = vmatprep.subr.bf16.mxu0 0
      %1770 = vmatpush1.bf16.msra.mxu0 0
      %1771 = vmatprep.subr.bf16.mxu0 0
      %1772 = vmatpush1.bf16.msra.mxu0 0
      %1773 = vmatprep.subr.bf16.mxu0 0
      %1774 = vmatpush1.bf16.msra.mxu0 0
      %1775 = vmatprep.subr.bf16.mxu0 0
      %1776 = vmatpush1.bf16.msra.mxu0 0
      %1777 = vmatprep.subr.bf16.mxu0 0
      %1778 = vmatpush1.bf16.msra.mxu0 0
      %1779 = vmatprep.subr.bf16.mxu0 0
      %1780 = vmatpush1.bf16.msra.mxu0 0
      %1781 = vmatprep.mubr.bf16.mxu0 0
      %1782 = vmatmul.mubr.bf16.gmra.mrb[0].mxu0 %v1738
      %v1783 = vpop.f32.mrb[0].mxu0
      %v1784 = vadd.f32 0.0, %v1783
      %v1785 = vpop.f32.mrb[0].mxu0
      %v1786 = vpop.f32.mrb[0].mxu0
      %v1787 = vadd.f32 0.0, %v1786
      %v1788 = vpop.f32.mrb[0].mxu0
      %1789 = vmatprep.mubr.bf16.mxu0 0
      %1790 = vmatmul.mubr.bf16.gmra.mrb[0].mxu0 %v1741
      %v1791 = vpop.f32.mrb[0].mxu0
      %v1792 = vadd.f32 0.0, %v1791
      %v1793 = vpop.f32.mrb[0].mxu0
      %v1794 = vpop.f32.mrb[0].mxu0
      %v1795 = vadd.f32 0.0, %v1794
      %v1796 = vpop.f32.mrb[0].mxu0
      %1797 = vmatprep.mubr.bf16.mxu0 0
      %1798 = vmatmul.mubr.bf16.gmra.mrb[0].mxu0 %v1744
      %v1799 = vpop.f32.mrb[0].mxu0
      %v1800 = vadd.f32 0.0, %v1799
      %v1801 = vpop.f32.mrb[0].mxu0
      %v1802 = vpop.f32.mrb[0].mxu0
      %v1803 = vadd.f32 0.0, %v1802
      %v1804 = vpop.f32.mrb[0].mxu0
      %1805 = vmatprep.mubr.bf16.mxu0 0
      %1806 = vmatmul.mubr.bf16.gmra.mrb[0].mxu0 %v1747
      %v1807 = vpop.f32.mrb[0].mxu0
      %v1808 = vadd.f32 0.0, %v1807
      %v1809 = vpop.f32.mrb[0].mxu0
      %v1810 = vpop.f32.mrb[0].mxu0
      %v1811 = vadd.f32 0.0, %v1810
      %v1812 = vpop.f32.mrb[0].mxu0
      %1813 = vdwg.mxu0
      %v1814 = vadd.f32 %v1667, %v1784
      %v1815 = vadd.f32 %v1668, %v1787
      %v1816 = vadd.f32 %v1669, %v1792
      %v1817 = vadd.f32 %v1670, %v1795
      %v1818 = vadd.f32 %v1671, %v1800
      %v1819 = vadd.f32 %v1672, %v1803
      %v1820 = vadd.f32 %v1673, %v1808
      %v1821 = vadd.f32 %v1674, %v1811
      %v1822 = vld [vmem:[%s435 + $0x8] sm:$0xf]
      %v1823 = vld [vmem:[%s435 + $0xc] sm:$0xf]
      %v1824 = vld [vmem:[%s435 + $0x10] sm:$0xf]
      %v1825 = vld [vmem:[%s435 + $0x14] sm:$0xf]
      %v1826 = vld [vmem:[%s435 + $0x18] sm:$0xf]
      %v1827 = vld [vmem:[%s435 + $0x1c] sm:$0xf]
      %v1828 = vld [vmem:[%s435 + $0x20] sm:$0xf]
      %v1829 = vld [vmem:[%s435 + $0x24] sm:$0xf]
      %v1830 = vld [vmem:[%s435 + $0x28] sm:$0x1]
      %s1831 = scalar_lea.vmem %s1, 224
      %v1832 = vld [vmem:[%s1831] sm:$0xf]
      %v1833 = vld [vmem:[%s1831 + $0x4] sm:$0xf]
      %v1834 = vld [vmem:[%s1831 + $0x8] sm:$0xf]
      %v1835 = vld [vmem:[%s1831 + $0xc] sm:$0xf]
      %v1836 = vld [vmem:[%s1831 + $0x10] sm:$0xf]
      %v1837 = vld [vmem:[%s1831 + $0x14] sm:$0xf]
      %v1838 = vld [vmem:[%s1831 + $0x18] sm:$0xf]
      %v1839 = vld [vmem:[%s1831 + $0x1c] sm:$0xf]
      %v1849 = vunpack.c.l.b16 %v1822
      %v1850 = vunpack.c.l.b16 %v1823
      %v1851 = vunpack.c.l.b16 %v1824
      %v1852 = vunpack.c.l.b16 %v1825
      %v1853 = vunpack.c.l.b16 %v1826
      %v1854 = vunpack.c.l.b16 %v1827
      %v1855 = vunpack.c.l.b16 %v1828
      %v1856 = vunpack.c.l.b16 %v1829
      %v1857 = vunpack.c.l.b16 %v1830
      %v1858 = vpack.c.b16 %v1850, %v1849
      %v1859 = vpack.c.b16 %v1852, %v1851
      %v1860 = vpack.c.b16 %v1854, %v1853
      %v1861 = vpack.c.b16 %v1856, %v1855
      %v1862 = vpack.c.b16 %v1857, %v1857
      %v1864 = vshrl.u32 %v1858, 16
      %v1866 = vshll.u32 %v1858, 16
      %v1868 = vrot.slane %v1866, 1
      %v1869 = vor.u32 %v1864, %v1868
      %v1871 = vshll.u32 %v1859, 16
      %v1873 = vrot.slane %v1871, 1
      %v1874 = vsel %vm662, %v1869, %v1873
      %v1875 = vshrl.u32 %v1859, 16
      %v1877 = vor.u32 %v1875, %v1873
      %v1879 = vshll.u32 %v1860, 16
      %v1881 = vrot.slane %v1879, 1
      %v1882 = vsel %vm662, %v1877, %v1881
      %v1883 = vshrl.u32 %v1860, 16
      %v1885 = vor.u32 %v1883, %v1881
      %v1887 = vshll.u32 %v1861, 16
      %v1889 = vrot.slane %v1887, 1
      %v1890 = vsel %vm662, %v1885, %v1889
      %v1891 = vshrl.u32 %v1861, 16
      %v1893 = vor.u32 %v1891, %v1889
      %v1895 = vshll.u32 %v1862, 16
      %v1897 = vrot.slane %v1895, 1
      %v1898 = vsel %vm662, %v1893, %v1897
      %v1907 = vunpack.c.l.b16 %v1832
      %v1908 = vunpack.c.l.b16 %v1833
      %v1909 = vunpack.c.l.b16 %v1834
      %v1910 = vunpack.c.l.b16 %v1835
      %v1911 = vunpack.c.l.b16 %v1836
      %v1912 = vunpack.c.l.b16 %v1837
      %v1913 = vunpack.c.l.b16 %v1838
      %v1914 = vunpack.c.l.b16 %v1839
      %v1915 = vpack.c.b16 %v1908, %v1907
      %v1916 = vpack.c.b16 %v1910, %v1909
      %v1917 = vpack.c.b16 %v1912, %v1911
      %v1918 = vpack.c.b16 %v1914, %v1913
      %v1924 = vsel %vm723, %v1874, 0
      %v1927 = vsel %vm723, %v1882, 0
      %v1930 = vsel %vm723, %v1890, 0
      %v1933 = vsel %vm723, %v1898, 0
      %1935 = vmatprep.subr.bf16.mxu0 0
      %1936 = vmatpush1.bf16.msra.mxu0 %v1915
      %1937 = vmatprep.subr.bf16.mxu0 0
      %1938 = vmatpush1.bf16.msra.mxu0 %v1916
      %1939 = vmatprep.subr.bf16.mxu0 0
      %1940 = vmatpush1.bf16.msra.mxu0 %v1917
      %1941 = vmatprep.subr.bf16.mxu0 0
      %1942 = vmatpush1.bf16.msra.mxu0 %v1918
      %1943 = vmatprep.subr.bf16.mxu0 0
      %1944 = vmatpush1.bf16.msra.mxu0 0
      %1945 = vmatprep.subr.bf16.mxu0 0
      %1946 = vmatpush1.bf16.msra.mxu0 0
      %1947 = vmatprep.subr.bf16.mxu0 0
      %1948 = vmatpush1.bf16.msra.mxu0 0
      %1949 = vmatprep.subr.bf16.mxu0 0
      %1950 = vmatpush1.bf16.msra.mxu0 0
      %1951 = vmatprep.subr.bf16.mxu0 0
      %1952 = vmatpush1.bf16.msra.mxu0 0
      %1953 = vmatprep.subr.bf16.mxu0 0
      %1954 = vmatpush1.bf16.msra.mxu0 0
      %1955 = vmatprep.subr.bf16.mxu0 0
      %1956 = vmatpush1.bf16.msra.mxu0 0
      %1957 = vmatprep.subr.bf16.mxu0 0
      %1958 = vmatpush1.bf16.msra.mxu0 0
      %1959 = vmatprep.subr.bf16.mxu0 0
      %1960 = vmatpush1.bf16.msra.mxu0 0
      %1961 = vmatprep.subr.bf16.mxu0 0
      %1962 = vmatpush1.bf16.msra.mxu0 0
      %1963 = vmatprep.subr.bf16.mxu0 0
      %1964 = vmatpush1.bf16.msra.mxu0 0
      %1965 = vmatprep.subr.bf16.mxu0 0
      %1966 = vmatpush1.bf16.msra.mxu0 0
      %1967 = vmatprep.mubr.bf16.mxu0 0
      %1968 = vmatmul.mubr.bf16.gmra.mrb[0].mxu0 %v1924
      %v1969 = vpop.f32.mrb[0].mxu0
      %v1970 = vadd.f32 0.0, %v1969
      %v1971 = vpop.f32.mrb[0].mxu0
      %v1972 = vpop.f32.mrb[0].mxu0
      %v1973 = vadd.f32 0.0, %v1972
      %v1974 = vpop.f32.mrb[0].mxu0
      %1975 = vmatprep.mubr.bf16.mxu0 0
      %1976 = vmatmul.mubr.bf16.gmra.mrb[0].mxu0 %v1927
      %v1977 = vpop.f32.mrb[0].mxu0
      %v1978 = vadd.f32 0.0, %v1977
      %v1979 = vpop.f32.mrb[0].mxu0
      %v1980 = vpop.f32.mrb[0].mxu0
      %v1981 = vadd.f32 0.0, %v1980
      %v1982 = vpop.f32.mrb[0].mxu0
      %1983 = vmatprep.mubr.bf16.mxu0 0
      %1984 = vmatmul.mubr.bf16.gmra.mrb[0].mxu0 %v1930
      %v1985 = vpop.f32.mrb[0].mxu0
      %v1986 = vadd.f32 0.0, %v1985
      %v1987 = vpop.f32.mrb[0].mxu0
      %v1988 = vpop.f32.mrb[0].mxu0
      %v1989 = vadd.f32 0.0, %v1988
      %v1990 = vpop.f32.mrb[0].mxu0
      %1991 = vmatprep.mubr.bf16.mxu0 0
      %1992 = vmatmul.mubr.bf16.gmra.mrb[0].mxu0 %v1933
      %v1993 = vpop.f32.mrb[0].mxu0
      %v1994 = vadd.f32 0.0, %v1993
      %v1995 = vpop.f32.mrb[0].mxu0
      %v1996 = vpop.f32.mrb[0].mxu0
      %v1997 = vadd.f32 0.0, %v1996
      %v1998 = vpop.f32.mrb[0].mxu0
      %1999 = vdwg.mxu0
      %v2000 = vadd.f32 %v1814, %v1970
      %v2001 = vadd.f32 %v1815, %v1973
      %v2002 = vadd.f32 %v1816, %v1978
      %v2003 = vadd.f32 %v1817, %v1981
      %v2004 = vadd.f32 %v1818, %v1986
      %v2005 = vadd.f32 %v1819, %v1989
      %v2006 = vadd.f32 %v1820, %v1994
      %v2007 = vadd.f32 %v1821, %v1997
      %v2008 = vld [vmem:[%s435 + $0x8] sm:$0xe]
      %v2009 = vsel %vm1013, %v2008, 0
      %v2010 = vsel %vm1014, %v1823, 0
      %v2011 = vsel %vm1015, %v1824, 0
      %v2012 = vsel %vm1016, %v1825, 0
      %v2013 = vsel %vm1017, %v1826, 0
      %v2014 = vsel %vm1018, %v1827, 0
      %v2015 = vsel %vm1019, %v1828, 0
      %v2016 = vsel %vm1020, %v1829, 0
      %v2017 = vsel %vm1021, %v1830, 0
      %s2018 = scalar_lea.vmem %s1, 256
      %v2019 = vld [vmem:[%s2018] sm:$0xf]
      %v2020 = vld [vmem:[%s2018 + $0x4] sm:$0xf]
      %v2021 = vld [vmem:[%s2018 + $0x8] sm:$0xf]
      %v2022 = vld [vmem:[%s2018 + $0xc] sm:$0xf]
      %v2023 = vld [vmem:[%s2018 + $0x10] sm:$0xf]
      %v2024 = vld [vmem:[%s2018 + $0x14] sm:$0xf]
      %v2025 = vld [vmem:[%s2018 + $0x18] sm:$0xf]
      %v2026 = vld [vmem:[%s2018 + $0x1c] sm:$0xf]
      %v2036 = vunpack.c.l.b16 %v2009
      %v2037 = vunpack.c.l.b16 %v2010
      %v2038 = vunpack.c.l.b16 %v2011
      %v2039 = vunpack.c.l.b16 %v2012
      %v2040 = vunpack.c.l.b16 %v2013
      %v2041 = vunpack.c.l.b16 %v2014
      %v2042 = vunpack.c.l.b16 %v2015
      %v2043 = vunpack.c.l.b16 %v2016
      %v2044 = vunpack.c.l.b16 %v2017
      %v2045 = vpack.c.b16 %v2037, %v2036
      %v2046 = vpack.c.b16 %v2039, %v2038
      %v2047 = vpack.c.b16 %v2041, %v2040
      %v2048 = vpack.c.b16 %v2043, %v2042
      %v2049 = vpack.c.b16 %v2044, %v2044
      %v2050 = vrot.slane %v2045, 1
      %v2051 = vrot.slane %v2046, 1
      %v2052 = vsel %vm1063, %v2050, %v2051
      %v2053 = vrot.slane %v2047, 1
      %v2054 = vsel %vm1063, %v2051, %v2053
      %v2055 = vrot.slane %v2048, 1
      %v2056 = vsel %vm1063, %v2053, %v2055
      %v2057 = vrot.slane %v2049, 1
      %v2058 = vsel %vm1063, %v2055, %v2057
      %v2067 = vunpack.c.l.b16 %v2019
      %v2068 = vunpack.c.l.b16 %v2020
      %v2069 = vunpack.c.l.b16 %v2021
      %v2070 = vunpack.c.l.b16 %v2022
      %v2071 = vunpack.c.l.b16 %v2023
      %v2072 = vunpack.c.l.b16 %v2024
      %v2073 = vunpack.c.l.b16 %v2025
      %v2074 = vunpack.c.l.b16 %v2026
      %v2075 = vpack.c.b16 %v2068, %v2067
      %v2076 = vpack.c.b16 %v2070, %v2069
      %v2077 = vpack.c.b16 %v2072, %v2071
      %v2078 = vpack.c.b16 %v2074, %v2073
      %v2084 = vsel %vm723, %v2052, 0
      %v2087 = vsel %vm723, %v2054, 0
      %v2090 = vsel %vm723, %v2056, 0
      %v2093 = vsel %vm723, %v2058, 0
      %2095 = vmatprep.subr.bf16.mxu0 0
      %2096 = vmatpush1.bf16.msra.mxu0 %v2075
      %2097 = vmatprep.subr.bf16.mxu0 0
      %2098 = vmatpush1.bf16.msra.mxu0 %v2076
      %2099 = vmatprep.subr.bf16.mxu0 0
      %2100 = vmatpush1.bf16.msra.mxu0 %v2077
      %2101 = vmatprep.subr.bf16.mxu0 0
      %2102 = vmatpush1.bf16.msra.mxu0 %v2078
      %2103 = vmatprep.subr.bf16.mxu0 0
      %2104 = vmatpush1.bf16.msra.mxu0 0
      %2105 = vmatprep.subr.bf16.mxu0 0
      %2106 = vmatpush1.bf16.msra.mxu0 0
      %2107 = vmatprep.subr.bf16.mxu0 0
      %2108 = vmatpush1.bf16.msra.mxu0 0
      %2109 = vmatprep.subr.bf16.mxu0 0
      %2110 = vmatpush1.bf16.msra.mxu0 0
      %2111 = vmatprep.subr.bf16.mxu0 0
      %2112 = vmatpush1.bf16.msra.mxu0 0
      %2113 = vmatprep.subr.bf16.mxu0 0
      %2114 = vmatpush1.bf16.msra.mxu0 0
      %2115 = vmatprep.subr.bf16.mxu0 0
      %2116 = vmatpush1.bf16.msra.mxu0 0
      %2117 = vmatprep.subr.bf16.mxu0 0
      %2118 = vmatpush1.bf16.msra.mxu0 0
      %2119 = vmatprep.subr.bf16.mxu0 0
      %2120 = vmatpush1.bf16.msra.mxu0 0
      %2121 = vmatprep.subr.bf16.mxu0 0
      %2122 = vmatpush1.bf16.msra.mxu0 0
      %2123 = vmatprep.subr.bf16.mxu0 0
      %2124 = vmatpush1.bf16.msra.mxu0 0
      %2125 = vmatprep.subr.bf16.mxu0 0
      %2126 = vmatpush1.bf16.msra.mxu0 0
      %2127 = vmatprep.mubr.bf16.mxu0 0
      %2128 = vmatmul.mubr.bf16.gmra.mrb[0].mxu0 %v2084
      %v2129 = vpop.f32.mrb[0].mxu0
      %v2130 = vadd.f32 0.0, %v2129
      %v2131 = vpop.f32.mrb[0].mxu0
      %v2132 = vpop.f32.mrb[0].mxu0
      %v2133 = vadd.f32 0.0, %v2132
      %v2134 = vpop.f32.mrb[0].mxu0
      %2135 = vmatprep.mubr.bf16.mxu0 0
      %2136 = vmatmul.mubr.bf16.gmra.mrb[0].mxu0 %v2087
      %v2137 = vpop.f32.mrb[0].mxu0
      %v2138 = vadd.f32 0.0, %v2137
      %v2139 = vpop.f32.mrb[0].mxu0
      %v2140 = vpop.f32.mrb[0].mxu0
      %v2141 = vadd.f32 0.0, %v2140
      %v2142 = vpop.f32.mrb[0].mxu0
      %2143 = vmatprep.mubr.bf16.mxu0 0
      %2144 = vmatmul.mubr.bf16.gmra.mrb[0].mxu0 %v2090
      %v2145 = vpop.f32.mrb[0].mxu0
      %v2146 = vadd.f32 0.0, %v2145
      %v2147 = vpop.f32.mrb[0].mxu0
      %v2148 = vpop.f32.mrb[0].mxu0
      %v2149 = vadd.f32 0.0, %v2148
      %v2150 = vpop.f32.mrb[0].mxu0
      %2151 = vmatprep.mubr.bf16.mxu0 0
      %2152 = vmatmul.mubr.bf16.gmra.mrb[0].mxu0 %v2093
      %v2153 = vpop.f32.mrb[0].mxu0
      %v2154 = vadd.f32 0.0, %v2153
      %v2155 = vpop.f32.mrb[0].mxu0
      %v2156 = vpop.f32.mrb[0].mxu0
      %v2157 = vadd.f32 0.0, %v2156
      %v2158 = vpop.f32.mrb[0].mxu0
      %2159 = vdwg.mxu0
      %v2160 = vadd.f32 %v2000, %v2130
      %v2161 = vadd.f32 %v2001, %v2133
      %v2162 = vadd.f32 %v2002, %v2138
      %v2163 = vadd.f32 %v2003, %v2141
      %v2164 = vadd.f32 %v2004, %v2146
      %v2165 = vadd.f32 %v2005, %v2149
      %v2166 = vadd.f32 %v2006, %v2154
      %v2167 = vadd.f32 %v2007, %v2157
      %v2168 = vld [vmem:[%s2] sm:$0x1]
      %v2169 = vld [vmem:[%s3] sm:$0x1]
      %v2170 = vsel %vm723, %v2160, 0.0
      %v2171 = vsel %vm723, %v2161, 0.0
      %v2172 = vadd.f32 %v2170, %v2171
      %v2173 = vsel %vm723, %v2162, 0.0
      %v2174 = vadd.f32 %v2172, %v2173
      %v2175 = vsel %vm723, %v2163, 0.0
      %v2176 = vadd.f32 %v2174, %v2175
      %v2177 = vsel %vm723, %v2164, 0.0
      %v2178 = vadd.f32 %v2176, %v2177
      %v2179 = vsel %vm723, %v2165, 0.0
      %v2180 = vadd.f32 %v2178, %v2179
      %v2181 = vsel %vm723, %v2166, 0.0
      %v2182 = vadd.f32 %v2180, %v2181
      %v2183 = vsel %vm723, %v2167, 0.0
      %v2184 = vadd.f32 %v2182, %v2183
      %2185 = vadd.xlane.f32.xlu0 %v2184
      %v2186 = vpop.xlane.xlu0 %2185
      %v2187 = vrot.slane %v2186, 4
      %v2188 = vadd.f32 %v2186, %v2187
      %v2189 = vrot.slane %v2188, 2
      %v2190 = vadd.f32 %v2188, %v2189
      %v2191 = vrot.slane %v2190, 1
      %v2192 = vadd.f32 %v2190, %v2191
      %s2193 = vtos %v2192
      %v2194 = vmul.f32 %v2160, %v2160
      %v2195 = vmul.f32 %v2161, %v2161
      %v2196 = vmul.f32 %v2162, %v2162
      %v2197 = vmul.f32 %v2163, %v2163
      %v2198 = vmul.f32 %v2164, %v2164
      %v2199 = vmul.f32 %v2165, %v2165
      %v2200 = vmul.f32 %v2166, %v2166
      %v2201 = vmul.f32 %v2167, %v2167
      %v2202 = vsel %vm723, %v2194, 0.0
      %v2203 = vsel %vm723, %v2195, 0.0
      %v2204 = vadd.f32 %v2202, %v2203
      %v2205 = vsel %vm723, %v2196, 0.0
      %v2206 = vadd.f32 %v2204, %v2205
      %v2207 = vsel %vm723, %v2197, 0.0
      %v2208 = vadd.f32 %v2206, %v2207
      %v2209 = vsel %vm723, %v2198, 0.0
      %v2210 = vadd.f32 %v2208, %v2209
      %v2211 = vsel %vm723, %v2199, 0.0
      %v2212 = vadd.f32 %v2210, %v2211
      %v2213 = vsel %vm723, %v2200, 0.0
      %v2214 = vadd.f32 %v2212, %v2213
      %v2215 = vsel %vm723, %v2201, 0.0
      %v2216 = vadd.f32 %v2214, %v2215
      %2217 = vadd.xlane.f32.xlu0 %v2216
      %v2218 = vpop.xlane.xlu0 %2217
      %v2219 = vrot.slane %v2218, 4
      %v2220 = vadd.f32 %v2218, %v2219
      %v2221 = vrot.slane %v2220, 2
      %v2222 = vadd.f32 %v2220, %v2221
      %v2223 = vrot.slane %v2222, 1
      %v2224 = vadd.f32 %v2222, %v2223
      %s2225 = vtos %v2224
      %v2226 = vrcp.pop 4096.0
      %s2227 = vtos %v2226
      %s2228 = smul.f32 %s2193, %s2227
      %v2229 = vrcp.pop 4096.0
      %s2230 = vtos %v2229
      %s2231 = smul.f32 %s2225, %s2230
      %s2232 = smul.f32 %s2228, %s2228
      %s2233 = ssub.f32 %s2231, %s2232
      %s2234 = smax.f32 %s2233, 0.0
      %v2235 = vstv %s2228
      %v2236 = vsub.f32 %v2160, %v2235
      %v2237 = vsub.f32 %v2161, %v2235
      %v2238 = vsub.f32 %v2162, %v2235
      %v2239 = vsub.f32 %v2163, %v2235
      %v2240 = vsub.f32 %v2164, %v2235
      %v2241 = vsub.f32 %v2165, %v2235
      %v2242 = vsub.f32 %v2166, %v2235
      %v2243 = vsub.f32 %v2167, %v2235
      %s2244 = sadd.f32 %s2234, 1e-05
      %v2245 = vstv %s2244
      %v2246 = vrsqrt.pop %v2245
      %s2247 = vtos %v2246
      %v2248 = vstv %s2247
      %v2249 = vmul.f32 %v2236, %v2248
      %v2250 = vmul.f32 %v2237, %v2248
      %v2251 = vmul.f32 %v2238, %v2248
      %v2252 = vmul.f32 %v2239, %v2248
      %v2253 = vmul.f32 %v2240, %v2248
      %v2254 = vmul.f32 %v2241, %v2248
      %v2255 = vmul.f32 %v2242, %v2248
      %v2256 = vmul.f32 %v2243, %v2248
      %v2258 = vlaneseq
      %v2259 = vshrl.u32 %v2258, 7
      %v2260 = vsub.s32 0, %v2259
      %v2261 = vrot.slane %v2168, %v2260
      %v2263 = vmul.f32 %v2249, %v2261
      %v2264 = vmul.f32 %v2250, %v2261
      %v2265 = vmul.f32 %v2251, %v2261
      %v2266 = vmul.f32 %v2252, %v2261
      %v2267 = vmul.f32 %v2253, %v2261
      %v2268 = vmul.f32 %v2254, %v2261
      %v2269 = vmul.f32 %v2255, %v2261
      %v2270 = vmul.f32 %v2256, %v2261
      %v2272 = vlaneseq
      %v2273 = vshrl.u32 %v2272, 7
      %v2274 = vsub.s32 0, %v2273
      %v2275 = vrot.slane %v2169, %v2274
      %v2277 = vadd.f32 %v2263, %v2275
      %v2278 = vadd.f32 %v2264, %v2275
      %v2279 = vadd.f32 %v2265, %v2275
      %v2280 = vadd.f32 %v2266, %v2275
      %v2281 = vadd.f32 %v2267, %v2275
      %v2282 = vadd.f32 %v2268, %v2275
      %v2283 = vadd.f32 %v2269, %v2275
      %v2284 = vadd.f32 %v2270, %v2275
      %v2285 = vmax.f32 %v2277, 0.0
      %v2286 = vmax.f32 %v2278, 0.0
      %v2287 = vmax.f32 %v2279, 0.0
      %v2288 = vmax.f32 %v2280, 0.0
      %v2289 = vmax.f32 %v2281, 0.0
      %v2290 = vmax.f32 %v2282, 0.0
      %v2291 = vmax.f32 %v2283, 0.0
      %v2292 = vmax.f32 %v2284, 0.0
      %v2293 = vpack.c.bf16 %v2286, %v2285
      %v2294 = vpack.c.bf16 %v2288, %v2287
      %v2295 = vpack.c.bf16 %v2290, %v2289
      %v2296 = vpack.c.bf16 %v2292, %v2291
      %v2297 = vld [vmem:[%s4] sm:$0xf]
      %v2298 = vld [vmem:[%s4 + $0x4] sm:$0xf]
      %v2299 = vld [vmem:[%s4 + $0x8] sm:$0xf]
      %v2300 = vld [vmem:[%s4 + $0xc] sm:$0xf]
      %v2301 = vld [vmem:[%s4 + $0x10] sm:$0xf]
      %v2302 = vld [vmem:[%s4 + $0x14] sm:$0xf]
      %v2303 = vld [vmem:[%s4 + $0x18] sm:$0xf]
      %v2304 = vld [vmem:[%s4 + $0x1c] sm:$0xf]
      %v2313 = vunpack.c.l.b16 %v2297
      %v2314 = vunpack.c.l.b16 %v2298
      %v2315 = vunpack.c.l.b16 %v2299
      %v2316 = vunpack.c.l.b16 %v2300
      %v2317 = vunpack.c.l.b16 %v2301
      %v2318 = vunpack.c.l.b16 %v2302
      %v2319 = vunpack.c.l.b16 %v2303
      %v2320 = vunpack.c.l.b16 %v2304
      %v2321 = vpack.c.b16 %v2314, %v2313
      %v2322 = vpack.c.b16 %v2316, %v2315
      %v2323 = vpack.c.b16 %v2318, %v2317
      %v2324 = vpack.c.b16 %v2320, %v2319
      %v2330 = vsel %vm723, %v2293, 0
      %v2333 = vsel %vm723, %v2294, 0
      %v2336 = vsel %vm723, %v2295, 0
      %v2339 = vsel %vm723, %v2296, 0
      %2341 = vmatprep.subr.bf16.mxu0 0
      %2342 = vmatpush1.bf16.msra.mxu0 %v2321
      %2343 = vmatprep.subr.bf16.mxu0 0
      %2344 = vmatpush1.bf16.msra.mxu0 %v2322
      %2345 = vmatprep.subr.bf16.mxu0 0
      %2346 = vmatpush1.bf16.msra.mxu0 %v2323
      %2347 = vmatprep.subr.bf16.mxu0 0
      %2348 = vmatpush1.bf16.msra.mxu0 %v2324
      %2349 = vmatprep.subr.bf16.mxu0 0
      %2350 = vmatpush1.bf16.msra.mxu0 0
      %2351 = vmatprep.subr.bf16.mxu0 0
      %2352 = vmatpush1.bf16.msra.mxu0 0
      %2353 = vmatprep.subr.bf16.mxu0 0
      %2354 = vmatpush1.bf16.msra.mxu0 0
      %2355 = vmatprep.subr.bf16.mxu0 0
      %2356 = vmatpush1.bf16.msra.mxu0 0
      %2357 = vmatprep.subr.bf16.mxu0 0
      %2358 = vmatpush1.bf16.msra.mxu0 0
      %2359 = vmatprep.subr.bf16.mxu0 0
      %2360 = vmatpush1.bf16.msra.mxu0 0
      %2361 = vmatprep.subr.bf16.mxu0 0
      %2362 = vmatpush1.bf16.msra.mxu0 0
      %2363 = vmatprep.subr.bf16.mxu0 0
      %2364 = vmatpush1.bf16.msra.mxu0 0
      %2365 = vmatprep.subr.bf16.mxu0 0
      %2366 = vmatpush1.bf16.msra.mxu0 0
      %2367 = vmatprep.subr.bf16.mxu0 0
      %2368 = vmatpush1.bf16.msra.mxu0 0
      %2369 = vmatprep.subr.bf16.mxu0 0
      %2370 = vmatpush1.bf16.msra.mxu0 0
      %2371 = vmatprep.subr.bf16.mxu0 0
      %2372 = vmatpush1.bf16.msra.mxu0 0
      %2373 = vmatprep.mubr.bf16.mxu0 0
      %2374 = vmatmul.mubr.bf16.gmra.mrb[0].mxu0 %v2330
      %v2375 = vpop.f32.mrb[0].mxu0
      %v2376 = vadd.f32 0.0, %v2375
      %v2377 = vpop.f32.mrb[0].mxu0
      %v2378 = vpop.f32.mrb[0].mxu0
      %v2379 = vadd.f32 0.0, %v2378
      %v2380 = vpop.f32.mrb[0].mxu0
      %2381 = vmatprep.mubr.bf16.mxu0 0
      %2382 = vmatmul.mubr.bf16.gmra.mrb[0].mxu0 %v2333
      %v2383 = vpop.f32.mrb[0].mxu0
      %v2384 = vadd.f32 0.0, %v2383
      %v2385 = vpop.f32.mrb[0].mxu0
      %v2386 = vpop.f32.mrb[0].mxu0
      %v2387 = vadd.f32 0.0, %v2386
      %v2388 = vpop.f32.mrb[0].mxu0
      %2389 = vmatprep.mubr.bf16.mxu0 0
      %2390 = vmatmul.mubr.bf16.gmra.mrb[0].mxu0 %v2336
      %v2391 = vpop.f32.mrb[0].mxu0
      %v2392 = vadd.f32 0.0, %v2391
      %v2393 = vpop.f32.mrb[0].mxu0
      %v2394 = vpop.f32.mrb[0].mxu0
      %v2395 = vadd.f32 0.0, %v2394
      %v2396 = vpop.f32.mrb[0].mxu0
      %2397 = vmatprep.mubr.bf16.mxu0 0
      %2398 = vmatmul.mubr.bf16.gmra.mrb[0].mxu0 %v2339
      %v2399 = vpop.f32.mrb[0].mxu0
      %v2400 = vadd.f32 0.0, %v2399
      %v2401 = vpop.f32.mrb[0].mxu0
      %v2402 = vpop.f32.mrb[0].mxu0
      %v2403 = vadd.f32 0.0, %v2402
      %v2404 = vpop.f32.mrb[0].mxu0
      %2405 = vdwg.mxu0
      %v2406 = vld [vmem:[%s5] sm:$0x1]
      %v2407 = vld [vmem:[%s6] sm:$0x1]
      %v2408 = vsel %vm723, %v2376, 0.0
      %v2409 = vsel %vm723, %v2379, 0.0
      %v2410 = vadd.f32 %v2408, %v2409
      %v2411 = vsel %vm723, %v2384, 0.0
      %v2412 = vadd.f32 %v2410, %v2411
      %v2413 = vsel %vm723, %v2387, 0.0
      %v2414 = vadd.f32 %v2412, %v2413
      %v2415 = vsel %vm723, %v2392, 0.0
      %v2416 = vadd.f32 %v2414, %v2415
      %v2417 = vsel %vm723, %v2395, 0.0
      %v2418 = vadd.f32 %v2416, %v2417
      %v2419 = vsel %vm723, %v2400, 0.0
      %v2420 = vadd.f32 %v2418, %v2419
      %v2421 = vsel %vm723, %v2403, 0.0
      %v2422 = vadd.f32 %v2420, %v2421
      %2423 = vadd.xlane.f32.xlu0 %v2422
      %v2424 = vpop.xlane.xlu0 %2423
      %v2425 = vrot.slane %v2424, 4
      %v2426 = vadd.f32 %v2424, %v2425
      %v2427 = vrot.slane %v2426, 2
      %v2428 = vadd.f32 %v2426, %v2427
      %v2429 = vrot.slane %v2428, 1
      %v2430 = vadd.f32 %v2428, %v2429
      %s2431 = vtos %v2430
      %v2432 = vmul.f32 %v2376, %v2376
      %v2433 = vmul.f32 %v2379, %v2379
      %v2434 = vmul.f32 %v2384, %v2384
      %v2435 = vmul.f32 %v2387, %v2387
      %v2436 = vmul.f32 %v2392, %v2392
      %v2437 = vmul.f32 %v2395, %v2395
      %v2438 = vmul.f32 %v2400, %v2400
      %v2439 = vmul.f32 %v2403, %v2403
      %v2440 = vsel %vm723, %v2432, 0.0
      %v2441 = vsel %vm723, %v2433, 0.0
      %v2442 = vadd.f32 %v2440, %v2441
      %v2443 = vsel %vm723, %v2434, 0.0
      %v2444 = vadd.f32 %v2442, %v2443
      %v2445 = vsel %vm723, %v2435, 0.0
      %v2446 = vadd.f32 %v2444, %v2445
      %v2447 = vsel %vm723, %v2436, 0.0
      %v2448 = vadd.f32 %v2446, %v2447
      %v2449 = vsel %vm723, %v2437, 0.0
      %v2450 = vadd.f32 %v2448, %v2449
      %v2451 = vsel %vm723, %v2438, 0.0
      %v2452 = vadd.f32 %v2450, %v2451
      %v2453 = vsel %vm723, %v2439, 0.0
      %v2454 = vadd.f32 %v2452, %v2453
      %2455 = vadd.xlane.f32.xlu0 %v2454
      %v2456 = vpop.xlane.xlu0 %2455
      %v2457 = vrot.slane %v2456, 4
      %v2458 = vadd.f32 %v2456, %v2457
      %v2459 = vrot.slane %v2458, 2
      %v2460 = vadd.f32 %v2458, %v2459
      %v2461 = vrot.slane %v2460, 1
      %v2462 = vadd.f32 %v2460, %v2461
      %s2463 = vtos %v2462
      %v2464 = vrcp.pop 4096.0
      %s2465 = vtos %v2464
      %s2466 = smul.f32 %s2431, %s2465
      %v2467 = vrcp.pop 4096.0
      %s2468 = vtos %v2467
      %s2469 = smul.f32 %s2463, %s2468
      %s2470 = smul.f32 %s2466, %s2466
      %s2471 = ssub.f32 %s2469, %s2470
      %s2472 = smax.f32 %s2471, 0.0
      %v2473 = vstv %s2466
      %v2474 = vsub.f32 %v2376, %v2473
      %v2475 = vsub.f32 %v2379, %v2473
      %v2476 = vsub.f32 %v2384, %v2473
      %v2477 = vsub.f32 %v2387, %v2473
      %v2478 = vsub.f32 %v2392, %v2473
      %v2479 = vsub.f32 %v2395, %v2473
      %v2480 = vsub.f32 %v2400, %v2473
      %v2481 = vsub.f32 %v2403, %v2473
      %s2482 = sadd.f32 %s2472, 1e-05
      %v2483 = vstv %s2482
      %v2484 = vrsqrt.pop %v2483
      %s2485 = vtos %v2484
      %v2486 = vstv %s2485
      %v2487 = vmul.f32 %v2474, %v2486
      %v2488 = vmul.f32 %v2475, %v2486
      %v2489 = vmul.f32 %v2476, %v2486
      %v2490 = vmul.f32 %v2477, %v2486
      %v2491 = vmul.f32 %v2478, %v2486
      %v2492 = vmul.f32 %v2479, %v2486
      %v2493 = vmul.f32 %v2480, %v2486
      %v2494 = vmul.f32 %v2481, %v2486
      %v2496 = vlaneseq
      %v2497 = vshrl.u32 %v2496, 7
      %v2498 = vsub.s32 0, %v2497
      %v2499 = vrot.slane %v2406, %v2498
      %v2501 = vmul.f32 %v2487, %v2499
      %v2502 = vmul.f32 %v2488, %v2499
      %v2503 = vmul.f32 %v2489, %v2499
      %v2504 = vmul.f32 %v2490, %v2499
      %v2505 = vmul.f32 %v2491, %v2499
      %v2506 = vmul.f32 %v2492, %v2499
      %v2507 = vmul.f32 %v2493, %v2499
      %v2508 = vmul.f32 %v2494, %v2499
      %v2510 = vlaneseq
      %v2511 = vshrl.u32 %v2510, 7
      %v2512 = vsub.s32 0, %v2511
      %v2513 = vrot.slane %v2407, %v2512
      %v2515 = vadd.f32 %v2501, %v2513
      %v2516 = vadd.f32 %v2502, %v2513
      %v2517 = vadd.f32 %v2503, %v2513
      %v2518 = vadd.f32 %v2504, %v2513
      %v2519 = vadd.f32 %v2505, %v2513
      %v2520 = vadd.f32 %v2506, %v2513
      %v2521 = vadd.f32 %v2507, %v2513
      %v2522 = vadd.f32 %v2508, %v2513
      %v2523 = vmax.f32 %v2515, 0.0
      %v2524 = vmax.f32 %v2516, 0.0
      %v2525 = vmax.f32 %v2517, 0.0
      %v2526 = vmax.f32 %v2518, 0.0
      %v2527 = vmax.f32 %v2519, 0.0
      %v2528 = vmax.f32 %v2520, 0.0
      %v2529 = vmax.f32 %v2521, 0.0
      %v2530 = vmax.f32 %v2522, 0.0
      %v2531 = vpack.c.bf16 %v2524, %v2523
      %v2532 = vpack.c.bf16 %v2526, %v2525
      %v2533 = vpack.c.bf16 %v2528, %v2527
      %v2534 = vpack.c.bf16 %v2530, %v2529
      %v2535 = vld [vmem:[%s7] sm:$0xf]
      %v2536 = vld [vmem:[%s7 + $0x4] sm:$0xf]
      %v2537 = vld [vmem:[%s7 + $0x8] sm:$0xf]
      %v2538 = vld [vmem:[%s7 + $0xc] sm:$0xf]
      %v2539 = vld [vmem:[%s7 + $0x10] sm:$0xf]
      %v2540 = vld [vmem:[%s7 + $0x14] sm:$0xf]
      %v2541 = vld [vmem:[%s7 + $0x18] sm:$0xf]
      %v2542 = vld [vmem:[%s7 + $0x1c] sm:$0xf]
      %v2551 = vunpack.c.l.b16 %v2535
      %v2552 = vunpack.c.l.b16 %v2536
      %v2553 = vunpack.c.l.b16 %v2537
      %v2554 = vunpack.c.l.b16 %v2538
      %v2555 = vunpack.c.l.b16 %v2539
      %v2556 = vunpack.c.l.b16 %v2540
      %v2557 = vunpack.c.l.b16 %v2541
      %v2558 = vunpack.c.l.b16 %v2542
      %v2559 = vpack.c.b16 %v2552, %v2551
      %v2560 = vpack.c.b16 %v2554, %v2553
      %v2561 = vpack.c.b16 %v2556, %v2555
      %v2562 = vpack.c.b16 %v2558, %v2557
      %v2568 = vsel %vm723, %v2531, 0
      %v2571 = vsel %vm723, %v2532, 0
      %v2574 = vsel %vm723, %v2533, 0
      %v2577 = vsel %vm723, %v2534, 0
      %2579 = vmatprep.subr.bf16.mxu0 0
      %2580 = vmatpush1.bf16.msra.mxu0 %v2559
      %2581 = vmatprep.subr.bf16.mxu0 0
      %2582 = vmatpush1.bf16.msra.mxu0 %v2560
      %2583 = vmatprep.subr.bf16.mxu0 0
      %2584 = vmatpush1.bf16.msra.mxu0 %v2561
      %2585 = vmatprep.subr.bf16.mxu0 0
      %2586 = vmatpush1.bf16.msra.mxu0 %v2562
      %2587 = vmatprep.subr.bf16.mxu0 0
      %2588 = vmatpush1.bf16.msra.mxu0 0
      %2589 = vmatprep.subr.bf16.mxu0 0
      %2590 = vmatpush1.bf16.msra.mxu0 0
      %2591 = vmatprep.subr.bf16.mxu0 0
      %2592 = vmatpush1.bf16.msra.mxu0 0
      %2593 = vmatprep.subr.bf16.mxu0 0
      %2594 = vmatpush1.bf16.msra.mxu0 0
      %2595 = vmatprep.subr.bf16.mxu0 0
      %2596 = vmatpush1.bf16.msra.mxu0 0
      %2597 = vmatprep.subr.bf16.mxu0 0
      %2598 = vmatpush1.bf16.msra.mxu0 0
      %2599 = vmatprep.subr.bf16.mxu0 0
      %2600 = vmatpush1.bf16.msra.mxu0 0
      %2601 = vmatprep.subr.bf16.mxu0 0
      %2602 = vmatpush1.bf16.msra.mxu0 0
      %2603 = vmatprep.subr.bf16.mxu0 0
      %2604 = vmatpush1.bf16.msra.mxu0 0
      %2605 = vmatprep.subr.bf16.mxu0 0
      %2606 = vmatpush1.bf16.msra.mxu0 0
      %2607 = vmatprep.subr.bf16.mxu0 0
      %2608 = vmatpush1.bf16.msra.mxu0 0
      %2609 = vmatprep.subr.bf16.mxu0 0
      %2610 = vmatpush1.bf16.msra.mxu0 0
      %2611 = vmatprep.mubr.bf16.mxu0 0
      %2612 = vmatmul.mubr.bf16.gmra.mrb[0].mxu0 %v2568
      %v2613 = vpop.f32.mrb[0].mxu0
      %v2614 = vadd.f32 0.0, %v2613
      %v2615 = vpop.f32.mrb[0].mxu0
      %v2616 = vpop.f32.mrb[0].mxu0
      %v2617 = vadd.f32 0.0, %v2616
      %v2618 = vpop.f32.mrb[0].mxu0
      %2619 = vmatprep.mubr.bf16.mxu0 0
      %2620 = vmatmul.mubr.bf16.gmra.mrb[0].mxu0 %v2571
      %v2621 = vpop.f32.mrb[0].mxu0
      %v2622 = vadd.f32 0.0, %v2621
      %v2623 = vpop.f32.mrb[0].mxu0
      %v2624 = vpop.f32.mrb[0].mxu0
      %v2625 = vadd.f32 0.0, %v2624
      %v2626 = vpop.f32.mrb[0].mxu0
      %2627 = vmatprep.mubr.bf16.mxu0 0
      %2628 = vmatmul.mubr.bf16.gmra.mrb[0].mxu0 %v2574
      %v2629 = vpop.f32.mrb[0].mxu0
      %v2630 = vadd.f32 0.0, %v2629
      %v2631 = vpop.f32.mrb[0].mxu0
      %v2632 = vpop.f32.mrb[0].mxu0
      %v2633 = vadd.f32 0.0, %v2632
      %v2634 = vpop.f32.mrb[0].mxu0
      %2635 = vmatprep.mubr.bf16.mxu0 0
      %2636 = vmatmul.mubr.bf16.gmra.mrb[0].mxu0 %v2577
      %v2637 = vpop.f32.mrb[0].mxu0
      %v2638 = vadd.f32 0.0, %v2637
      %v2639 = vpop.f32.mrb[0].mxu0
      %v2640 = vpop.f32.mrb[0].mxu0
      %v2641 = vadd.f32 0.0, %v2640
      %v2642 = vpop.f32.mrb[0].mxu0
      %2643 = vdwg.mxu0
      %v2644 = vld [vmem:[%s8] sm:$0x1]
      %v2645 = vld [vmem:[%s9] sm:$0x1]
      %v2646 = vsel %vm723, %v2614, 0.0
      %v2647 = vsel %vm723, %v2617, 0.0
      %v2648 = vadd.f32 %v2646, %v2647
      %v2649 = vsel %vm723, %v2622, 0.0
      %v2650 = vadd.f32 %v2648, %v2649
      %v2651 = vsel %vm723, %v2625, 0.0
      %v2652 = vadd.f32 %v2650, %v2651
      %v2653 = vsel %vm723, %v2630, 0.0
      %v2654 = vadd.f32 %v2652, %v2653
      %v2655 = vsel %vm723, %v2633, 0.0
      %v2656 = vadd.f32 %v2654, %v2655
      %v2657 = vsel %vm723, %v2638, 0.0
      %v2658 = vadd.f32 %v2656, %v2657
      %v2659 = vsel %vm723, %v2641, 0.0
      %v2660 = vadd.f32 %v2658, %v2659
      %2661 = vadd.xlane.f32.xlu0 %v2660
      %v2662 = vpop.xlane.xlu0 %2661
      %v2663 = vrot.slane %v2662, 4
      %v2664 = vadd.f32 %v2662, %v2663
      %v2665 = vrot.slane %v2664, 2
      %v2666 = vadd.f32 %v2664, %v2665
      %v2667 = vrot.slane %v2666, 1
      %v2668 = vadd.f32 %v2666, %v2667
      %s2669 = vtos %v2668
      %v2670 = vmul.f32 %v2614, %v2614
      %v2671 = vmul.f32 %v2617, %v2617
      %v2672 = vmul.f32 %v2622, %v2622
      %v2673 = vmul.f32 %v2625, %v2625
      %v2674 = vmul.f32 %v2630, %v2630
      %v2675 = vmul.f32 %v2633, %v2633
      %v2676 = vmul.f32 %v2638, %v2638
      %v2677 = vmul.f32 %v2641, %v2641
      %v2678 = vsel %vm723, %v2670, 0.0
      %v2679 = vsel %vm723, %v2671, 0.0
      %v2680 = vadd.f32 %v2678, %v2679
      %v2681 = vsel %vm723, %v2672, 0.0
      %v2682 = vadd.f32 %v2680, %v2681
      %v2683 = vsel %vm723, %v2673, 0.0
      %v2684 = vadd.f32 %v2682, %v2683
      %v2685 = vsel %vm723, %v2674, 0.0
      %v2686 = vadd.f32 %v2684, %v2685
      %v2687 = vsel %vm723, %v2675, 0.0
      %v2688 = vadd.f32 %v2686, %v2687
      %v2689 = vsel %vm723, %v2676, 0.0
      %v2690 = vadd.f32 %v2688, %v2689
      %v2691 = vsel %vm723, %v2677, 0.0
      %v2692 = vadd.f32 %v2690, %v2691
      %2693 = vadd.xlane.f32.xlu0 %v2692
      %v2694 = vpop.xlane.xlu0 %2693
      %v2695 = vrot.slane %v2694, 4
      %v2696 = vadd.f32 %v2694, %v2695
      %v2697 = vrot.slane %v2696, 2
      %v2698 = vadd.f32 %v2696, %v2697
      %v2699 = vrot.slane %v2698, 1
      %v2700 = vadd.f32 %v2698, %v2699
      %s2701 = vtos %v2700
      %v2702 = vrcp.pop 4096.0
      %s2703 = vtos %v2702
      %s2704 = smul.f32 %s2669, %s2703
      %v2705 = vrcp.pop 4096.0
      %s2706 = vtos %v2705
      %s2707 = smul.f32 %s2701, %s2706
      %s2708 = smul.f32 %s2704, %s2704
      %s2709 = ssub.f32 %s2707, %s2708
      %s2710 = smax.f32 %s2709, 0.0
      %v2711 = vstv %s2704
      %v2712 = vsub.f32 %v2614, %v2711
      %v2713 = vsub.f32 %v2617, %v2711
      %v2714 = vsub.f32 %v2622, %v2711
      %v2715 = vsub.f32 %v2625, %v2711
      %v2716 = vsub.f32 %v2630, %v2711
      %v2717 = vsub.f32 %v2633, %v2711
      %v2718 = vsub.f32 %v2638, %v2711
      %v2719 = vsub.f32 %v2641, %v2711
      %s2720 = sadd.f32 %s2710, 1e-05
      %v2721 = vstv %s2720
      %v2722 = vrsqrt.pop %v2721
      %s2723 = vtos %v2722
      %v2724 = vstv %s2723
      %v2725 = vmul.f32 %v2712, %v2724
      %v2726 = vmul.f32 %v2713, %v2724
      %v2727 = vmul.f32 %v2714, %v2724
      %v2728 = vmul.f32 %v2715, %v2724
      %v2729 = vmul.f32 %v2716, %v2724
      %v2730 = vmul.f32 %v2717, %v2724
      %v2731 = vmul.f32 %v2718, %v2724
      %v2732 = vmul.f32 %v2719, %v2724
      %v2734 = vlaneseq
      %v2735 = vshrl.u32 %v2734, 7
      %v2736 = vsub.s32 0, %v2735
      %v2737 = vrot.slane %v2644, %v2736
      %v2739 = vmul.f32 %v2725, %v2737
      %v2740 = vmul.f32 %v2726, %v2737
      %v2741 = vmul.f32 %v2727, %v2737
      %v2742 = vmul.f32 %v2728, %v2737
      %v2743 = vmul.f32 %v2729, %v2737
      %v2744 = vmul.f32 %v2730, %v2737
      %v2745 = vmul.f32 %v2731, %v2737
      %v2746 = vmul.f32 %v2732, %v2737
      %v2748 = vlaneseq
      %v2749 = vshrl.u32 %v2748, 7
      %v2750 = vsub.s32 0, %v2749
      %v2751 = vrot.slane %v2645, %v2750
      %v2753 = vadd.f32 %v2739, %v2751
      %v2754 = vadd.f32 %v2740, %v2751
      %v2755 = vadd.f32 %v2741, %v2751
      %v2756 = vadd.f32 %v2742, %v2751
      %v2757 = vadd.f32 %v2743, %v2751
      %v2758 = vadd.f32 %v2744, %v2751
      %v2759 = vadd.f32 %v2745, %v2751
      %v2760 = vadd.f32 %v2746, %v2751
      %v2761 = vmax.f32 %v2753, 0.0
      %v2762 = vmax.f32 %v2754, 0.0
      %v2763 = vmax.f32 %v2755, 0.0
      %v2764 = vmax.f32 %v2756, 0.0
      %v2765 = vmax.f32 %v2757, 0.0
      %v2766 = vmax.f32 %v2758, 0.0
      %v2767 = vmax.f32 %v2759, 0.0
      %v2768 = vmax.f32 %v2760, 0.0
      %v2769 = vpack.c.bf16 %v2762, %v2761
      %v2770 = vpack.c.bf16 %v2764, %v2763
      %v2771 = vpack.c.bf16 %v2766, %v2765
      %v2772 = vpack.c.bf16 %v2768, %v2767
      %v2773 = vld [vmem:[%s10] sm:$0xff]
      %v2774 = vld [vmem:[%s10 + $0x8] sm:$0xff]
      %v2775 = vld [vmem:[%s10 + $0x10] sm:$0xff]
      %v2776 = vld [vmem:[%s10 + $0x18] sm:$0xff]
      %v2777 = vld [vmem:[%s10 + $0x20] sm:$0xff]
      %v2778 = vld [vmem:[%s10 + $0x28] sm:$0xff]
      %v2779 = vld [vmem:[%s10 + $0x30] sm:$0xff]
      %v2780 = vld [vmem:[%s10 + $0x38] sm:$0xff]
      %v2789 = vunpack.c.l.b16 %v2773
      %v2790 = vunpack.c.h.b16 %v2773
      %v2791 = vunpack.c.l.b16 %v2774
      %v2792 = vunpack.c.h.b16 %v2774
      %v2793 = vunpack.c.l.b16 %v2775
      %v2794 = vunpack.c.h.b16 %v2775
      %v2795 = vunpack.c.l.b16 %v2776
      %v2796 = vunpack.c.h.b16 %v2776
      %v2797 = vunpack.c.l.b16 %v2777
      %v2798 = vunpack.c.h.b16 %v2777
      %v2799 = vunpack.c.l.b16 %v2778
      %v2800 = vunpack.c.h.b16 %v2778
      %v2801 = vunpack.c.l.b16 %v2779
      %v2802 = vunpack.c.h.b16 %v2779
      %v2803 = vunpack.c.l.b16 %v2780
      %v2804 = vunpack.c.h.b16 %v2780
      %v2805 = vpack.c.b16 %v2791, %v2789
      %v2806 = vpack.c.b16 %v2792, %v2790
      %v2807 = vpack.c.b16 %v2795, %v2793
      %v2808 = vpack.c.b16 %v2796, %v2794
      %v2809 = vpack.c.b16 %v2799, %v2797
      %v2810 = vpack.c.b16 %v2800, %v2798
      %v2811 = vpack.c.b16 %v2803, %v2801
      %v2812 = vpack.c.b16 %v2804, %v2802
      %v2822 = vsel %vm723, %v2769, 0
      %v2825 = vsel %vm723, %v2770, 0
      %v2828 = vsel %vm723, %v2771, 0
      %v2831 = vsel %vm723, %v2772, 0
      %2833 = vmatprep.subr.bf16.mxu0 %v2806
      %2834 = vmatpush1.bf16.msra.mxu0 %v2805
      %2835 = vmatprep.subr.bf16.mxu0 %v2808
      %2836 = vmatpush1.bf16.msra.mxu0 %v2807
      %2837 = vmatprep.subr.bf16.mxu0 %v2810
      %2838 = vmatpush1.bf16.msra.mxu0 %v2809
      %2839 = vmatprep.subr.bf16.mxu0 %v2812
      %2840 = vmatpush1.bf16.msra.mxu0 %v2811
      %2841 = vmatprep.subr.bf16.mxu0 0
      %2842 = vmatpush1.bf16.msra.mxu0 0
      %2843 = vmatprep.subr.bf16.mxu0 0
      %2844 = vmatpush1.bf16.msra.mxu0 0
      %2845 = vmatprep.subr.bf16.mxu0 0
      %2846 = vmatpush1.bf16.msra.mxu0 0
      %2847 = vmatprep.subr.bf16.mxu0 0
      %2848 = vmatpush1.bf16.msra.mxu0 0
      %2849 = vmatprep.subr.bf16.mxu0 0
      %2850 = vmatpush1.bf16.msra.mxu0 0
      %2851 = vmatprep.subr.bf16.mxu0 0
      %2852 = vmatpush1.bf16.msra.mxu0 0
      %2853 = vmatprep.subr.bf16.mxu0 0
      %2854 = vmatpush1.bf16.msra.mxu0 0
      %2855 = vmatprep.subr.bf16.mxu0 0
      %2856 = vmatpush1.bf16.msra.mxu0 0
      %2857 = vmatprep.subr.bf16.mxu0 0
      %2858 = vmatpush1.bf16.msra.mxu0 0
      %2859 = vmatprep.subr.bf16.mxu0 0
      %2860 = vmatpush1.bf16.msra.mxu0 0
      %2861 = vmatprep.subr.bf16.mxu0 0
      %2862 = vmatpush1.bf16.msra.mxu0 0
      %2863 = vmatprep.subr.bf16.mxu0 0
      %2864 = vmatpush1.bf16.msra.mxu0 0
      %2865 = vmatprep.mubr.bf16.mxu0 0
      %2866 = vmatmul.mubr.bf16.gmra.mrb[0].mxu0 %v2822
      %v2867 = vpop.f32.mrb[0].mxu0
      %v2868 = vadd.f32 0.0, %v2867
      %v2869 = vpop.f32.mrb[0].mxu0
      %v2870 = vadd.f32 0.0, %v2869
      %v2871 = vpop.f32.mrb[0].mxu0
      %v2872 = vadd.f32 0.0, %v2871
      %v2873 = vpop.f32.mrb[0].mxu0
      %v2874 = vadd.f32 0.0, %v2873
      %2875 = vmatprep.mubr.bf16.mxu0 0
      %2876 = vmatmul.mubr.bf16.gmra.mrb[0].mxu0 %v2825
      %v2877 = vpop.f32.mrb[0].mxu0
      %v2878 = vadd.f32 0.0, %v2877
      %v2879 = vpop.f32.mrb[0].mxu0
      %v2880 = vadd.f32 0.0, %v2879
      %v2881 = vpop.f32.mrb[0].mxu0
      %v2882 = vadd.f32 0.0, %v2881
      %v2883 = vpop.f32.mrb[0].mxu0
      %v2884 = vadd.f32 0.0, %v2883
      %2885 = vmatprep.mubr.bf16.mxu0 0
      %2886 = vmatmul.mubr.bf16.gmra.mrb[0].mxu0 %v2828
      %v2887 = vpop.f32.mrb[0].mxu0
      %v2888 = vadd.f32 0.0, %v2887
      %v2889 = vpop.f32.mrb[0].mxu0
      %v2890 = vadd.f32 0.0, %v2889
      %v2891 = vpop.f32.mrb[0].mxu0
      %v2892 = vadd.f32 0.0, %v2891
      %v2893 = vpop.f32.mrb[0].mxu0
      %v2894 = vadd.f32 0.0, %v2893
      %2895 = vmatprep.mubr.bf16.mxu0 0
      %2896 = vmatmul.mubr.bf16.gmra.mrb[0].mxu0 %v2831
      %v2897 = vpop.f32.mrb[0].mxu0
      %v2898 = vadd.f32 0.0, %v2897
      %v2899 = vpop.f32.mrb[0].mxu0
      %v2900 = vadd.f32 0.0, %v2899
      %v2901 = vpop.f32.mrb[0].mxu0
      %v2902 = vadd.f32 0.0, %v2901
      %v2903 = vpop.f32.mrb[0].mxu0
      %v2904 = vadd.f32 0.0, %v2903
      %2905 = vdwg.mxu0
      %v2906 = vld [vmem:[%s11] sm:$0x3]
      %v2907 = vld [vmem:[%s12] sm:$0x3]
      %v2908 = vadd.f32 %v2868, %v2870
      %v2909 = vadd.f32 %v2908, %v2872
      %v2910 = vadd.f32 %v2909, %v2874
      %v2911 = vadd.f32 %v2910, %v2878
      %v2912 = vadd.f32 %v2911, %v2880
      %v2913 = vadd.f32 %v2912, %v2882
      %v2914 = vadd.f32 %v2913, %v2884
      %v2915 = vadd.f32 %v2914, %v2888
      %v2916 = vadd.f32 %v2915, %v2890
      %v2917 = vadd.f32 %v2916, %v2892
      %v2918 = vadd.f32 %v2917, %v2894
      %v2919 = vadd.f32 %v2918, %v2898
      %v2920 = vadd.f32 %v2919, %v2900
      %v2921 = vadd.f32 %v2920, %v2902
      %v2922 = vadd.f32 %v2921, %v2904
      %2923 = vadd.xlane.f32.xlu0 %v2922
      %v2924 = vpop.xlane.xlu0 %2923
      %v2925 = vrot.slane %v2924, 4
      %v2926 = vadd.f32 %v2924, %v2925
      %v2927 = vrot.slane %v2926, 2
      %v2928 = vadd.f32 %v2926, %v2927
      %v2929 = vrot.slane %v2928, 1
      %v2930 = vadd.f32 %v2928, %v2929
      %s2931 = vtos %v2930
      %v2932 = vmul.f32 %v2868, %v2868
      %v2933 = vmul.f32 %v2870, %v2870
      %v2934 = vmul.f32 %v2872, %v2872
      %v2935 = vmul.f32 %v2874, %v2874
      %v2936 = vmul.f32 %v2878, %v2878
      %v2937 = vmul.f32 %v2880, %v2880
      %v2938 = vmul.f32 %v2882, %v2882
      %v2939 = vmul.f32 %v2884, %v2884
      %v2940 = vmul.f32 %v2888, %v2888
      %v2941 = vmul.f32 %v2890, %v2890
      %v2942 = vmul.f32 %v2892, %v2892
      %v2943 = vmul.f32 %v2894, %v2894
      %v2944 = vmul.f32 %v2898, %v2898
      %v2945 = vmul.f32 %v2900, %v2900
      %v2946 = vmul.f32 %v2902, %v2902
      %v2947 = vmul.f32 %v2904, %v2904
      %v2948 = vadd.f32 %v2932, %v2933
      %v2949 = vadd.f32 %v2948, %v2934
      %v2950 = vadd.f32 %v2949, %v2935
      %v2951 = vadd.f32 %v2950, %v2936
      %v2952 = vadd.f32 %v2951, %v2937
      %v2953 = vadd.f32 %v2952, %v2938
      %v2954 = vadd.f32 %v2953, %v2939
      %v2955 = vadd.f32 %v2954, %v2940
      %v2956 = vadd.f32 %v2955, %v2941
      %v2957 = vadd.f32 %v2956, %v2942
      %v2958 = vadd.f32 %v2957, %v2943
      %v2959 = vadd.f32 %v2958, %v2944
      %v2960 = vadd.f32 %v2959, %v2945
      %v2961 = vadd.f32 %v2960, %v2946
      %v2962 = vadd.f32 %v2961, %v2947
      %2963 = vadd.xlane.f32.xlu0 %v2962
      %v2964 = vpop.xlane.xlu0 %2963
      %v2965 = vrot.slane %v2964, 4
      %v2966 = vadd.f32 %v2964, %v2965
      %v2967 = vrot.slane %v2966, 2
      %v2968 = vadd.f32 %v2966, %v2967
      %v2969 = vrot.slane %v2968, 1
      %v2970 = vadd.f32 %v2968, %v2969
      %s2971 = vtos %v2970
      %v2972 = vrcp.pop 16384.0
      %s2973 = vtos %v2972
      %s2974 = smul.f32 %s2931, %s2973
      %v2975 = vrcp.pop 16384.0
      %s2976 = vtos %v2975
      %s2977 = smul.f32 %s2971, %s2976
      %s2978 = smul.f32 %s2974, %s2974
      %s2979 = ssub.f32 %s2977, %s2978
      %s2980 = smax.f32 %s2979, 0.0
      %v2981 = vstv %s2974
      %v2982 = vsub.f32 %v2868, %v2981
      %v2983 = vsub.f32 %v2870, %v2981
      %v2984 = vsub.f32 %v2872, %v2981
      %v2985 = vsub.f32 %v2874, %v2981
      %v2986 = vsub.f32 %v2878, %v2981
      %v2987 = vsub.f32 %v2880, %v2981
      %v2988 = vsub.f32 %v2882, %v2981
      %v2989 = vsub.f32 %v2884, %v2981
      %v2990 = vsub.f32 %v2888, %v2981
      %v2991 = vsub.f32 %v2890, %v2981
      %v2992 = vsub.f32 %v2892, %v2981
      %v2993 = vsub.f32 %v2894, %v2981
      %v2994 = vsub.f32 %v2898, %v2981
      %v2995 = vsub.f32 %v2900, %v2981
      %v2996 = vsub.f32 %v2902, %v2981
      %v2997 = vsub.f32 %v2904, %v2981
      %s2998 = sadd.f32 %s2980, 1e-05
      %v2999 = vstv %s2998
      %v3000 = vrsqrt.pop %v2999
      %s3001 = vtos %v3000
      %v3002 = vstv %s3001
      %v3003 = vmul.f32 %v2982, %v3002
      %v3004 = vmul.f32 %v2983, %v3002
      %v3005 = vmul.f32 %v2984, %v3002
      %v3006 = vmul.f32 %v2985, %v3002
      %v3007 = vmul.f32 %v2986, %v3002
      %v3008 = vmul.f32 %v2987, %v3002
      %v3009 = vmul.f32 %v2988, %v3002
      %v3010 = vmul.f32 %v2989, %v3002
      %v3011 = vmul.f32 %v2990, %v3002
      %v3012 = vmul.f32 %v2991, %v3002
      %v3013 = vmul.f32 %v2992, %v3002
      %v3014 = vmul.f32 %v2993, %v3002
      %v3015 = vmul.f32 %v2994, %v3002
      %v3016 = vmul.f32 %v2995, %v3002
      %v3017 = vmul.f32 %v2996, %v3002
      %v3018 = vmul.f32 %v2997, %v3002
      %v3020 = vlaneseq
      %v3021 = vshrl.u32 %v3020, 7
      %v3022 = vsub.s32 0, %v3021
      %v3023 = vrot.slane %v2906, %v3022
      %v3024 = vlaneseq
      %v3025 = vshrl.u32 %v3024, 7
      %v3026 = vsub.s32 1, %v3025
      %v3027 = vrot.slane %v2906, %v3026
      %v3030 = vmul.f32 %v3003, %v3023
      %v3031 = vmul.f32 %v3004, %v3027
      %v3032 = vmul.f32 %v3005, %v3023
      %v3033 = vmul.f32 %v3006, %v3027
      %v3034 = vmul.f32 %v3007, %v3023
      %v3035 = vmul.f32 %v3008, %v3027
      %v3036 = vmul.f32 %v3009, %v3023
      %v3037 = vmul.f32 %v3010, %v3027
      %v3038 = vmul.f32 %v3011, %v3023
      %v3039 = vmul.f32 %v3012, %v3027
      %v3040 = vmul.f32 %v3013, %v3023
      %v3041 = vmul.f32 %v3014, %v3027
      %v3042 = vmul.f32 %v3015, %v3023
      %v3043 = vmul.f32 %v3016, %v3027
      %v3044 = vmul.f32 %v3017, %v3023
      %v3045 = vmul.f32 %v3018, %v3027
      %v3047 = vlaneseq
      %v3048 = vshrl.u32 %v3047, 7
      %v3049 = vsub.s32 0, %v3048
      %v3050 = vrot.slane %v2907, %v3049
      %v3051 = vlaneseq
      %v3052 = vshrl.u32 %v3051, 7
      %v3053 = vsub.s32 1, %v3052
      %v3054 = vrot.slane %v2907, %v3053
      %v3057 = vadd.f32 %v3030, %v3050
      %v3058 = vadd.f32 %v3031, %v3054
      %v3059 = vadd.f32 %v3032, %v3050
      %v3060 = vadd.f32 %v3033, %v3054
      %v3061 = vadd.f32 %v3034, %v3050
      %v3062 = vadd.f32 %v3035, %v3054
      %v3063 = vadd.f32 %v3036, %v3050
      %v3064 = vadd.f32 %v3037, %v3054
      %v3065 = vadd.f32 %v3038, %v3050
      %v3066 = vadd.f32 %v3039, %v3054
      %v3067 = vadd.f32 %v3040, %v3050
      %v3068 = vadd.f32 %v3041, %v3054
      %v3069 = vadd.f32 %v3042, %v3050
      %v3070 = vadd.f32 %v3043, %v3054
      %v3071 = vadd.f32 %v3044, %v3050
      %v3072 = vadd.f32 %v3045, %v3054
      %v3073 = vmax.f32 %v3057, 0.0
      %v3074 = vmax.f32 %v3058, 0.0
      %v3075 = vmax.f32 %v3059, 0.0
      %v3076 = vmax.f32 %v3060, 0.0
      %v3077 = vmax.f32 %v3061, 0.0
      %v3078 = vmax.f32 %v3062, 0.0
      %v3079 = vmax.f32 %v3063, 0.0
      %v3080 = vmax.f32 %v3064, 0.0
      %v3081 = vmax.f32 %v3065, 0.0
      %v3082 = vmax.f32 %v3066, 0.0
      %v3083 = vmax.f32 %v3067, 0.0
      %v3084 = vmax.f32 %v3068, 0.0
      %v3085 = vmax.f32 %v3069, 0.0
      %v3086 = vmax.f32 %v3070, 0.0
      %v3087 = vmax.f32 %v3071, 0.0
      %v3088 = vmax.f32 %v3072, 0.0
      %v3089 = vpack.c.bf16 %v3075, %v3073
      %v3090 = vpack.c.bf16 %v3076, %v3074
      %v3091 = vpack.c.bf16 %v3079, %v3077
      %v3092 = vpack.c.bf16 %v3080, %v3078
      %v3093 = vpack.c.bf16 %v3083, %v3081
      %v3094 = vpack.c.bf16 %v3084, %v3082
      %v3095 = vpack.c.bf16 %v3087, %v3085
      %v3096 = vpack.c.bf16 %v3088, %v3086
      %v3105 = vunpack.c.l.b16 %v3089
      %v3106 = vunpack.c.l.b16 %v3090
      %v3107 = vunpack.c.h.b16 %v3089
      %v3108 = vunpack.c.h.b16 %v3090
      %v3109 = vunpack.c.l.b16 %v3091
      %v3110 = vunpack.c.l.b16 %v3092
      %v3111 = vunpack.c.h.b16 %v3091
      %v3112 = vunpack.c.h.b16 %v3092
      %v3113 = vunpack.c.l.b16 %v3093
      %v3114 = vunpack.c.l.b16 %v3094
      %v3115 = vunpack.c.h.b16 %v3093
      %v3116 = vunpack.c.h.b16 %v3094
      %v3117 = vunpack.c.l.b16 %v3095
      %v3118 = vunpack.c.l.b16 %v3096
      %v3119 = vunpack.c.h.b16 %v3095
      %v3120 = vunpack.c.h.b16 %v3096
      %v3121 = vpack.c.b16 %v3106, %v3105
      %v3122 = vpack.c.b16 %v3108, %v3107
      %v3123 = vpack.c.b16 %v3110, %v3109
      %v3124 = vpack.c.b16 %v3112, %v3111
      %v3125 = vpack.c.b16 %v3114, %v3113
      %v3126 = vpack.c.b16 %v3116, %v3115
      %v3127 = vpack.c.b16 %v3118, %v3117
      %v3128 = vpack.c.b16 %v3120, %v3119
      %3137 = vst [vmem:[%s440] sm:$0xff] %v3121
      %3138 = vst [vmem:[%s440 + $0x8] sm:$0xff] %v3122
      %3139 = vst [vmem:[%s440 + $0x10] sm:$0xff] %v3123
      %3140 = vst [vmem:[%s440 + $0x18] sm:$0xff] %v3124
      %3141 = vst [vmem:[%s440 + $0x20] sm:$0xff] %v3125
      %3142 = vst [vmem:[%s440 + $0x28] sm:$0xff] %v3126
      %3143 = vst [vmem:[%s440 + $0x30] sm:$0xff] %v3127
      %3144 = vst [vmem:[%s440 + $0x38] sm:$0xff] %v3128
      %p3145 = scmp.lt.s32.totalorder %s24, 1
      %s3146 = scalar_select %p3145, %s24, 1
      %s3147 = smul.addr %s3146, 16
      %s3148 = smul.addr %s3147, 4
      %s3149 = scalar_lea.vmem %s13, %s3148
      // Predicated region
      $region73: #{vae_decoder_forward.6} parent=71 // pred_check
        %p3150 = pneg %p320
      $region74: #{vae_decoder_forward.6} parent=71 // pred_check_branch
        %3152 = sbr.rel (%p3150) target = $region76
      $region75: #{vae_decoder_forward.6} parent=71 // pred_region
        _
      $region76: #{vae_decoder_forward.6} parent=71 // pred_fallthru
        _
    $region72: #{vae_decoder_forward.6} parent=5 // pred_fallthru
      _
    %p3153 = scmp.le.s32.totalorder 2, %s19
    // Predicated region
    $region77: #{vae_decoder_forward.6} parent=5 // pred_check
      %p3154 = pneg %p3153
    $region78: #{vae_decoder_forward.6} parent=5 // pred_check_branch
      %3156 = sbr.rel (%p3154) target = $region80
    $region79: #{vae_decoder_forward.6} parent=5 // pred_region
      %s3157 = ssub.s32 %s19, 2
      // Predicated region
      $region81: #{vae_decoder_forward.6} parent=79 // pred_check
        %p3158 = pneg %p326
      $region82: #{vae_decoder_forward.6} parent=79 // pred_check_branch
        %3160 = sbr.rel (%p3158) target = $region84
      $region83: #{vae_decoder_forward.6} parent=79 // pred_region
        %p3161 = scmp.lt.s32.totalorder %s25, 1
        %s3162 = scalar_select %p3161, %s25, 1
        %s3163 = smul.addr %s3162, 16
        %s3164 = smul.addr %s3163, 4
        %s3165 = scalar_lea.vmem %s13, %s3164
      $region84: #{vae_decoder_forward.6} parent=79 // pred_fallthru
        _
    $region80: #{vae_decoder_forward.6} parent=5 // pred_fallthru
      _
  $region6: #{vae_decoder_forward.6} parent=0 // loop_footer
    %s23 = sadd.s32 1, %s19
  $region7: #{vae_decoder_forward.6} parent=0 // loop_footer_branch
    %18 = sbr.rel target = $region3
  $region8: #{vae_decoder_forward.6} parent=0 // loop_exit
    _

// kernel: vae_decoder_forward.7
$region0: #{vae_decoder_forward.7}
  #allocation0 [shape = 'u32[]', space=smem, size = 0x4, offset = 0x4, fixed_abs, tag = 'smem constant byte address 0x4 - core index']
  #allocation1 [shape = 'u32[144,128]{1,0:T(1,128)}', space=vmem, size = 0x12000, scoped, tag = 'internal scratch']
  %s0 = inlined_call_operand.vmem [shape: bf16[2,256,64], index: 0, kind: input, shape index: {}]
  %s1 = inlined_call_operand.vmem [shape: bf16[64,3], index: 1, kind: input, shape index: {}]
  %s2 = inlined_call_operand.vmem [shape: f32[1,3], index: 2, kind: input, shape index: {}]
  %s3 = inlined_call_operand.vmem [shape: f32[2,256,3], index: 3, kind: output, shape index: {}]
  %s4 = sld [smem:[#allocation0]]
  $region45: #{vae_decoder_forward.7} parent=0
    _
  %s6 = ssub.s32 1, %s4
  %s7 = scalar_select 0, %s6, %s4
  loop: start=0, step=1, limit=4
  $region2: #{vae_decoder_forward.7} parent=0 // loop_pre_header
    _
  $region3: #{vae_decoder_forward.7} parent=0 // loop_header
    %s9 = sphi 0, %s13
    %p10 = scmp.ge.s32.totalorder %s9, 4
    %s19 = sphi 0, %s21
    %s22 = sphi 0, %s19
    %s23 = sphi 0, %s22
    %s39 = sphi 0, %s23
    %s43 = sphi 0, %s43
    %s45 = sphi 0, %s43
    %s46 = sphi 0, %s45
    %s60 = sphi 0, %s46
    %s64 = sphi 0, %s64
    %s66 = sphi 0, %s64
    %s67 = sphi 0, %s66
    %s81 = sphi 0, %s67
    %s87 = sphi 0, %s89
    %s90 = sphi 0, %s87
    %s91 = sphi 0, %s90
    %s107 = sphi 0, %s91
  $region4: #{vae_decoder_forward.7} parent=0 // loop_header_branch
    %12 = sbr.rel (%p10) target = $region8
  $region5: #{vae_decoder_forward.7} parent=0 // loop_body
    %s14 = ssub.s32 %s9, 1
    %s15 = ssub.s32 %s9, 2
    %s16 = sadd.s32 %s9, 1
    %s17 = ssub.s32 %s9, %s16
    %p18 = scmp.eq.s32.totalorder %s17, 0
    %s20 = sadd.s32 %s19, 1
    %s21 = scalar_select %p18, %s19, %s20
    %p24 = pneg %p18
    %p25 = scmp.eq.s32.totalorder %s9, 1
    %p26 = por %p24, %p25
    %p27 = scmp.ne.s32.totalorder %s19, %s22
    %p28 = scmp.eq.s32.totalorder %s9, 0
    %p29 = por %p27, %p28
    %p30 = scmp.ne.s32.totalorder %s19, %s22
    %p31 = scmp.eq.s32.totalorder %s14, 1
    %p32 = por %p30, %p31
    %p33 = scmp.ne.s32.totalorder %s22, %s23
    %p34 = scmp.eq.s32.totalorder %s14, 0
    %p35 = por %p33, %p34
    %p36 = scmp.ne.s32.totalorder %s22, %s23
    %p37 = scmp.eq.s32.totalorder %s15, 1
    %p38 = por %p36, %p37
    %p40 = scmp.ne.s32.totalorder %s23, %s39
    %p41 = scmp.eq.s32.totalorder %s15, 0
    %p42 = por %p40, %p41
    %s44 = sadd.s32 %s43, 1
    %p47 = scmp.eq.s32.totalorder %s9, 1
    %p48 = scmp.ne.s32.totalorder %s43, %s45
    %p49 = scmp.eq.s32.totalorder %s9, 0
    %p50 = por %p48, %p49
    %p51 = scmp.ne.s32.totalorder %s43, %s45
    %p52 = scmp.eq.s32.totalorder %s14, 1
    %p53 = por %p51, %p52
    %p54 = scmp.ne.s32.totalorder %s45, %s46
    %p55 = scmp.eq.s32.totalorder %s14, 0
    %p56 = por %p54, %p55
    %p57 = scmp.ne.s32.totalorder %s45, %s46
    %p58 = scmp.eq.s32.totalorder %s15, 1
    %p59 = por %p57, %p58
    %p61 = scmp.ne.s32.totalorder %s46, %s60
    %p62 = scmp.eq.s32.totalorder %s15, 0
    %p63 = por %p61, %p62
    %s65 = sadd.s32 %s64, 1
    %p68 = scmp.eq.s32.totalorder %s9, 1
    %p69 = scmp.ne.s32.totalorder %s64, %s66
    %p70 = scmp.eq.s32.totalorder %s9, 0
    %p71 = por %p69, %p70
    %p72 = scmp.ne.s32.totalorder %s64, %s66
    %p73 = scmp.eq.s32.totalorder %s14, 1
    %p74 = por %p72, %p73
    %p75 = scmp.ne.s32.totalorder %s66, %s67
    %p76 = scmp.eq.s32.totalorder %s14, 0
    %p77 = por %p75, %p76
    %p78 = scmp.ne.s32.totalorder %s66, %s67
    %p79 = scmp.eq.s32.totalorder %s15, 1
    %p80 = por %p78, %p79
    %p82 = scmp.ne.s32.totalorder %s67, %s81
    %p83 = scmp.eq.s32.totalorder %s15, 0
    %p84 = por %p82, %p83
    %s85 = ssub.s32 %s9, %s16
    %p86 = scmp.eq.s32.totalorder %s85, 0
    %s88 = sadd.s32 %s87, 1
    %s89 = scalar_select %p86, %s87, %s88
    %p92 = pneg %p86
    %p93 = scmp.eq.s32.totalorder %s9, 1
    %p94 = por %p92, %p93
    %p95 = scmp.ne.s32.totalorder %s87, %s90
    %p96 = scmp.eq.s32.totalorder %s9, 0
    %p97 = por %p95, %p96
    %p98 = scmp.ne.s32.totalorder %s87, %s90
    %p99 = scmp.eq.s32.totalorder %s14, 1
    %p100 = por %p98, %p99
    %p101 = scmp.ne.s32.totalorder %s90, %s91
    %p102 = scmp.eq.s32.totalorder %s14, 0
    %p103 = por %p101, %p102
    %p104 = scmp.ne.s32.totalorder %s90, %s91
    %p105 = scmp.eq.s32.totalorder %s15, 1
    %p106 = por %p104, %p105
    %p108 = scmp.ne.s32.totalorder %s91, %s107
    %p109 = scmp.eq.s32.totalorder %s15, 0
    %p110 = por %p108, %p109
    %p111 = scmp.le.s32.totalorder 1, %s9
    %p112 = scmp.lt.s32.totalorder %s9, 3
    %p113 = pnand %p111, %p112
    %p114 = pneg %p113
    // Predicated region
    $region9: #{vae_decoder_forward.7} parent=5 // pred_check
      _
    $region10: #{vae_decoder_forward.7} parent=5 // pred_check_branch
      %116 = sbr.rel (%p113) target = $region12
    $region11: #{vae_decoder_forward.7} parent=5 // pred_region
      %s117 = ssub.s32 %s9, 1
      // Predicated region
      $region13: #{vae_decoder_forward.7} parent=11 // pred_check
        %p118 = pneg %p56
      $region14: #{vae_decoder_forward.7} parent=11 // pred_check_branch
        %120 = sbr.rel (%p118) target = $region16
      $region15: #{vae_decoder_forward.7} parent=11 // pred_region
        _
      $region16: #{vae_decoder_forward.7} parent=11 // pred_fallthru
        _
      // Predicated region
      $region17: #{vae_decoder_forward.7} parent=11 // pred_check
        %p121 = pneg %p77
      $region18: #{vae_decoder_forward.7} parent=11 // pred_check_branch
        %123 = sbr.rel (%p121) target = $region20
      $region19: #{vae_decoder_forward.7} parent=11 // pred_region
        _
      $region20: #{vae_decoder_forward.7} parent=11 // pred_fallthru
        _
    $region12: #{vae_decoder_forward.7} parent=5 // pred_fallthru
      _
    %p124 = scmp.lt.s32.totalorder %s9, 2
    // Predicated region
    $region21: #{vae_decoder_forward.7} parent=5 // pred_check
      %p125 = pneg %p124
    $region22: #{vae_decoder_forward.7} parent=5 // pred_check_branch
      %127 = sbr.rel (%p125) target = $region24
    $region23: #{vae_decoder_forward.7} parent=5 // pred_region
      // Predicated region
      $region25: #{vae_decoder_forward.7} parent=23 // pred_check
        %p128 = pneg %p29
      $region26: #{vae_decoder_forward.7} parent=23 // pred_check_branch
        %130 = sbr.rel (%p128) target = $region28
      $region27: #{vae_decoder_forward.7} parent=23 // pred_region
        %p131 = scmp.lt.s32.totalorder %s9, 1
        %s132 = scalar_select %p131, %s9, 1
        %s133 = smul.addr %s132, 32
        %s134 = smul.addr %s133, 4
        %s135 = scalar_lea.vmem %s0, %s134
      $region28: #{vae_decoder_forward.7} parent=23 // pred_fallthru
        _
    $region24: #{vae_decoder_forward.7} parent=5 // pred_fallthru
      _
    %p136 = scmp.le.s32.totalorder 1, %s9
    %p137 = scmp.lt.s32.totalorder %s9, 3
    %p138 = pnand %p136, %p137
    %p139 = pneg %p138
    // Predicated region
    $region29: #{vae_decoder_forward.7} parent=5 // pred_check
      _
    $region30: #{vae_decoder_forward.7} parent=5 // pred_check_branch
      %141 = sbr.rel (%p138) target = $region32
    $region31: #{vae_decoder_forward.7} parent=5 // pred_region
      %s142 = ssub.s32 %s9, 1
      %p143 = scmp.lt.s32.totalorder %s14, 1
      %s144 = scalar_select %p143, %s14, 1
      %s145 = smul.addr %s144, 32
      %s146 = smul.addr %s145, 4
      %s147 = scalar_lea.vmem %s0, %s146
      %p148 = pneg %p35
      %p149 = pneg %p32
      %p150 = pneg %p56
      %p151 = pneg %p53
      %p152 = pneg %p77
      %p153 = pneg %p74
      %p154 = pneg %p103
      %p155 = pneg %p100
      %p156 = scmp.lt.s32.totalorder %s14, 1
      %s157 = scalar_select %p156, %s14, 1
      %s158 = smul.addr %s157, 32
      %s159 = smul.addr %s158, 8
      %s160 = scalar_lea.vmem %s3, %s159
      %p161 = scmp.lt.s32.totalorder %s14, 1
      %s162 = scalar_select %p161, %s14, 1
      %s163 = smul.addr %s162, 32
      %s164 = smul.addr %s163, 4
      %s165 = scalar_lea.vmem %s0, %s164
      %p166 = scmp.lt.s32.totalorder %s14, 1
      %s167 = scalar_select %p166, %s14, 1
      %s168 = smul.addr %s167, 32
      %s169 = smul.addr %s168, 8
      %s170 = scalar_lea.vmem %s3, %s169
      %v172 = vld [vmem:[%s165] sm:$0xf]
      %v173 = vld [vmem:[%s165 + $0x4] sm:$0xf]
      %v174 = vld [vmem:[%s165 + $0x8] sm:$0xf]
      %v175 = vld [vmem:[%s165 + $0xc] sm:$0xf]
      %v176 = vld [vmem:[%s165 + $0x10] sm:$0xf]
      %v177 = vld [vmem:[%s165 + $0x14] sm:$0xf]
      %v178 = vld [vmem:[%s165 + $0x18] sm:$0xf]
      %v179 = vld [vmem:[%s165 + $0x1c] sm:$0xf]
      %v180 = vld [vmem:[%s165 + $0x20] sm:$0xf]
      %v181 = vld [vmem:[%s165 + $0x24] sm:$0xf]
      %v182 = vld [vmem:[%s165 + $0x28] sm:$0xf]
      %v183 = vld [vmem:[%s165 + $0x2c] sm:$0xf]
      %v184 = vld [vmem:[%s165 + $0x30] sm:$0xf]
      %v185 = vld [vmem:[%s165 + $0x34] sm:$0xf]
      %v186 = vld [vmem:[%s165 + $0x38] sm:$0xf]
      %v187 = vld [vmem:[%s165 + $0x3c] sm:$0xf]
      %v188 = vld [vmem:[%s165 + $0x40] sm:$0xf]
      %v189 = vld [vmem:[%s165 + $0x44] sm:$0xf]
      %v190 = vld [vmem:[%s165 + $0x48] sm:$0xf]
      %v191 = vld [vmem:[%s165 + $0x4c] sm:$0xf]
      %v192 = vld [vmem:[%s165 + $0x50] sm:$0xf]
      %v193 = vld [vmem:[%s165 + $0x54] sm:$0xf]
      %v194 = vld [vmem:[%s165 + $0x58] sm:$0xf]
      %v195 = vld [vmem:[%s165 + $0x5c] sm:$0xf]
      %v196 = vld [vmem:[%s165 + $0x60] sm:$0xf]
      %v197 = vld [vmem:[%s165 + $0x64] sm:$0xf]
      %v198 = vld [vmem:[%s165 + $0x68] sm:$0xf]
      %v199 = vld [vmem:[%s165 + $0x6c] sm:$0xf]
      %v200 = vld [vmem:[%s165 + $0x70] sm:$0xf]
      %v201 = vld [vmem:[%s165 + $0x74] sm:$0xf]
      %v202 = vld [vmem:[%s165 + $0x78] sm:$0xf]
      %v203 = vld [vmem:[%s165 + $0x7c] sm:$0xf]
      %v204 = vld [vmem:[%s1] sm:$0xf]
      %v205 = vld [vmem:[%s1 + $0x4] sm:$0xf]
      %v206 = vld [vmem:[%s1 + $0x8] sm:$0xf]
      %v207 = vld [vmem:[%s1 + $0xc] sm:$0xf]
      %v208 = vld [vmem:[%s1 + $0x10] sm:$0xf]
      %v209 = vld [vmem:[%s1 + $0x14] sm:$0xf]
      %v210 = vld [vmem:[%s1 + $0x18] sm:$0xf]
      %v211 = vld [vmem:[%s1 + $0x1c] sm:$0xf]
      %v212 = vld [vmem:[%s2] sm:$0x1]
      %v214 = vlaneseq
      %v215 = vshrl.u32 %v214, 7
      %v216 = vsub.s32 0, %v215
      %v217 = vrot.slane %v212, %v216
      %v251 = vunpack.c.l.b16 %v172
      %v252 = vunpack.c.l.b16 %v173
      %v253 = vunpack.c.l.b16 %v174
      %v254 = vunpack.c.l.b16 %v175
      %v255 = vunpack.c.l.b16 %v176
      %v256 = vunpack.c.l.b16 %v177
      %v257 = vunpack.c.l.b16 %v178
      %v258 = vunpack.c.l.b16 %v179
      %v259 = vunpack.c.l.b16 %v180
      %v260 = vunpack.c.l.b16 %v181
      %v261 = vunpack.c.l.b16 %v182
      %v262 = vunpack.c.l.b16 %v183
      %v263 = vunpack.c.l.b16 %v184
      %v264 = vunpack.c.l.b16 %v185
      %v265 = vunpack.c.l.b16 %v186
      %v266 = vunpack.c.l.b16 %v187
      %v267 = vunpack.c.l.b16 %v188
      %v268 = vunpack.c.l.b16 %v189
      %v269 = vunpack.c.l.b16 %v190
      %v270 = vunpack.c.l.b16 %v191
      %v271 = vunpack.c.l.b16 %v192
      %v272 = vunpack.c.l.b16 %v193
      %v273 = vunpack.c.l.b16 %v194
      %v274 = vunpack.c.l.b16 %v195
      %v275 = vunpack.c.l.b16 %v196
      %v276 = vunpack.c.l.b16 %v197
      %v277 = vunpack.c.l.b16 %v198
      %v278 = vunpack.c.l.b16 %v199
      %v279 = vunpack.c.l.b16 %v200
      %v280 = vunpack.c.l.b16 %v201
      %v281 = vunpack.c.l.b16 %v202
      %v282 = vunpack.c.l.b16 %v203
      %v283 = vpack.c.b16 %v252, %v251
      %v284 = vpack.c.b16 %v254, %v253
      %v285 = vpack.c.b16 %v256, %v255
      %v286 = vpack.c.b16 %v258, %v257
      %v287 = vpack.c.b16 %v260, %v259
      %v288 = vpack.c.b16 %v262, %v261
      %v289 = vpack.c.b16 %v264, %v263
      %v290 = vpack.c.b16 %v266, %v265
      %v291 = vpack.c.b16 %v268, %v267
      %v292 = vpack.c.b16 %v270, %v269
      %v293 = vpack.c.b16 %v272, %v271
      %v294 = vpack.c.b16 %v274, %v273
      %v295 = vpack.c.b16 %v276, %v275
      %v296 = vpack.c.b16 %v278, %v277
      %v297 = vpack.c.b16 %v280, %v279
      %v298 = vpack.c.b16 %v282, %v281
      %v307 = vunpack.c.l.b16 %v204
      %v308 = vunpack.c.l.b16 %v205
      %v309 = vunpack.c.l.b16 %v206
      %v310 = vunpack.c.l.b16 %v207
      %v311 = vunpack.c.l.b16 %v208
      %v312 = vunpack.c.l.b16 %v209
      %v313 = vunpack.c.l.b16 %v210
      %v314 = vunpack.c.l.b16 %v211
      %v315 = vpack.c.b16 %v308, %v307
      %v316 = vpack.c.b16 %v310, %v309
      %v317 = vpack.c.b16 %v312, %v311
      %v318 = vpack.c.b16 %v314, %v313
      %vm323 = vcmask 523264
      %v325 = vsel %vm323, %v283, 0
      %v328 = vsel %vm323, %v284, 0
      %v331 = vsel %vm323, %v285, 0
      %v334 = vsel %vm323, %v286, 0
      %v337 = vsel %vm323, %v287, 0
      %v340 = vsel %vm323, %v288, 0
      %v343 = vsel %vm323, %v289, 0
      %v346 = vsel %vm323, %v290, 0
      %v349 = vsel %vm323, %v291, 0
      %v352 = vsel %vm323, %v292, 0
      %v355 = vsel %vm323, %v293, 0
      %v358 = vsel %vm323, %v294, 0
      %v361 = vsel %vm323, %v295, 0
      %v364 = vsel %vm323, %v296, 0
      %v367 = vsel %vm323, %v297, 0
      %v370 = vsel %vm323, %v298, 0
      %372 = vmatprep.subr.bf16.mxu0 0
      %373 = vmatpush1.bf16.msra.mxu0 %v315
      %374 = vmatprep.subr.bf16.mxu0 0
      %375 = vmatpush1.bf16.msra.mxu0 %v316
      %376 = vmatprep.subr.bf16.mxu0 0
      %377 = vmatpush1.bf16.msra.mxu0 %v317
      %378 = vmatprep.subr.bf16.mxu0 0
      %379 = vmatpush1.bf16.msra.mxu0 %v318
      %380 = vmatprep.subr.bf16.mxu0 0
      %381 = vmatpush1.bf16.msra.mxu0 0
      %382 = vmatprep.subr.bf16.mxu0 0
      %383 = vmatpush1.bf16.msra.mxu0 0
      %384 = vmatprep.subr.bf16.mxu0 0
      %385 = vmatpush1.bf16.msra.mxu0 0
      %386 = vmatprep.subr.bf16.mxu0 0
      %387 = vmatpush1.bf16.msra.mxu0 0
      %388 = vmatprep.subr.bf16.mxu0 0
      %389 = vmatpush1.bf16.msra.mxu0 0
      %390 = vmatprep.subr.bf16.mxu0 0
      %391 = vmatpush1.bf16.msra.mxu0 0
      %392 = vmatprep.subr.bf16.mxu0 0
      %393 = vmatpush1.bf16.msra.mxu0 0
      %394 = vmatprep.subr.bf16.mxu0 0
      %395 = vmatpush1.bf16.msra.mxu0 0
      %396 = vmatprep.subr.bf16.mxu0 0
      %397 = vmatpush1.bf16.msra.mxu0 0
      %398 = vmatprep.subr.bf16.mxu0 0
      %399 = vmatpush1.bf16.msra.mxu0 0
      %400 = vmatprep.subr.bf16.mxu0 0
      %401 = vmatpush1.bf16.msra.mxu0 0
      %402 = vmatprep.subr.bf16.mxu0 0
      %403 = vmatpush1.bf16.msra.mxu0 0
      %404 = vmatprep.mubr.bf16.mxu0 0
      %405 = vmatmul.mubr.bf16.gmra.mrb[0].mxu0 %v325
      %v406 = vpop.f32.mrb[0].mxu0
      %v407 = vadd.f32 %v217, %v406
      %v408 = vpop.f32.mrb[0].mxu0
      %v409 = vpop.f32.mrb[0].mxu0
      %v410 = vadd.f32 %v217, %v409
      %v411 = vpop.f32.mrb[0].mxu0
      %412 = vmatprep.mubr.bf16.mxu0 0
      %413 = vmatmul.mubr.bf16.gmra.mrb[0].mxu0 %v328
      %v414 = vpop.f32.mrb[0].mxu0
      %v415 = vadd.f32 %v217, %v414
      %v416 = vpop.f32.mrb[0].mxu0
      %v417 = vpop.f32.mrb[0].mxu0
      %v418 = vadd.f32 %v217, %v417
      %v419 = vpop.f32.mrb[0].mxu0
      %420 = vmatprep.mubr.bf16.mxu0 0
      %421 = vmatmul.mubr.bf16.gmra.mrb[0].mxu0 %v331
      %v422 = vpop.f32.mrb[0].mxu0
      %v423 = vadd.f32 %v217, %v422
      %v424 = vpop.f32.mrb[0].mxu0
      %v425 = vpop.f32.mrb[0].mxu0
      %v426 = vadd.f32 %v217, %v425
      %v427 = vpop.f32.mrb[0].mxu0
      %428 = vmatprep.mubr.bf16.mxu0 0
      %429 = vmatmul.mubr.bf16.gmra.mrb[0].mxu0 %v334
      %v430 = vpop.f32.mrb[0].mxu0
      %v431 = vadd.f32 %v217, %v430
      %v432 = vpop.f32.mrb[0].mxu0
      %v433 = vpop.f32.mrb[0].mxu0
      %v434 = vadd.f32 %v217, %v433
      %v435 = vpop.f32.mrb[0].mxu0
      %436 = vmatprep.mubr.bf16.mxu0 0
      %437 = vmatmul.mubr.bf16.gmra.mrb[0].mxu0 %v337
      %v438 = vpop.f32.mrb[0].mxu0
      %v439 = vadd.f32 %v217, %v438
      %v440 = vpop.f32.mrb[0].mxu0
      %v441 = vpop.f32.mrb[0].mxu0
      %v442 = vadd.f32 %v217, %v441
      %v443 = vpop.f32.mrb[0].mxu0
      %444 = vmatprep.mubr.bf16.mxu0 0
      %445 = vmatmul.mubr.bf16.gmra.mrb[0].mxu0 %v340
      %v446 = vpop.f32.mrb[0].mxu0
      %v447 = vadd.f32 %v217, %v446
      %v448 = vpop.f32.mrb[0].mxu0
      %v449 = vpop.f32.mrb[0].mxu0
      %v450 = vadd.f32 %v217, %v449
      %v451 = vpop.f32.mrb[0].mxu0
      %452 = vmatprep.mubr.bf16.mxu0 0
      %453 = vmatmul.mubr.bf16.gmra.mrb[0].mxu0 %v343
      %v454 = vpop.f32.mrb[0].mxu0
      %v455 = vadd.f32 %v217, %v454
      %v456 = vpop.f32.mrb[0].mxu0
      %v457 = vpop.f32.mrb[0].mxu0
      %v458 = vadd.f32 %v217, %v457
      %v459 = vpop.f32.mrb[0].mxu0
      %460 = vmatprep.mubr.bf16.mxu0 0
      %461 = vmatmul.mubr.bf16.gmra.mrb[0].mxu0 %v346
      %v462 = vpop.f32.mrb[0].mxu0
      %v463 = vadd.f32 %v217, %v462
      %v464 = vpop.f32.mrb[0].mxu0
      %v465 = vpop.f32.mrb[0].mxu0
      %v466 = vadd.f32 %v217, %v465
      %v467 = vpop.f32.mrb[0].mxu0
      %468 = vmatprep.mubr.bf16.mxu0 0
      %469 = vmatmul.mubr.bf16.gmra.mrb[0].mxu0 %v349
      %v470 = vpop.f32.mrb[0].mxu0
      %v471 = vadd.f32 %v217, %v470
      %v472 = vpop.f32.mrb[0].mxu0
      %v473 = vpop.f32.mrb[0].mxu0
      %v474 = vadd.f32 %v217, %v473
      %v475 = vpop.f32.mrb[0].mxu0
      %476 = vmatprep.mubr.bf16.mxu0 0
      %477 = vmatmul.mubr.bf16.gmra.mrb[0].mxu0 %v352
      %v478 = vpop.f32.mrb[0].mxu0
      %v479 = vadd.f32 %v217, %v478
      %v480 = vpop.f32.mrb[0].mxu0
      %v481 = vpop.f32.mrb[0].mxu0
      %v482 = vadd.f32 %v217, %v481
      %v483 = vpop.f32.mrb[0].mxu0
      %484 = vmatprep.mubr.bf16.mxu0 0
      %485 = vmatmul.mubr.bf16.gmra.mrb[0].mxu0 %v355
      %v486 = vpop.f32.mrb[0].mxu0
      %v487 = vadd.f32 %v217, %v486
      %v488 = vpop.f32.mrb[0].mxu0
      %v489 = vpop.f32.mrb[0].mxu0
      %v490 = vadd.f32 %v217, %v489
      %v491 = vpop.f32.mrb[0].mxu0
      %492 = vmatprep.mubr.bf16.mxu0 0
      %493 = vmatmul.mubr.bf16.gmra.mrb[0].mxu0 %v358
      %v494 = vpop.f32.mrb[0].mxu0
      %v495 = vadd.f32 %v217, %v494
      %v496 = vpop.f32.mrb[0].mxu0
      %v497 = vpop.f32.mrb[0].mxu0
      %v498 = vadd.f32 %v217, %v497
      %v499 = vpop.f32.mrb[0].mxu0
      %500 = vmatprep.mubr.bf16.mxu0 0
      %501 = vmatmul.mubr.bf16.gmra.mrb[0].mxu0 %v361
      %v502 = vpop.f32.mrb[0].mxu0
      %v503 = vadd.f32 %v217, %v502
      %v504 = vpop.f32.mrb[0].mxu0
      %v505 = vpop.f32.mrb[0].mxu0
      %v506 = vadd.f32 %v217, %v505
      %v507 = vpop.f32.mrb[0].mxu0
      %508 = vmatprep.mubr.bf16.mxu0 0
      %509 = vmatmul.mubr.bf16.gmra.mrb[0].mxu0 %v364
      %v510 = vpop.f32.mrb[0].mxu0
      %v511 = vadd.f32 %v217, %v510
      %v512 = vpop.f32.mrb[0].mxu0
      %v513 = vpop.f32.mrb[0].mxu0
      %v514 = vadd.f32 %v217, %v513
      %v515 = vpop.f32.mrb[0].mxu0
      %516 = vmatprep.mubr.bf16.mxu0 0
      %517 = vmatmul.mubr.bf16.gmra.mrb[0].mxu0 %v367
      %v518 = vpop.f32.mrb[0].mxu0
      %v519 = vadd.f32 %v217, %v518
      %v520 = vpop.f32.mrb[0].mxu0
      %v521 = vpop.f32.mrb[0].mxu0
      %v522 = vadd.f32 %v217, %v521
      %v523 = vpop.f32.mrb[0].mxu0
      %524 = vmatprep.mubr.bf16.mxu0 0
      %525 = vmatmul.mubr.bf16.gmra.mrb[0].mxu0 %v370
      %v526 = vpop.f32.mrb[0].mxu0
      %v527 = vadd.f32 %v217, %v526
      %v528 = vpop.f32.mrb[0].mxu0
      %v529 = vpop.f32.mrb[0].mxu0
      %v530 = vadd.f32 %v217, %v529
      %v531 = vpop.f32.mrb[0].mxu0
      %532 = vdwg.mxu0
      %vm533 = vcmask 23552
      %534 = vst.msk [vmem:[%s170] sm:$0xff] %vm533, %v407
      %535 = vst.msk [vmem:[%s170 + $0x8] sm:$0xff] %vm533, %v410
      %536 = vst.msk [vmem:[%s170 + $0x10] sm:$0xff] %vm533, %v415
      %537 = vst.msk [vmem:[%s170 + $0x18] sm:$0xff] %vm533, %v418
      %538 = vst.msk [vmem:[%s170 + $0x20] sm:$0xff] %vm533, %v423
      %539 = vst.msk [vmem:[%s170 + $0x28] sm:$0xff] %vm533, %v426
      %540 = vst.msk [vmem:[%s170 + $0x30] sm:$0xff] %vm533, %v431
      %541 = vst.msk [vmem:[%s170 + $0x38] sm:$0xff] %vm533, %v434
      %542 = vst.msk [vmem:[%s170 + $0x40] sm:$0xff] %vm533, %v439
      %543 = vst.msk [vmem:[%s170 + $0x48] sm:$0xff] %vm533, %v442
      %544 = vst.msk [vmem:[%s170 + $0x50] sm:$0xff] %vm533, %v447
      %545 = vst.msk [vmem:[%s170 + $0x58] sm:$0xff] %vm533, %v450
      %546 = vst.msk [vmem:[%s170 + $0x60] sm:$0xff] %vm533, %v455
      %547 = vst.msk [vmem:[%s170 + $0x68] sm:$0xff] %vm533, %v458
      %548 = vst.msk [vmem:[%s170 + $0x70] sm:$0xff] %vm533, %v463
      %549 = vst.msk [vmem:[%s170 + $0x78] sm:$0xff] %vm533, %v466
      %550 = vst.msk [vmem:[%s170 + $0x80] sm:$0xff] %vm533, %v471
      %551 = vst.msk [vmem:[%s170 + $0x88] sm:$0xff] %vm533, %v474
      %552 = vst.msk [vmem:[%s170 + $0x90] sm:$0xff] %vm533, %v479
      %553 = vst.msk [vmem:[%s170 + $0x98] sm:$0xff] %vm533, %v482
      %554 = vst.msk [vmem:[%s170 + $0xa0] sm:$0xff] %vm533, %v487
      %555 = vst.msk [vmem:[%s170 + $0xa8] sm:$0xff] %vm533, %v490
      %556 = vst.msk [vmem:[%s170 + $0xb0] sm:$0xff] %vm533, %v495
      %557 = vst.msk [vmem:[%s170 + $0xb8] sm:$0xff] %vm533, %v498
      %558 = vst.msk [vmem:[%s170 + $0xc0] sm:$0xff] %vm533, %v503
      %559 = vst.msk [vmem:[%s170 + $0xc8] sm:$0xff] %vm533, %v506
      %560 = vst.msk [vmem:[%s170 + $0xd0] sm:$0xff] %vm533, %v511
      %561 = vst.msk [vmem:[%s170 + $0xd8] sm:$0xff] %vm533, %v514
      %562 = vst.msk [vmem:[%s170 + $0xe0] sm:$0xff] %vm533, %v519
      %563 = vst.msk [vmem:[%s170 + $0xe8] sm:$0xff] %vm533, %v522
      %564 = vst.msk [vmem:[%s170 + $0xf0] sm:$0xff] %vm533, %v527
      %565 = vst.msk [vmem:[%s170 + $0xf8] sm:$0xff] %vm533, %v530
      %p566 = scmp.lt.s32.totalorder %s14, 1
      %s567 = scalar_select %p566, %s14, 1
      %s568 = smul.addr %s567, 32
      %s569 = smul.addr %s568, 8
      %s570 = scalar_lea.vmem %s3, %s569
      // Predicated region
      $region33: #{vae_decoder_forward.7} parent=31 // pred_check
        %p571 = pneg %p100
      $region34: #{vae_decoder_forward.7} parent=31 // pred_check_branch
        %573 = sbr.rel (%p571) target = $region36
      $region35: #{vae_decoder_forward.7} parent=31 // pred_region
        _
      $region36: #{vae_decoder_forward.7} parent=31 // pred_fallthru
        _
    $region32: #{vae_decoder_forward.7} parent=5 // pred_fallthru
      _
    %p574 = scmp.le.s32.totalorder 2, %s9
    // Predicated region
    $region37: #{vae_decoder_forward.7} parent=5 // pred_check
      %p575 = pneg %p574
    $region38: #{vae_decoder_forward.7} parent=5 // pred_check_branch
      %577 = sbr.rel (%p575) target = $region40
    $region39: #{vae_decoder_forward.7} parent=5 // pred_region
      %s578 = ssub.s32 %s9, 2
      // Predicated region
      $region41: #{vae_decoder_forward.7} parent=39 // pred_check
        %p579 = pneg %p106
      $region42: #{vae_decoder_forward.7} parent=39 // pred_check_branch
        %581 = sbr.rel (%p579) target = $region44
      $region43: #{vae_decoder_forward.7} parent=39 // pred_region
        %p582 = scmp.lt.s32.totalorder %s15, 1
        %s583 = scalar_select %p582, %s15, 1
        %s584 = smul.addr %s583, 32
        %s585 = smul.addr %s584, 8
        %s586 = scalar_lea.vmem %s3, %s585
      $region44: #{vae_decoder_forward.7} parent=39 // pred_fallthru
        _
    $region40: #{vae_decoder_forward.7} parent=5 // pred_fallthru
      _
  $region6: #{vae_decoder_forward.7} parent=0 // loop_footer
    %s13 = sadd.s32 1, %s9
  $region7: #{vae_decoder_forward.7} parent=0 // loop_footer_branch
    %8 = sbr.rel target = $region3
  $region8: #{vae_decoder_forward.7} parent=0 // loop_exit
    _

</llo_original>
